<compile_context>
chip_gen: v7x
topology: tpu7x:2x2x1
jax: 0.10.0
libtpu: 0.0.40
codegen_flags: <defaults>
</compile_context>

<pallas_src>
import functools

import jax
import jax.numpy as jnp
from jax import lax
from jax.experimental import pallas as pl
from jax.experimental.pallas import tpu as pltpu

C = 64              # fixed by the module (Conv2d(64, 64, ...))
NEG_SLOPE = 0.01    # nn.LeakyReLU() default
EPS = 1e-5          # nn.BatchNorm2d default


def _leaky(x):
    return jnp.where(x >= 0, x, NEG_SLOPE * x)


# --------------------------- fused ResBlock kernel ---------------------------
def _resblock_kernel(x_ref, w1_ref, w2_ref, g1_ref, beta1_ref, g2_ref, beta2_ref,
                     out_ref, xpad_ref, *, N, H, W):
    # x_ref:            (M, C)  f32, M = N*H*W   (flattened NHWC activations)
    # w1_ref / w2_ref:  (9*C, C) bf16            (HWIO conv weights, tap-major)
    # g*/beta*_ref:     (1, C)  f32              (BatchNorm affine params)
    # out_ref:          (M, C)  f32
    # xpad_ref:         (N, H+2, W+4, C) bf16 scratch; activation data lives at
    #                   [:, 1:H+1, 2:W+2, :] so the interior store starts at an
    #                   even sublane offset (aligned to bf16 packing); the
    #                   1-pixel halo around it stays zero.
    M = N * H * W

    def conv3x3(w_ref):
        # 9 accumulating MXU dots directly on per-tap ref slices (no im2col).
        acc = jnp.zeros((M, C), jnp.float32)
        for t in range(9):
            ky, kx = divmod(t, 3)
            tap = xpad_ref[:, ky:ky + H, kx + 1:kx + 1 + W, :].reshape(M, C)
            acc = acc + jnp.dot(tap, w_ref[t * C:(t + 1) * C, :],
                                preferred_element_type=jnp.float32)
        return acc

    def bn(z, g_ref, b_ref):
        # Training-mode BatchNorm: per-channel batch mean / biased variance
        # over the M = N*H*W rows, then affine.
        m = jnp.mean(z, axis=0, keepdims=True)                 # (1, C)
        d = z - m
        v = jnp.mean(d * d, axis=0, keepdims=True)             # (1, C)
        return d * (g_ref[...] * lax.rsqrt(v + EPS)) + b_ref[...]

    # Zero the padded scratch exactly once (bf16 -> ~26 KiB of stores); only
    # the interior is rewritten before each conv, so the halo stays zero.
    xpad_ref[...] = jnp.zeros_like(xpad_ref)

    # ---- conv1 -> bn1 -> LeakyReLU ----
    # (conv bias omitted: exactly cancelled by the batch-statistics BN)
    xpad_ref[:, 1:H + 1, 2:W + 2, :] = (
        x_ref[...].astype(jnp.bfloat16).reshape(N, H, W, C))
    a1 = _leaky(bn(conv3x3(w1_ref), g1_ref, beta1_ref))

    # ---- conv2 -> bn2 ----
    xpad_ref[:, 1:H + 1, 2:W + 2, :] = a1.astype(jnp.bfloat16).reshape(N, H, W, C)
    z2 = bn(conv3x3(w2_ref), g2_ref, beta2_ref)

    # ---- residual add (re-read x_ref, f32 path) -> LeakyReLU ----
    out_ref[...] = _leaky(z2 + x_ref[...])


# ------------------------------ Pallas wrapper ------------------------------
def prepare_params(params):
    """One-time parameter prep (outside the forward path): tap-major bf16 weights."""
    # TODO(synk): BatchNorm running_mean/running_var buffer updates (training
    # side effect) are not emitted.
    return {
        "w1": params["w1"].reshape(9 * C, C).astype(jnp.bfloat16),
        "w2": params["w2"].reshape(9 * C, C).astype(jnp.bfloat16),
        "gamma1": params["gamma1"].reshape(1, C),
        "beta1": params["beta1"].reshape(1, C),
        "gamma2": params["gamma2"].reshape(1, C),
        "beta2": params["beta2"].reshape(1, C),
        # Conv biases params["b1"]/params["b2"] are intentionally not passed:
        # a bias right before a batch-statistics BatchNorm cancels exactly.
    }


def resblock_forward(x_nchw, kparams):
    """x_nchw: (N, 64, H, W) float32 (PyTorch layout)."""
    N, _, H, W = x_nchw.shape
    M = N * H * W
    x = jnp.transpose(x_nchw, (0, 2, 3, 1)).reshape(M, C)    # NHWC, flattened

    vec = pl.BlockSpec((1, C), lambda i: (0, 0))
    out = pl.pallas_call(
        functools.partial(_resblock_kernel, N=N, H=H, W=W),
        out_shape=jax.ShapeDtypeStruct((M, C), jnp.float32),
        grid=(1,),
        in_specs=[
            pl.BlockSpec((M, C), lambda i: (0, 0)),            # x (flattened)
            pl.BlockSpec((9 * C, C), lambda i: (0, 0)),        # w1 (bf16)
            pl.BlockSpec((9 * C, C), lambda i: (0, 0)),        # w2 (bf16)
            vec, vec, vec, vec,                                # gamma1 beta1 gamma2 beta2
        ],
        out_specs=pl.BlockSpec((M, C), lambda i: (0, 0)),
        scratch_shapes=[
            pltpu.VMEM((N, H + 2, W + 4, C), jnp.bfloat16),    # zero-padded acts
        ],
        compiler_params=pltpu.CompilerParams(
            dimension_semantics=("arbitrary",)),
    )(x, kparams["w1"], kparams["w2"], kparams["gamma1"], kparams["beta1"],
      kparams["gamma2"], kparams["beta2"])
    return jnp.transpose(out.reshape(N, H, W, C), (0, 3, 1, 2))


# --------------------------- params / JAX reference ---------------------------
def init_params(key):
    k1, k2, k3, k4 = jax.random.split(key, 4)
    bound = 1.0 / jnp.sqrt(9.0 * C)   # ~ PyTorch conv kaiming-uniform bound
    return {
        "w1": jax.random.uniform(k1, (3, 3, C, C), jnp.float32, -bound, bound),  # HWIO
        "b1": jax.random.uniform(k2, (C,), jnp.float32, -bound, bound),
        "w2": jax.random.uniform(k3, (3, 3, C, C), jnp.float32, -bound, bound),  # HWIO
        "b2": jax.random.uniform(k4, (C,), jnp.float32, -bound, bound),
        "gamma1": jnp.ones((C,), jnp.float32),
        "beta1": jnp.zeros((C,), jnp.float32),
        "gamma2": jnp.ones((C,), jnp.float32),
        "beta2": jnp.zeros((C,), jnp.float32),
    }


def resblock_ref(x_nchw, p):
    x = jnp.transpose(x_nchw, (0, 2, 3, 1))                    # NHWC
    dn = ("NHWC", "HWIO", "NHWC")
    y1 = lax.conv_general_dilated(x, p["w1"], (1, 1), "SAME",
                                  dimension_numbers=dn) + p["b1"]
    m1, v1 = y1.mean((0, 1, 2)), y1.var((0, 1, 2))
    a = _leaky((y1 - m1) / jnp.sqrt(v1 + EPS) * p["gamma1"] + p["beta1"])
    y2 = lax.conv_general_dilated(a, p["w2"], (1, 1), "SAME",
                                  dimension_numbers=dn) + p["b2"]
    m2, v2 = y2.mean((0, 1, 2)), y2.var((0, 1, 2))
    z = (y2 - m2) / jnp.sqrt(v2 + EPS) * p["gamma2"] + p["beta2"] + x
    return jnp.transpose(_leaky(z), (0, 3, 1, 2))               # back to NCHW


if __name__ == "__main__":
    N, H, W = 2, 8, 8
    key = jax.random.PRNGKey(0)
    kx, kp = jax.random.split(key)
    # NCHW input, as the PyTorch module expects: (2, 64, 8, 8)
    x = jax.random.normal(kx, (N, C, H, W), jnp.float32)
    params = init_params(kp)
    kparams = prepare_params(params)        # one-time weight prep (outside jit)

    fwd = jax.jit(resblock_forward)
    out = fwd(x, kparams)
    jax.block_until_ready(out)
    assert out.shape == (N, C, H, W) and out.dtype == jnp.float32

    ref = resblock_ref(x, params)
    max_err = float(jnp.max(jnp.abs(out - ref)))
    assert jnp.allclose(out, ref, atol=3e-2, rtol=3e-2), f"max_err={max_err}"

    print("KERNEL_OK")
</pallas_src>

<mosaic_0001>
module attributes {stable_mosaic.version = 11 : i64} {
  func.func @_resblock_kernel(%arg0: i32, %arg1: memref<128x64xf32, #tpu.memory_space<vmem>>, %arg2: memref<576x64xbf16, #tpu.memory_space<vmem>>, %arg3: memref<576x64xbf16, #tpu.memory_space<vmem>>, %arg4: memref<1x64xf32, #tpu.memory_space<vmem>>, %arg5: memref<1x64xf32, #tpu.memory_space<vmem>>, %arg6: memref<1x64xf32, #tpu.memory_space<vmem>>, %arg7: memref<1x64xf32, #tpu.memory_space<vmem>>, %arg8: memref<128x64xf32, #tpu.memory_space<vmem>>, %arg9: memref<2x10x12x64xbf16, #tpu.memory_space<vmem>>) attributes {dimension_semantics = [#tpu.dimension_semantics<arbitrary>], iteration_bounds = array<i64: 1>, scalar_prefetch = 0 : i64, scratch_operands = 1 : i64, tpu.core_type = #tpu.core_type<tc>, window_params = [{pipeline_mode = #tpu.pipeline_mode<synchronous>, transform_indices = @transform_0, window_bounds = array<i64: 128, 64>}, {pipeline_mode = #tpu.pipeline_mode<synchronous>, transform_indices = @transform_1, window_bounds = array<i64: 576, 64>}, {pipeline_mode = #tpu.pipeline_mode<synchronous>, transform_indices = @transform_2, window_bounds = array<i64: 576, 64>}, {pipeline_mode = #tpu.pipeline_mode<synchronous>, transform_indices = @transform_3, window_bounds = array<i64: 1, 64>}, {pipeline_mode = #tpu.pipeline_mode<synchronous>, transform_indices = @transform_4, window_bounds = array<i64: 1, 64>}, {pipeline_mode = #tpu.pipeline_mode<synchronous>, transform_indices = @transform_5, window_bounds = array<i64: 1, 64>}, {pipeline_mode = #tpu.pipeline_mode<synchronous>, transform_indices = @transform_6, window_bounds = array<i64: 1, 64>}, {pipeline_mode = #tpu.pipeline_mode<synchronous>, transform_indices = @transform_7, window_bounds = array<i64: 128, 64>}]} {
    %cst = arith.constant 0.000000e+00 : bf16
    %0 = vector.broadcast %cst : bf16 to vector<2x10x12x64xbf16>
    %c0 = arith.constant 0 : index
    %c0_0 = arith.constant 0 : index
    %c0_1 = arith.constant 0 : index
    %c0_2 = arith.constant 0 : index
    %1 = vector.load %arg9[%c0, %c0_0, %c0_1, %c0_2] : memref<2x10x12x64xbf16, #tpu.memory_space<vmem>>, vector<2x10x12x64xbf16>
    tpu.vector_store %arg9[%c0, %c0_0, %c0_1, %c0_2], %0 {strides = array<i32>} : memref<2x10x12x64xbf16, #tpu.memory_space<vmem>>, vector<2x10x12x64xbf16>,
    %c0_3 = arith.constant 0 : index
    %c0_4 = arith.constant 0 : index
    %2 = vector.load %arg1[%c0_3, %c0_4] : memref<128x64xf32, #tpu.memory_space<vmem>>, vector<128x64xf32>
    %3 = arith.truncf %2 : vector<128x64xf32> to vector<128x64xbf16>
    %4 = vector.shape_cast %3 : vector<128x64xbf16> to vector<2x8x8x64xbf16>
    %c0_5 = arith.constant 0 : index
    %c1 = arith.constant 1 : index
    %c2 = arith.constant 2 : index
    %c0_6 = arith.constant 0 : index
    %5 = vector.load %arg9[%c0_5, %c1, %c2, %c0_6] : memref<2x10x12x64xbf16, #tpu.memory_space<vmem>>, vector<2x8x8x64xbf16>
    tpu.vector_store %arg9[%c0_5, %c1, %c2, %c0_6], %4 {strides = array<i32>} : memref<2x10x12x64xbf16, #tpu.memory_space<vmem>>, vector<2x8x8x64xbf16>,
    %cst_7 = arith.constant 0.000000e+00 : f32
    %6 = vector.broadcast %cst_7 : f32 to vector<128x64xf32>
    %c0_8 = arith.constant 0 : index
    %c0_9 = arith.constant 0 : index
    %c1_10 = arith.constant 1 : index
    %c0_11 = arith.constant 0 : index
    %7 = vector.load %arg9[%c0_8, %c0_9, %c1_10, %c0_11] : memref<2x10x12x64xbf16, #tpu.memory_space<vmem>>, vector<2x8x8x64xbf16>
    %8 = vector.shape_cast %7 : vector<2x8x8x64xbf16> to vector<128x64xbf16>
    %c0_12 = arith.constant 0 : index
    %c0_13 = arith.constant 0 : index
    %9 = vector.load %arg2[%c0_12, %c0_13] : memref<576x64xbf16, #tpu.memory_space<vmem>>, vector<64x64xbf16>
    %cst_14 = arith.constant dense<0.000000e+00> : vector<128x64xf32>
    %10 = tpu.matmul %8, %9, %cst_14 {dimension_numbers = #tpu.dot_dimension_numbers<[1], [0], [0], [1], [0, 0, 1, 1], [], []>} : vector<128x64xbf16>, vector<64x64xbf16>, vector<128x64xf32> -> vector<128x64xf32>
    %11 = arith.addf %6, %10 : vector<128x64xf32>
    %c0_15 = arith.constant 0 : index
    %c0_16 = arith.constant 0 : index
    %c2_17 = arith.constant 2 : index
    %c0_18 = arith.constant 0 : index
    %12 = vector.load %arg9[%c0_15, %c0_16, %c2_17, %c0_18] : memref<2x10x12x64xbf16, #tpu.memory_space<vmem>>, vector<2x8x8x64xbf16>
    %13 = vector.shape_cast %12 : vector<2x8x8x64xbf16> to vector<128x64xbf16>
    %c64 = arith.constant 64 : index
    %c0_19 = arith.constant 0 : index
    %14 = vector.load %arg2[%c64, %c0_19] : memref<576x64xbf16, #tpu.memory_space<vmem>>, vector<64x64xbf16>
    %cst_20 = arith.constant dense<0.000000e+00> : vector<128x64xf32>
    %15 = tpu.matmul %13, %14, %cst_20 {dimension_numbers = #tpu.dot_dimension_numbers<[1], [0], [0], [1], [0, 0, 1, 1], [], []>} : vector<128x64xbf16>, vector<64x64xbf16>, vector<128x64xf32> -> vector<128x64xf32>
    %16 = arith.addf %11, %15 : vector<128x64xf32>
    %c0_21 = arith.constant 0 : index
    %c0_22 = arith.constant 0 : index
    %c3 = arith.constant 3 : index
    %c0_23 = arith.constant 0 : index
    %17 = vector.load %arg9[%c0_21, %c0_22, %c3, %c0_23] : memref<2x10x12x64xbf16, #tpu.memory_space<vmem>>, vector<2x8x8x64xbf16>
    %18 = vector.shape_cast %17 : vector<2x8x8x64xbf16> to vector<128x64xbf16>
    %c128 = arith.constant 128 : index
    %c0_24 = arith.constant 0 : index
    %19 = vector.load %arg2[%c128, %c0_24] : memref<576x64xbf16, #tpu.memory_space<vmem>>, vector<64x64xbf16>
    %cst_25 = arith.constant dense<0.000000e+00> : vector<128x64xf32>
    %20 = tpu.matmul %18, %19, %cst_25 {dimension_numbers = #tpu.dot_dimension_numbers<[1], [0], [0], [1], [0, 0, 1, 1], [], []>} : vector<128x64xbf16>, vector<64x64xbf16>, vector<128x64xf32> -> vector<128x64xf32>
    %21 = arith.addf %16, %20 : vector<128x64xf32>
    %c0_26 = arith.constant 0 : index
    %c1_27 = arith.constant 1 : index
    %c1_28 = arith.constant 1 : index
    %c0_29 = arith.constant 0 : index
    %22 = vector.load %arg9[%c0_26, %c1_27, %c1_28, %c0_29] : memref<2x10x12x64xbf16, #tpu.memory_space<vmem>>, vector<2x8x8x64xbf16>
    %23 = vector.shape_cast %22 : vector<2x8x8x64xbf16> to vector<128x64xbf16>
    %c192 = arith.constant 192 : index
    %c0_30 = arith.constant 0 : index
    %24 = vector.load %arg2[%c192, %c0_30] : memref<576x64xbf16, #tpu.memory_space<vmem>>, vector<64x64xbf16>
    %cst_31 = arith.constant dense<0.000000e+00> : vector<128x64xf32>
    %25 = tpu.matmul %23, %24, %cst_31 {dimension_numbers = #tpu.dot_dimension_numbers<[1], [0], [0], [1], [0, 0, 1, 1], [], []>} : vector<128x64xbf16>, vector<64x64xbf16>, vector<128x64xf32> -> vector<128x64xf32>
    %26 = arith.addf %21, %25 : vector<128x64xf32>
    %c0_32 = arith.constant 0 : index
    %c1_33 = arith.constant 1 : index
    %c2_34 = arith.constant 2 : index
    %c0_35 = arith.constant 0 : index
    %27 = vector.load %arg9[%c0_32, %c1_33, %c2_34, %c0_35] : memref<2x10x12x64xbf16, #tpu.memory_space<vmem>>, vector<2x8x8x64xbf16>
    %28 = vector.shape_cast %27 : vector<2x8x8x64xbf16> to vector<128x64xbf16>
    %c256 = arith.constant 256 : index
    %c0_36 = arith.constant 0 : index
    %29 = vector.load %arg2[%c256, %c0_36] : memref<576x64xbf16, #tpu.memory_space<vmem>>, vector<64x64xbf16>
    %cst_37 = arith.constant dense<0.000000e+00> : vector<128x64xf32>
    %30 = tpu.matmul %28, %29, %cst_37 {dimension_numbers = #tpu.dot_dimension_numbers<[1], [0], [0], [1], [0, 0, 1, 1], [], []>} : vector<128x64xbf16>, vector<64x64xbf16>, vector<128x64xf32> -> vector<128x64xf32>
    %31 = arith.addf %26, %30 : vector<128x64xf32>
    %c0_38 = arith.constant 0 : index
    %c1_39 = arith.constant 1 : index
    %c3_40 = arith.constant 3 : index
    %c0_41 = arith.constant 0 : index
    %32 = vector.load %arg9[%c0_38, %c1_39, %c3_40, %c0_41] : memref<2x10x12x64xbf16, #tpu.memory_space<vmem>>, vector<2x8x8x64xbf16>
    %33 = vector.shape_cast %32 : vector<2x8x8x64xbf16> to vector<128x64xbf16>
    %c320 = arith.constant 320 : index
    %c0_42 = arith.constant 0 : index
    %34 = vector.load %arg2[%c320, %c0_42] : memref<576x64xbf16, #tpu.memory_space<vmem>>, vector<64x64xbf16>
    %cst_43 = arith.constant dense<0.000000e+00> : vector<128x64xf32>
    %35 = tpu.matmul %33, %34, %cst_43 {dimension_numbers = #tpu.dot_dimension_numbers<[1], [0], [0], [1], [0, 0, 1, 1], [], []>} : vector<128x64xbf16>, vector<64x64xbf16>, vector<128x64xf32> -> vector<128x64xf32>
    %36 = arith.addf %31, %35 : vector<128x64xf32>
    %c0_44 = arith.constant 0 : index
    %c2_45 = arith.constant 2 : index
    %c1_46 = arith.constant 1 : index
    %c0_47 = arith.constant 0 : index
    %37 = vector.load %arg9[%c0_44, %c2_45, %c1_46, %c0_47] : memref<2x10x12x64xbf16, #tpu.memory_space<vmem>>, vector<2x8x8x64xbf16>
    %38 = vector.shape_cast %37 : vector<2x8x8x64xbf16> to vector<128x64xbf16>
    %c384 = arith.constant 384 : index
    %c0_48 = arith.constant 0 : index
    %39 = vector.load %arg2[%c384, %c0_48] : memref<576x64xbf16, #tpu.memory_space<vmem>>, vector<64x64xbf16>
    %cst_49 = arith.constant dense<0.000000e+00> : vector<128x64xf32>
    %40 = tpu.matmul %38, %39, %cst_49 {dimension_numbers = #tpu.dot_dimension_numbers<[1], [0], [0], [1], [0, 0, 1, 1], [], []>} : vector<128x64xbf16>, vector<64x64xbf16>, vector<128x64xf32> -> vector<128x64xf32>
    %41 = arith.addf %36, %40 : vector<128x64xf32>
    %c0_50 = arith.constant 0 : index
    %c2_51 = arith.constant 2 : index
    %c2_52 = arith.constant 2 : index
    %c0_53 = arith.constant 0 : index
    %42 = vector.load %arg9[%c0_50, %c2_51, %c2_52, %c0_53] : memref<2x10x12x64xbf16, #tpu.memory_space<vmem>>, vector<2x8x8x64xbf16>
    %43 = vector.shape_cast %42 : vector<2x8x8x64xbf16> to vector<128x64xbf16>
    %c448 = arith.constant 448 : index
    %c0_54 = arith.constant 0 : index
    %44 = vector.load %arg2[%c448, %c0_54] : memref<576x64xbf16, #tpu.memory_space<vmem>>, vector<64x64xbf16>
    %cst_55 = arith.constant dense<0.000000e+00> : vector<128x64xf32>
    %45 = tpu.matmul %43, %44, %cst_55 {dimension_numbers = #tpu.dot_dimension_numbers<[1], [0], [0], [1], [0, 0, 1, 1], [], []>} : vector<128x64xbf16>, vector<64x64xbf16>, vector<128x64xf32> -> vector<128x64xf32>
    %46 = arith.addf %41, %45 : vector<128x64xf32>
    %c0_56 = arith.constant 0 : index
    %c2_57 = arith.constant 2 : index
    %c3_58 = arith.constant 3 : index
    %c0_59 = arith.constant 0 : index
    %47 = vector.load %arg9[%c0_56, %c2_57, %c3_58, %c0_59] : memref<2x10x12x64xbf16, #tpu.memory_space<vmem>>, vector<2x8x8x64xbf16>
    %48 = vector.shape_cast %47 : vector<2x8x8x64xbf16> to vector<128x64xbf16>
    %c512 = arith.constant 512 : index
    %c0_60 = arith.constant 0 : index
    %49 = vector.load %arg2[%c512, %c0_60] : memref<576x64xbf16, #tpu.memory_space<vmem>>, vector<64x64xbf16>
    %cst_61 = arith.constant dense<0.000000e+00> : vector<128x64xf32>
    %50 = tpu.matmul %48, %49, %cst_61 {dimension_numbers = #tpu.dot_dimension_numbers<[1], [0], [0], [1], [0, 0, 1, 1], [], []>} : vector<128x64xbf16>, vector<64x64xbf16>, vector<128x64xf32> -> vector<128x64xf32>
    %51 = arith.addf %46, %50 : vector<128x64xf32>
    %cst_62 = arith.constant dense<0.000000e+00> : vector<64xf32>
    %52 = vector.multi_reduction <add>, %51, %cst_62 [0] : vector<128x64xf32> to vector<64xf32>
    %53 = vector.shape_cast %52 : vector<64xf32> to vector<1x64xf32>
    %cst_63 = arith.constant 1.280000e+02 : f32
    %54 = vector.broadcast %cst_63 : f32 to vector<1x64xf32>
    %55 = arith.divf %53, %54 : vector<1x64xf32>
    %56 = vector.broadcast %55 : vector<1x64xf32> to vector<128x64xf32>
    %57 = arith.subf %51, %56 : vector<128x64xf32>
    %58 = arith.mulf %57, %57 : vector<128x64xf32>
    %cst_64 = arith.constant dense<0.000000e+00> : vector<64xf32>
    %59 = vector.multi_reduction <add>, %58, %cst_64 [0] : vector<128x64xf32> to vector<64xf32>
    %60 = vector.shape_cast %59 : vector<64xf32> to vector<1x64xf32>
    %cst_65 = arith.constant 1.280000e+02 : f32
    %61 = vector.broadcast %cst_65 : f32 to vector<1x64xf32>
    %62 = arith.divf %60, %61 : vector<1x64xf32>
    %c0_66 = arith.constant 0 : index
    %c0_67 = arith.constant 0 : index
    %63 = vector.load %arg4[%c0_66, %c0_67] : memref<1x64xf32, #tpu.memory_space<vmem>>, vector<1x64xf32>
    %cst_68 = arith.constant 9.99999974E-6 : f32
    %64 = vector.broadcast %cst_68 : f32 to vector<1x64xf32>
    %65 = arith.addf %62, %64 : vector<1x64xf32>
    %66 = math.rsqrt %65 : vector<1x64xf32>
    %67 = arith.mulf %63, %66 : vector<1x64xf32>
    %68 = vector.broadcast %67 : vector<1x64xf32> to vector<128x64xf32>
    %69 = arith.mulf %57, %68 : vector<128x64xf32>
    %c0_69 = arith.constant 0 : index
    %c0_70 = arith.constant 0 : index
    %70 = vector.load %arg5[%c0_69, %c0_70] : memref<1x64xf32, #tpu.memory_space<vmem>>, vector<1x64xf32>
    %71 = vector.broadcast %70 : vector<1x64xf32> to vector<128x64xf32>
    %72 = arith.addf %69, %71 : vector<128x64xf32>
    %cst_71 = arith.constant 0.000000e+00 : f32
    %73 = vector.broadcast %cst_71 : f32 to vector<128x64xf32>
    %74 = arith.cmpf oge, %72, %73 : vector<128x64xf32>
    %cst_72 = arith.constant 0.00999999977 : f32
    %75 = vector.broadcast %cst_72 : f32 to vector<128x64xf32>
    %76 = arith.mulf %75, %72 : vector<128x64xf32>
    %77 = arith.select %74, %72, %76 : vector<128x64xi1>, vector<128x64xf32>
    %78 = arith.truncf %77 : vector<128x64xf32> to vector<128x64xbf16>
    %79 = vector.shape_cast %78 : vector<128x64xbf16> to vector<2x8x8x64xbf16>
    %c0_73 = arith.constant 0 : index
    %c1_74 = arith.constant 1 : index
    %c2_75 = arith.constant 2 : index
    %c0_76 = arith.constant 0 : index
    %80 = vector.load %arg9[%c0_73, %c1_74, %c2_75, %c0_76] : memref<2x10x12x64xbf16, #tpu.memory_space<vmem>>, vector<2x8x8x64xbf16>
    tpu.vector_store %arg9[%c0_73, %c1_74, %c2_75, %c0_76], %79 {strides = array<i32>} : memref<2x10x12x64xbf16, #tpu.memory_space<vmem>>, vector<2x8x8x64xbf16>,
    %cst_77 = arith.constant 0.000000e+00 : f32
    %81 = vector.broadcast %cst_77 : f32 to vector<128x64xf32>
    %c0_78 = arith.constant 0 : index
    %c0_79 = arith.constant 0 : index
    %c1_80 = arith.constant 1 : index
    %c0_81 = arith.constant 0 : index
    %82 = vector.load %arg9[%c0_78, %c0_79, %c1_80, %c0_81] : memref<2x10x12x64xbf16, #tpu.memory_space<vmem>>, vector<2x8x8x64xbf16>
    %83 = vector.shape_cast %82 : vector<2x8x8x64xbf16> to vector<128x64xbf16>
    %c0_82 = arith.constant 0 : index
    %c0_83 = arith.constant 0 : index
    %84 = vector.load %arg3[%c0_82, %c0_83] : memref<576x64xbf16, #tpu.memory_space<vmem>>, vector<64x64xbf16>
    %cst_84 = arith.constant dense<0.000000e+00> : vector<128x64xf32>
    %85 = tpu.matmul %83, %84, %cst_84 {dimension_numbers = #tpu.dot_dimension_numbers<[1], [0], [0], [1], [0, 0, 1, 1], [], []>} : vector<128x64xbf16>, vector<64x64xbf16>, vector<128x64xf32> -> vector<128x64xf32>
    %86 = arith.addf %81, %85 : vector<128x64xf32>
    %c0_85 = arith.constant 0 : index
    %c0_86 = arith.constant 0 : index
    %c2_87 = arith.constant 2 : index
    %c0_88 = arith.constant 0 : index
    %87 = vector.load %arg9[%c0_85, %c0_86, %c2_87, %c0_88] : memref<2x10x12x64xbf16, #tpu.memory_space<vmem>>, vector<2x8x8x64xbf16>
    %88 = vector.shape_cast %87 : vector<2x8x8x64xbf16> to vector<128x64xbf16>
    %c64_89 = arith.constant 64 : index
    %c0_90 = arith.constant 0 : index
    %89 = vector.load %arg3[%c64_89, %c0_90] : memref<576x64xbf16, #tpu.memory_space<vmem>>, vector<64x64xbf16>
    %cst_91 = arith.constant dense<0.000000e+00> : vector<128x64xf32>
    %90 = tpu.matmul %88, %89, %cst_91 {dimension_numbers = #tpu.dot_dimension_numbers<[1], [0], [0], [1], [0, 0, 1, 1], [], []>} : vector<128x64xbf16>, vector<64x64xbf16>, vector<128x64xf32> -> vector<128x64xf32>
    %91 = arith.addf %86, %90 : vector<128x64xf32>
    %c0_92 = arith.constant 0 : index
    %c0_93 = arith.constant 0 : index
    %c3_94 = arith.constant 3 : index
    %c0_95 = arith.constant 0 : index
    %92 = vector.load %arg9[%c0_92, %c0_93, %c3_94, %c0_95] : memref<2x10x12x64xbf16, #tpu.memory_space<vmem>>, vector<2x8x8x64xbf16>
    %93 = vector.shape_cast %92 : vector<2x8x8x64xbf16> to vector<128x64xbf16>
    %c128_96 = arith.constant 128 : index
    %c0_97 = arith.constant 0 : index
    %94 = vector.load %arg3[%c128_96, %c0_97] : memref<576x64xbf16, #tpu.memory_space<vmem>>, vector<64x64xbf16>
    %cst_98 = arith.constant dense<0.000000e+00> : vector<128x64xf32>
    %95 = tpu.matmul %93, %94, %cst_98 {dimension_numbers = #tpu.dot_dimension_numbers<[1], [0], [0], [1], [0, 0, 1, 1], [], []>} : vector<128x64xbf16>, vector<64x64xbf16>, vector<128x64xf32> -> vector<128x64xf32>
    %96 = arith.addf %91, %95 : vector<128x64xf32>
    %c0_99 = arith.constant 0 : index
    %c1_100 = arith.constant 1 : index
    %c1_101 = arith.constant 1 : index
    %c0_102 = arith.constant 0 : index
    %97 = vector.load %arg9[%c0_99, %c1_100, %c1_101, %c0_102] : memref<2x10x12x64xbf16, #tpu.memory_space<vmem>>, vector<2x8x8x64xbf16>
    %98 = vector.shape_cast %97 : vector<2x8x8x64xbf16> to vector<128x64xbf16>
    %c192_103 = arith.constant 192 : index
    %c0_104 = arith.constant 0 : index
    %99 = vector.load %arg3[%c192_103, %c0_104] : memref<576x64xbf16, #tpu.memory_space<vmem>>, vector<64x64xbf16>
    %cst_105 = arith.constant dense<0.000000e+00> : vector<128x64xf32>
    %100 = tpu.matmul %98, %99, %cst_105 {dimension_numbers = #tpu.dot_dimension_numbers<[1], [0], [0], [1], [0, 0, 1, 1], [], []>} : vector<128x64xbf16>, vector<64x64xbf16>, vector<128x64xf32> -> vector<128x64xf32>
    %101 = arith.addf %96, %100 : vector<128x64xf32>
    %c0_106 = arith.constant 0 : index
    %c1_107 = arith.constant 1 : index
    %c2_108 = arith.constant 2 : index
    %c0_109 = arith.constant 0 : index
    %102 = vector.load %arg9[%c0_106, %c1_107, %c2_108, %c0_109] : memref<2x10x12x64xbf16, #tpu.memory_space<vmem>>, vector<2x8x8x64xbf16>
    %103 = vector.shape_cast %102 : vector<2x8x8x64xbf16> to vector<128x64xbf16>
    %c256_110 = arith.constant 256 : index
    %c0_111 = arith.constant 0 : index
    %104 = vector.load %arg3[%c256_110, %c0_111] : memref<576x64xbf16, #tpu.memory_space<vmem>>, vector<64x64xbf16>
    %cst_112 = arith.constant dense<0.000000e+00> : vector<128x64xf32>
    %105 = tpu.matmul %103, %104, %cst_112 {dimension_numbers = #tpu.dot_dimension_numbers<[1], [0], [0], [1], [0, 0, 1, 1], [], []>} : vector<128x64xbf16>, vector<64x64xbf16>, vector<128x64xf32> -> vector<128x64xf32>
    %106 = arith.addf %101, %105 : vector<128x64xf32>
    %c0_113 = arith.constant 0 : index
    %c1_114 = arith.constant 1 : index
    %c3_115 = arith.constant 3 : index
    %c0_116 = arith.constant 0 : index
    %107 = vector.load %arg9[%c0_113, %c1_114, %c3_115, %c0_116] : memref<2x10x12x64xbf16, #tpu.memory_space<vmem>>, vector<2x8x8x64xbf16>
    %108 = vector.shape_cast %107 : vector<2x8x8x64xbf16> to vector<128x64xbf16>
    %c320_117 = arith.constant 320 : index
    %c0_118 = arith.constant 0 : index
    %109 = vector.load %arg3[%c320_117, %c0_118] : memref<576x64xbf16, #tpu.memory_space<vmem>>, vector<64x64xbf16>
    %cst_119 = arith.constant dense<0.000000e+00> : vector<128x64xf32>
    %110 = tpu.matmul %108, %109, %cst_119 {dimension_numbers = #tpu.dot_dimension_numbers<[1], [0], [0], [1], [0, 0, 1, 1], [], []>} : vector<128x64xbf16>, vector<64x64xbf16>, vector<128x64xf32> -> vector<128x64xf32>
    %111 = arith.addf %106, %110 : vector<128x64xf32>
    %c0_120 = arith.constant 0 : index
    %c2_121 = arith.constant 2 : index
    %c1_122 = arith.constant 1 : index
    %c0_123 = arith.constant 0 : index
    %112 = vector.load %arg9[%c0_120, %c2_121, %c1_122, %c0_123] : memref<2x10x12x64xbf16, #tpu.memory_space<vmem>>, vector<2x8x8x64xbf16>
    %113 = vector.shape_cast %112 : vector<2x8x8x64xbf16> to vector<128x64xbf16>
    %c384_124 = arith.constant 384 : index
    %c0_125 = arith.constant 0 : index
    %114 = vector.load %arg3[%c384_124, %c0_125] : memref<576x64xbf16, #tpu.memory_space<vmem>>, vector<64x64xbf16>
    %cst_126 = arith.constant dense<0.000000e+00> : vector<128x64xf32>
    %115 = tpu.matmul %113, %114, %cst_126 {dimension_numbers = #tpu.dot_dimension_numbers<[1], [0], [0], [1], [0, 0, 1, 1], [], []>} : vector<128x64xbf16>, vector<64x64xbf16>, vector<128x64xf32> -> vector<128x64xf32>
    %116 = arith.addf %111, %115 : vector<128x64xf32>
    %c0_127 = arith.constant 0 : index
    %c2_128 = arith.constant 2 : index
    %c2_129 = arith.constant 2 : index
    %c0_130 = arith.constant 0 : index
    %117 = vector.load %arg9[%c0_127, %c2_128, %c2_129, %c0_130] : memref<2x10x12x64xbf16, #tpu.memory_space<vmem>>, vector<2x8x8x64xbf16>
    %118 = vector.shape_cast %117 : vector<2x8x8x64xbf16> to vector<128x64xbf16>
    %c448_131 = arith.constant 448 : index
    %c0_132 = arith.constant 0 : index
    %119 = vector.load %arg3[%c448_131, %c0_132] : memref<576x64xbf16, #tpu.memory_space<vmem>>, vector<64x64xbf16>
    %cst_133 = arith.constant dense<0.000000e+00> : vector<128x64xf32>
    %120 = tpu.matmul %118, %119, %cst_133 {dimension_numbers = #tpu.dot_dimension_numbers<[1], [0], [0], [1], [0, 0, 1, 1], [], []>} : vector<128x64xbf16>, vector<64x64xbf16>, vector<128x64xf32> -> vector<128x64xf32>
    %121 = arith.addf %116, %120 : vector<128x64xf32>
    %c0_134 = arith.constant 0 : index
    %c2_135 = arith.constant 2 : index
    %c3_136 = arith.constant 3 : index
    %c0_137 = arith.constant 0 : index
    %122 = vector.load %arg9[%c0_134, %c2_135, %c3_136, %c0_137] : memref<2x10x12x64xbf16, #tpu.memory_space<vmem>>, vector<2x8x8x64xbf16>
    %123 = vector.shape_cast %122 : vector<2x8x8x64xbf16> to vector<128x64xbf16>
    %c512_138 = arith.constant 512 : index
    %c0_139 = arith.constant 0 : index
    %124 = vector.load %arg3[%c512_138, %c0_139] : memref<576x64xbf16, #tpu.memory_space<vmem>>, vector<64x64xbf16>
    %cst_140 = arith.constant dense<0.000000e+00> : vector<128x64xf32>
    %125 = tpu.matmul %123, %124, %cst_140 {dimension_numbers = #tpu.dot_dimension_numbers<[1], [0], [0], [1], [0, 0, 1, 1], [], []>} : vector<128x64xbf16>, vector<64x64xbf16>, vector<128x64xf32> -> vector<128x64xf32>
    %126 = arith.addf %121, %125 : vector<128x64xf32>
    %cst_141 = arith.constant dense<0.000000e+00> : vector<64xf32>
    %127 = vector.multi_reduction <add>, %126, %cst_141 [0] : vector<128x64xf32> to vector<64xf32>
    %128 = vector.shape_cast %127 : vector<64xf32> to vector<1x64xf32>
    %cst_142 = arith.constant 1.280000e+02 : f32
    %129 = vector.broadcast %cst_142 : f32 to vector<1x64xf32>
    %130 = arith.divf %128, %129 : vector<1x64xf32>
    %131 = vector.broadcast %130 : vector<1x64xf32> to vector<128x64xf32>
    %132 = arith.subf %126, %131 : vector<128x64xf32>
    %133 = arith.mulf %132, %132 : vector<128x64xf32>
    %cst_143 = arith.constant dense<0.000000e+00> : vector<64xf32>
    %134 = vector.multi_reduction <add>, %133, %cst_143 [0] : vector<128x64xf32> to vector<64xf32>
    %135 = vector.shape_cast %134 : vector<64xf32> to vector<1x64xf32>
    %cst_144 = arith.constant 1.280000e+02 : f32
    %136 = vector.broadcast %cst_144 : f32 to vector<1x64xf32>
    %137 = arith.divf %135, %136 : vector<1x64xf32>
    %c0_145 = arith.constant 0 : index
    %c0_146 = arith.constant 0 : index
    %138 = vector.load %arg6[%c0_145, %c0_146] : memref<1x64xf32, #tpu.memory_space<vmem>>, vector<1x64xf32>
    %cst_147 = arith.constant 9.99999974E-6 : f32
    %139 = vector.broadcast %cst_147 : f32 to vector<1x64xf32>
    %140 = arith.addf %137, %139 : vector<1x64xf32>
    %141 = math.rsqrt %140 : vector<1x64xf32>
    %142 = arith.mulf %138, %141 : vector<1x64xf32>
    %143 = vector.broadcast %142 : vector<1x64xf32> to vector<128x64xf32>
    %144 = arith.mulf %132, %143 : vector<128x64xf32>
    %c0_148 = arith.constant 0 : index
    %c0_149 = arith.constant 0 : index
    %145 = vector.load %arg7[%c0_148, %c0_149] : memref<1x64xf32, #tpu.memory_space<vmem>>, vector<1x64xf32>
    %146 = vector.broadcast %145 : vector<1x64xf32> to vector<128x64xf32>
    %147 = arith.addf %144, %146 : vector<128x64xf32>
    %c0_150 = arith.constant 0 : index
    %c0_151 = arith.constant 0 : index
    %148 = vector.load %arg1[%c0_150, %c0_151] : memref<128x64xf32, #tpu.memory_space<vmem>>, vector<128x64xf32>
    %149 = arith.addf %147, %148 : vector<128x64xf32>
    %cst_152 = arith.constant 0.000000e+00 : f32
    %150 = vector.broadcast %cst_152 : f32 to vector<128x64xf32>
    %151 = arith.cmpf oge, %149, %150 : vector<128x64xf32>
    %cst_153 = arith.constant 0.00999999977 : f32
    %152 = vector.broadcast %cst_153 : f32 to vector<128x64xf32>
    %153 = arith.mulf %152, %149 : vector<128x64xf32>
    %154 = arith.select %151, %149, %153 : vector<128x64xi1>, vector<128x64xf32>
    %c0_154 = arith.constant 0 : index
    %c0_155 = arith.constant 0 : index
    %155 = vector.load %arg8[%c0_154, %c0_155] : memref<128x64xf32, #tpu.memory_space<vmem>>, vector<128x64xf32>
    tpu.vector_store %arg8[%c0_154, %c0_155], %154 {strides = array<i32>} : memref<128x64xf32, #tpu.memory_space<vmem>>, vector<128x64xf32>,
    return
  }
  func.func @transform_0(%arg0: i32) -> (i32, i32) {
    %c0_i32 = arith.constant 0 : i32
    %c0_i32_0 = arith.constant 0 : i32
    %c0_i32_1 = arith.constant 0 : i32
    return %c0_i32, %c0_i32_0 : i32, i32
  }
  func.func @transform_1(%arg0: i32) -> (i32, i32) {
    %c0_i32 = arith.constant 0 : i32
    %c0_i32_0 = arith.constant 0 : i32
    %c0_i32_1 = arith.constant 0 : i32
    return %c0_i32, %c0_i32_0 : i32, i32
  }
  func.func @transform_2(%arg0: i32) -> (i32, i32) {
    %c0_i32 = arith.constant 0 : i32
    %c0_i32_0 = arith.constant 0 : i32
    %c0_i32_1 = arith.constant 0 : i32
    return %c0_i32, %c0_i32_0 : i32, i32
  }
  func.func @transform_3(%arg0: i32) -> (i32, i32) {
    %c0_i32 = arith.constant 0 : i32
    %c0_i32_0 = arith.constant 0 : i32
    %c0_i32_1 = arith.constant 0 : i32
    return %c0_i32, %c0_i32_0 : i32, i32
  }
  func.func @transform_4(%arg0: i32) -> (i32, i32) {
    %c0_i32 = arith.constant 0 : i32
    %c0_i32_0 = arith.constant 0 : i32
    %c0_i32_1 = arith.constant 0 : i32
    return %c0_i32, %c0_i32_0 : i32, i32
  }
  func.func @transform_5(%arg0: i32) -> (i32, i32) {
    %c0_i32 = arith.constant 0 : i32
    %c0_i32_0 = arith.constant 0 : i32
    %c0_i32_1 = arith.constant 0 : i32
    return %c0_i32, %c0_i32_0 : i32, i32
  }
  func.func @transform_6(%arg0: i32) -> (i32, i32) {
    %c0_i32 = arith.constant 0 : i32
    %c0_i32_0 = arith.constant 0 : i32
    %c0_i32_1 = arith.constant 0 : i32
    return %c0_i32, %c0_i32_0 : i32, i32
  }
  func.func @transform_7(%arg0: i32) -> (i32, i32) {
    %c0_i32 = arith.constant 0 : i32
    %c0_i32_0 = arith.constant 0 : i32
    %c0_i32_1 = arith.constant 0 : i32
    return %c0_i32, %c0_i32_0 : i32, i32
  }
}

</mosaic_0001>

<llo_original>
// kernel: resblock_forward.1
$region0: #{resblock_forward.1}
  #allocation0 [shape = 'u32[]', space=smem, size = 0x4, offset = 0x4, fixed_abs, tag = 'smem constant byte address 0x4 - core index']
  #allocation1 [shape = 'u32[144,128]{1,0:T(1,128)}', space=vmem, size = 0x12000, scoped, tag = 'internal scratch']
  #allocation2 [shape = 'bf16[2,10,12,64]{3,2,1,0:T(8,128)(2,1)}', space=vmem, size = 0x14000, scoped, tag = 'scratch operand']
  %s0 = inlined_call_operand.vmem [shape: f32[128,64], index: 0, kind: input, shape index: {}]
  %s1 = inlined_call_operand.vmem [shape: bf16[576,64], index: 1, kind: input, shape index: {}]
  %s2 = inlined_call_operand.vmem [shape: bf16[576,64], index: 2, kind: input, shape index: {}]
  %s3 = inlined_call_operand.vmem [shape: f32[1,64], index: 3, kind: input, shape index: {}]
  %s4 = inlined_call_operand.vmem [shape: f32[1,64], index: 4, kind: input, shape index: {}]
  %s5 = inlined_call_operand.vmem [shape: f32[1,64], index: 5, kind: input, shape index: {}]
  %s6 = inlined_call_operand.vmem [shape: f32[1,64], index: 6, kind: input, shape index: {}]
  %s7 = inlined_call_operand.hbm [shape: f32[128,64], index: 7, kind: output, shape index: {}]
  %s8 = sld [smem:[#allocation0]]
  $region38: #{resblock_forward.1} parent=0
    _
  %s10 = ssub.s32 1, %s8
  %s11 = scalar_select 0, %s10, %s8
  $region1: #{resblock_forward.1} parent=0
    #allocation3 [shape = 'u8[65536]{0}', space=vmem, size = 0x10000, scoped, tag = 'output window, operand 0, single buffered']
    #allocation4 [shape = 's32[1]{0}', space=sflag, size = 0x4, scoped, tag = 'scoped memory for resblock_forward.1']
    %12 = vsyncpa [#allocation4], 0
    // Predicated region
    $region2: #{resblock_forward.1} parent=1 // pred_check
      _
    $region3: #{resblock_forward.1} parent=1 // pred_check_branch
      %14 = sbr.rel (0) target = $region5
    $region4: #{resblock_forward.1} parent=1 // pred_region
      _
    $region5: #{resblock_forward.1} parent=1 // pred_fallthru
      _
    // Predicated region
    $region6: #{resblock_forward.1} parent=1 // pred_check
      _
    $region7: #{resblock_forward.1} parent=1 // pred_check_branch
      %16 = sbr.rel (0) target = $region9
    $region8: #{resblock_forward.1} parent=1 // pred_region
      _
    $region9: #{resblock_forward.1} parent=1 // pred_fallthru
      _
    // Predicated region
    $region10: #{resblock_forward.1} parent=1 // pred_check
      _
    $region11: #{resblock_forward.1} parent=1 // pred_check_branch
      %18 = sbr.rel (0) target = $region13
    $region12: #{resblock_forward.1} parent=1 // pred_region
      _
    $region13: #{resblock_forward.1} parent=1 // pred_fallthru
      _
    // Predicated region
    $region14: #{resblock_forward.1} parent=1 // pred_check
      _
    $region15: #{resblock_forward.1} parent=1 // pred_check_branch
      %20 = sbr.rel (0) target = $region17
    $region16: #{resblock_forward.1} parent=1 // pred_region
      _
    $region17: #{resblock_forward.1} parent=1 // pred_fallthru
      _
    // Predicated region
    $region18: #{resblock_forward.1} parent=1 // pred_check
      _
    $region19: #{resblock_forward.1} parent=1 // pred_check_branch
      %22 = sbr.rel (0) target = $region21
    $region20: #{resblock_forward.1} parent=1 // pred_region
      _
    $region21: #{resblock_forward.1} parent=1 // pred_fallthru
      _
    // Predicated region
    $region22: #{resblock_forward.1} parent=1 // pred_check
      _
    $region23: #{resblock_forward.1} parent=1 // pred_check_branch
      %24 = sbr.rel (0) target = $region25
    $region24: #{resblock_forward.1} parent=1 // pred_region
      _
    $region25: #{resblock_forward.1} parent=1 // pred_fallthru
      _
    // Predicated region
    $region26: #{resblock_forward.1} parent=1 // pred_check
      _
    $region27: #{resblock_forward.1} parent=1 // pred_check_branch
      %26 = sbr.rel (0) target = $region29
    $region28: #{resblock_forward.1} parent=1 // pred_region
      _
    $region29: #{resblock_forward.1} parent=1 // pred_fallthru
      _
    %vm28 = vcmask 519168
    %29 = vst.msk [vmem:[#allocation2] sm:$0xf] %vm28, 0
    %vm30 = vcmask 517120
    %31 = vst.msk [vmem:[#allocation2 + $0x4] sm:$0x3] %vm30, 0
    %32 = vst.msk [vmem:[#allocation2 + $0x8] sm:$0xf] %vm28, 0
    %33 = vst.msk [vmem:[#allocation2 + $0xc] sm:$0x3] %vm30, 0
    %34 = vst.msk [vmem:[#allocation2 + $0x10] sm:$0xf] %vm28, 0
    %35 = vst.msk [vmem:[#allocation2 + $0x14] sm:$0x3] %vm30, 0
    %36 = vst.msk [vmem:[#allocation2 + $0x18] sm:$0xf] %vm28, 0
    %37 = vst.msk [vmem:[#allocation2 + $0x1c] sm:$0x3] %vm30, 0
    %38 = vst.msk [vmem:[#allocation2 + $0x20] sm:$0xf] %vm28, 0
    %39 = vst.msk [vmem:[#allocation2 + $0x24] sm:$0x3] %vm30, 0
    %40 = vst.msk [vmem:[#allocation2 + $0x28] sm:$0xf] %vm28, 0
    %41 = vst.msk [vmem:[#allocation2 + $0x2c] sm:$0x3] %vm30, 0
    %42 = vst.msk [vmem:[#allocation2 + $0x30] sm:$0xf] %vm28, 0
    %43 = vst.msk [vmem:[#allocation2 + $0x34] sm:$0x3] %vm30, 0
    %44 = vst.msk [vmem:[#allocation2 + $0x38] sm:$0xf] %vm28, 0
    %45 = vst.msk [vmem:[#allocation2 + $0x3c] sm:$0x3] %vm30, 0
    %46 = vst.msk [vmem:[#allocation2 + $0x40] sm:$0xf] %vm28, 0
    %47 = vst.msk [vmem:[#allocation2 + $0x44] sm:$0x3] %vm30, 0
    %48 = vst.msk [vmem:[#allocation2 + $0x48] sm:$0xf] %vm28, 0
    %49 = vst.msk [vmem:[#allocation2 + $0x4c] sm:$0x3] %vm30, 0
    %50 = vst.msk [vmem:[#allocation2 + $0x50] sm:$0xf] %vm28, 0
    %51 = vst.msk [vmem:[#allocation2 + $0x54] sm:$0x3] %vm30, 0
    %52 = vst.msk [vmem:[#allocation2 + $0x58] sm:$0xf] %vm28, 0
    %53 = vst.msk [vmem:[#allocation2 + $0x5c] sm:$0x3] %vm30, 0
    %54 = vst.msk [vmem:[#allocation2 + $0x60] sm:$0xf] %vm28, 0
    %55 = vst.msk [vmem:[#allocation2 + $0x64] sm:$0x3] %vm30, 0
    %56 = vst.msk [vmem:[#allocation2 + $0x68] sm:$0xf] %vm28, 0
    %57 = vst.msk [vmem:[#allocation2 + $0x6c] sm:$0x3] %vm30, 0
    %58 = vst.msk [vmem:[#allocation2 + $0x70] sm:$0xf] %vm28, 0
    %59 = vst.msk [vmem:[#allocation2 + $0x74] sm:$0x3] %vm30, 0
    %60 = vst.msk [vmem:[#allocation2 + $0x78] sm:$0xf] %vm28, 0
    %61 = vst.msk [vmem:[#allocation2 + $0x7c] sm:$0x3] %vm30, 0
    %62 = vst.msk [vmem:[#allocation2 + $0x80] sm:$0xf] %vm28, 0
    %63 = vst.msk [vmem:[#allocation2 + $0x84] sm:$0x3] %vm30, 0
    %64 = vst.msk [vmem:[#allocation2 + $0x88] sm:$0xf] %vm28, 0
    %65 = vst.msk [vmem:[#allocation2 + $0x8c] sm:$0x3] %vm30, 0
    %66 = vst.msk [vmem:[#allocation2 + $0x90] sm:$0xf] %vm28, 0
    %67 = vst.msk [vmem:[#allocation2 + $0x94] sm:$0x3] %vm30, 0
    %68 = vst.msk [vmem:[#allocation2 + $0x98] sm:$0xf] %vm28, 0
    %69 = vst.msk [vmem:[#allocation2 + $0x9c] sm:$0x3] %vm30, 0
    %v70 = vld [vmem:[%s0] sm:$0xff]
    %v71 = vld [vmem:[%s0 + $0x8] sm:$0xff]
    %v72 = vld [vmem:[%s0 + $0x10] sm:$0xff]
    %v73 = vld [vmem:[%s0 + $0x18] sm:$0xff]
    %v74 = vld [vmem:[%s0 + $0x20] sm:$0xff]
    %v75 = vld [vmem:[%s0 + $0x28] sm:$0xff]
    %v76 = vld [vmem:[%s0 + $0x30] sm:$0xff]
    %v77 = vld [vmem:[%s0 + $0x38] sm:$0xff]
    %v78 = vld [vmem:[%s0 + $0x40] sm:$0xff]
    %v79 = vld [vmem:[%s0 + $0x48] sm:$0xff]
    %v80 = vld [vmem:[%s0 + $0x50] sm:$0xff]
    %v81 = vld [vmem:[%s0 + $0x58] sm:$0xff]
    %v82 = vld [vmem:[%s0 + $0x60] sm:$0xff]
    %v83 = vld [vmem:[%s0 + $0x68] sm:$0xff]
    %v84 = vld [vmem:[%s0 + $0x70] sm:$0xff]
    %v85 = vld [vmem:[%s0 + $0x78] sm:$0xff]
    %v86 = vpack.c.bf16 %v71, %v70
    %v87 = vpack.c.bf16 %v73, %v72
    %v88 = vpack.c.bf16 %v75, %v74
    %v89 = vpack.c.bf16 %v77, %v76
    %v90 = vpack.c.bf16 %v79, %v78
    %v91 = vpack.c.bf16 %v81, %v80
    %v92 = vpack.c.bf16 %v83, %v82
    %v93 = vpack.c.bf16 %v85, %v84
    %v102 = vunpack.c.l.b16 %v86
    %v103 = vunpack.c.h.b16 %v86
    %v104 = vunpack.c.l.b16 %v87
    %v105 = vunpack.c.h.b16 %v87
    %v106 = vunpack.c.l.b16 %v88
    %v107 = vunpack.c.h.b16 %v88
    %v108 = vunpack.c.l.b16 %v89
    %v109 = vunpack.c.h.b16 %v89
    %v110 = vunpack.c.l.b16 %v90
    %v111 = vunpack.c.h.b16 %v90
    %v112 = vunpack.c.l.b16 %v91
    %v113 = vunpack.c.h.b16 %v91
    %v114 = vunpack.c.l.b16 %v92
    %v115 = vunpack.c.h.b16 %v92
    %v116 = vunpack.c.l.b16 %v93
    %v117 = vunpack.c.h.b16 %v93
    %v118 = vpack.c.b16 %v102, %v102
    %v119 = vpack.c.b16 %v103, %v103
    %v120 = vpack.c.b16 %v104, %v104
    %v121 = vpack.c.b16 %v105, %v105
    %v122 = vpack.c.b16 %v106, %v106
    %v123 = vpack.c.b16 %v107, %v107
    %v124 = vpack.c.b16 %v108, %v108
    %v125 = vpack.c.b16 %v109, %v109
    %v126 = vpack.c.b16 %v110, %v110
    %v127 = vpack.c.b16 %v111, %v111
    %v128 = vpack.c.b16 %v112, %v112
    %v129 = vpack.c.b16 %v113, %v113
    %v130 = vpack.c.b16 %v114, %v114
    %v131 = vpack.c.b16 %v115, %v115
    %v132 = vpack.c.b16 %v116, %v116
    %v133 = vpack.c.b16 %v117, %v117
    %v134 = vrot.slane %v118, 7
    %v135 = vrot.slane %v134, 4
    %v136 = vrot.slane %v119, 7
    %v137 = vrot.slane %v136, 4
    %v138 = vrot.slane %v120, 7
    %v139 = vrot.slane %v138, 4
    %v140 = vrot.slane %v121, 7
    %v141 = vrot.slane %v140, 4
    %v142 = vrot.slane %v122, 7
    %v143 = vrot.slane %v142, 4
    %v144 = vrot.slane %v123, 7
    %v145 = vrot.slane %v144, 4
    %v146 = vrot.slane %v124, 7
    %v147 = vrot.slane %v146, 4
    %v148 = vrot.slane %v125, 7
    %v149 = vrot.slane %v148, 4
    %v150 = vrot.slane %v126, 7
    %v151 = vrot.slane %v150, 4
    %v152 = vrot.slane %v127, 7
    %v153 = vrot.slane %v152, 4
    %v154 = vrot.slane %v128, 7
    %v155 = vrot.slane %v154, 4
    %v156 = vrot.slane %v129, 7
    %v157 = vrot.slane %v156, 4
    %v158 = vrot.slane %v130, 7
    %v159 = vrot.slane %v158, 4
    %v160 = vrot.slane %v131, 7
    %v161 = vrot.slane %v160, 4
    %v162 = vrot.slane %v132, 7
    %v163 = vrot.slane %v162, 4
    %v164 = vrot.slane %v133, 7
    %v165 = vrot.slane %v164, 4
    %s198 = scalar_lea.vmem [#allocation2], 8
    %vm199 = vcmask 519169
    %200 = vst.msk [vmem:[%s198] sm:$0xe] %vm199, %v134
    %vm201 = vcmask 516096
    %202 = vst.msk [vmem:[%s198 + $0x4] sm:$0x1] %vm201, %v135
    %203 = vst.msk [vmem:[%s198 + $0x8] sm:$0xe] %vm199, %v136
    %204 = vst.msk [vmem:[%s198 + $0xc] sm:$0x1] %vm201, %v137
    %205 = vst.msk [vmem:[%s198 + $0x10] sm:$0xe] %vm199, %v138
    %206 = vst.msk [vmem:[%s198 + $0x14] sm:$0x1] %vm201, %v139
    %207 = vst.msk [vmem:[%s198 + $0x18] sm:$0xe] %vm199, %v140
    %208 = vst.msk [vmem:[%s198 + $0x1c] sm:$0x1] %vm201, %v141
    %209 = vst.msk [vmem:[%s198 + $0x20] sm:$0xe] %vm199, %v142
    %210 = vst.msk [vmem:[%s198 + $0x24] sm:$0x1] %vm201, %v143
    %211 = vst.msk [vmem:[%s198 + $0x28] sm:$0xe] %vm199, %v144
    %212 = vst.msk [vmem:[%s198 + $0x2c] sm:$0x1] %vm201, %v145
    %213 = vst.msk [vmem:[%s198 + $0x30] sm:$0xe] %vm199, %v146
    %214 = vst.msk [vmem:[%s198 + $0x34] sm:$0x1] %vm201, %v147
    %215 = vst.msk [vmem:[%s198 + $0x38] sm:$0xe] %vm199, %v148
    %216 = vst.msk [vmem:[%s198 + $0x3c] sm:$0x1] %vm201, %v149
    %217 = vst.msk [vmem:[%s198 + $0x50] sm:$0xe] %vm199, %v150
    %218 = vst.msk [vmem:[%s198 + $0x54] sm:$0x1] %vm201, %v151
    %219 = vst.msk [vmem:[%s198 + $0x58] sm:$0xe] %vm199, %v152
    %220 = vst.msk [vmem:[%s198 + $0x5c] sm:$0x1] %vm201, %v153
    %221 = vst.msk [vmem:[%s198 + $0x60] sm:$0xe] %vm199, %v154
    %222 = vst.msk [vmem:[%s198 + $0x64] sm:$0x1] %vm201, %v155
    %223 = vst.msk [vmem:[%s198 + $0x68] sm:$0xe] %vm199, %v156
    %224 = vst.msk [vmem:[%s198 + $0x6c] sm:$0x1] %vm201, %v157
    %225 = vst.msk [vmem:[%s198 + $0x70] sm:$0xe] %vm199, %v158
    %226 = vst.msk [vmem:[%s198 + $0x74] sm:$0x1] %vm201, %v159
    %227 = vst.msk [vmem:[%s198 + $0x78] sm:$0xe] %vm199, %v160
    %228 = vst.msk [vmem:[%s198 + $0x7c] sm:$0x1] %vm201, %v161
    %229 = vst.msk [vmem:[%s198 + $0x80] sm:$0xe] %vm199, %v162
    %230 = vst.msk [vmem:[%s198 + $0x84] sm:$0x1] %vm201, %v163
    %231 = vst.msk [vmem:[%s198 + $0x88] sm:$0xe] %vm199, %v164
    %232 = vst.msk [vmem:[%s198 + $0x8c] sm:$0x1] %vm201, %v165
    %v233 = vld [vmem:[#allocation2] sm:$0xf]
    %v234 = vld [vmem:[#allocation2 + $0x4] sm:$0x1]
    %v235 = vld [vmem:[#allocation2 + $0x8] sm:$0xf]
    %v236 = vld [vmem:[#allocation2 + $0xc] sm:$0x1]
    %v237 = vld [vmem:[#allocation2 + $0x10] sm:$0xf]
    %v238 = vld [vmem:[#allocation2 + $0x14] sm:$0x1]
    %v239 = vld [vmem:[#allocation2 + $0x18] sm:$0xf]
    %v240 = vld [vmem:[#allocation2 + $0x1c] sm:$0x1]
    %v241 = vld [vmem:[#allocation2 + $0x20] sm:$0xf]
    %v242 = vld [vmem:[#allocation2 + $0x24] sm:$0x1]
    %v243 = vld [vmem:[#allocation2 + $0x28] sm:$0xf]
    %v244 = vld [vmem:[#allocation2 + $0x2c] sm:$0x1]
    %v245 = vld [vmem:[#allocation2 + $0x30] sm:$0xf]
    %v246 = vld [vmem:[#allocation2 + $0x34] sm:$0x1]
    %v247 = vld [vmem:[#allocation2 + $0x38] sm:$0xf]
    %v248 = vld [vmem:[#allocation2 + $0x3c] sm:$0x1]
    %v249 = vld [vmem:[#allocation2 + $0x50] sm:$0xf]
    %v250 = vld [vmem:[#allocation2 + $0x54] sm:$0x1]
    %v251 = vld [vmem:[#allocation2 + $0x58] sm:$0xf]
    %v252 = vld [vmem:[#allocation2 + $0x5c] sm:$0x1]
    %v253 = vld [vmem:[#allocation2 + $0x60] sm:$0xf]
    %v254 = vld [vmem:[#allocation2 + $0x64] sm:$0x1]
    %v255 = vld [vmem:[#allocation2 + $0x68] sm:$0xf]
    %v256 = vld [vmem:[#allocation2 + $0x6c] sm:$0x1]
    %v257 = vld [vmem:[#allocation2 + $0x70] sm:$0xf]
    %v258 = vld [vmem:[#allocation2 + $0x74] sm:$0x1]
    %v259 = vld [vmem:[#allocation2 + $0x78] sm:$0xf]
    %v260 = vld [vmem:[#allocation2 + $0x7c] sm:$0x1]
    %v261 = vld [vmem:[#allocation2 + $0x80] sm:$0xf]
    %v262 = vld [vmem:[#allocation2 + $0x84] sm:$0x1]
    %v263 = vld [vmem:[#allocation2 + $0x88] sm:$0xf]
    %v264 = vld [vmem:[#allocation2 + $0x8c] sm:$0x1]
    %vm265 = vsmask.f32 3328
    %vm266 = vsmask.f32 7440
    %vm267 = vmor %vm265, %vm266
    %v269 = vshrl.u32 %v233, 16
    %v271 = vrot.slane %v269, 4
    %v272 = vshll.u32 %v233, 16
    %v274 = vrot.slane %v272, 5
    %v275 = vor.u32 %v271, %v274
    %v276 = vrot.slane %v275, 4
    %v278 = vshll.u32 %v234, 16
    %v280 = vrot.slane %v278, 5
    %v281 = vsel %vm267, %v276, %v280
    %v283 = vshrl.u32 %v235, 16
    %v285 = vrot.slane %v283, 4
    %v286 = vshll.u32 %v235, 16
    %v288 = vrot.slane %v286, 5
    %v289 = vor.u32 %v285, %v288
    %v290 = vrot.slane %v289, 4
    %v292 = vshll.u32 %v236, 16
    %v294 = vrot.slane %v292, 5
    %v295 = vsel %vm267, %v290, %v294
    %v297 = vshrl.u32 %v237, 16
    %v299 = vrot.slane %v297, 4
    %v300 = vshll.u32 %v237, 16
    %v302 = vrot.slane %v300, 5
    %v303 = vor.u32 %v299, %v302
    %v304 = vrot.slane %v303, 4
    %v306 = vshll.u32 %v238, 16
    %v308 = vrot.slane %v306, 5
    %v309 = vsel %vm267, %v304, %v308
    %v311 = vshrl.u32 %v239, 16
    %v313 = vrot.slane %v311, 4
    %v314 = vshll.u32 %v239, 16
    %v316 = vrot.slane %v314, 5
    %v317 = vor.u32 %v313, %v316
    %v318 = vrot.slane %v317, 4
    %v320 = vshll.u32 %v240, 16
    %v322 = vrot.slane %v320, 5
    %v323 = vsel %vm267, %v318, %v322
    %v325 = vshrl.u32 %v241, 16
    %v327 = vrot.slane %v325, 4
    %v328 = vshll.u32 %v241, 16
    %v330 = vrot.slane %v328, 5
    %v331 = vor.u32 %v327, %v330
    %v332 = vrot.slane %v331, 4
    %v334 = vshll.u32 %v242, 16
    %v336 = vrot.slane %v334, 5
    %v337 = vsel %vm267, %v332, %v336
    %v339 = vshrl.u32 %v243, 16
    %v341 = vrot.slane %v339, 4
    %v342 = vshll.u32 %v243, 16
    %v344 = vrot.slane %v342, 5
    %v345 = vor.u32 %v341, %v344
    %v346 = vrot.slane %v345, 4
    %v348 = vshll.u32 %v244, 16
    %v350 = vrot.slane %v348, 5
    %v351 = vsel %vm267, %v346, %v350
    %v353 = vshrl.u32 %v245, 16
    %v355 = vrot.slane %v353, 4
    %v356 = vshll.u32 %v245, 16
    %v358 = vrot.slane %v356, 5
    %v359 = vor.u32 %v355, %v358
    %v360 = vrot.slane %v359, 4
    %v362 = vshll.u32 %v246, 16
    %v364 = vrot.slane %v362, 5
    %v365 = vsel %vm267, %v360, %v364
    %v367 = vshrl.u32 %v247, 16
    %v369 = vrot.slane %v367, 4
    %v370 = vshll.u32 %v247, 16
    %v372 = vrot.slane %v370, 5
    %v373 = vor.u32 %v369, %v372
    %v374 = vrot.slane %v373, 4
    %v376 = vshll.u32 %v248, 16
    %v378 = vrot.slane %v376, 5
    %v379 = vsel %vm267, %v374, %v378
    %v381 = vshrl.u32 %v249, 16
    %v383 = vrot.slane %v381, 4
    %v384 = vshll.u32 %v249, 16
    %v386 = vrot.slane %v384, 5
    %v387 = vor.u32 %v383, %v386
    %v388 = vrot.slane %v387, 4
    %v390 = vshll.u32 %v250, 16
    %v392 = vrot.slane %v390, 5
    %v393 = vsel %vm267, %v388, %v392
    %v395 = vshrl.u32 %v251, 16
    %v397 = vrot.slane %v395, 4
    %v398 = vshll.u32 %v251, 16
    %v400 = vrot.slane %v398, 5
    %v401 = vor.u32 %v397, %v400
    %v402 = vrot.slane %v401, 4
    %v404 = vshll.u32 %v252, 16
    %v406 = vrot.slane %v404, 5
    %v407 = vsel %vm267, %v402, %v406
    %v409 = vshrl.u32 %v253, 16
    %v411 = vrot.slane %v409, 4
    %v412 = vshll.u32 %v253, 16
    %v414 = vrot.slane %v412, 5
    %v415 = vor.u32 %v411, %v414
    %v416 = vrot.slane %v415, 4
    %v418 = vshll.u32 %v254, 16
    %v420 = vrot.slane %v418, 5
    %v421 = vsel %vm267, %v416, %v420
    %v423 = vshrl.u32 %v255, 16
    %v425 = vrot.slane %v423, 4
    %v426 = vshll.u32 %v255, 16
    %v428 = vrot.slane %v426, 5
    %v429 = vor.u32 %v425, %v428
    %v430 = vrot.slane %v429, 4
    %v432 = vshll.u32 %v256, 16
    %v434 = vrot.slane %v432, 5
    %v435 = vsel %vm267, %v430, %v434
    %v437 = vshrl.u32 %v257, 16
    %v439 = vrot.slane %v437, 4
    %v440 = vshll.u32 %v257, 16
    %v442 = vrot.slane %v440, 5
    %v443 = vor.u32 %v439, %v442
    %v444 = vrot.slane %v443, 4
    %v446 = vshll.u32 %v258, 16
    %v448 = vrot.slane %v446, 5
    %v449 = vsel %vm267, %v444, %v448
    %v451 = vshrl.u32 %v259, 16
    %v453 = vrot.slane %v451, 4
    %v454 = vshll.u32 %v259, 16
    %v456 = vrot.slane %v454, 5
    %v457 = vor.u32 %v453, %v456
    %v458 = vrot.slane %v457, 4
    %v460 = vshll.u32 %v260, 16
    %v462 = vrot.slane %v460, 5
    %v463 = vsel %vm267, %v458, %v462
    %v465 = vshrl.u32 %v261, 16
    %v467 = vrot.slane %v465, 4
    %v468 = vshll.u32 %v261, 16
    %v470 = vrot.slane %v468, 5
    %v471 = vor.u32 %v467, %v470
    %v472 = vrot.slane %v471, 4
    %v474 = vshll.u32 %v262, 16
    %v476 = vrot.slane %v474, 5
    %v477 = vsel %vm267, %v472, %v476
    %v479 = vshrl.u32 %v263, 16
    %v481 = vrot.slane %v479, 4
    %v482 = vshll.u32 %v263, 16
    %v484 = vrot.slane %v482, 5
    %v485 = vor.u32 %v481, %v484
    %v486 = vrot.slane %v485, 4
    %v488 = vshll.u32 %v264, 16
    %v490 = vrot.slane %v488, 5
    %v491 = vsel %vm267, %v486, %v490
    %v492 = vld [vmem:[%s1] sm:$0xf]
    %v493 = vld [vmem:[%s1 + $0x4] sm:$0xf]
    %v494 = vld [vmem:[%s1 + $0x8] sm:$0xf]
    %v495 = vld [vmem:[%s1 + $0xc] sm:$0xf]
    %v496 = vld [vmem:[%s1 + $0x10] sm:$0xf]
    %v497 = vld [vmem:[%s1 + $0x14] sm:$0xf]
    %v498 = vld [vmem:[%s1 + $0x18] sm:$0xf]
    %v499 = vld [vmem:[%s1 + $0x1c] sm:$0xf]
    %v500 = vld [vmem:[#allocation2] sm:$0xe]
    %v501 = vld [vmem:[#allocation2 + $0x8] sm:$0xe]
    %v502 = vld [vmem:[#allocation2 + $0x10] sm:$0xe]
    %v503 = vld [vmem:[#allocation2 + $0x18] sm:$0xe]
    %v504 = vld [vmem:[#allocation2 + $0x20] sm:$0xe]
    %v505 = vld [vmem:[#allocation2 + $0x28] sm:$0xe]
    %v506 = vld [vmem:[#allocation2 + $0x30] sm:$0xe]
    %v507 = vld [vmem:[#allocation2 + $0x38] sm:$0xe]
    %v508 = vld [vmem:[#allocation2 + $0x50] sm:$0xe]
    %v509 = vld [vmem:[#allocation2 + $0x58] sm:$0xe]
    %v510 = vld [vmem:[#allocation2 + $0x60] sm:$0xe]
    %v511 = vld [vmem:[#allocation2 + $0x68] sm:$0xe]
    %v512 = vld [vmem:[#allocation2 + $0x70] sm:$0xe]
    %v513 = vld [vmem:[#allocation2 + $0x78] sm:$0xe]
    %v514 = vld [vmem:[#allocation2 + $0x80] sm:$0xe]
    %v515 = vld [vmem:[#allocation2 + $0x88] sm:$0xe]
    %vm548 = vcmask 1042432
    %vm549 = vcmask 1046532
    %vm550 = vmor %vm548, %vm549
    %v551 = vrot.slane %v500, 5
    %v552 = vrot.slane %v551, 4
    %v553 = vrot.slane %v234, 5
    %v554 = vsel %vm550, %v552, %v553
    %v555 = vrot.slane %v501, 5
    %v556 = vrot.slane %v555, 4
    %v557 = vrot.slane %v236, 5
    %v558 = vsel %vm550, %v556, %v557
    %v559 = vrot.slane %v502, 5
    %v560 = vrot.slane %v559, 4
    %v561 = vrot.slane %v238, 5
    %v562 = vsel %vm550, %v560, %v561
    %v563 = vrot.slane %v503, 5
    %v564 = vrot.slane %v563, 4
    %v565 = vrot.slane %v240, 5
    %v566 = vsel %vm550, %v564, %v565
    %v567 = vrot.slane %v504, 5
    %v568 = vrot.slane %v567, 4
    %v569 = vrot.slane %v242, 5
    %v570 = vsel %vm550, %v568, %v569
    %v571 = vrot.slane %v505, 5
    %v572 = vrot.slane %v571, 4
    %v573 = vrot.slane %v244, 5
    %v574 = vsel %vm550, %v572, %v573
    %v575 = vrot.slane %v506, 5
    %v576 = vrot.slane %v575, 4
    %v577 = vrot.slane %v246, 5
    %v578 = vsel %vm550, %v576, %v577
    %v579 = vrot.slane %v507, 5
    %v580 = vrot.slane %v579, 4
    %v581 = vrot.slane %v248, 5
    %v582 = vsel %vm550, %v580, %v581
    %v583 = vrot.slane %v508, 5
    %v584 = vrot.slane %v583, 4
    %v585 = vrot.slane %v250, 5
    %v586 = vsel %vm550, %v584, %v585
    %v587 = vrot.slane %v509, 5
    %v588 = vrot.slane %v587, 4
    %v589 = vrot.slane %v252, 5
    %v590 = vsel %vm550, %v588, %v589
    %v591 = vrot.slane %v510, 5
    %v592 = vrot.slane %v591, 4
    %v593 = vrot.slane %v254, 5
    %v594 = vsel %vm550, %v592, %v593
    %v595 = vrot.slane %v511, 5
    %v596 = vrot.slane %v595, 4
    %v597 = vrot.slane %v256, 5
    %v598 = vsel %vm550, %v596, %v597
    %v599 = vrot.slane %v512, 5
    %v600 = vrot.slane %v599, 4
    %v601 = vrot.slane %v258, 5
    %v602 = vsel %vm550, %v600, %v601
    %v603 = vrot.slane %v513, 5
    %v604 = vrot.slane %v603, 4
    %v605 = vrot.slane %v260, 5
    %v606 = vsel %vm550, %v604, %v605
    %v607 = vrot.slane %v514, 5
    %v608 = vrot.slane %v607, 4
    %v609 = vrot.slane %v262, 5
    %v610 = vsel %vm550, %v608, %v609
    %v611 = vrot.slane %v515, 5
    %v612 = vrot.slane %v611, 4
    %v613 = vrot.slane %v264, 5
    %v614 = vsel %vm550, %v612, %v613
    %v615 = vld [vmem:[%s1 + $0x20] sm:$0xf]
    %v616 = vld [vmem:[%s1 + $0x24] sm:$0xf]
    %v617 = vld [vmem:[%s1 + $0x28] sm:$0xf]
    %v618 = vld [vmem:[%s1 + $0x2c] sm:$0xf]
    %v619 = vld [vmem:[%s1 + $0x30] sm:$0xf]
    %v620 = vld [vmem:[%s1 + $0x34] sm:$0xf]
    %v621 = vld [vmem:[%s1 + $0x38] sm:$0xf]
    %v622 = vld [vmem:[%s1 + $0x3c] sm:$0xf]
    %v623 = vunpack.c.l.b16 %v554
    %v624 = vunpack.c.l.b16 %v558
    %v625 = vunpack.c.l.b16 %v562
    %v626 = vunpack.c.l.b16 %v566
    %v627 = vunpack.c.l.b16 %v570
    %v628 = vunpack.c.l.b16 %v574
    %v629 = vunpack.c.l.b16 %v578
    %v630 = vunpack.c.l.b16 %v582
    %v631 = vunpack.c.l.b16 %v586
    %v632 = vunpack.c.l.b16 %v590
    %v633 = vunpack.c.l.b16 %v594
    %v634 = vunpack.c.l.b16 %v598
    %v635 = vunpack.c.l.b16 %v602
    %v636 = vunpack.c.l.b16 %v606
    %v637 = vunpack.c.l.b16 %v610
    %v638 = vunpack.c.l.b16 %v614
    %v639 = vpack.c.b16 %v624, %v623
    %v640 = vpack.c.b16 %v626, %v625
    %v641 = vpack.c.b16 %v628, %v627
    %v642 = vpack.c.b16 %v630, %v629
    %v643 = vpack.c.b16 %v632, %v631
    %v644 = vpack.c.b16 %v634, %v633
    %v645 = vpack.c.b16 %v636, %v635
    %v646 = vpack.c.b16 %v638, %v637
    %v655 = vunpack.c.l.b16 %v615
    %v656 = vunpack.c.l.b16 %v616
    %v657 = vunpack.c.l.b16 %v617
    %v658 = vunpack.c.l.b16 %v618
    %v659 = vunpack.c.l.b16 %v619
    %v660 = vunpack.c.l.b16 %v620
    %v661 = vunpack.c.l.b16 %v621
    %v662 = vunpack.c.l.b16 %v622
    %v663 = vpack.c.b16 %v656, %v655
    %v664 = vpack.c.b16 %v658, %v657
    %v665 = vpack.c.b16 %v660, %v659
    %v666 = vpack.c.b16 %v662, %v661
    %vm671 = vcmask 523264
    %v673 = vsel %vm671, %v639, 0
    %v676 = vsel %vm671, %v640, 0
    %v679 = vsel %vm671, %v641, 0
    %v682 = vsel %vm671, %v642, 0
    %v685 = vsel %vm671, %v643, 0
    %v688 = vsel %vm671, %v644, 0
    %v691 = vsel %vm671, %v645, 0
    %v694 = vsel %vm671, %v646, 0
    %696 = vmatprep.subr.bf16.mxu0 0
    %697 = vmatpush1.bf16.msra.mxu0 %v663
    %698 = vmatprep.subr.bf16.mxu0 0
    %699 = vmatpush1.bf16.msra.mxu0 %v664
    %700 = vmatprep.subr.bf16.mxu0 0
    %701 = vmatpush1.bf16.msra.mxu0 %v665
    %702 = vmatprep.subr.bf16.mxu0 0
    %703 = vmatpush1.bf16.msra.mxu0 %v666
    %704 = vmatprep.subr.bf16.mxu0 0
    %705 = vmatpush1.bf16.msra.mxu0 0
    %706 = vmatprep.subr.bf16.mxu0 0
    %707 = vmatpush1.bf16.msra.mxu0 0
    %708 = vmatprep.subr.bf16.mxu0 0
    %709 = vmatpush1.bf16.msra.mxu0 0
    %710 = vmatprep.subr.bf16.mxu0 0
    %711 = vmatpush1.bf16.msra.mxu0 0
    %712 = vmatprep.subr.bf16.mxu0 0
    %713 = vmatpush1.bf16.msra.mxu0 0
    %714 = vmatprep.subr.bf16.mxu0 0
    %715 = vmatpush1.bf16.msra.mxu0 0
    %716 = vmatprep.subr.bf16.mxu0 0
    %717 = vmatpush1.bf16.msra.mxu0 0
    %718 = vmatprep.subr.bf16.mxu0 0
    %719 = vmatpush1.bf16.msra.mxu0 0
    %720 = vmatprep.subr.bf16.mxu0 0
    %721 = vmatpush1.bf16.msra.mxu0 0
    %722 = vmatprep.subr.bf16.mxu0 0
    %723 = vmatpush1.bf16.msra.mxu0 0
    %724 = vmatprep.subr.bf16.mxu0 0
    %725 = vmatpush1.bf16.msra.mxu0 0
    %726 = vmatprep.subr.bf16.mxu0 0
    %727 = vmatpush1.bf16.msra.mxu0 0
    %728 = vmatprep.mubr.bf16.mxu0 0
    %729 = vmatmul.mubr.bf16.gmra.mrb[0].mxu0 %v673
    %v730 = vpop.f32.mrb[0].mxu0
    %v731 = vadd.f32 0.0, %v730
    %v732 = vpop.f32.mrb[0].mxu0
    %v733 = vpop.f32.mrb[0].mxu0
    %v734 = vadd.f32 0.0, %v733
    %v735 = vpop.f32.mrb[0].mxu0
    %736 = vmatprep.mubr.bf16.mxu0 0
    %737 = vmatmul.mubr.bf16.gmra.mrb[0].mxu0 %v676
    %v738 = vpop.f32.mrb[0].mxu0
    %v739 = vadd.f32 0.0, %v738
    %v740 = vpop.f32.mrb[0].mxu0
    %v741 = vpop.f32.mrb[0].mxu0
    %v742 = vadd.f32 0.0, %v741
    %v743 = vpop.f32.mrb[0].mxu0
    %744 = vmatprep.mubr.bf16.mxu0 0
    %745 = vmatmul.mubr.bf16.gmra.mrb[0].mxu0 %v679
    %v746 = vpop.f32.mrb[0].mxu0
    %v747 = vadd.f32 0.0, %v746
    %v748 = vpop.f32.mrb[0].mxu0
    %v749 = vpop.f32.mrb[0].mxu0
    %v750 = vadd.f32 0.0, %v749
    %v751 = vpop.f32.mrb[0].mxu0
    %752 = vmatprep.mubr.bf16.mxu0 0
    %753 = vmatmul.mubr.bf16.gmra.mrb[0].mxu0 %v682
    %v754 = vpop.f32.mrb[0].mxu0
    %v755 = vadd.f32 0.0, %v754
    %v756 = vpop.f32.mrb[0].mxu0
    %v757 = vpop.f32.mrb[0].mxu0
    %v758 = vadd.f32 0.0, %v757
    %v759 = vpop.f32.mrb[0].mxu0
    %760 = vmatprep.mubr.bf16.mxu0 0
    %761 = vmatmul.mubr.bf16.gmra.mrb[0].mxu0 %v685
    %v762 = vpop.f32.mrb[0].mxu0
    %v763 = vadd.f32 0.0, %v762
    %v764 = vpop.f32.mrb[0].mxu0
    %v765 = vpop.f32.mrb[0].mxu0
    %v766 = vadd.f32 0.0, %v765
    %v767 = vpop.f32.mrb[0].mxu0
    %768 = vmatprep.mubr.bf16.mxu0 0
    %769 = vmatmul.mubr.bf16.gmra.mrb[0].mxu0 %v688
    %v770 = vpop.f32.mrb[0].mxu0
    %v771 = vadd.f32 0.0, %v770
    %v772 = vpop.f32.mrb[0].mxu0
    %v773 = vpop.f32.mrb[0].mxu0
    %v774 = vadd.f32 0.0, %v773
    %v775 = vpop.f32.mrb[0].mxu0
    %776 = vmatprep.mubr.bf16.mxu0 0
    %777 = vmatmul.mubr.bf16.gmra.mrb[0].mxu0 %v691
    %v778 = vpop.f32.mrb[0].mxu0
    %v779 = vadd.f32 0.0, %v778
    %v780 = vpop.f32.mrb[0].mxu0
    %v781 = vpop.f32.mrb[0].mxu0
    %v782 = vadd.f32 0.0, %v781
    %v783 = vpop.f32.mrb[0].mxu0
    %784 = vmatprep.mubr.bf16.mxu0 0
    %785 = vmatmul.mubr.bf16.gmra.mrb[0].mxu0 %v694
    %v786 = vpop.f32.mrb[0].mxu0
    %v787 = vadd.f32 0.0, %v786
    %v788 = vpop.f32.mrb[0].mxu0
    %v789 = vpop.f32.mrb[0].mxu0
    %v790 = vadd.f32 0.0, %v789
    %v791 = vpop.f32.mrb[0].mxu0
    %792 = vdwg.mxu0
    %v793 = vunpack.c.l.b16 %v281
    %v794 = vunpack.c.l.b16 %v295
    %v795 = vunpack.c.l.b16 %v309
    %v796 = vunpack.c.l.b16 %v323
    %v797 = vunpack.c.l.b16 %v337
    %v798 = vunpack.c.l.b16 %v351
    %v799 = vunpack.c.l.b16 %v365
    %v800 = vunpack.c.l.b16 %v379
    %v801 = vunpack.c.l.b16 %v393
    %v802 = vunpack.c.l.b16 %v407
    %v803 = vunpack.c.l.b16 %v421
    %v804 = vunpack.c.l.b16 %v435
    %v805 = vunpack.c.l.b16 %v449
    %v806 = vunpack.c.l.b16 %v463
    %v807 = vunpack.c.l.b16 %v477
    %v808 = vunpack.c.l.b16 %v491
    %v809 = vpack.c.b16 %v794, %v793
    %v810 = vpack.c.b16 %v796, %v795
    %v811 = vpack.c.b16 %v798, %v797
    %v812 = vpack.c.b16 %v800, %v799
    %v813 = vpack.c.b16 %v802, %v801
    %v814 = vpack.c.b16 %v804, %v803
    %v815 = vpack.c.b16 %v806, %v805
    %v816 = vpack.c.b16 %v808, %v807
    %v825 = vunpack.c.l.b16 %v492
    %v826 = vunpack.c.l.b16 %v493
    %v827 = vunpack.c.l.b16 %v494
    %v828 = vunpack.c.l.b16 %v495
    %v829 = vunpack.c.l.b16 %v496
    %v830 = vunpack.c.l.b16 %v497
    %v831 = vunpack.c.l.b16 %v498
    %v832 = vunpack.c.l.b16 %v499
    %v833 = vpack.c.b16 %v826, %v825
    %v834 = vpack.c.b16 %v828, %v827
    %v835 = vpack.c.b16 %v830, %v829
    %v836 = vpack.c.b16 %v832, %v831
    %v842 = vsel %vm671, %v809, 0
    %v845 = vsel %vm671, %v810, 0
    %v848 = vsel %vm671, %v811, 0
    %v851 = vsel %vm671, %v812, 0
    %v854 = vsel %vm671, %v813, 0
    %v857 = vsel %vm671, %v814, 0
    %v860 = vsel %vm671, %v815, 0
    %v863 = vsel %vm671, %v816, 0
    %865 = vmatprep.subr.bf16.mxu0 0
    %866 = vmatpush1.bf16.msra.mxu0 %v833
    %867 = vmatprep.subr.bf16.mxu0 0
    %868 = vmatpush1.bf16.msra.mxu0 %v834
    %869 = vmatprep.subr.bf16.mxu0 0
    %870 = vmatpush1.bf16.msra.mxu0 %v835
    %871 = vmatprep.subr.bf16.mxu0 0
    %872 = vmatpush1.bf16.msra.mxu0 %v836
    %873 = vmatprep.subr.bf16.mxu0 0
    %874 = vmatpush1.bf16.msra.mxu0 0
    %875 = vmatprep.subr.bf16.mxu0 0
    %876 = vmatpush1.bf16.msra.mxu0 0
    %877 = vmatprep.subr.bf16.mxu0 0
    %878 = vmatpush1.bf16.msra.mxu0 0
    %879 = vmatprep.subr.bf16.mxu0 0
    %880 = vmatpush1.bf16.msra.mxu0 0
    %881 = vmatprep.subr.bf16.mxu0 0
    %882 = vmatpush1.bf16.msra.mxu0 0
    %883 = vmatprep.subr.bf16.mxu0 0
    %884 = vmatpush1.bf16.msra.mxu0 0
    %885 = vmatprep.subr.bf16.mxu0 0
    %886 = vmatpush1.bf16.msra.mxu0 0
    %887 = vmatprep.subr.bf16.mxu0 0
    %888 = vmatpush1.bf16.msra.mxu0 0
    %889 = vmatprep.subr.bf16.mxu0 0
    %890 = vmatpush1.bf16.msra.mxu0 0
    %891 = vmatprep.subr.bf16.mxu0 0
    %892 = vmatpush1.bf16.msra.mxu0 0
    %893 = vmatprep.subr.bf16.mxu0 0
    %894 = vmatpush1.bf16.msra.mxu0 0
    %895 = vmatprep.subr.bf16.mxu0 0
    %896 = vmatpush1.bf16.msra.mxu0 0
    %897 = vmatprep.mubr.bf16.mxu0 0
    %898 = vmatmul.mubr.bf16.gmra.mrb[0].mxu0 %v842
    %v899 = vpop.f32.mrb[0].mxu0
    %v900 = vadd.f32 %v731, %v899
    %v901 = vpop.f32.mrb[0].mxu0
    %v902 = vpop.f32.mrb[0].mxu0
    %v903 = vadd.f32 %v734, %v902
    %v904 = vpop.f32.mrb[0].mxu0
    %905 = vmatprep.mubr.bf16.mxu0 0
    %906 = vmatmul.mubr.bf16.gmra.mrb[0].mxu0 %v845
    %v907 = vpop.f32.mrb[0].mxu0
    %v908 = vadd.f32 %v739, %v907
    %v909 = vpop.f32.mrb[0].mxu0
    %v910 = vpop.f32.mrb[0].mxu0
    %v911 = vadd.f32 %v742, %v910
    %v912 = vpop.f32.mrb[0].mxu0
    %913 = vmatprep.mubr.bf16.mxu0 0
    %914 = vmatmul.mubr.bf16.gmra.mrb[0].mxu0 %v848
    %v915 = vpop.f32.mrb[0].mxu0
    %v916 = vadd.f32 %v747, %v915
    %v917 = vpop.f32.mrb[0].mxu0
    %v918 = vpop.f32.mrb[0].mxu0
    %v919 = vadd.f32 %v750, %v918
    %v920 = vpop.f32.mrb[0].mxu0
    %921 = vmatprep.mubr.bf16.mxu0 0
    %922 = vmatmul.mubr.bf16.gmra.mrb[0].mxu0 %v851
    %v923 = vpop.f32.mrb[0].mxu0
    %v924 = vadd.f32 %v755, %v923
    %v925 = vpop.f32.mrb[0].mxu0
    %v926 = vpop.f32.mrb[0].mxu0
    %v927 = vadd.f32 %v758, %v926
    %v928 = vpop.f32.mrb[0].mxu0
    %929 = vmatprep.mubr.bf16.mxu0 0
    %930 = vmatmul.mubr.bf16.gmra.mrb[0].mxu0 %v854
    %v931 = vpop.f32.mrb[0].mxu0
    %v932 = vadd.f32 %v763, %v931
    %v933 = vpop.f32.mrb[0].mxu0
    %v934 = vpop.f32.mrb[0].mxu0
    %v935 = vadd.f32 %v766, %v934
    %v936 = vpop.f32.mrb[0].mxu0
    %937 = vmatprep.mubr.bf16.mxu0 0
    %938 = vmatmul.mubr.bf16.gmra.mrb[0].mxu0 %v857
    %v939 = vpop.f32.mrb[0].mxu0
    %v940 = vadd.f32 %v771, %v939
    %v941 = vpop.f32.mrb[0].mxu0
    %v942 = vpop.f32.mrb[0].mxu0
    %v943 = vadd.f32 %v774, %v942
    %v944 = vpop.f32.mrb[0].mxu0
    %945 = vmatprep.mubr.bf16.mxu0 0
    %946 = vmatmul.mubr.bf16.gmra.mrb[0].mxu0 %v860
    %v947 = vpop.f32.mrb[0].mxu0
    %v948 = vadd.f32 %v779, %v947
    %v949 = vpop.f32.mrb[0].mxu0
    %v950 = vpop.f32.mrb[0].mxu0
    %v951 = vadd.f32 %v782, %v950
    %v952 = vpop.f32.mrb[0].mxu0
    %953 = vmatprep.mubr.bf16.mxu0 0
    %954 = vmatmul.mubr.bf16.gmra.mrb[0].mxu0 %v863
    %v955 = vpop.f32.mrb[0].mxu0
    %v956 = vadd.f32 %v787, %v955
    %v957 = vpop.f32.mrb[0].mxu0
    %v958 = vpop.f32.mrb[0].mxu0
    %v959 = vadd.f32 %v790, %v958
    %v960 = vpop.f32.mrb[0].mxu0
    %961 = vdwg.mxu0
    %v962 = vld [vmem:[#allocation2 + $0x4] sm:$0x3]
    %v963 = vld [vmem:[#allocation2 + $0xc] sm:$0x3]
    %v964 = vld [vmem:[#allocation2 + $0x14] sm:$0x3]
    %v965 = vld [vmem:[#allocation2 + $0x1c] sm:$0x3]
    %v966 = vld [vmem:[#allocation2 + $0x24] sm:$0x3]
    %v967 = vld [vmem:[#allocation2 + $0x2c] sm:$0x3]
    %v968 = vld [vmem:[#allocation2 + $0x34] sm:$0x3]
    %v969 = vld [vmem:[#allocation2 + $0x3c] sm:$0x3]
    %v970 = vld [vmem:[#allocation2 + $0x54] sm:$0x3]
    %v971 = vld [vmem:[#allocation2 + $0x5c] sm:$0x3]
    %v972 = vld [vmem:[#allocation2 + $0x64] sm:$0x3]
    %v973 = vld [vmem:[#allocation2 + $0x6c] sm:$0x3]
    %v974 = vld [vmem:[#allocation2 + $0x74] sm:$0x3]
    %v975 = vld [vmem:[#allocation2 + $0x7c] sm:$0x3]
    %v976 = vld [vmem:[#allocation2 + $0x84] sm:$0x3]
    %v977 = vld [vmem:[#allocation2 + $0x8c] sm:$0x3]
    %vm978 = vsmask.f32 2304
    %vm979 = vsmask.f32 6416
    %vm980 = vmor %vm978, %vm979
    %v982 = vshrl.u32 %v500, 16
    %v984 = vrot.slane %v982, 5
    %v985 = vshll.u32 %v500, 16
    %v987 = vrot.slane %v985, 6
    %v988 = vor.u32 %v984, %v987
    %v989 = vrot.slane %v988, 4
    %v991 = vshrl.u32 %v962, 16
    %v993 = vrot.slane %v991, 5
    %v994 = vshll.u32 %v962, 16
    %v996 = vrot.slane %v994, 6
    %v997 = vor.u32 %v993, %v996
    %v998 = vsel %vm980, %v989, %v997
    %v1000 = vshrl.u32 %v501, 16
    %v1002 = vrot.slane %v1000, 5
    %v1003 = vshll.u32 %v501, 16
    %v1005 = vrot.slane %v1003, 6
    %v1006 = vor.u32 %v1002, %v1005
    %v1007 = vrot.slane %v1006, 4
    %v1009 = vshrl.u32 %v963, 16
    %v1011 = vrot.slane %v1009, 5
    %v1012 = vshll.u32 %v963, 16
    %v1014 = vrot.slane %v1012, 6
    %v1015 = vor.u32 %v1011, %v1014
    %v1016 = vsel %vm980, %v1007, %v1015
    %v1018 = vshrl.u32 %v502, 16
    %v1020 = vrot.slane %v1018, 5
    %v1021 = vshll.u32 %v502, 16
    %v1023 = vrot.slane %v1021, 6
    %v1024 = vor.u32 %v1020, %v1023
    %v1025 = vrot.slane %v1024, 4
    %v1027 = vshrl.u32 %v964, 16
    %v1029 = vrot.slane %v1027, 5
    %v1030 = vshll.u32 %v964, 16
    %v1032 = vrot.slane %v1030, 6
    %v1033 = vor.u32 %v1029, %v1032
    %v1034 = vsel %vm980, %v1025, %v1033
    %v1036 = vshrl.u32 %v503, 16
    %v1038 = vrot.slane %v1036, 5
    %v1039 = vshll.u32 %v503, 16
    %v1041 = vrot.slane %v1039, 6
    %v1042 = vor.u32 %v1038, %v1041
    %v1043 = vrot.slane %v1042, 4
    %v1045 = vshrl.u32 %v965, 16
    %v1047 = vrot.slane %v1045, 5
    %v1048 = vshll.u32 %v965, 16
    %v1050 = vrot.slane %v1048, 6
    %v1051 = vor.u32 %v1047, %v1050
    %v1052 = vsel %vm980, %v1043, %v1051
    %v1054 = vshrl.u32 %v504, 16
    %v1056 = vrot.slane %v1054, 5
    %v1057 = vshll.u32 %v504, 16
    %v1059 = vrot.slane %v1057, 6
    %v1060 = vor.u32 %v1056, %v1059
    %v1061 = vrot.slane %v1060, 4
    %v1063 = vshrl.u32 %v966, 16
    %v1065 = vrot.slane %v1063, 5
    %v1066 = vshll.u32 %v966, 16
    %v1068 = vrot.slane %v1066, 6
    %v1069 = vor.u32 %v1065, %v1068
    %v1070 = vsel %vm980, %v1061, %v1069
    %v1072 = vshrl.u32 %v505, 16
    %v1074 = vrot.slane %v1072, 5
    %v1075 = vshll.u32 %v505, 16
    %v1077 = vrot.slane %v1075, 6
    %v1078 = vor.u32 %v1074, %v1077
    %v1079 = vrot.slane %v1078, 4
    %v1081 = vshrl.u32 %v967, 16
    %v1083 = vrot.slane %v1081, 5
    %v1084 = vshll.u32 %v967, 16
    %v1086 = vrot.slane %v1084, 6
    %v1087 = vor.u32 %v1083, %v1086
    %v1088 = vsel %vm980, %v1079, %v1087
    %v1090 = vshrl.u32 %v506, 16
    %v1092 = vrot.slane %v1090, 5
    %v1093 = vshll.u32 %v506, 16
    %v1095 = vrot.slane %v1093, 6
    %v1096 = vor.u32 %v1092, %v1095
    %v1097 = vrot.slane %v1096, 4
    %v1099 = vshrl.u32 %v968, 16
    %v1101 = vrot.slane %v1099, 5
    %v1102 = vshll.u32 %v968, 16
    %v1104 = vrot.slane %v1102, 6
    %v1105 = vor.u32 %v1101, %v1104
    %v1106 = vsel %vm980, %v1097, %v1105
    %v1108 = vshrl.u32 %v507, 16
    %v1110 = vrot.slane %v1108, 5
    %v1111 = vshll.u32 %v507, 16
    %v1113 = vrot.slane %v1111, 6
    %v1114 = vor.u32 %v1110, %v1113
    %v1115 = vrot.slane %v1114, 4
    %v1117 = vshrl.u32 %v969, 16
    %v1119 = vrot.slane %v1117, 5
    %v1120 = vshll.u32 %v969, 16
    %v1122 = vrot.slane %v1120, 6
    %v1123 = vor.u32 %v1119, %v1122
    %v1124 = vsel %vm980, %v1115, %v1123
    %v1126 = vshrl.u32 %v508, 16
    %v1128 = vrot.slane %v1126, 5
    %v1129 = vshll.u32 %v508, 16
    %v1131 = vrot.slane %v1129, 6
    %v1132 = vor.u32 %v1128, %v1131
    %v1133 = vrot.slane %v1132, 4
    %v1135 = vshrl.u32 %v970, 16
    %v1137 = vrot.slane %v1135, 5
    %v1138 = vshll.u32 %v970, 16
    %v1140 = vrot.slane %v1138, 6
    %v1141 = vor.u32 %v1137, %v1140
    %v1142 = vsel %vm980, %v1133, %v1141
    %v1144 = vshrl.u32 %v509, 16
    %v1146 = vrot.slane %v1144, 5
    %v1147 = vshll.u32 %v509, 16
    %v1149 = vrot.slane %v1147, 6
    %v1150 = vor.u32 %v1146, %v1149
    %v1151 = vrot.slane %v1150, 4
    %v1153 = vshrl.u32 %v971, 16
    %v1155 = vrot.slane %v1153, 5
    %v1156 = vshll.u32 %v971, 16
    %v1158 = vrot.slane %v1156, 6
    %v1159 = vor.u32 %v1155, %v1158
    %v1160 = vsel %vm980, %v1151, %v1159
    %v1162 = vshrl.u32 %v510, 16
    %v1164 = vrot.slane %v1162, 5
    %v1165 = vshll.u32 %v510, 16
    %v1167 = vrot.slane %v1165, 6
    %v1168 = vor.u32 %v1164, %v1167
    %v1169 = vrot.slane %v1168, 4
    %v1171 = vshrl.u32 %v972, 16
    %v1173 = vrot.slane %v1171, 5
    %v1174 = vshll.u32 %v972, 16
    %v1176 = vrot.slane %v1174, 6
    %v1177 = vor.u32 %v1173, %v1176
    %v1178 = vsel %vm980, %v1169, %v1177
    %v1180 = vshrl.u32 %v511, 16
    %v1182 = vrot.slane %v1180, 5
    %v1183 = vshll.u32 %v511, 16
    %v1185 = vrot.slane %v1183, 6
    %v1186 = vor.u32 %v1182, %v1185
    %v1187 = vrot.slane %v1186, 4
    %v1189 = vshrl.u32 %v973, 16
    %v1191 = vrot.slane %v1189, 5
    %v1192 = vshll.u32 %v973, 16
    %v1194 = vrot.slane %v1192, 6
    %v1195 = vor.u32 %v1191, %v1194
    %v1196 = vsel %vm980, %v1187, %v1195
    %v1198 = vshrl.u32 %v512, 16
    %v1200 = vrot.slane %v1198, 5
    %v1201 = vshll.u32 %v512, 16
    %v1203 = vrot.slane %v1201, 6
    %v1204 = vor.u32 %v1200, %v1203
    %v1205 = vrot.slane %v1204, 4
    %v1207 = vshrl.u32 %v974, 16
    %v1209 = vrot.slane %v1207, 5
    %v1210 = vshll.u32 %v974, 16
    %v1212 = vrot.slane %v1210, 6
    %v1213 = vor.u32 %v1209, %v1212
    %v1214 = vsel %vm980, %v1205, %v1213
    %v1216 = vshrl.u32 %v513, 16
    %v1218 = vrot.slane %v1216, 5
    %v1219 = vshll.u32 %v513, 16
    %v1221 = vrot.slane %v1219, 6
    %v1222 = vor.u32 %v1218, %v1221
    %v1223 = vrot.slane %v1222, 4
    %v1225 = vshrl.u32 %v975, 16
    %v1227 = vrot.slane %v1225, 5
    %v1228 = vshll.u32 %v975, 16
    %v1230 = vrot.slane %v1228, 6
    %v1231 = vor.u32 %v1227, %v1230
    %v1232 = vsel %vm980, %v1223, %v1231
    %v1234 = vshrl.u32 %v514, 16
    %v1236 = vrot.slane %v1234, 5
    %v1237 = vshll.u32 %v514, 16
    %v1239 = vrot.slane %v1237, 6
    %v1240 = vor.u32 %v1236, %v1239
    %v1241 = vrot.slane %v1240, 4
    %v1243 = vshrl.u32 %v976, 16
    %v1245 = vrot.slane %v1243, 5
    %v1246 = vshll.u32 %v976, 16
    %v1248 = vrot.slane %v1246, 6
    %v1249 = vor.u32 %v1245, %v1248
    %v1250 = vsel %vm980, %v1241, %v1249
    %v1252 = vshrl.u32 %v515, 16
    %v1254 = vrot.slane %v1252, 5
    %v1255 = vshll.u32 %v515, 16
    %v1257 = vrot.slane %v1255, 6
    %v1258 = vor.u32 %v1254, %v1257
    %v1259 = vrot.slane %v1258, 4
    %v1261 = vshrl.u32 %v977, 16
    %v1263 = vrot.slane %v1261, 5
    %v1264 = vshll.u32 %v977, 16
    %v1266 = vrot.slane %v1264, 6
    %v1267 = vor.u32 %v1263, %v1266
    %v1268 = vsel %vm980, %v1259, %v1267
    %v1269 = vld [vmem:[%s1 + $0x40] sm:$0xf]
    %v1270 = vld [vmem:[%s1 + $0x44] sm:$0xf]
    %v1271 = vld [vmem:[%s1 + $0x48] sm:$0xf]
    %v1272 = vld [vmem:[%s1 + $0x4c] sm:$0xf]
    %v1273 = vld [vmem:[%s1 + $0x50] sm:$0xf]
    %v1274 = vld [vmem:[%s1 + $0x54] sm:$0xf]
    %v1275 = vld [vmem:[%s1 + $0x58] sm:$0xf]
    %v1276 = vld [vmem:[%s1 + $0x5c] sm:$0xf]
    %v1277 = vunpack.c.l.b16 %v998
    %v1278 = vunpack.c.l.b16 %v1016
    %v1279 = vunpack.c.l.b16 %v1034
    %v1280 = vunpack.c.l.b16 %v1052
    %v1281 = vunpack.c.l.b16 %v1070
    %v1282 = vunpack.c.l.b16 %v1088
    %v1283 = vunpack.c.l.b16 %v1106
    %v1284 = vunpack.c.l.b16 %v1124
    %v1285 = vunpack.c.l.b16 %v1142
    %v1286 = vunpack.c.l.b16 %v1160
    %v1287 = vunpack.c.l.b16 %v1178
    %v1288 = vunpack.c.l.b16 %v1196
    %v1289 = vunpack.c.l.b16 %v1214
    %v1290 = vunpack.c.l.b16 %v1232
    %v1291 = vunpack.c.l.b16 %v1250
    %v1292 = vunpack.c.l.b16 %v1268
    %v1293 = vpack.c.b16 %v1278, %v1277
    %v1294 = vpack.c.b16 %v1280, %v1279
    %v1295 = vpack.c.b16 %v1282, %v1281
    %v1296 = vpack.c.b16 %v1284, %v1283
    %v1297 = vpack.c.b16 %v1286, %v1285
    %v1298 = vpack.c.b16 %v1288, %v1287
    %v1299 = vpack.c.b16 %v1290, %v1289
    %v1300 = vpack.c.b16 %v1292, %v1291
    %v1309 = vunpack.c.l.b16 %v1269
    %v1310 = vunpack.c.l.b16 %v1270
    %v1311 = vunpack.c.l.b16 %v1271
    %v1312 = vunpack.c.l.b16 %v1272
    %v1313 = vunpack.c.l.b16 %v1273
    %v1314 = vunpack.c.l.b16 %v1274
    %v1315 = vunpack.c.l.b16 %v1275
    %v1316 = vunpack.c.l.b16 %v1276
    %v1317 = vpack.c.b16 %v1310, %v1309
    %v1318 = vpack.c.b16 %v1312, %v1311
    %v1319 = vpack.c.b16 %v1314, %v1313
    %v1320 = vpack.c.b16 %v1316, %v1315
    %v1326 = vsel %vm671, %v1293, 0
    %v1329 = vsel %vm671, %v1294, 0
    %v1332 = vsel %vm671, %v1295, 0
    %v1335 = vsel %vm671, %v1296, 0
    %v1338 = vsel %vm671, %v1297, 0
    %v1341 = vsel %vm671, %v1298, 0
    %v1344 = vsel %vm671, %v1299, 0
    %v1347 = vsel %vm671, %v1300, 0
    %1349 = vmatprep.subr.bf16.mxu0 0
    %1350 = vmatpush1.bf16.msra.mxu0 %v1317
    %1351 = vmatprep.subr.bf16.mxu0 0
    %1352 = vmatpush1.bf16.msra.mxu0 %v1318
    %1353 = vmatprep.subr.bf16.mxu0 0
    %1354 = vmatpush1.bf16.msra.mxu0 %v1319
    %1355 = vmatprep.subr.bf16.mxu0 0
    %1356 = vmatpush1.bf16.msra.mxu0 %v1320
    %1357 = vmatprep.subr.bf16.mxu0 0
    %1358 = vmatpush1.bf16.msra.mxu0 0
    %1359 = vmatprep.subr.bf16.mxu0 0
    %1360 = vmatpush1.bf16.msra.mxu0 0
    %1361 = vmatprep.subr.bf16.mxu0 0
    %1362 = vmatpush1.bf16.msra.mxu0 0
    %1363 = vmatprep.subr.bf16.mxu0 0
    %1364 = vmatpush1.bf16.msra.mxu0 0
    %1365 = vmatprep.subr.bf16.mxu0 0
    %1366 = vmatpush1.bf16.msra.mxu0 0
    %1367 = vmatprep.subr.bf16.mxu0 0
    %1368 = vmatpush1.bf16.msra.mxu0 0
    %1369 = vmatprep.subr.bf16.mxu0 0
    %1370 = vmatpush1.bf16.msra.mxu0 0
    %1371 = vmatprep.subr.bf16.mxu0 0
    %1372 = vmatpush1.bf16.msra.mxu0 0
    %1373 = vmatprep.subr.bf16.mxu0 0
    %1374 = vmatpush1.bf16.msra.mxu0 0
    %1375 = vmatprep.subr.bf16.mxu0 0
    %1376 = vmatpush1.bf16.msra.mxu0 0
    %1377 = vmatprep.subr.bf16.mxu0 0
    %1378 = vmatpush1.bf16.msra.mxu0 0
    %1379 = vmatprep.subr.bf16.mxu0 0
    %1380 = vmatpush1.bf16.msra.mxu0 0
    %1381 = vmatprep.mubr.bf16.mxu0 0
    %1382 = vmatmul.mubr.bf16.gmra.mrb[0].mxu0 %v1326
    %v1383 = vpop.f32.mrb[0].mxu0
    %v1384 = vadd.f32 0.0, %v1383
    %v1385 = vpop.f32.mrb[0].mxu0
    %v1386 = vpop.f32.mrb[0].mxu0
    %v1387 = vadd.f32 0.0, %v1386
    %v1388 = vpop.f32.mrb[0].mxu0
    %1389 = vmatprep.mubr.bf16.mxu0 0
    %1390 = vmatmul.mubr.bf16.gmra.mrb[0].mxu0 %v1329
    %v1391 = vpop.f32.mrb[0].mxu0
    %v1392 = vadd.f32 0.0, %v1391
    %v1393 = vpop.f32.mrb[0].mxu0
    %v1394 = vpop.f32.mrb[0].mxu0
    %v1395 = vadd.f32 0.0, %v1394
    %v1396 = vpop.f32.mrb[0].mxu0
    %1397 = vmatprep.mubr.bf16.mxu0 0
    %1398 = vmatmul.mubr.bf16.gmra.mrb[0].mxu0 %v1332
    %v1399 = vpop.f32.mrb[0].mxu0
    %v1400 = vadd.f32 0.0, %v1399
    %v1401 = vpop.f32.mrb[0].mxu0
    %v1402 = vpop.f32.mrb[0].mxu0
    %v1403 = vadd.f32 0.0, %v1402
    %v1404 = vpop.f32.mrb[0].mxu0
    %1405 = vmatprep.mubr.bf16.mxu0 0
    %1406 = vmatmul.mubr.bf16.gmra.mrb[0].mxu0 %v1335
    %v1407 = vpop.f32.mrb[0].mxu0
    %v1408 = vadd.f32 0.0, %v1407
    %v1409 = vpop.f32.mrb[0].mxu0
    %v1410 = vpop.f32.mrb[0].mxu0
    %v1411 = vadd.f32 0.0, %v1410
    %v1412 = vpop.f32.mrb[0].mxu0
    %1413 = vmatprep.mubr.bf16.mxu0 0
    %1414 = vmatmul.mubr.bf16.gmra.mrb[0].mxu0 %v1338
    %v1415 = vpop.f32.mrb[0].mxu0
    %v1416 = vadd.f32 0.0, %v1415
    %v1417 = vpop.f32.mrb[0].mxu0
    %v1418 = vpop.f32.mrb[0].mxu0
    %v1419 = vadd.f32 0.0, %v1418
    %v1420 = vpop.f32.mrb[0].mxu0
    %1421 = vmatprep.mubr.bf16.mxu0 0
    %1422 = vmatmul.mubr.bf16.gmra.mrb[0].mxu0 %v1341
    %v1423 = vpop.f32.mrb[0].mxu0
    %v1424 = vadd.f32 0.0, %v1423
    %v1425 = vpop.f32.mrb[0].mxu0
    %v1426 = vpop.f32.mrb[0].mxu0
    %v1427 = vadd.f32 0.0, %v1426
    %v1428 = vpop.f32.mrb[0].mxu0
    %1429 = vmatprep.mubr.bf16.mxu0 0
    %1430 = vmatmul.mubr.bf16.gmra.mrb[0].mxu0 %v1344
    %v1431 = vpop.f32.mrb[0].mxu0
    %v1432 = vadd.f32 0.0, %v1431
    %v1433 = vpop.f32.mrb[0].mxu0
    %v1434 = vpop.f32.mrb[0].mxu0
    %v1435 = vadd.f32 0.0, %v1434
    %v1436 = vpop.f32.mrb[0].mxu0
    %1437 = vmatprep.mubr.bf16.mxu0 0
    %1438 = vmatmul.mubr.bf16.gmra.mrb[0].mxu0 %v1347
    %v1439 = vpop.f32.mrb[0].mxu0
    %v1440 = vadd.f32 0.0, %v1439
    %v1441 = vpop.f32.mrb[0].mxu0
    %v1442 = vpop.f32.mrb[0].mxu0
    %v1443 = vadd.f32 0.0, %v1442
    %v1444 = vpop.f32.mrb[0].mxu0
    %1445 = vdwg.mxu0
    %v1446 = vadd.f32 %v900, %v1384
    %v1447 = vadd.f32 %v903, %v1387
    %v1448 = vadd.f32 %v908, %v1392
    %v1449 = vadd.f32 %v911, %v1395
    %v1450 = vadd.f32 %v916, %v1400
    %v1451 = vadd.f32 %v919, %v1403
    %v1452 = vadd.f32 %v924, %v1408
    %v1453 = vadd.f32 %v927, %v1411
    %v1454 = vadd.f32 %v932, %v1416
    %v1455 = vadd.f32 %v935, %v1419
    %v1456 = vadd.f32 %v940, %v1424
    %v1457 = vadd.f32 %v943, %v1427
    %v1458 = vadd.f32 %v948, %v1432
    %v1459 = vadd.f32 %v951, %v1435
    %v1460 = vadd.f32 %v956, %v1440
    %v1461 = vadd.f32 %v959, %v1443
    %v1462 = vld [vmem:[%s198] sm:$0xf]
    %v1463 = vld [vmem:[%s198 + $0x4] sm:$0x1]
    %v1464 = vld [vmem:[%s198 + $0x8] sm:$0xf]
    %v1465 = vld [vmem:[%s198 + $0xc] sm:$0x1]
    %v1466 = vld [vmem:[%s198 + $0x10] sm:$0xf]
    %v1467 = vld [vmem:[%s198 + $0x14] sm:$0x1]
    %v1468 = vld [vmem:[%s198 + $0x18] sm:$0xf]
    %v1469 = vld [vmem:[%s198 + $0x1c] sm:$0x1]
    %v1470 = vld [vmem:[%s198 + $0x20] sm:$0xf]
    %v1471 = vld [vmem:[%s198 + $0x24] sm:$0x1]
    %v1472 = vld [vmem:[%s198 + $0x28] sm:$0xf]
    %v1473 = vld [vmem:[%s198 + $0x2c] sm:$0x1]
    %v1474 = vld [vmem:[%s198 + $0x30] sm:$0xf]
    %v1475 = vld [vmem:[%s198 + $0x34] sm:$0x1]
    %v1476 = vld [vmem:[%s198 + $0x38] sm:$0xf]
    %v1477 = vld [vmem:[%s198 + $0x3c] sm:$0x1]
    %v1478 = vld [vmem:[%s198 + $0x50] sm:$0xf]
    %v1479 = vld [vmem:[%s198 + $0x54] sm:$0x1]
    %v1480 = vld [vmem:[%s198 + $0x58] sm:$0xf]
    %v1481 = vld [vmem:[%s198 + $0x5c] sm:$0x1]
    %v1482 = vld [vmem:[%s198 + $0x60] sm:$0xf]
    %v1483 = vld [vmem:[%s198 + $0x64] sm:$0x1]
    %v1484 = vld [vmem:[%s198 + $0x68] sm:$0xf]
    %v1485 = vld [vmem:[%s198 + $0x6c] sm:$0x1]
    %v1486 = vld [vmem:[%s198 + $0x70] sm:$0xf]
    %v1487 = vld [vmem:[%s198 + $0x74] sm:$0x1]
    %v1488 = vld [vmem:[%s198 + $0x78] sm:$0xf]
    %v1489 = vld [vmem:[%s198 + $0x7c] sm:$0x1]
    %v1490 = vld [vmem:[%s198 + $0x80] sm:$0xf]
    %v1491 = vld [vmem:[%s198 + $0x84] sm:$0x1]
    %v1492 = vld [vmem:[%s198 + $0x88] sm:$0xf]
    %v1493 = vld [vmem:[%s198 + $0x8c] sm:$0x1]
    %v1495 = vshrl.u32 %v1462, 16
    %v1497 = vrot.slane %v1495, 4
    %v1498 = vshll.u32 %v1462, 16
    %v1500 = vrot.slane %v1498, 5
    %v1501 = vor.u32 %v1497, %v1500
    %v1502 = vrot.slane %v1501, 4
    %v1504 = vshll.u32 %v1463, 16
    %v1506 = vrot.slane %v1504, 5
    %v1507 = vsel %vm267, %v1502, %v1506
    %v1509 = vshrl.u32 %v1464, 16
    %v1511 = vrot.slane %v1509, 4
    %v1512 = vshll.u32 %v1464, 16
    %v1514 = vrot.slane %v1512, 5
    %v1515 = vor.u32 %v1511, %v1514
    %v1516 = vrot.slane %v1515, 4
    %v1518 = vshll.u32 %v1465, 16
    %v1520 = vrot.slane %v1518, 5
    %v1521 = vsel %vm267, %v1516, %v1520
    %v1523 = vshrl.u32 %v1466, 16
    %v1525 = vrot.slane %v1523, 4
    %v1526 = vshll.u32 %v1466, 16
    %v1528 = vrot.slane %v1526, 5
    %v1529 = vor.u32 %v1525, %v1528
    %v1530 = vrot.slane %v1529, 4
    %v1532 = vshll.u32 %v1467, 16
    %v1534 = vrot.slane %v1532, 5
    %v1535 = vsel %vm267, %v1530, %v1534
    %v1537 = vshrl.u32 %v1468, 16
    %v1539 = vrot.slane %v1537, 4
    %v1540 = vshll.u32 %v1468, 16
    %v1542 = vrot.slane %v1540, 5
    %v1543 = vor.u32 %v1539, %v1542
    %v1544 = vrot.slane %v1543, 4
    %v1546 = vshll.u32 %v1469, 16
    %v1548 = vrot.slane %v1546, 5
    %v1549 = vsel %vm267, %v1544, %v1548
    %v1551 = vshrl.u32 %v1470, 16
    %v1553 = vrot.slane %v1551, 4
    %v1554 = vshll.u32 %v1470, 16
    %v1556 = vrot.slane %v1554, 5
    %v1557 = vor.u32 %v1553, %v1556
    %v1558 = vrot.slane %v1557, 4
    %v1560 = vshll.u32 %v1471, 16
    %v1562 = vrot.slane %v1560, 5
    %v1563 = vsel %vm267, %v1558, %v1562
    %v1565 = vshrl.u32 %v1472, 16
    %v1567 = vrot.slane %v1565, 4
    %v1568 = vshll.u32 %v1472, 16
    %v1570 = vrot.slane %v1568, 5
    %v1571 = vor.u32 %v1567, %v1570
    %v1572 = vrot.slane %v1571, 4
    %v1574 = vshll.u32 %v1473, 16
    %v1576 = vrot.slane %v1574, 5
    %v1577 = vsel %vm267, %v1572, %v1576
    %v1579 = vshrl.u32 %v1474, 16
    %v1581 = vrot.slane %v1579, 4
    %v1582 = vshll.u32 %v1474, 16
    %v1584 = vrot.slane %v1582, 5
    %v1585 = vor.u32 %v1581, %v1584
    %v1586 = vrot.slane %v1585, 4
    %v1588 = vshll.u32 %v1475, 16
    %v1590 = vrot.slane %v1588, 5
    %v1591 = vsel %vm267, %v1586, %v1590
    %v1593 = vshrl.u32 %v1476, 16
    %v1595 = vrot.slane %v1593, 4
    %v1596 = vshll.u32 %v1476, 16
    %v1598 = vrot.slane %v1596, 5
    %v1599 = vor.u32 %v1595, %v1598
    %v1600 = vrot.slane %v1599, 4
    %v1602 = vshll.u32 %v1477, 16
    %v1604 = vrot.slane %v1602, 5
    %v1605 = vsel %vm267, %v1600, %v1604
    %v1607 = vshrl.u32 %v1478, 16
    %v1609 = vrot.slane %v1607, 4
    %v1610 = vshll.u32 %v1478, 16
    %v1612 = vrot.slane %v1610, 5
    %v1613 = vor.u32 %v1609, %v1612
    %v1614 = vrot.slane %v1613, 4
    %v1616 = vshll.u32 %v1479, 16
    %v1618 = vrot.slane %v1616, 5
    %v1619 = vsel %vm267, %v1614, %v1618
    %v1621 = vshrl.u32 %v1480, 16
    %v1623 = vrot.slane %v1621, 4
    %v1624 = vshll.u32 %v1480, 16
    %v1626 = vrot.slane %v1624, 5
    %v1627 = vor.u32 %v1623, %v1626
    %v1628 = vrot.slane %v1627, 4
    %v1630 = vshll.u32 %v1481, 16
    %v1632 = vrot.slane %v1630, 5
    %v1633 = vsel %vm267, %v1628, %v1632
    %v1635 = vshrl.u32 %v1482, 16
    %v1637 = vrot.slane %v1635, 4
    %v1638 = vshll.u32 %v1482, 16
    %v1640 = vrot.slane %v1638, 5
    %v1641 = vor.u32 %v1637, %v1640
    %v1642 = vrot.slane %v1641, 4
    %v1644 = vshll.u32 %v1483, 16
    %v1646 = vrot.slane %v1644, 5
    %v1647 = vsel %vm267, %v1642, %v1646
    %v1649 = vshrl.u32 %v1484, 16
    %v1651 = vrot.slane %v1649, 4
    %v1652 = vshll.u32 %v1484, 16
    %v1654 = vrot.slane %v1652, 5
    %v1655 = vor.u32 %v1651, %v1654
    %v1656 = vrot.slane %v1655, 4
    %v1658 = vshll.u32 %v1485, 16
    %v1660 = vrot.slane %v1658, 5
    %v1661 = vsel %vm267, %v1656, %v1660
    %v1663 = vshrl.u32 %v1486, 16
    %v1665 = vrot.slane %v1663, 4
    %v1666 = vshll.u32 %v1486, 16
    %v1668 = vrot.slane %v1666, 5
    %v1669 = vor.u32 %v1665, %v1668
    %v1670 = vrot.slane %v1669, 4
    %v1672 = vshll.u32 %v1487, 16
    %v1674 = vrot.slane %v1672, 5
    %v1675 = vsel %vm267, %v1670, %v1674
    %v1677 = vshrl.u32 %v1488, 16
    %v1679 = vrot.slane %v1677, 4
    %v1680 = vshll.u32 %v1488, 16
    %v1682 = vrot.slane %v1680, 5
    %v1683 = vor.u32 %v1679, %v1682
    %v1684 = vrot.slane %v1683, 4
    %v1686 = vshll.u32 %v1489, 16
    %v1688 = vrot.slane %v1686, 5
    %v1689 = vsel %vm267, %v1684, %v1688
    %v1691 = vshrl.u32 %v1490, 16
    %v1693 = vrot.slane %v1691, 4
    %v1694 = vshll.u32 %v1490, 16
    %v1696 = vrot.slane %v1694, 5
    %v1697 = vor.u32 %v1693, %v1696
    %v1698 = vrot.slane %v1697, 4
    %v1700 = vshll.u32 %v1491, 16
    %v1702 = vrot.slane %v1700, 5
    %v1703 = vsel %vm267, %v1698, %v1702
    %v1705 = vshrl.u32 %v1492, 16
    %v1707 = vrot.slane %v1705, 4
    %v1708 = vshll.u32 %v1492, 16
    %v1710 = vrot.slane %v1708, 5
    %v1711 = vor.u32 %v1707, %v1710
    %v1712 = vrot.slane %v1711, 4
    %v1714 = vshll.u32 %v1493, 16
    %v1716 = vrot.slane %v1714, 5
    %v1717 = vsel %vm267, %v1712, %v1716
    %v1718 = vld [vmem:[%s1 + $0x60] sm:$0xf]
    %v1719 = vld [vmem:[%s1 + $0x64] sm:$0xf]
    %v1720 = vld [vmem:[%s1 + $0x68] sm:$0xf]
    %v1721 = vld [vmem:[%s1 + $0x6c] sm:$0xf]
    %v1722 = vld [vmem:[%s1 + $0x70] sm:$0xf]
    %v1723 = vld [vmem:[%s1 + $0x74] sm:$0xf]
    %v1724 = vld [vmem:[%s1 + $0x78] sm:$0xf]
    %v1725 = vld [vmem:[%s1 + $0x7c] sm:$0xf]
    %v1726 = vunpack.c.l.b16 %v1507
    %v1727 = vunpack.c.l.b16 %v1521
    %v1728 = vunpack.c.l.b16 %v1535
    %v1729 = vunpack.c.l.b16 %v1549
    %v1730 = vunpack.c.l.b16 %v1563
    %v1731 = vunpack.c.l.b16 %v1577
    %v1732 = vunpack.c.l.b16 %v1591
    %v1733 = vunpack.c.l.b16 %v1605
    %v1734 = vunpack.c.l.b16 %v1619
    %v1735 = vunpack.c.l.b16 %v1633
    %v1736 = vunpack.c.l.b16 %v1647
    %v1737 = vunpack.c.l.b16 %v1661
    %v1738 = vunpack.c.l.b16 %v1675
    %v1739 = vunpack.c.l.b16 %v1689
    %v1740 = vunpack.c.l.b16 %v1703
    %v1741 = vunpack.c.l.b16 %v1717
    %v1742 = vpack.c.b16 %v1727, %v1726
    %v1743 = vpack.c.b16 %v1729, %v1728
    %v1744 = vpack.c.b16 %v1731, %v1730
    %v1745 = vpack.c.b16 %v1733, %v1732
    %v1746 = vpack.c.b16 %v1735, %v1734
    %v1747 = vpack.c.b16 %v1737, %v1736
    %v1748 = vpack.c.b16 %v1739, %v1738
    %v1749 = vpack.c.b16 %v1741, %v1740
    %v1758 = vunpack.c.l.b16 %v1718
    %v1759 = vunpack.c.l.b16 %v1719
    %v1760 = vunpack.c.l.b16 %v1720
    %v1761 = vunpack.c.l.b16 %v1721
    %v1762 = vunpack.c.l.b16 %v1722
    %v1763 = vunpack.c.l.b16 %v1723
    %v1764 = vunpack.c.l.b16 %v1724
    %v1765 = vunpack.c.l.b16 %v1725
    %v1766 = vpack.c.b16 %v1759, %v1758
    %v1767 = vpack.c.b16 %v1761, %v1760
    %v1768 = vpack.c.b16 %v1763, %v1762
    %v1769 = vpack.c.b16 %v1765, %v1764
    %v1775 = vsel %vm671, %v1742, 0
    %v1778 = vsel %vm671, %v1743, 0
    %v1781 = vsel %vm671, %v1744, 0
    %v1784 = vsel %vm671, %v1745, 0
    %v1787 = vsel %vm671, %v1746, 0
    %v1790 = vsel %vm671, %v1747, 0
    %v1793 = vsel %vm671, %v1748, 0
    %v1796 = vsel %vm671, %v1749, 0
    %1798 = vmatprep.subr.bf16.mxu0 0
    %1799 = vmatpush1.bf16.msra.mxu0 %v1766
    %1800 = vmatprep.subr.bf16.mxu0 0
    %1801 = vmatpush1.bf16.msra.mxu0 %v1767
    %1802 = vmatprep.subr.bf16.mxu0 0
    %1803 = vmatpush1.bf16.msra.mxu0 %v1768
    %1804 = vmatprep.subr.bf16.mxu0 0
    %1805 = vmatpush1.bf16.msra.mxu0 %v1769
    %1806 = vmatprep.subr.bf16.mxu0 0
    %1807 = vmatpush1.bf16.msra.mxu0 0
    %1808 = vmatprep.subr.bf16.mxu0 0
    %1809 = vmatpush1.bf16.msra.mxu0 0
    %1810 = vmatprep.subr.bf16.mxu0 0
    %1811 = vmatpush1.bf16.msra.mxu0 0
    %1812 = vmatprep.subr.bf16.mxu0 0
    %1813 = vmatpush1.bf16.msra.mxu0 0
    %1814 = vmatprep.subr.bf16.mxu0 0
    %1815 = vmatpush1.bf16.msra.mxu0 0
    %1816 = vmatprep.subr.bf16.mxu0 0
    %1817 = vmatpush1.bf16.msra.mxu0 0
    %1818 = vmatprep.subr.bf16.mxu0 0
    %1819 = vmatpush1.bf16.msra.mxu0 0
    %1820 = vmatprep.subr.bf16.mxu0 0
    %1821 = vmatpush1.bf16.msra.mxu0 0
    %1822 = vmatprep.subr.bf16.mxu0 0
    %1823 = vmatpush1.bf16.msra.mxu0 0
    %1824 = vmatprep.subr.bf16.mxu0 0
    %1825 = vmatpush1.bf16.msra.mxu0 0
    %1826 = vmatprep.subr.bf16.mxu0 0
    %1827 = vmatpush1.bf16.msra.mxu0 0
    %1828 = vmatprep.subr.bf16.mxu0 0
    %1829 = vmatpush1.bf16.msra.mxu0 0
    %1830 = vmatprep.mubr.bf16.mxu0 0
    %1831 = vmatmul.mubr.bf16.gmra.mrb[0].mxu0 %v1775
    %v1832 = vpop.f32.mrb[0].mxu0
    %v1833 = vadd.f32 0.0, %v1832
    %v1834 = vpop.f32.mrb[0].mxu0
    %v1835 = vpop.f32.mrb[0].mxu0
    %v1836 = vadd.f32 0.0, %v1835
    %v1837 = vpop.f32.mrb[0].mxu0
    %1838 = vmatprep.mubr.bf16.mxu0 0
    %1839 = vmatmul.mubr.bf16.gmra.mrb[0].mxu0 %v1778
    %v1840 = vpop.f32.mrb[0].mxu0
    %v1841 = vadd.f32 0.0, %v1840
    %v1842 = vpop.f32.mrb[0].mxu0
    %v1843 = vpop.f32.mrb[0].mxu0
    %v1844 = vadd.f32 0.0, %v1843
    %v1845 = vpop.f32.mrb[0].mxu0
    %1846 = vmatprep.mubr.bf16.mxu0 0
    %1847 = vmatmul.mubr.bf16.gmra.mrb[0].mxu0 %v1781
    %v1848 = vpop.f32.mrb[0].mxu0
    %v1849 = vadd.f32 0.0, %v1848
    %v1850 = vpop.f32.mrb[0].mxu0
    %v1851 = vpop.f32.mrb[0].mxu0
    %v1852 = vadd.f32 0.0, %v1851
    %v1853 = vpop.f32.mrb[0].mxu0
    %1854 = vmatprep.mubr.bf16.mxu0 0
    %1855 = vmatmul.mubr.bf16.gmra.mrb[0].mxu0 %v1784
    %v1856 = vpop.f32.mrb[0].mxu0
    %v1857 = vadd.f32 0.0, %v1856
    %v1858 = vpop.f32.mrb[0].mxu0
    %v1859 = vpop.f32.mrb[0].mxu0
    %v1860 = vadd.f32 0.0, %v1859
    %v1861 = vpop.f32.mrb[0].mxu0
    %1862 = vmatprep.mubr.bf16.mxu0 0
    %1863 = vmatmul.mubr.bf16.gmra.mrb[0].mxu0 %v1787
    %v1864 = vpop.f32.mrb[0].mxu0
    %v1865 = vadd.f32 0.0, %v1864
    %v1866 = vpop.f32.mrb[0].mxu0
    %v1867 = vpop.f32.mrb[0].mxu0
    %v1868 = vadd.f32 0.0, %v1867
    %v1869 = vpop.f32.mrb[0].mxu0
    %1870 = vmatprep.mubr.bf16.mxu0 0
    %1871 = vmatmul.mubr.bf16.gmra.mrb[0].mxu0 %v1790
    %v1872 = vpop.f32.mrb[0].mxu0
    %v1873 = vadd.f32 0.0, %v1872
    %v1874 = vpop.f32.mrb[0].mxu0
    %v1875 = vpop.f32.mrb[0].mxu0
    %v1876 = vadd.f32 0.0, %v1875
    %v1877 = vpop.f32.mrb[0].mxu0
    %1878 = vmatprep.mubr.bf16.mxu0 0
    %1879 = vmatmul.mubr.bf16.gmra.mrb[0].mxu0 %v1793
    %v1880 = vpop.f32.mrb[0].mxu0
    %v1881 = vadd.f32 0.0, %v1880
    %v1882 = vpop.f32.mrb[0].mxu0
    %v1883 = vpop.f32.mrb[0].mxu0
    %v1884 = vadd.f32 0.0, %v1883
    %v1885 = vpop.f32.mrb[0].mxu0
    %1886 = vmatprep.mubr.bf16.mxu0 0
    %1887 = vmatmul.mubr.bf16.gmra.mrb[0].mxu0 %v1796
    %v1888 = vpop.f32.mrb[0].mxu0
    %v1889 = vadd.f32 0.0, %v1888
    %v1890 = vpop.f32.mrb[0].mxu0
    %v1891 = vpop.f32.mrb[0].mxu0
    %v1892 = vadd.f32 0.0, %v1891
    %v1893 = vpop.f32.mrb[0].mxu0
    %1894 = vdwg.mxu0
    %v1895 = vadd.f32 %v1446, %v1833
    %v1896 = vadd.f32 %v1447, %v1836
    %v1897 = vadd.f32 %v1448, %v1841
    %v1898 = vadd.f32 %v1449, %v1844
    %v1899 = vadd.f32 %v1450, %v1849
    %v1900 = vadd.f32 %v1451, %v1852
    %v1901 = vadd.f32 %v1452, %v1857
    %v1902 = vadd.f32 %v1453, %v1860
    %v1903 = vadd.f32 %v1454, %v1865
    %v1904 = vadd.f32 %v1455, %v1868
    %v1905 = vadd.f32 %v1456, %v1873
    %v1906 = vadd.f32 %v1457, %v1876
    %v1907 = vadd.f32 %v1458, %v1881
    %v1908 = vadd.f32 %v1459, %v1884
    %v1909 = vadd.f32 %v1460, %v1889
    %v1910 = vadd.f32 %v1461, %v1892
    %v1911 = vld [vmem:[%s198] sm:$0xe]
    %v1912 = vld [vmem:[%s198 + $0x8] sm:$0xe]
    %v1913 = vld [vmem:[%s198 + $0x10] sm:$0xe]
    %v1914 = vld [vmem:[%s198 + $0x18] sm:$0xe]
    %v1915 = vld [vmem:[%s198 + $0x20] sm:$0xe]
    %v1916 = vld [vmem:[%s198 + $0x28] sm:$0xe]
    %v1917 = vld [vmem:[%s198 + $0x30] sm:$0xe]
    %v1918 = vld [vmem:[%s198 + $0x38] sm:$0xe]
    %v1919 = vld [vmem:[%s198 + $0x50] sm:$0xe]
    %v1920 = vld [vmem:[%s198 + $0x58] sm:$0xe]
    %v1921 = vld [vmem:[%s198 + $0x60] sm:$0xe]
    %v1922 = vld [vmem:[%s198 + $0x68] sm:$0xe]
    %v1923 = vld [vmem:[%s198 + $0x70] sm:$0xe]
    %v1924 = vld [vmem:[%s198 + $0x78] sm:$0xe]
    %v1925 = vld [vmem:[%s198 + $0x80] sm:$0xe]
    %v1926 = vld [vmem:[%s198 + $0x88] sm:$0xe]
    %v1959 = vrot.slane %v1911, 5
    %v1960 = vrot.slane %v1959, 4
    %v1961 = vrot.slane %v1463, 5
    %v1962 = vsel %vm550, %v1960, %v1961
    %v1963 = vrot.slane %v1912, 5
    %v1964 = vrot.slane %v1963, 4
    %v1965 = vrot.slane %v1465, 5
    %v1966 = vsel %vm550, %v1964, %v1965
    %v1967 = vrot.slane %v1913, 5
    %v1968 = vrot.slane %v1967, 4
    %v1969 = vrot.slane %v1467, 5
    %v1970 = vsel %vm550, %v1968, %v1969
    %v1971 = vrot.slane %v1914, 5
    %v1972 = vrot.slane %v1971, 4
    %v1973 = vrot.slane %v1469, 5
    %v1974 = vsel %vm550, %v1972, %v1973
    %v1975 = vrot.slane %v1915, 5
    %v1976 = vrot.slane %v1975, 4
    %v1977 = vrot.slane %v1471, 5
    %v1978 = vsel %vm550, %v1976, %v1977
    %v1979 = vrot.slane %v1916, 5
    %v1980 = vrot.slane %v1979, 4
    %v1981 = vrot.slane %v1473, 5
    %v1982 = vsel %vm550, %v1980, %v1981
    %v1983 = vrot.slane %v1917, 5
    %v1984 = vrot.slane %v1983, 4
    %v1985 = vrot.slane %v1475, 5
    %v1986 = vsel %vm550, %v1984, %v1985
    %v1987 = vrot.slane %v1918, 5
    %v1988 = vrot.slane %v1987, 4
    %v1989 = vrot.slane %v1477, 5
    %v1990 = vsel %vm550, %v1988, %v1989
    %v1991 = vrot.slane %v1919, 5
    %v1992 = vrot.slane %v1991, 4
    %v1993 = vrot.slane %v1479, 5
    %v1994 = vsel %vm550, %v1992, %v1993
    %v1995 = vrot.slane %v1920, 5
    %v1996 = vrot.slane %v1995, 4
    %v1997 = vrot.slane %v1481, 5
    %v1998 = vsel %vm550, %v1996, %v1997
    %v1999 = vrot.slane %v1921, 5
    %v2000 = vrot.slane %v1999, 4
    %v2001 = vrot.slane %v1483, 5
    %v2002 = vsel %vm550, %v2000, %v2001
    %v2003 = vrot.slane %v1922, 5
    %v2004 = vrot.slane %v2003, 4
    %v2005 = vrot.slane %v1485, 5
    %v2006 = vsel %vm550, %v2004, %v2005
    %v2007 = vrot.slane %v1923, 5
    %v2008 = vrot.slane %v2007, 4
    %v2009 = vrot.slane %v1487, 5
    %v2010 = vsel %vm550, %v2008, %v2009
    %v2011 = vrot.slane %v1924, 5
    %v2012 = vrot.slane %v2011, 4
    %v2013 = vrot.slane %v1489, 5
    %v2014 = vsel %vm550, %v2012, %v2013
    %v2015 = vrot.slane %v1925, 5
    %v2016 = vrot.slane %v2015, 4
    %v2017 = vrot.slane %v1491, 5
    %v2018 = vsel %vm550, %v2016, %v2017
    %v2019 = vrot.slane %v1926, 5
    %v2020 = vrot.slane %v2019, 4
    %v2021 = vrot.slane %v1493, 5
    %v2022 = vsel %vm550, %v2020, %v2021
    %v2023 = vld [vmem:[%s1 + $0x80] sm:$0xf]
    %v2024 = vld [vmem:[%s1 + $0x84] sm:$0xf]
    %v2025 = vld [vmem:[%s1 + $0x88] sm:$0xf]
    %v2026 = vld [vmem:[%s1 + $0x8c] sm:$0xf]
    %v2027 = vld [vmem:[%s1 + $0x90] sm:$0xf]
    %v2028 = vld [vmem:[%s1 + $0x94] sm:$0xf]
    %v2029 = vld [vmem:[%s1 + $0x98] sm:$0xf]
    %v2030 = vld [vmem:[%s1 + $0x9c] sm:$0xf]
    %v2031 = vunpack.c.l.b16 %v1962
    %v2032 = vunpack.c.l.b16 %v1966
    %v2033 = vunpack.c.l.b16 %v1970
    %v2034 = vunpack.c.l.b16 %v1974
    %v2035 = vunpack.c.l.b16 %v1978
    %v2036 = vunpack.c.l.b16 %v1982
    %v2037 = vunpack.c.l.b16 %v1986
    %v2038 = vunpack.c.l.b16 %v1990
    %v2039 = vunpack.c.l.b16 %v1994
    %v2040 = vunpack.c.l.b16 %v1998
    %v2041 = vunpack.c.l.b16 %v2002
    %v2042 = vunpack.c.l.b16 %v2006
    %v2043 = vunpack.c.l.b16 %v2010
    %v2044 = vunpack.c.l.b16 %v2014
    %v2045 = vunpack.c.l.b16 %v2018
    %v2046 = vunpack.c.l.b16 %v2022
    %v2047 = vpack.c.b16 %v2032, %v2031
    %v2048 = vpack.c.b16 %v2034, %v2033
    %v2049 = vpack.c.b16 %v2036, %v2035
    %v2050 = vpack.c.b16 %v2038, %v2037
    %v2051 = vpack.c.b16 %v2040, %v2039
    %v2052 = vpack.c.b16 %v2042, %v2041
    %v2053 = vpack.c.b16 %v2044, %v2043
    %v2054 = vpack.c.b16 %v2046, %v2045
    %v2063 = vunpack.c.l.b16 %v2023
    %v2064 = vunpack.c.l.b16 %v2024
    %v2065 = vunpack.c.l.b16 %v2025
    %v2066 = vunpack.c.l.b16 %v2026
    %v2067 = vunpack.c.l.b16 %v2027
    %v2068 = vunpack.c.l.b16 %v2028
    %v2069 = vunpack.c.l.b16 %v2029
    %v2070 = vunpack.c.l.b16 %v2030
    %v2071 = vpack.c.b16 %v2064, %v2063
    %v2072 = vpack.c.b16 %v2066, %v2065
    %v2073 = vpack.c.b16 %v2068, %v2067
    %v2074 = vpack.c.b16 %v2070, %v2069
    %v2080 = vsel %vm671, %v2047, 0
    %v2083 = vsel %vm671, %v2048, 0
    %v2086 = vsel %vm671, %v2049, 0
    %v2089 = vsel %vm671, %v2050, 0
    %v2092 = vsel %vm671, %v2051, 0
    %v2095 = vsel %vm671, %v2052, 0
    %v2098 = vsel %vm671, %v2053, 0
    %v2101 = vsel %vm671, %v2054, 0
    %2103 = vmatprep.subr.bf16.mxu0 0
    %2104 = vmatpush1.bf16.msra.mxu0 %v2071
    %2105 = vmatprep.subr.bf16.mxu0 0
    %2106 = vmatpush1.bf16.msra.mxu0 %v2072
    %2107 = vmatprep.subr.bf16.mxu0 0
    %2108 = vmatpush1.bf16.msra.mxu0 %v2073
    %2109 = vmatprep.subr.bf16.mxu0 0
    %2110 = vmatpush1.bf16.msra.mxu0 %v2074
    %2111 = vmatprep.subr.bf16.mxu0 0
    %2112 = vmatpush1.bf16.msra.mxu0 0
    %2113 = vmatprep.subr.bf16.mxu0 0
    %2114 = vmatpush1.bf16.msra.mxu0 0
    %2115 = vmatprep.subr.bf16.mxu0 0
    %2116 = vmatpush1.bf16.msra.mxu0 0
    %2117 = vmatprep.subr.bf16.mxu0 0
    %2118 = vmatpush1.bf16.msra.mxu0 0
    %2119 = vmatprep.subr.bf16.mxu0 0
    %2120 = vmatpush1.bf16.msra.mxu0 0
    %2121 = vmatprep.subr.bf16.mxu0 0
    %2122 = vmatpush1.bf16.msra.mxu0 0
    %2123 = vmatprep.subr.bf16.mxu0 0
    %2124 = vmatpush1.bf16.msra.mxu0 0
    %2125 = vmatprep.subr.bf16.mxu0 0
    %2126 = vmatpush1.bf16.msra.mxu0 0
    %2127 = vmatprep.subr.bf16.mxu0 0
    %2128 = vmatpush1.bf16.msra.mxu0 0
    %2129 = vmatprep.subr.bf16.mxu0 0
    %2130 = vmatpush1.bf16.msra.mxu0 0
    %2131 = vmatprep.subr.bf16.mxu0 0
    %2132 = vmatpush1.bf16.msra.mxu0 0
    %2133 = vmatprep.subr.bf16.mxu0 0
    %2134 = vmatpush1.bf16.msra.mxu0 0
    %2135 = vmatprep.mubr.bf16.mxu0 0
    %2136 = vmatmul.mubr.bf16.gmra.mrb[0].mxu0 %v2080
    %v2137 = vpop.f32.mrb[0].mxu0
    %v2138 = vadd.f32 0.0, %v2137
    %v2139 = vpop.f32.mrb[0].mxu0
    %v2140 = vpop.f32.mrb[0].mxu0
    %v2141 = vadd.f32 0.0, %v2140
    %v2142 = vpop.f32.mrb[0].mxu0
    %2143 = vmatprep.mubr.bf16.mxu0 0
    %2144 = vmatmul.mubr.bf16.gmra.mrb[0].mxu0 %v2083
    %v2145 = vpop.f32.mrb[0].mxu0
    %v2146 = vadd.f32 0.0, %v2145
    %v2147 = vpop.f32.mrb[0].mxu0
    %v2148 = vpop.f32.mrb[0].mxu0
    %v2149 = vadd.f32 0.0, %v2148
    %v2150 = vpop.f32.mrb[0].mxu0
    %2151 = vmatprep.mubr.bf16.mxu0 0
    %2152 = vmatmul.mubr.bf16.gmra.mrb[0].mxu0 %v2086
    %v2153 = vpop.f32.mrb[0].mxu0
    %v2154 = vadd.f32 0.0, %v2153
    %v2155 = vpop.f32.mrb[0].mxu0
    %v2156 = vpop.f32.mrb[0].mxu0
    %v2157 = vadd.f32 0.0, %v2156
    %v2158 = vpop.f32.mrb[0].mxu0
    %2159 = vmatprep.mubr.bf16.mxu0 0
    %2160 = vmatmul.mubr.bf16.gmra.mrb[0].mxu0 %v2089
    %v2161 = vpop.f32.mrb[0].mxu0
    %v2162 = vadd.f32 0.0, %v2161
    %v2163 = vpop.f32.mrb[0].mxu0
    %v2164 = vpop.f32.mrb[0].mxu0
    %v2165 = vadd.f32 0.0, %v2164
    %v2166 = vpop.f32.mrb[0].mxu0
    %2167 = vmatprep.mubr.bf16.mxu0 0
    %2168 = vmatmul.mubr.bf16.gmra.mrb[0].mxu0 %v2092
    %v2169 = vpop.f32.mrb[0].mxu0
    %v2170 = vadd.f32 0.0, %v2169
    %v2171 = vpop.f32.mrb[0].mxu0
    %v2172 = vpop.f32.mrb[0].mxu0
    %v2173 = vadd.f32 0.0, %v2172
    %v2174 = vpop.f32.mrb[0].mxu0
    %2175 = vmatprep.mubr.bf16.mxu0 0
    %2176 = vmatmul.mubr.bf16.gmra.mrb[0].mxu0 %v2095
    %v2177 = vpop.f32.mrb[0].mxu0
    %v2178 = vadd.f32 0.0, %v2177
    %v2179 = vpop.f32.mrb[0].mxu0
    %v2180 = vpop.f32.mrb[0].mxu0
    %v2181 = vadd.f32 0.0, %v2180
    %v2182 = vpop.f32.mrb[0].mxu0
    %2183 = vmatprep.mubr.bf16.mxu0 0
    %2184 = vmatmul.mubr.bf16.gmra.mrb[0].mxu0 %v2098
    %v2185 = vpop.f32.mrb[0].mxu0
    %v2186 = vadd.f32 0.0, %v2185
    %v2187 = vpop.f32.mrb[0].mxu0
    %v2188 = vpop.f32.mrb[0].mxu0
    %v2189 = vadd.f32 0.0, %v2188
    %v2190 = vpop.f32.mrb[0].mxu0
    %2191 = vmatprep.mubr.bf16.mxu0 0
    %2192 = vmatmul.mubr.bf16.gmra.mrb[0].mxu0 %v2101
    %v2193 = vpop.f32.mrb[0].mxu0
    %v2194 = vadd.f32 0.0, %v2193
    %v2195 = vpop.f32.mrb[0].mxu0
    %v2196 = vpop.f32.mrb[0].mxu0
    %v2197 = vadd.f32 0.0, %v2196
    %v2198 = vpop.f32.mrb[0].mxu0
    %2199 = vdwg.mxu0
    %v2200 = vadd.f32 %v1895, %v2138
    %v2201 = vadd.f32 %v1896, %v2141
    %v2202 = vadd.f32 %v1897, %v2146
    %v2203 = vadd.f32 %v1898, %v2149
    %v2204 = vadd.f32 %v1899, %v2154
    %v2205 = vadd.f32 %v1900, %v2157
    %v2206 = vadd.f32 %v1901, %v2162
    %v2207 = vadd.f32 %v1902, %v2165
    %v2208 = vadd.f32 %v1903, %v2170
    %v2209 = vadd.f32 %v1904, %v2173
    %v2210 = vadd.f32 %v1905, %v2178
    %v2211 = vadd.f32 %v1906, %v2181
    %v2212 = vadd.f32 %v1907, %v2186
    %v2213 = vadd.f32 %v1908, %v2189
    %v2214 = vadd.f32 %v1909, %v2194
    %v2215 = vadd.f32 %v1910, %v2197
    %v2216 = vld [vmem:[%s198 + $0x4] sm:$0x3]
    %v2217 = vld [vmem:[%s198 + $0xc] sm:$0x3]
    %v2218 = vld [vmem:[%s198 + $0x14] sm:$0x3]
    %v2219 = vld [vmem:[%s198 + $0x1c] sm:$0x3]
    %v2220 = vld [vmem:[%s198 + $0x24] sm:$0x3]
    %v2221 = vld [vmem:[%s198 + $0x2c] sm:$0x3]
    %v2222 = vld [vmem:[%s198 + $0x34] sm:$0x3]
    %v2223 = vld [vmem:[%s198 + $0x3c] sm:$0x3]
    %v2224 = vld [vmem:[%s198 + $0x54] sm:$0x3]
    %v2225 = vld [vmem:[%s198 + $0x5c] sm:$0x3]
    %v2226 = vld [vmem:[%s198 + $0x64] sm:$0x3]
    %v2227 = vld [vmem:[%s198 + $0x6c] sm:$0x3]
    %v2228 = vld [vmem:[%s198 + $0x74] sm:$0x3]
    %v2229 = vld [vmem:[%s198 + $0x7c] sm:$0x3]
    %v2230 = vld [vmem:[%s198 + $0x84] sm:$0x3]
    %v2231 = vld [vmem:[%s198 + $0x8c] sm:$0x3]
    %v2233 = vshrl.u32 %v1911, 16
    %v2235 = vrot.slane %v2233, 5
    %v2236 = vshll.u32 %v1911, 16
    %v2238 = vrot.slane %v2236, 6
    %v2239 = vor.u32 %v2235, %v2238
    %v2240 = vrot.slane %v2239, 4
    %v2242 = vshrl.u32 %v2216, 16
    %v2244 = vrot.slane %v2242, 5
    %v2245 = vshll.u32 %v2216, 16
    %v2247 = vrot.slane %v2245, 6
    %v2248 = vor.u32 %v2244, %v2247
    %v2249 = vsel %vm980, %v2240, %v2248
    %v2251 = vshrl.u32 %v1912, 16
    %v2253 = vrot.slane %v2251, 5
    %v2254 = vshll.u32 %v1912, 16
    %v2256 = vrot.slane %v2254, 6
    %v2257 = vor.u32 %v2253, %v2256
    %v2258 = vrot.slane %v2257, 4
    %v2260 = vshrl.u32 %v2217, 16
    %v2262 = vrot.slane %v2260, 5
    %v2263 = vshll.u32 %v2217, 16
    %v2265 = vrot.slane %v2263, 6
    %v2266 = vor.u32 %v2262, %v2265
    %v2267 = vsel %vm980, %v2258, %v2266
    %v2269 = vshrl.u32 %v1913, 16
    %v2271 = vrot.slane %v2269, 5
    %v2272 = vshll.u32 %v1913, 16
    %v2274 = vrot.slane %v2272, 6
    %v2275 = vor.u32 %v2271, %v2274
    %v2276 = vrot.slane %v2275, 4
    %v2278 = vshrl.u32 %v2218, 16
    %v2280 = vrot.slane %v2278, 5
    %v2281 = vshll.u32 %v2218, 16
    %v2283 = vrot.slane %v2281, 6
    %v2284 = vor.u32 %v2280, %v2283
    %v2285 = vsel %vm980, %v2276, %v2284
    %v2287 = vshrl.u32 %v1914, 16
    %v2289 = vrot.slane %v2287, 5
    %v2290 = vshll.u32 %v1914, 16
    %v2292 = vrot.slane %v2290, 6
    %v2293 = vor.u32 %v2289, %v2292
    %v2294 = vrot.slane %v2293, 4
    %v2296 = vshrl.u32 %v2219, 16
    %v2298 = vrot.slane %v2296, 5
    %v2299 = vshll.u32 %v2219, 16
    %v2301 = vrot.slane %v2299, 6
    %v2302 = vor.u32 %v2298, %v2301
    %v2303 = vsel %vm980, %v2294, %v2302
    %v2305 = vshrl.u32 %v1915, 16
    %v2307 = vrot.slane %v2305, 5
    %v2308 = vshll.u32 %v1915, 16
    %v2310 = vrot.slane %v2308, 6
    %v2311 = vor.u32 %v2307, %v2310
    %v2312 = vrot.slane %v2311, 4
    %v2314 = vshrl.u32 %v2220, 16
    %v2316 = vrot.slane %v2314, 5
    %v2317 = vshll.u32 %v2220, 16
    %v2319 = vrot.slane %v2317, 6
    %v2320 = vor.u32 %v2316, %v2319
    %v2321 = vsel %vm980, %v2312, %v2320
    %v2323 = vshrl.u32 %v1916, 16
    %v2325 = vrot.slane %v2323, 5
    %v2326 = vshll.u32 %v1916, 16
    %v2328 = vrot.slane %v2326, 6
    %v2329 = vor.u32 %v2325, %v2328
    %v2330 = vrot.slane %v2329, 4
    %v2332 = vshrl.u32 %v2221, 16
    %v2334 = vrot.slane %v2332, 5
    %v2335 = vshll.u32 %v2221, 16
    %v2337 = vrot.slane %v2335, 6
    %v2338 = vor.u32 %v2334, %v2337
    %v2339 = vsel %vm980, %v2330, %v2338
    %v2341 = vshrl.u32 %v1917, 16
    %v2343 = vrot.slane %v2341, 5
    %v2344 = vshll.u32 %v1917, 16
    %v2346 = vrot.slane %v2344, 6
    %v2347 = vor.u32 %v2343, %v2346
    %v2348 = vrot.slane %v2347, 4
    %v2350 = vshrl.u32 %v2222, 16
    %v2352 = vrot.slane %v2350, 5
    %v2353 = vshll.u32 %v2222, 16
    %v2355 = vrot.slane %v2353, 6
    %v2356 = vor.u32 %v2352, %v2355
    %v2357 = vsel %vm980, %v2348, %v2356
    %v2359 = vshrl.u32 %v1918, 16
    %v2361 = vrot.slane %v2359, 5
    %v2362 = vshll.u32 %v1918, 16
    %v2364 = vrot.slane %v2362, 6
    %v2365 = vor.u32 %v2361, %v2364
    %v2366 = vrot.slane %v2365, 4
    %v2368 = vshrl.u32 %v2223, 16
    %v2370 = vrot.slane %v2368, 5
    %v2371 = vshll.u32 %v2223, 16
    %v2373 = vrot.slane %v2371, 6
    %v2374 = vor.u32 %v2370, %v2373
    %v2375 = vsel %vm980, %v2366, %v2374
    %v2377 = vshrl.u32 %v1919, 16
    %v2379 = vrot.slane %v2377, 5
    %v2380 = vshll.u32 %v1919, 16
    %v2382 = vrot.slane %v2380, 6
    %v2383 = vor.u32 %v2379, %v2382
    %v2384 = vrot.slane %v2383, 4
    %v2386 = vshrl.u32 %v2224, 16
    %v2388 = vrot.slane %v2386, 5
    %v2389 = vshll.u32 %v2224, 16
    %v2391 = vrot.slane %v2389, 6
    %v2392 = vor.u32 %v2388, %v2391
    %v2393 = vsel %vm980, %v2384, %v2392
    %v2395 = vshrl.u32 %v1920, 16
    %v2397 = vrot.slane %v2395, 5
    %v2398 = vshll.u32 %v1920, 16
    %v2400 = vrot.slane %v2398, 6
    %v2401 = vor.u32 %v2397, %v2400
    %v2402 = vrot.slane %v2401, 4
    %v2404 = vshrl.u32 %v2225, 16
    %v2406 = vrot.slane %v2404, 5
    %v2407 = vshll.u32 %v2225, 16
    %v2409 = vrot.slane %v2407, 6
    %v2410 = vor.u32 %v2406, %v2409
    %v2411 = vsel %vm980, %v2402, %v2410
    %v2413 = vshrl.u32 %v1921, 16
    %v2415 = vrot.slane %v2413, 5
    %v2416 = vshll.u32 %v1921, 16
    %v2418 = vrot.slane %v2416, 6
    %v2419 = vor.u32 %v2415, %v2418
    %v2420 = vrot.slane %v2419, 4
    %v2422 = vshrl.u32 %v2226, 16
    %v2424 = vrot.slane %v2422, 5
    %v2425 = vshll.u32 %v2226, 16
    %v2427 = vrot.slane %v2425, 6
    %v2428 = vor.u32 %v2424, %v2427
    %v2429 = vsel %vm980, %v2420, %v2428
    %v2431 = vshrl.u32 %v1922, 16
    %v2433 = vrot.slane %v2431, 5
    %v2434 = vshll.u32 %v1922, 16
    %v2436 = vrot.slane %v2434, 6
    %v2437 = vor.u32 %v2433, %v2436
    %v2438 = vrot.slane %v2437, 4
    %v2440 = vshrl.u32 %v2227, 16
    %v2442 = vrot.slane %v2440, 5
    %v2443 = vshll.u32 %v2227, 16
    %v2445 = vrot.slane %v2443, 6
    %v2446 = vor.u32 %v2442, %v2445
    %v2447 = vsel %vm980, %v2438, %v2446
    %v2449 = vshrl.u32 %v1923, 16
    %v2451 = vrot.slane %v2449, 5
    %v2452 = vshll.u32 %v1923, 16
    %v2454 = vrot.slane %v2452, 6
    %v2455 = vor.u32 %v2451, %v2454
    %v2456 = vrot.slane %v2455, 4
    %v2458 = vshrl.u32 %v2228, 16
    %v2460 = vrot.slane %v2458, 5
    %v2461 = vshll.u32 %v2228, 16
    %v2463 = vrot.slane %v2461, 6
    %v2464 = vor.u32 %v2460, %v2463
    %v2465 = vsel %vm980, %v2456, %v2464
    %v2467 = vshrl.u32 %v1924, 16
    %v2469 = vrot.slane %v2467, 5
    %v2470 = vshll.u32 %v1924, 16
    %v2472 = vrot.slane %v2470, 6
    %v2473 = vor.u32 %v2469, %v2472
    %v2474 = vrot.slane %v2473, 4
    %v2476 = vshrl.u32 %v2229, 16
    %v2478 = vrot.slane %v2476, 5
    %v2479 = vshll.u32 %v2229, 16
    %v2481 = vrot.slane %v2479, 6
    %v2482 = vor.u32 %v2478, %v2481
    %v2483 = vsel %vm980, %v2474, %v2482
    %v2485 = vshrl.u32 %v1925, 16
    %v2487 = vrot.slane %v2485, 5
    %v2488 = vshll.u32 %v1925, 16
    %v2490 = vrot.slane %v2488, 6
    %v2491 = vor.u32 %v2487, %v2490
    %v2492 = vrot.slane %v2491, 4
    %v2494 = vshrl.u32 %v2230, 16
    %v2496 = vrot.slane %v2494, 5
    %v2497 = vshll.u32 %v2230, 16
    %v2499 = vrot.slane %v2497, 6
    %v2500 = vor.u32 %v2496, %v2499
    %v2501 = vsel %vm980, %v2492, %v2500
    %v2503 = vshrl.u32 %v1926, 16
    %v2505 = vrot.slane %v2503, 5
    %v2506 = vshll.u32 %v1926, 16
    %v2508 = vrot.slane %v2506, 6
    %v2509 = vor.u32 %v2505, %v2508
    %v2510 = vrot.slane %v2509, 4
    %v2512 = vshrl.u32 %v2231, 16
    %v2514 = vrot.slane %v2512, 5
    %v2515 = vshll.u32 %v2231, 16
    %v2517 = vrot.slane %v2515, 6
    %v2518 = vor.u32 %v2514, %v2517
    %v2519 = vsel %vm980, %v2510, %v2518
    %v2520 = vld [vmem:[%s1 + $0xa0] sm:$0xf]
    %v2521 = vld [vmem:[%s1 + $0xa4] sm:$0xf]
    %v2522 = vld [vmem:[%s1 + $0xa8] sm:$0xf]
    %v2523 = vld [vmem:[%s1 + $0xac] sm:$0xf]
    %v2524 = vld [vmem:[%s1 + $0xb0] sm:$0xf]
    %v2525 = vld [vmem:[%s1 + $0xb4] sm:$0xf]
    %v2526 = vld [vmem:[%s1 + $0xb8] sm:$0xf]
    %v2527 = vld [vmem:[%s1 + $0xbc] sm:$0xf]
    %v2528 = vunpack.c.l.b16 %v2249
    %v2529 = vunpack.c.l.b16 %v2267
    %v2530 = vunpack.c.l.b16 %v2285
    %v2531 = vunpack.c.l.b16 %v2303
    %v2532 = vunpack.c.l.b16 %v2321
    %v2533 = vunpack.c.l.b16 %v2339
    %v2534 = vunpack.c.l.b16 %v2357
    %v2535 = vunpack.c.l.b16 %v2375
    %v2536 = vunpack.c.l.b16 %v2393
    %v2537 = vunpack.c.l.b16 %v2411
    %v2538 = vunpack.c.l.b16 %v2429
    %v2539 = vunpack.c.l.b16 %v2447
    %v2540 = vunpack.c.l.b16 %v2465
    %v2541 = vunpack.c.l.b16 %v2483
    %v2542 = vunpack.c.l.b16 %v2501
    %v2543 = vunpack.c.l.b16 %v2519
    %v2544 = vpack.c.b16 %v2529, %v2528
    %v2545 = vpack.c.b16 %v2531, %v2530
    %v2546 = vpack.c.b16 %v2533, %v2532
    %v2547 = vpack.c.b16 %v2535, %v2534
    %v2548 = vpack.c.b16 %v2537, %v2536
    %v2549 = vpack.c.b16 %v2539, %v2538
    %v2550 = vpack.c.b16 %v2541, %v2540
    %v2551 = vpack.c.b16 %v2543, %v2542
    %v2560 = vunpack.c.l.b16 %v2520
    %v2561 = vunpack.c.l.b16 %v2521
    %v2562 = vunpack.c.l.b16 %v2522
    %v2563 = vunpack.c.l.b16 %v2523
    %v2564 = vunpack.c.l.b16 %v2524
    %v2565 = vunpack.c.l.b16 %v2525
    %v2566 = vunpack.c.l.b16 %v2526
    %v2567 = vunpack.c.l.b16 %v2527
    %v2568 = vpack.c.b16 %v2561, %v2560
    %v2569 = vpack.c.b16 %v2563, %v2562
    %v2570 = vpack.c.b16 %v2565, %v2564
    %v2571 = vpack.c.b16 %v2567, %v2566
    %v2577 = vsel %vm671, %v2544, 0
    %v2580 = vsel %vm671, %v2545, 0
    %v2583 = vsel %vm671, %v2546, 0
    %v2586 = vsel %vm671, %v2547, 0
    %v2589 = vsel %vm671, %v2548, 0
    %v2592 = vsel %vm671, %v2549, 0
    %v2595 = vsel %vm671, %v2550, 0
    %v2598 = vsel %vm671, %v2551, 0
    %2600 = vmatprep.subr.bf16.mxu0 0
    %2601 = vmatpush1.bf16.msra.mxu0 %v2568
    %2602 = vmatprep.subr.bf16.mxu0 0
    %2603 = vmatpush1.bf16.msra.mxu0 %v2569
    %2604 = vmatprep.subr.bf16.mxu0 0
    %2605 = vmatpush1.bf16.msra.mxu0 %v2570
    %2606 = vmatprep.subr.bf16.mxu0 0
    %2607 = vmatpush1.bf16.msra.mxu0 %v2571
    %2608 = vmatprep.subr.bf16.mxu0 0
    %2609 = vmatpush1.bf16.msra.mxu0 0
    %2610 = vmatprep.subr.bf16.mxu0 0
    %2611 = vmatpush1.bf16.msra.mxu0 0
    %2612 = vmatprep.subr.bf16.mxu0 0
    %2613 = vmatpush1.bf16.msra.mxu0 0
    %2614 = vmatprep.subr.bf16.mxu0 0
    %2615 = vmatpush1.bf16.msra.mxu0 0
    %2616 = vmatprep.subr.bf16.mxu0 0
    %2617 = vmatpush1.bf16.msra.mxu0 0
    %2618 = vmatprep.subr.bf16.mxu0 0
    %2619 = vmatpush1.bf16.msra.mxu0 0
    %2620 = vmatprep.subr.bf16.mxu0 0
    %2621 = vmatpush1.bf16.msra.mxu0 0
    %2622 = vmatprep.subr.bf16.mxu0 0
    %2623 = vmatpush1.bf16.msra.mxu0 0
    %2624 = vmatprep.subr.bf16.mxu0 0
    %2625 = vmatpush1.bf16.msra.mxu0 0
    %2626 = vmatprep.subr.bf16.mxu0 0
    %2627 = vmatpush1.bf16.msra.mxu0 0
    %2628 = vmatprep.subr.bf16.mxu0 0
    %2629 = vmatpush1.bf16.msra.mxu0 0
    %2630 = vmatprep.subr.bf16.mxu0 0
    %2631 = vmatpush1.bf16.msra.mxu0 0
    %2632 = vmatprep.mubr.bf16.mxu0 0
    %2633 = vmatmul.mubr.bf16.gmra.mrb[0].mxu0 %v2577
    %v2634 = vpop.f32.mrb[0].mxu0
    %v2635 = vadd.f32 0.0, %v2634
    %v2636 = vpop.f32.mrb[0].mxu0
    %v2637 = vpop.f32.mrb[0].mxu0
    %v2638 = vadd.f32 0.0, %v2637
    %v2639 = vpop.f32.mrb[0].mxu0
    %2640 = vmatprep.mubr.bf16.mxu0 0
    %2641 = vmatmul.mubr.bf16.gmra.mrb[0].mxu0 %v2580
    %v2642 = vpop.f32.mrb[0].mxu0
    %v2643 = vadd.f32 0.0, %v2642
    %v2644 = vpop.f32.mrb[0].mxu0
    %v2645 = vpop.f32.mrb[0].mxu0
    %v2646 = vadd.f32 0.0, %v2645
    %v2647 = vpop.f32.mrb[0].mxu0
    %2648 = vmatprep.mubr.bf16.mxu0 0
    %2649 = vmatmul.mubr.bf16.gmra.mrb[0].mxu0 %v2583
    %v2650 = vpop.f32.mrb[0].mxu0
    %v2651 = vadd.f32 0.0, %v2650
    %v2652 = vpop.f32.mrb[0].mxu0
    %v2653 = vpop.f32.mrb[0].mxu0
    %v2654 = vadd.f32 0.0, %v2653
    %v2655 = vpop.f32.mrb[0].mxu0
    %2656 = vmatprep.mubr.bf16.mxu0 0
    %2657 = vmatmul.mubr.bf16.gmra.mrb[0].mxu0 %v2586
    %v2658 = vpop.f32.mrb[0].mxu0
    %v2659 = vadd.f32 0.0, %v2658
    %v2660 = vpop.f32.mrb[0].mxu0
    %v2661 = vpop.f32.mrb[0].mxu0
    %v2662 = vadd.f32 0.0, %v2661
    %v2663 = vpop.f32.mrb[0].mxu0
    %2664 = vmatprep.mubr.bf16.mxu0 0
    %2665 = vmatmul.mubr.bf16.gmra.mrb[0].mxu0 %v2589
    %v2666 = vpop.f32.mrb[0].mxu0
    %v2667 = vadd.f32 0.0, %v2666
    %v2668 = vpop.f32.mrb[0].mxu0
    %v2669 = vpop.f32.mrb[0].mxu0
    %v2670 = vadd.f32 0.0, %v2669
    %v2671 = vpop.f32.mrb[0].mxu0
    %2672 = vmatprep.mubr.bf16.mxu0 0
    %2673 = vmatmul.mubr.bf16.gmra.mrb[0].mxu0 %v2592
    %v2674 = vpop.f32.mrb[0].mxu0
    %v2675 = vadd.f32 0.0, %v2674
    %v2676 = vpop.f32.mrb[0].mxu0
    %v2677 = vpop.f32.mrb[0].mxu0
    %v2678 = vadd.f32 0.0, %v2677
    %v2679 = vpop.f32.mrb[0].mxu0
    %2680 = vmatprep.mubr.bf16.mxu0 0
    %2681 = vmatmul.mubr.bf16.gmra.mrb[0].mxu0 %v2595
    %v2682 = vpop.f32.mrb[0].mxu0
    %v2683 = vadd.f32 0.0, %v2682
    %v2684 = vpop.f32.mrb[0].mxu0
    %v2685 = vpop.f32.mrb[0].mxu0
    %v2686 = vadd.f32 0.0, %v2685
    %v2687 = vpop.f32.mrb[0].mxu0
    %2688 = vmatprep.mubr.bf16.mxu0 0
    %2689 = vmatmul.mubr.bf16.gmra.mrb[0].mxu0 %v2598
    %v2690 = vpop.f32.mrb[0].mxu0
    %v2691 = vadd.f32 0.0, %v2690
    %v2692 = vpop.f32.mrb[0].mxu0
    %v2693 = vpop.f32.mrb[0].mxu0
    %v2694 = vadd.f32 0.0, %v2693
    %v2695 = vpop.f32.mrb[0].mxu0
    %2696 = vdwg.mxu0
    %v2697 = vadd.f32 %v2200, %v2635
    %v2698 = vadd.f32 %v2201, %v2638
    %v2699 = vadd.f32 %v2202, %v2643
    %v2700 = vadd.f32 %v2203, %v2646
    %v2701 = vadd.f32 %v2204, %v2651
    %v2702 = vadd.f32 %v2205, %v2654
    %v2703 = vadd.f32 %v2206, %v2659
    %v2704 = vadd.f32 %v2207, %v2662
    %v2705 = vadd.f32 %v2208, %v2667
    %v2706 = vadd.f32 %v2209, %v2670
    %v2707 = vadd.f32 %v2210, %v2675
    %v2708 = vadd.f32 %v2211, %v2678
    %v2709 = vadd.f32 %v2212, %v2683
    %v2710 = vadd.f32 %v2213, %v2686
    %v2711 = vadd.f32 %v2214, %v2691
    %v2712 = vadd.f32 %v2215, %v2694
    %s2713 = scalar_lea.vmem [#allocation2], 16
    %v2714 = vld [vmem:[%s2713] sm:$0xf]
    %v2715 = vld [vmem:[%s2713 + $0x4] sm:$0x1]
    %v2716 = vld [vmem:[%s2713 + $0x8] sm:$0xf]
    %v2717 = vld [vmem:[%s2713 + $0xc] sm:$0x1]
    %v2718 = vld [vmem:[%s2713 + $0x10] sm:$0xf]
    %v2719 = vld [vmem:[%s2713 + $0x14] sm:$0x1]
    %v2720 = vld [vmem:[%s2713 + $0x18] sm:$0xf]
    %v2721 = vld [vmem:[%s2713 + $0x1c] sm:$0x1]
    %v2722 = vld [vmem:[%s2713 + $0x20] sm:$0xf]
    %v2723 = vld [vmem:[%s2713 + $0x24] sm:$0x1]
    %v2724 = vld [vmem:[%s2713 + $0x28] sm:$0xf]
    %v2725 = vld [vmem:[%s2713 + $0x2c] sm:$0x1]
    %v2726 = vld [vmem:[%s2713 + $0x30] sm:$0xf]
    %v2727 = vld [vmem:[%s2713 + $0x34] sm:$0x1]
    %v2728 = vld [vmem:[%s2713 + $0x38] sm:$0xf]
    %v2729 = vld [vmem:[%s2713 + $0x3c] sm:$0x1]
    %v2730 = vld [vmem:[%s2713 + $0x50] sm:$0xf]
    %v2731 = vld [vmem:[%s2713 + $0x54] sm:$0x1]
    %v2732 = vld [vmem:[%s2713 + $0x58] sm:$0xf]
    %v2733 = vld [vmem:[%s2713 + $0x5c] sm:$0x1]
    %v2734 = vld [vmem:[%s2713 + $0x60] sm:$0xf]
    %v2735 = vld [vmem:[%s2713 + $0x64] sm:$0x1]
    %v2736 = vld [vmem:[%s2713 + $0x68] sm:$0xf]
    %v2737 = vld [vmem:[%s2713 + $0x6c] sm:$0x1]
    %v2738 = vld [vmem:[%s2713 + $0x70] sm:$0xf]
    %v2739 = vld [vmem:[%s2713 + $0x74] sm:$0x1]
    %v2740 = vld [vmem:[%s2713 + $0x78] sm:$0xf]
    %v2741 = vld [vmem:[%s2713 + $0x7c] sm:$0x1]
    %v2742 = vld [vmem:[%s2713 + $0x80] sm:$0xf]
    %v2743 = vld [vmem:[%s2713 + $0x84] sm:$0x1]
    %v2744 = vld [vmem:[%s2713 + $0x88] sm:$0xf]
    %v2745 = vld [vmem:[%s2713 + $0x8c] sm:$0x1]
    %v2747 = vshrl.u32 %v2714, 16
    %v2749 = vrot.slane %v2747, 4
    %v2750 = vshll.u32 %v2714, 16
    %v2752 = vrot.slane %v2750, 5
    %v2753 = vor.u32 %v2749, %v2752
    %v2754 = vrot.slane %v2753, 4
    %v2756 = vshll.u32 %v2715, 16
    %v2758 = vrot.slane %v2756, 5
    %v2759 = vsel %vm267, %v2754, %v2758
    %v2761 = vshrl.u32 %v2716, 16
    %v2763 = vrot.slane %v2761, 4
    %v2764 = vshll.u32 %v2716, 16
    %v2766 = vrot.slane %v2764, 5
    %v2767 = vor.u32 %v2763, %v2766
    %v2768 = vrot.slane %v2767, 4
    %v2770 = vshll.u32 %v2717, 16
    %v2772 = vrot.slane %v2770, 5
    %v2773 = vsel %vm267, %v2768, %v2772
    %v2775 = vshrl.u32 %v2718, 16
    %v2777 = vrot.slane %v2775, 4
    %v2778 = vshll.u32 %v2718, 16
    %v2780 = vrot.slane %v2778, 5
    %v2781 = vor.u32 %v2777, %v2780
    %v2782 = vrot.slane %v2781, 4
    %v2784 = vshll.u32 %v2719, 16
    %v2786 = vrot.slane %v2784, 5
    %v2787 = vsel %vm267, %v2782, %v2786
    %v2789 = vshrl.u32 %v2720, 16
    %v2791 = vrot.slane %v2789, 4
    %v2792 = vshll.u32 %v2720, 16
    %v2794 = vrot.slane %v2792, 5
    %v2795 = vor.u32 %v2791, %v2794
    %v2796 = vrot.slane %v2795, 4
    %v2798 = vshll.u32 %v2721, 16
    %v2800 = vrot.slane %v2798, 5
    %v2801 = vsel %vm267, %v2796, %v2800
    %v2803 = vshrl.u32 %v2722, 16
    %v2805 = vrot.slane %v2803, 4
    %v2806 = vshll.u32 %v2722, 16
    %v2808 = vrot.slane %v2806, 5
    %v2809 = vor.u32 %v2805, %v2808
    %v2810 = vrot.slane %v2809, 4
    %v2812 = vshll.u32 %v2723, 16
    %v2814 = vrot.slane %v2812, 5
    %v2815 = vsel %vm267, %v2810, %v2814
    %v2817 = vshrl.u32 %v2724, 16
    %v2819 = vrot.slane %v2817, 4
    %v2820 = vshll.u32 %v2724, 16
    %v2822 = vrot.slane %v2820, 5
    %v2823 = vor.u32 %v2819, %v2822
    %v2824 = vrot.slane %v2823, 4
    %v2826 = vshll.u32 %v2725, 16
    %v2828 = vrot.slane %v2826, 5
    %v2829 = vsel %vm267, %v2824, %v2828
    %v2831 = vshrl.u32 %v2726, 16
    %v2833 = vrot.slane %v2831, 4
    %v2834 = vshll.u32 %v2726, 16
    %v2836 = vrot.slane %v2834, 5
    %v2837 = vor.u32 %v2833, %v2836
    %v2838 = vrot.slane %v2837, 4
    %v2840 = vshll.u32 %v2727, 16
    %v2842 = vrot.slane %v2840, 5
    %v2843 = vsel %vm267, %v2838, %v2842
    %v2845 = vshrl.u32 %v2728, 16
    %v2847 = vrot.slane %v2845, 4
    %v2848 = vshll.u32 %v2728, 16
    %v2850 = vrot.slane %v2848, 5
    %v2851 = vor.u32 %v2847, %v2850
    %v2852 = vrot.slane %v2851, 4
    %v2854 = vshll.u32 %v2729, 16
    %v2856 = vrot.slane %v2854, 5
    %v2857 = vsel %vm267, %v2852, %v2856
    %v2859 = vshrl.u32 %v2730, 16
    %v2861 = vrot.slane %v2859, 4
    %v2862 = vshll.u32 %v2730, 16
    %v2864 = vrot.slane %v2862, 5
    %v2865 = vor.u32 %v2861, %v2864
    %v2866 = vrot.slane %v2865, 4
    %v2868 = vshll.u32 %v2731, 16
    %v2870 = vrot.slane %v2868, 5
    %v2871 = vsel %vm267, %v2866, %v2870
    %v2873 = vshrl.u32 %v2732, 16
    %v2875 = vrot.slane %v2873, 4
    %v2876 = vshll.u32 %v2732, 16
    %v2878 = vrot.slane %v2876, 5
    %v2879 = vor.u32 %v2875, %v2878
    %v2880 = vrot.slane %v2879, 4
    %v2882 = vshll.u32 %v2733, 16
    %v2884 = vrot.slane %v2882, 5
    %v2885 = vsel %vm267, %v2880, %v2884
    %v2887 = vshrl.u32 %v2734, 16
    %v2889 = vrot.slane %v2887, 4
    %v2890 = vshll.u32 %v2734, 16
    %v2892 = vrot.slane %v2890, 5
    %v2893 = vor.u32 %v2889, %v2892
    %v2894 = vrot.slane %v2893, 4
    %v2896 = vshll.u32 %v2735, 16
    %v2898 = vrot.slane %v2896, 5
    %v2899 = vsel %vm267, %v2894, %v2898
    %v2901 = vshrl.u32 %v2736, 16
    %v2903 = vrot.slane %v2901, 4
    %v2904 = vshll.u32 %v2736, 16
    %v2906 = vrot.slane %v2904, 5
    %v2907 = vor.u32 %v2903, %v2906
    %v2908 = vrot.slane %v2907, 4
    %v2910 = vshll.u32 %v2737, 16
    %v2912 = vrot.slane %v2910, 5
    %v2913 = vsel %vm267, %v2908, %v2912
    %v2915 = vshrl.u32 %v2738, 16
    %v2917 = vrot.slane %v2915, 4
    %v2918 = vshll.u32 %v2738, 16
    %v2920 = vrot.slane %v2918, 5
    %v2921 = vor.u32 %v2917, %v2920
    %v2922 = vrot.slane %v2921, 4
    %v2924 = vshll.u32 %v2739, 16
    %v2926 = vrot.slane %v2924, 5
    %v2927 = vsel %vm267, %v2922, %v2926
    %v2929 = vshrl.u32 %v2740, 16
    %v2931 = vrot.slane %v2929, 4
    %v2932 = vshll.u32 %v2740, 16
    %v2934 = vrot.slane %v2932, 5
    %v2935 = vor.u32 %v2931, %v2934
    %v2936 = vrot.slane %v2935, 4
    %v2938 = vshll.u32 %v2741, 16
    %v2940 = vrot.slane %v2938, 5
    %v2941 = vsel %vm267, %v2936, %v2940
    %v2943 = vshrl.u32 %v2742, 16
    %v2945 = vrot.slane %v2943, 4
    %v2946 = vshll.u32 %v2742, 16
    %v2948 = vrot.slane %v2946, 5
    %v2949 = vor.u32 %v2945, %v2948
    %v2950 = vrot.slane %v2949, 4
    %v2952 = vshll.u32 %v2743, 16
    %v2954 = vrot.slane %v2952, 5
    %v2955 = vsel %vm267, %v2950, %v2954
    %v2957 = vshrl.u32 %v2744, 16
    %v2959 = vrot.slane %v2957, 4
    %v2960 = vshll.u32 %v2744, 16
    %v2962 = vrot.slane %v2960, 5
    %v2963 = vor.u32 %v2959, %v2962
    %v2964 = vrot.slane %v2963, 4
    %v2966 = vshll.u32 %v2745, 16
    %v2968 = vrot.slane %v2966, 5
    %v2969 = vsel %vm267, %v2964, %v2968
    %v2970 = vld [vmem:[%s1 + $0xc0] sm:$0xf]
    %v2971 = vld [vmem:[%s1 + $0xc4] sm:$0xf]
    %v2972 = vld [vmem:[%s1 + $0xc8] sm:$0xf]
    %v2973 = vld [vmem:[%s1 + $0xcc] sm:$0xf]
    %v2974 = vld [vmem:[%s1 + $0xd0] sm:$0xf]
    %v2975 = vld [vmem:[%s1 + $0xd4] sm:$0xf]
    %v2976 = vld [vmem:[%s1 + $0xd8] sm:$0xf]
    %v2977 = vld [vmem:[%s1 + $0xdc] sm:$0xf]
    %v2978 = vunpack.c.l.b16 %v2759
    %v2979 = vunpack.c.l.b16 %v2773
    %v2980 = vunpack.c.l.b16 %v2787
    %v2981 = vunpack.c.l.b16 %v2801
    %v2982 = vunpack.c.l.b16 %v2815
    %v2983 = vunpack.c.l.b16 %v2829
    %v2984 = vunpack.c.l.b16 %v2843
    %v2985 = vunpack.c.l.b16 %v2857
    %v2986 = vunpack.c.l.b16 %v2871
    %v2987 = vunpack.c.l.b16 %v2885
    %v2988 = vunpack.c.l.b16 %v2899
    %v2989 = vunpack.c.l.b16 %v2913
    %v2990 = vunpack.c.l.b16 %v2927
    %v2991 = vunpack.c.l.b16 %v2941
    %v2992 = vunpack.c.l.b16 %v2955
    %v2993 = vunpack.c.l.b16 %v2969
    %v2994 = vpack.c.b16 %v2979, %v2978
    %v2995 = vpack.c.b16 %v2981, %v2980
    %v2996 = vpack.c.b16 %v2983, %v2982
    %v2997 = vpack.c.b16 %v2985, %v2984
    %v2998 = vpack.c.b16 %v2987, %v2986
    %v2999 = vpack.c.b16 %v2989, %v2988
    %v3000 = vpack.c.b16 %v2991, %v2990
    %v3001 = vpack.c.b16 %v2993, %v2992
    %v3010 = vunpack.c.l.b16 %v2970
    %v3011 = vunpack.c.l.b16 %v2971
    %v3012 = vunpack.c.l.b16 %v2972
    %v3013 = vunpack.c.l.b16 %v2973
    %v3014 = vunpack.c.l.b16 %v2974
    %v3015 = vunpack.c.l.b16 %v2975
    %v3016 = vunpack.c.l.b16 %v2976
    %v3017 = vunpack.c.l.b16 %v2977
    %v3018 = vpack.c.b16 %v3011, %v3010
    %v3019 = vpack.c.b16 %v3013, %v3012
    %v3020 = vpack.c.b16 %v3015, %v3014
    %v3021 = vpack.c.b16 %v3017, %v3016
    %v3027 = vsel %vm671, %v2994, 0
    %v3030 = vsel %vm671, %v2995, 0
    %v3033 = vsel %vm671, %v2996, 0
    %v3036 = vsel %vm671, %v2997, 0
    %v3039 = vsel %vm671, %v2998, 0
    %v3042 = vsel %vm671, %v2999, 0
    %v3045 = vsel %vm671, %v3000, 0
    %v3048 = vsel %vm671, %v3001, 0
    %3050 = vmatprep.subr.bf16.mxu0 0
    %3051 = vmatpush1.bf16.msra.mxu0 %v3018
    %3052 = vmatprep.subr.bf16.mxu0 0
    %3053 = vmatpush1.bf16.msra.mxu0 %v3019
    %3054 = vmatprep.subr.bf16.mxu0 0
    %3055 = vmatpush1.bf16.msra.mxu0 %v3020
    %3056 = vmatprep.subr.bf16.mxu0 0
    %3057 = vmatpush1.bf16.msra.mxu0 %v3021
    %3058 = vmatprep.subr.bf16.mxu0 0
    %3059 = vmatpush1.bf16.msra.mxu0 0
    %3060 = vmatprep.subr.bf16.mxu0 0
    %3061 = vmatpush1.bf16.msra.mxu0 0
    %3062 = vmatprep.subr.bf16.mxu0 0
    %3063 = vmatpush1.bf16.msra.mxu0 0
    %3064 = vmatprep.subr.bf16.mxu0 0
    %3065 = vmatpush1.bf16.msra.mxu0 0
    %3066 = vmatprep.subr.bf16.mxu0 0
    %3067 = vmatpush1.bf16.msra.mxu0 0
    %3068 = vmatprep.subr.bf16.mxu0 0
    %3069 = vmatpush1.bf16.msra.mxu0 0
    %3070 = vmatprep.subr.bf16.mxu0 0
    %3071 = vmatpush1.bf16.msra.mxu0 0
    %3072 = vmatprep.subr.bf16.mxu0 0
    %3073 = vmatpush1.bf16.msra.mxu0 0
    %3074 = vmatprep.subr.bf16.mxu0 0
    %3075 = vmatpush1.bf16.msra.mxu0 0
    %3076 = vmatprep.subr.bf16.mxu0 0
    %3077 = vmatpush1.bf16.msra.mxu0 0
    %3078 = vmatprep.subr.bf16.mxu0 0
    %3079 = vmatpush1.bf16.msra.mxu0 0
    %3080 = vmatprep.subr.bf16.mxu0 0
    %3081 = vmatpush1.bf16.msra.mxu0 0
    %3082 = vmatprep.mubr.bf16.mxu0 0
    %3083 = vmatmul.mubr.bf16.gmra.mrb[0].mxu0 %v3027
    %v3084 = vpop.f32.mrb[0].mxu0
    %v3085 = vadd.f32 0.0, %v3084
    %v3086 = vpop.f32.mrb[0].mxu0
    %v3087 = vpop.f32.mrb[0].mxu0
    %v3088 = vadd.f32 0.0, %v3087
    %v3089 = vpop.f32.mrb[0].mxu0
    %3090 = vmatprep.mubr.bf16.mxu0 0
    %3091 = vmatmul.mubr.bf16.gmra.mrb[0].mxu0 %v3030
    %v3092 = vpop.f32.mrb[0].mxu0
    %v3093 = vadd.f32 0.0, %v3092
    %v3094 = vpop.f32.mrb[0].mxu0
    %v3095 = vpop.f32.mrb[0].mxu0
    %v3096 = vadd.f32 0.0, %v3095
    %v3097 = vpop.f32.mrb[0].mxu0
    %3098 = vmatprep.mubr.bf16.mxu0 0
    %3099 = vmatmul.mubr.bf16.gmra.mrb[0].mxu0 %v3033
    %v3100 = vpop.f32.mrb[0].mxu0
    %v3101 = vadd.f32 0.0, %v3100
    %v3102 = vpop.f32.mrb[0].mxu0
    %v3103 = vpop.f32.mrb[0].mxu0
    %v3104 = vadd.f32 0.0, %v3103
    %v3105 = vpop.f32.mrb[0].mxu0
    %3106 = vmatprep.mubr.bf16.mxu0 0
    %3107 = vmatmul.mubr.bf16.gmra.mrb[0].mxu0 %v3036
    %v3108 = vpop.f32.mrb[0].mxu0
    %v3109 = vadd.f32 0.0, %v3108
    %v3110 = vpop.f32.mrb[0].mxu0
    %v3111 = vpop.f32.mrb[0].mxu0
    %v3112 = vadd.f32 0.0, %v3111
    %v3113 = vpop.f32.mrb[0].mxu0
    %3114 = vmatprep.mubr.bf16.mxu0 0
    %3115 = vmatmul.mubr.bf16.gmra.mrb[0].mxu0 %v3039
    %v3116 = vpop.f32.mrb[0].mxu0
    %v3117 = vadd.f32 0.0, %v3116
    %v3118 = vpop.f32.mrb[0].mxu0
    %v3119 = vpop.f32.mrb[0].mxu0
    %v3120 = vadd.f32 0.0, %v3119
    %v3121 = vpop.f32.mrb[0].mxu0
    %3122 = vmatprep.mubr.bf16.mxu0 0
    %3123 = vmatmul.mubr.bf16.gmra.mrb[0].mxu0 %v3042
    %v3124 = vpop.f32.mrb[0].mxu0
    %v3125 = vadd.f32 0.0, %v3124
    %v3126 = vpop.f32.mrb[0].mxu0
    %v3127 = vpop.f32.mrb[0].mxu0
    %v3128 = vadd.f32 0.0, %v3127
    %v3129 = vpop.f32.mrb[0].mxu0
    %3130 = vmatprep.mubr.bf16.mxu0 0
    %3131 = vmatmul.mubr.bf16.gmra.mrb[0].mxu0 %v3045
    %v3132 = vpop.f32.mrb[0].mxu0
    %v3133 = vadd.f32 0.0, %v3132
    %v3134 = vpop.f32.mrb[0].mxu0
    %v3135 = vpop.f32.mrb[0].mxu0
    %v3136 = vadd.f32 0.0, %v3135
    %v3137 = vpop.f32.mrb[0].mxu0
    %3138 = vmatprep.mubr.bf16.mxu0 0
    %3139 = vmatmul.mubr.bf16.gmra.mrb[0].mxu0 %v3048
    %v3140 = vpop.f32.mrb[0].mxu0
    %v3141 = vadd.f32 0.0, %v3140
    %v3142 = vpop.f32.mrb[0].mxu0
    %v3143 = vpop.f32.mrb[0].mxu0
    %v3144 = vadd.f32 0.0, %v3143
    %v3145 = vpop.f32.mrb[0].mxu0
    %3146 = vdwg.mxu0
    %v3147 = vadd.f32 %v2697, %v3085
    %v3148 = vadd.f32 %v2698, %v3088
    %v3149 = vadd.f32 %v2699, %v3093
    %v3150 = vadd.f32 %v2700, %v3096
    %v3151 = vadd.f32 %v2701, %v3101
    %v3152 = vadd.f32 %v2702, %v3104
    %v3153 = vadd.f32 %v2703, %v3109
    %v3154 = vadd.f32 %v2704, %v3112
    %v3155 = vadd.f32 %v2705, %v3117
    %v3156 = vadd.f32 %v2706, %v3120
    %v3157 = vadd.f32 %v2707, %v3125
    %v3158 = vadd.f32 %v2708, %v3128
    %v3159 = vadd.f32 %v2709, %v3133
    %v3160 = vadd.f32 %v2710, %v3136
    %v3161 = vadd.f32 %v2711, %v3141
    %v3162 = vadd.f32 %v2712, %v3144
    %v3163 = vld [vmem:[%s2713] sm:$0xe]
    %v3164 = vld [vmem:[%s2713 + $0x8] sm:$0xe]
    %v3165 = vld [vmem:[%s2713 + $0x10] sm:$0xe]
    %v3166 = vld [vmem:[%s2713 + $0x18] sm:$0xe]
    %v3167 = vld [vmem:[%s2713 + $0x20] sm:$0xe]
    %v3168 = vld [vmem:[%s2713 + $0x28] sm:$0xe]
    %v3169 = vld [vmem:[%s2713 + $0x30] sm:$0xe]
    %v3170 = vld [vmem:[%s2713 + $0x38] sm:$0xe]
    %v3171 = vld [vmem:[%s2713 + $0x50] sm:$0xe]
    %v3172 = vld [vmem:[%s2713 + $0x58] sm:$0xe]
    %v3173 = vld [vmem:[%s2713 + $0x60] sm:$0xe]
    %v3174 = vld [vmem:[%s2713 + $0x68] sm:$0xe]
    %v3175 = vld [vmem:[%s2713 + $0x70] sm:$0xe]
    %v3176 = vld [vmem:[%s2713 + $0x78] sm:$0xe]
    %v3177 = vld [vmem:[%s2713 + $0x80] sm:$0xe]
    %v3178 = vld [vmem:[%s2713 + $0x88] sm:$0xe]
    %v3211 = vrot.slane %v3163, 5
    %v3212 = vrot.slane %v3211, 4
    %v3213 = vrot.slane %v2715, 5
    %v3214 = vsel %vm550, %v3212, %v3213
    %v3215 = vrot.slane %v3164, 5
    %v3216 = vrot.slane %v3215, 4
    %v3217 = vrot.slane %v2717, 5
    %v3218 = vsel %vm550, %v3216, %v3217
    %v3219 = vrot.slane %v3165, 5
    %v3220 = vrot.slane %v3219, 4
    %v3221 = vrot.slane %v2719, 5
    %v3222 = vsel %vm550, %v3220, %v3221
    %v3223 = vrot.slane %v3166, 5
    %v3224 = vrot.slane %v3223, 4
    %v3225 = vrot.slane %v2721, 5
    %v3226 = vsel %vm550, %v3224, %v3225
    %v3227 = vrot.slane %v3167, 5
    %v3228 = vrot.slane %v3227, 4
    %v3229 = vrot.slane %v2723, 5
    %v3230 = vsel %vm550, %v3228, %v3229
    %v3231 = vrot.slane %v3168, 5
    %v3232 = vrot.slane %v3231, 4
    %v3233 = vrot.slane %v2725, 5
    %v3234 = vsel %vm550, %v3232, %v3233
    %v3235 = vrot.slane %v3169, 5
    %v3236 = vrot.slane %v3235, 4
    %v3237 = vrot.slane %v2727, 5
    %v3238 = vsel %vm550, %v3236, %v3237
    %v3239 = vrot.slane %v3170, 5
    %v3240 = vrot.slane %v3239, 4
    %v3241 = vrot.slane %v2729, 5
    %v3242 = vsel %vm550, %v3240, %v3241
    %v3243 = vrot.slane %v3171, 5
    %v3244 = vrot.slane %v3243, 4
    %v3245 = vrot.slane %v2731, 5
    %v3246 = vsel %vm550, %v3244, %v3245
    %v3247 = vrot.slane %v3172, 5
    %v3248 = vrot.slane %v3247, 4
    %v3249 = vrot.slane %v2733, 5
    %v3250 = vsel %vm550, %v3248, %v3249
    %v3251 = vrot.slane %v3173, 5
    %v3252 = vrot.slane %v3251, 4
    %v3253 = vrot.slane %v2735, 5
    %v3254 = vsel %vm550, %v3252, %v3253
    %v3255 = vrot.slane %v3174, 5
    %v3256 = vrot.slane %v3255, 4
    %v3257 = vrot.slane %v2737, 5
    %v3258 = vsel %vm550, %v3256, %v3257
    %v3259 = vrot.slane %v3175, 5
    %v3260 = vrot.slane %v3259, 4
    %v3261 = vrot.slane %v2739, 5
    %v3262 = vsel %vm550, %v3260, %v3261
    %v3263 = vrot.slane %v3176, 5
    %v3264 = vrot.slane %v3263, 4
    %v3265 = vrot.slane %v2741, 5
    %v3266 = vsel %vm550, %v3264, %v3265
    %v3267 = vrot.slane %v3177, 5
    %v3268 = vrot.slane %v3267, 4
    %v3269 = vrot.slane %v2743, 5
    %v3270 = vsel %vm550, %v3268, %v3269
    %v3271 = vrot.slane %v3178, 5
    %v3272 = vrot.slane %v3271, 4
    %v3273 = vrot.slane %v2745, 5
    %v3274 = vsel %vm550, %v3272, %v3273
    %v3275 = vld [vmem:[%s1 + $0xe0] sm:$0xf]
    %v3276 = vld [vmem:[%s1 + $0xe4] sm:$0xf]
    %v3277 = vld [vmem:[%s1 + $0xe8] sm:$0xf]
    %v3278 = vld [vmem:[%s1 + $0xec] sm:$0xf]
    %v3279 = vld [vmem:[%s1 + $0xf0] sm:$0xf]
    %v3280 = vld [vmem:[%s1 + $0xf4] sm:$0xf]
    %v3281 = vld [vmem:[%s1 + $0xf8] sm:$0xf]
    %v3282 = vld [vmem:[%s1 + $0xfc] sm:$0xf]
    %v3283 = vunpack.c.l.b16 %v3214
    %v3284 = vunpack.c.l.b16 %v3218
    %v3285 = vunpack.c.l.b16 %v3222
    %v3286 = vunpack.c.l.b16 %v3226
    %v3287 = vunpack.c.l.b16 %v3230
    %v3288 = vunpack.c.l.b16 %v3234
    %v3289 = vunpack.c.l.b16 %v3238
    %v3290 = vunpack.c.l.b16 %v3242
    %v3291 = vunpack.c.l.b16 %v3246
    %v3292 = vunpack.c.l.b16 %v3250
    %v3293 = vunpack.c.l.b16 %v3254
    %v3294 = vunpack.c.l.b16 %v3258
    %v3295 = vunpack.c.l.b16 %v3262
    %v3296 = vunpack.c.l.b16 %v3266
    %v3297 = vunpack.c.l.b16 %v3270
    %v3298 = vunpack.c.l.b16 %v3274
    %v3299 = vpack.c.b16 %v3284, %v3283
    %v3300 = vpack.c.b16 %v3286, %v3285
    %v3301 = vpack.c.b16 %v3288, %v3287
    %v3302 = vpack.c.b16 %v3290, %v3289
    %v3303 = vpack.c.b16 %v3292, %v3291
    %v3304 = vpack.c.b16 %v3294, %v3293
    %v3305 = vpack.c.b16 %v3296, %v3295
    %v3306 = vpack.c.b16 %v3298, %v3297
    %v3315 = vunpack.c.l.b16 %v3275
    %v3316 = vunpack.c.l.b16 %v3276
    %v3317 = vunpack.c.l.b16 %v3277
    %v3318 = vunpack.c.l.b16 %v3278
    %v3319 = vunpack.c.l.b16 %v3279
    %v3320 = vunpack.c.l.b16 %v3280
    %v3321 = vunpack.c.l.b16 %v3281
    %v3322 = vunpack.c.l.b16 %v3282
    %v3323 = vpack.c.b16 %v3316, %v3315
    %v3324 = vpack.c.b16 %v3318, %v3317
    %v3325 = vpack.c.b16 %v3320, %v3319
    %v3326 = vpack.c.b16 %v3322, %v3321
    %v3332 = vsel %vm671, %v3299, 0
    %v3335 = vsel %vm671, %v3300, 0
    %v3338 = vsel %vm671, %v3301, 0
    %v3341 = vsel %vm671, %v3302, 0
    %v3344 = vsel %vm671, %v3303, 0
    %v3347 = vsel %vm671, %v3304, 0
    %v3350 = vsel %vm671, %v3305, 0
    %v3353 = vsel %vm671, %v3306, 0
    %3355 = vmatprep.subr.bf16.mxu0 0
    %3356 = vmatpush1.bf16.msra.mxu0 %v3323
    %3357 = vmatprep.subr.bf16.mxu0 0
    %3358 = vmatpush1.bf16.msra.mxu0 %v3324
    %3359 = vmatprep.subr.bf16.mxu0 0
    %3360 = vmatpush1.bf16.msra.mxu0 %v3325
    %3361 = vmatprep.subr.bf16.mxu0 0
    %3362 = vmatpush1.bf16.msra.mxu0 %v3326
    %3363 = vmatprep.subr.bf16.mxu0 0
    %3364 = vmatpush1.bf16.msra.mxu0 0
    %3365 = vmatprep.subr.bf16.mxu0 0
    %3366 = vmatpush1.bf16.msra.mxu0 0
    %3367 = vmatprep.subr.bf16.mxu0 0
    %3368 = vmatpush1.bf16.msra.mxu0 0
    %3369 = vmatprep.subr.bf16.mxu0 0
    %3370 = vmatpush1.bf16.msra.mxu0 0
    %3371 = vmatprep.subr.bf16.mxu0 0
    %3372 = vmatpush1.bf16.msra.mxu0 0
    %3373 = vmatprep.subr.bf16.mxu0 0
    %3374 = vmatpush1.bf16.msra.mxu0 0
    %3375 = vmatprep.subr.bf16.mxu0 0
    %3376 = vmatpush1.bf16.msra.mxu0 0
    %3377 = vmatprep.subr.bf16.mxu0 0
    %3378 = vmatpush1.bf16.msra.mxu0 0
    %3379 = vmatprep.subr.bf16.mxu0 0
    %3380 = vmatpush1.bf16.msra.mxu0 0
    %3381 = vmatprep.subr.bf16.mxu0 0
    %3382 = vmatpush1.bf16.msra.mxu0 0
    %3383 = vmatprep.subr.bf16.mxu0 0
    %3384 = vmatpush1.bf16.msra.mxu0 0
    %3385 = vmatprep.subr.bf16.mxu0 0
    %3386 = vmatpush1.bf16.msra.mxu0 0
    %3387 = vmatprep.mubr.bf16.mxu0 0
    %3388 = vmatmul.mubr.bf16.gmra.mrb[0].mxu0 %v3332
    %v3389 = vpop.f32.mrb[0].mxu0
    %v3390 = vadd.f32 0.0, %v3389
    %v3391 = vpop.f32.mrb[0].mxu0
    %v3392 = vpop.f32.mrb[0].mxu0
    %v3393 = vadd.f32 0.0, %v3392
    %v3394 = vpop.f32.mrb[0].mxu0
    %3395 = vmatprep.mubr.bf16.mxu0 0
    %3396 = vmatmul.mubr.bf16.gmra.mrb[0].mxu0 %v3335
    %v3397 = vpop.f32.mrb[0].mxu0
    %v3398 = vadd.f32 0.0, %v3397
    %v3399 = vpop.f32.mrb[0].mxu0
    %v3400 = vpop.f32.mrb[0].mxu0
    %v3401 = vadd.f32 0.0, %v3400
    %v3402 = vpop.f32.mrb[0].mxu0
    %3403 = vmatprep.mubr.bf16.mxu0 0
    %3404 = vmatmul.mubr.bf16.gmra.mrb[0].mxu0 %v3338
    %v3405 = vpop.f32.mrb[0].mxu0
    %v3406 = vadd.f32 0.0, %v3405
    %v3407 = vpop.f32.mrb[0].mxu0
    %v3408 = vpop.f32.mrb[0].mxu0
    %v3409 = vadd.f32 0.0, %v3408
    %v3410 = vpop.f32.mrb[0].mxu0
    %3411 = vmatprep.mubr.bf16.mxu0 0
    %3412 = vmatmul.mubr.bf16.gmra.mrb[0].mxu0 %v3341
    %v3413 = vpop.f32.mrb[0].mxu0
    %v3414 = vadd.f32 0.0, %v3413
    %v3415 = vpop.f32.mrb[0].mxu0
    %v3416 = vpop.f32.mrb[0].mxu0
    %v3417 = vadd.f32 0.0, %v3416
    %v3418 = vpop.f32.mrb[0].mxu0
    %3419 = vmatprep.mubr.bf16.mxu0 0
    %3420 = vmatmul.mubr.bf16.gmra.mrb[0].mxu0 %v3344
    %v3421 = vpop.f32.mrb[0].mxu0
    %v3422 = vadd.f32 0.0, %v3421
    %v3423 = vpop.f32.mrb[0].mxu0
    %v3424 = vpop.f32.mrb[0].mxu0
    %v3425 = vadd.f32 0.0, %v3424
    %v3426 = vpop.f32.mrb[0].mxu0
    %3427 = vmatprep.mubr.bf16.mxu0 0
    %3428 = vmatmul.mubr.bf16.gmra.mrb[0].mxu0 %v3347
    %v3429 = vpop.f32.mrb[0].mxu0
    %v3430 = vadd.f32 0.0, %v3429
    %v3431 = vpop.f32.mrb[0].mxu0
    %v3432 = vpop.f32.mrb[0].mxu0
    %v3433 = vadd.f32 0.0, %v3432
    %v3434 = vpop.f32.mrb[0].mxu0
    %3435 = vmatprep.mubr.bf16.mxu0 0
    %3436 = vmatmul.mubr.bf16.gmra.mrb[0].mxu0 %v3350
    %v3437 = vpop.f32.mrb[0].mxu0
    %v3438 = vadd.f32 0.0, %v3437
    %v3439 = vpop.f32.mrb[0].mxu0
    %v3440 = vpop.f32.mrb[0].mxu0
    %v3441 = vadd.f32 0.0, %v3440
    %v3442 = vpop.f32.mrb[0].mxu0
    %3443 = vmatprep.mubr.bf16.mxu0 0
    %3444 = vmatmul.mubr.bf16.gmra.mrb[0].mxu0 %v3353
    %v3445 = vpop.f32.mrb[0].mxu0
    %v3446 = vadd.f32 0.0, %v3445
    %v3447 = vpop.f32.mrb[0].mxu0
    %v3448 = vpop.f32.mrb[0].mxu0
    %v3449 = vadd.f32 0.0, %v3448
    %v3450 = vpop.f32.mrb[0].mxu0
    %3451 = vdwg.mxu0
    %v3452 = vadd.f32 %v3147, %v3390
    %v3453 = vadd.f32 %v3148, %v3393
    %v3454 = vadd.f32 %v3149, %v3398
    %v3455 = vadd.f32 %v3150, %v3401
    %v3456 = vadd.f32 %v3151, %v3406
    %v3457 = vadd.f32 %v3152, %v3409
    %v3458 = vadd.f32 %v3153, %v3414
    %v3459 = vadd.f32 %v3154, %v3417
    %v3460 = vadd.f32 %v3155, %v3422
    %v3461 = vadd.f32 %v3156, %v3425
    %v3462 = vadd.f32 %v3157, %v3430
    %v3463 = vadd.f32 %v3158, %v3433
    %v3464 = vadd.f32 %v3159, %v3438
    %v3465 = vadd.f32 %v3160, %v3441
    %v3466 = vadd.f32 %v3161, %v3446
    %v3467 = vadd.f32 %v3162, %v3449
    %v3468 = vld [vmem:[%s2713 + $0x4] sm:$0x3]
    %v3469 = vld [vmem:[%s2713 + $0xc] sm:$0x3]
    %v3470 = vld [vmem:[%s2713 + $0x14] sm:$0x3]
    %v3471 = vld [vmem:[%s2713 + $0x1c] sm:$0x3]
    %v3472 = vld [vmem:[%s2713 + $0x24] sm:$0x3]
    %v3473 = vld [vmem:[%s2713 + $0x2c] sm:$0x3]
    %v3474 = vld [vmem:[%s2713 + $0x34] sm:$0x3]
    %v3475 = vld [vmem:[%s2713 + $0x3c] sm:$0x3]
    %v3476 = vld [vmem:[%s2713 + $0x54] sm:$0x3]
    %v3477 = vld [vmem:[%s2713 + $0x5c] sm:$0x3]
    %v3478 = vld [vmem:[%s2713 + $0x64] sm:$0x3]
    %v3479 = vld [vmem:[%s2713 + $0x6c] sm:$0x3]
    %v3480 = vld [vmem:[%s2713 + $0x74] sm:$0x3]
    %v3481 = vld [vmem:[%s2713 + $0x7c] sm:$0x3]
    %v3482 = vld [vmem:[%s2713 + $0x84] sm:$0x3]
    %v3483 = vld [vmem:[%s2713 + $0x8c] sm:$0x3]
    %v3485 = vshrl.u32 %v3163, 16
    %v3487 = vrot.slane %v3485, 5
    %v3488 = vshll.u32 %v3163, 16
    %v3490 = vrot.slane %v3488, 6
    %v3491 = vor.u32 %v3487, %v3490
    %v3492 = vrot.slane %v3491, 4
    %v3494 = vshrl.u32 %v3468, 16
    %v3496 = vrot.slane %v3494, 5
    %v3497 = vshll.u32 %v3468, 16
    %v3499 = vrot.slane %v3497, 6
    %v3500 = vor.u32 %v3496, %v3499
    %v3501 = vsel %vm980, %v3492, %v3500
    %v3503 = vshrl.u32 %v3164, 16
    %v3505 = vrot.slane %v3503, 5
    %v3506 = vshll.u32 %v3164, 16
    %v3508 = vrot.slane %v3506, 6
    %v3509 = vor.u32 %v3505, %v3508
    %v3510 = vrot.slane %v3509, 4
    %v3512 = vshrl.u32 %v3469, 16
    %v3514 = vrot.slane %v3512, 5
    %v3515 = vshll.u32 %v3469, 16
    %v3517 = vrot.slane %v3515, 6
    %v3518 = vor.u32 %v3514, %v3517
    %v3519 = vsel %vm980, %v3510, %v3518
    %v3521 = vshrl.u32 %v3165, 16
    %v3523 = vrot.slane %v3521, 5
    %v3524 = vshll.u32 %v3165, 16
    %v3526 = vrot.slane %v3524, 6
    %v3527 = vor.u32 %v3523, %v3526
    %v3528 = vrot.slane %v3527, 4
    %v3530 = vshrl.u32 %v3470, 16
    %v3532 = vrot.slane %v3530, 5
    %v3533 = vshll.u32 %v3470, 16
    %v3535 = vrot.slane %v3533, 6
    %v3536 = vor.u32 %v3532, %v3535
    %v3537 = vsel %vm980, %v3528, %v3536
    %v3539 = vshrl.u32 %v3166, 16
    %v3541 = vrot.slane %v3539, 5
    %v3542 = vshll.u32 %v3166, 16
    %v3544 = vrot.slane %v3542, 6
    %v3545 = vor.u32 %v3541, %v3544
    %v3546 = vrot.slane %v3545, 4
    %v3548 = vshrl.u32 %v3471, 16
    %v3550 = vrot.slane %v3548, 5
    %v3551 = vshll.u32 %v3471, 16
    %v3553 = vrot.slane %v3551, 6
    %v3554 = vor.u32 %v3550, %v3553
    %v3555 = vsel %vm980, %v3546, %v3554
    %v3557 = vshrl.u32 %v3167, 16
    %v3559 = vrot.slane %v3557, 5
    %v3560 = vshll.u32 %v3167, 16
    %v3562 = vrot.slane %v3560, 6
    %v3563 = vor.u32 %v3559, %v3562
    %v3564 = vrot.slane %v3563, 4
    %v3566 = vshrl.u32 %v3472, 16
    %v3568 = vrot.slane %v3566, 5
    %v3569 = vshll.u32 %v3472, 16
    %v3571 = vrot.slane %v3569, 6
    %v3572 = vor.u32 %v3568, %v3571
    %v3573 = vsel %vm980, %v3564, %v3572
    %v3575 = vshrl.u32 %v3168, 16
    %v3577 = vrot.slane %v3575, 5
    %v3578 = vshll.u32 %v3168, 16
    %v3580 = vrot.slane %v3578, 6
    %v3581 = vor.u32 %v3577, %v3580
    %v3582 = vrot.slane %v3581, 4
    %v3584 = vshrl.u32 %v3473, 16
    %v3586 = vrot.slane %v3584, 5
    %v3587 = vshll.u32 %v3473, 16
    %v3589 = vrot.slane %v3587, 6
    %v3590 = vor.u32 %v3586, %v3589
    %v3591 = vsel %vm980, %v3582, %v3590
    %v3593 = vshrl.u32 %v3169, 16
    %v3595 = vrot.slane %v3593, 5
    %v3596 = vshll.u32 %v3169, 16
    %v3598 = vrot.slane %v3596, 6
    %v3599 = vor.u32 %v3595, %v3598
    %v3600 = vrot.slane %v3599, 4
    %v3602 = vshrl.u32 %v3474, 16
    %v3604 = vrot.slane %v3602, 5
    %v3605 = vshll.u32 %v3474, 16
    %v3607 = vrot.slane %v3605, 6
    %v3608 = vor.u32 %v3604, %v3607
    %v3609 = vsel %vm980, %v3600, %v3608
    %v3611 = vshrl.u32 %v3170, 16
    %v3613 = vrot.slane %v3611, 5
    %v3614 = vshll.u32 %v3170, 16
    %v3616 = vrot.slane %v3614, 6
    %v3617 = vor.u32 %v3613, %v3616
    %v3618 = vrot.slane %v3617, 4
    %v3620 = vshrl.u32 %v3475, 16
    %v3622 = vrot.slane %v3620, 5
    %v3623 = vshll.u32 %v3475, 16
    %v3625 = vrot.slane %v3623, 6
    %v3626 = vor.u32 %v3622, %v3625
    %v3627 = vsel %vm980, %v3618, %v3626
    %v3629 = vshrl.u32 %v3171, 16
    %v3631 = vrot.slane %v3629, 5
    %v3632 = vshll.u32 %v3171, 16
    %v3634 = vrot.slane %v3632, 6
    %v3635 = vor.u32 %v3631, %v3634
    %v3636 = vrot.slane %v3635, 4
    %v3638 = vshrl.u32 %v3476, 16
    %v3640 = vrot.slane %v3638, 5
    %v3641 = vshll.u32 %v3476, 16
    %v3643 = vrot.slane %v3641, 6
    %v3644 = vor.u32 %v3640, %v3643
    %v3645 = vsel %vm980, %v3636, %v3644
    %v3647 = vshrl.u32 %v3172, 16
    %v3649 = vrot.slane %v3647, 5
    %v3650 = vshll.u32 %v3172, 16
    %v3652 = vrot.slane %v3650, 6
    %v3653 = vor.u32 %v3649, %v3652
    %v3654 = vrot.slane %v3653, 4
    %v3656 = vshrl.u32 %v3477, 16
    %v3658 = vrot.slane %v3656, 5
    %v3659 = vshll.u32 %v3477, 16
    %v3661 = vrot.slane %v3659, 6
    %v3662 = vor.u32 %v3658, %v3661
    %v3663 = vsel %vm980, %v3654, %v3662
    %v3665 = vshrl.u32 %v3173, 16
    %v3667 = vrot.slane %v3665, 5
    %v3668 = vshll.u32 %v3173, 16
    %v3670 = vrot.slane %v3668, 6
    %v3671 = vor.u32 %v3667, %v3670
    %v3672 = vrot.slane %v3671, 4
    %v3674 = vshrl.u32 %v3478, 16
    %v3676 = vrot.slane %v3674, 5
    %v3677 = vshll.u32 %v3478, 16
    %v3679 = vrot.slane %v3677, 6
    %v3680 = vor.u32 %v3676, %v3679
    %v3681 = vsel %vm980, %v3672, %v3680
    %v3683 = vshrl.u32 %v3174, 16
    %v3685 = vrot.slane %v3683, 5
    %v3686 = vshll.u32 %v3174, 16
    %v3688 = vrot.slane %v3686, 6
    %v3689 = vor.u32 %v3685, %v3688
    %v3690 = vrot.slane %v3689, 4
    %v3692 = vshrl.u32 %v3479, 16
    %v3694 = vrot.slane %v3692, 5
    %v3695 = vshll.u32 %v3479, 16
    %v3697 = vrot.slane %v3695, 6
    %v3698 = vor.u32 %v3694, %v3697
    %v3699 = vsel %vm980, %v3690, %v3698
    %v3701 = vshrl.u32 %v3175, 16
    %v3703 = vrot.slane %v3701, 5
    %v3704 = vshll.u32 %v3175, 16
    %v3706 = vrot.slane %v3704, 6
    %v3707 = vor.u32 %v3703, %v3706
    %v3708 = vrot.slane %v3707, 4
    %v3710 = vshrl.u32 %v3480, 16
    %v3712 = vrot.slane %v3710, 5
    %v3713 = vshll.u32 %v3480, 16
    %v3715 = vrot.slane %v3713, 6
    %v3716 = vor.u32 %v3712, %v3715
    %v3717 = vsel %vm980, %v3708, %v3716
    %v3719 = vshrl.u32 %v3176, 16
    %v3721 = vrot.slane %v3719, 5
    %v3722 = vshll.u32 %v3176, 16
    %v3724 = vrot.slane %v3722, 6
    %v3725 = vor.u32 %v3721, %v3724
    %v3726 = vrot.slane %v3725, 4
    %v3728 = vshrl.u32 %v3481, 16
    %v3730 = vrot.slane %v3728, 5
    %v3731 = vshll.u32 %v3481, 16
    %v3733 = vrot.slane %v3731, 6
    %v3734 = vor.u32 %v3730, %v3733
    %v3735 = vsel %vm980, %v3726, %v3734
    %v3737 = vshrl.u32 %v3177, 16
    %v3739 = vrot.slane %v3737, 5
    %v3740 = vshll.u32 %v3177, 16
    %v3742 = vrot.slane %v3740, 6
    %v3743 = vor.u32 %v3739, %v3742
    %v3744 = vrot.slane %v3743, 4
    %v3746 = vshrl.u32 %v3482, 16
    %v3748 = vrot.slane %v3746, 5
    %v3749 = vshll.u32 %v3482, 16
    %v3751 = vrot.slane %v3749, 6
    %v3752 = vor.u32 %v3748, %v3751
    %v3753 = vsel %vm980, %v3744, %v3752
    %v3755 = vshrl.u32 %v3178, 16
    %v3757 = vrot.slane %v3755, 5
    %v3758 = vshll.u32 %v3178, 16
    %v3760 = vrot.slane %v3758, 6
    %v3761 = vor.u32 %v3757, %v3760
    %v3762 = vrot.slane %v3761, 4
    %v3764 = vshrl.u32 %v3483, 16
    %v3766 = vrot.slane %v3764, 5
    %v3767 = vshll.u32 %v3483, 16
    %v3769 = vrot.slane %v3767, 6
    %v3770 = vor.u32 %v3766, %v3769
    %v3771 = vsel %vm980, %v3762, %v3770
    %v3772 = vld [vmem:[%s1 + $0x100] sm:$0xf]
    %v3773 = vld [vmem:[%s1 + $0x104] sm:$0xf]
    %v3774 = vld [vmem:[%s1 + $0x108] sm:$0xf]
    %v3775 = vld [vmem:[%s1 + $0x10c] sm:$0xf]
    %v3776 = vld [vmem:[%s1 + $0x110] sm:$0xf]
    %v3777 = vld [vmem:[%s1 + $0x114] sm:$0xf]
    %v3778 = vld [vmem:[%s1 + $0x118] sm:$0xf]
    %v3779 = vld [vmem:[%s1 + $0x11c] sm:$0xf]
    %v3780 = vunpack.c.l.b16 %v3501
    %v3781 = vunpack.c.l.b16 %v3519
    %v3782 = vunpack.c.l.b16 %v3537
    %v3783 = vunpack.c.l.b16 %v3555
    %v3784 = vunpack.c.l.b16 %v3573
    %v3785 = vunpack.c.l.b16 %v3591
    %v3786 = vunpack.c.l.b16 %v3609
    %v3787 = vunpack.c.l.b16 %v3627
    %v3788 = vunpack.c.l.b16 %v3645
    %v3789 = vunpack.c.l.b16 %v3663
    %v3790 = vunpack.c.l.b16 %v3681
    %v3791 = vunpack.c.l.b16 %v3699
    %v3792 = vunpack.c.l.b16 %v3717
    %v3793 = vunpack.c.l.b16 %v3735
    %v3794 = vunpack.c.l.b16 %v3753
    %v3795 = vunpack.c.l.b16 %v3771
    %v3796 = vpack.c.b16 %v3781, %v3780
    %v3797 = vpack.c.b16 %v3783, %v3782
    %v3798 = vpack.c.b16 %v3785, %v3784
    %v3799 = vpack.c.b16 %v3787, %v3786
    %v3800 = vpack.c.b16 %v3789, %v3788
    %v3801 = vpack.c.b16 %v3791, %v3790
    %v3802 = vpack.c.b16 %v3793, %v3792
    %v3803 = vpack.c.b16 %v3795, %v3794
    %v3812 = vunpack.c.l.b16 %v3772
    %v3813 = vunpack.c.l.b16 %v3773
    %v3814 = vunpack.c.l.b16 %v3774
    %v3815 = vunpack.c.l.b16 %v3775
    %v3816 = vunpack.c.l.b16 %v3776
    %v3817 = vunpack.c.l.b16 %v3777
    %v3818 = vunpack.c.l.b16 %v3778
    %v3819 = vunpack.c.l.b16 %v3779
    %v3820 = vpack.c.b16 %v3813, %v3812
    %v3821 = vpack.c.b16 %v3815, %v3814
    %v3822 = vpack.c.b16 %v3817, %v3816
    %v3823 = vpack.c.b16 %v3819, %v3818
    %v3829 = vsel %vm671, %v3796, 0
    %v3832 = vsel %vm671, %v3797, 0
    %v3835 = vsel %vm671, %v3798, 0
    %v3838 = vsel %vm671, %v3799, 0
    %v3841 = vsel %vm671, %v3800, 0
    %v3844 = vsel %vm671, %v3801, 0
    %v3847 = vsel %vm671, %v3802, 0
    %v3850 = vsel %vm671, %v3803, 0
    %3852 = vmatprep.subr.bf16.mxu0 0
    %3853 = vmatpush1.bf16.msra.mxu0 %v3820
    %3854 = vmatprep.subr.bf16.mxu0 0
    %3855 = vmatpush1.bf16.msra.mxu0 %v3821
    %3856 = vmatprep.subr.bf16.mxu0 0
    %3857 = vmatpush1.bf16.msra.mxu0 %v3822
    %3858 = vmatprep.subr.bf16.mxu0 0
    %3859 = vmatpush1.bf16.msra.mxu0 %v3823
    %3860 = vmatprep.subr.bf16.mxu0 0
    %3861 = vmatpush1.bf16.msra.mxu0 0
    %3862 = vmatprep.subr.bf16.mxu0 0
    %3863 = vmatpush1.bf16.msra.mxu0 0
    %3864 = vmatprep.subr.bf16.mxu0 0
    %3865 = vmatpush1.bf16.msra.mxu0 0
    %3866 = vmatprep.subr.bf16.mxu0 0
    %3867 = vmatpush1.bf16.msra.mxu0 0
    %3868 = vmatprep.subr.bf16.mxu0 0
    %3869 = vmatpush1.bf16.msra.mxu0 0
    %3870 = vmatprep.subr.bf16.mxu0 0
    %3871 = vmatpush1.bf16.msra.mxu0 0
    %3872 = vmatprep.subr.bf16.mxu0 0
    %3873 = vmatpush1.bf16.msra.mxu0 0
    %3874 = vmatprep.subr.bf16.mxu0 0
    %3875 = vmatpush1.bf16.msra.mxu0 0
    %3876 = vmatprep.subr.bf16.mxu0 0
    %3877 = vmatpush1.bf16.msra.mxu0 0
    %3878 = vmatprep.subr.bf16.mxu0 0
    %3879 = vmatpush1.bf16.msra.mxu0 0
    %3880 = vmatprep.subr.bf16.mxu0 0
    %3881 = vmatpush1.bf16.msra.mxu0 0
    %3882 = vmatprep.subr.bf16.mxu0 0
    %3883 = vmatpush1.bf16.msra.mxu0 0
    %3884 = vmatprep.mubr.bf16.mxu0 0
    %3885 = vmatmul.mubr.bf16.gmra.mrb[0].mxu0 %v3829
    %v3886 = vpop.f32.mrb[0].mxu0
    %v3887 = vadd.f32 0.0, %v3886
    %v3888 = vpop.f32.mrb[0].mxu0
    %v3889 = vpop.f32.mrb[0].mxu0
    %v3890 = vadd.f32 0.0, %v3889
    %v3891 = vpop.f32.mrb[0].mxu0
    %3892 = vmatprep.mubr.bf16.mxu0 0
    %3893 = vmatmul.mubr.bf16.gmra.mrb[0].mxu0 %v3832
    %v3894 = vpop.f32.mrb[0].mxu0
    %v3895 = vadd.f32 0.0, %v3894
    %v3896 = vpop.f32.mrb[0].mxu0
    %v3897 = vpop.f32.mrb[0].mxu0
    %v3898 = vadd.f32 0.0, %v3897
    %v3899 = vpop.f32.mrb[0].mxu0
    %3900 = vmatprep.mubr.bf16.mxu0 0
    %3901 = vmatmul.mubr.bf16.gmra.mrb[0].mxu0 %v3835
    %v3902 = vpop.f32.mrb[0].mxu0
    %v3903 = vadd.f32 0.0, %v3902
    %v3904 = vpop.f32.mrb[0].mxu0
    %v3905 = vpop.f32.mrb[0].mxu0
    %v3906 = vadd.f32 0.0, %v3905
    %v3907 = vpop.f32.mrb[0].mxu0
    %3908 = vmatprep.mubr.bf16.mxu0 0
    %3909 = vmatmul.mubr.bf16.gmra.mrb[0].mxu0 %v3838
    %v3910 = vpop.f32.mrb[0].mxu0
    %v3911 = vadd.f32 0.0, %v3910
    %v3912 = vpop.f32.mrb[0].mxu0
    %v3913 = vpop.f32.mrb[0].mxu0
    %v3914 = vadd.f32 0.0, %v3913
    %v3915 = vpop.f32.mrb[0].mxu0
    %3916 = vmatprep.mubr.bf16.mxu0 0
    %3917 = vmatmul.mubr.bf16.gmra.mrb[0].mxu0 %v3841
    %v3918 = vpop.f32.mrb[0].mxu0
    %v3919 = vadd.f32 0.0, %v3918
    %v3920 = vpop.f32.mrb[0].mxu0
    %v3921 = vpop.f32.mrb[0].mxu0
    %v3922 = vadd.f32 0.0, %v3921
    %v3923 = vpop.f32.mrb[0].mxu0
    %3924 = vmatprep.mubr.bf16.mxu0 0
    %3925 = vmatmul.mubr.bf16.gmra.mrb[0].mxu0 %v3844
    %v3926 = vpop.f32.mrb[0].mxu0
    %v3927 = vadd.f32 0.0, %v3926
    %v3928 = vpop.f32.mrb[0].mxu0
    %v3929 = vpop.f32.mrb[0].mxu0
    %v3930 = vadd.f32 0.0, %v3929
    %v3931 = vpop.f32.mrb[0].mxu0
    %3932 = vmatprep.mubr.bf16.mxu0 0
    %3933 = vmatmul.mubr.bf16.gmra.mrb[0].mxu0 %v3847
    %v3934 = vpop.f32.mrb[0].mxu0
    %v3935 = vadd.f32 0.0, %v3934
    %v3936 = vpop.f32.mrb[0].mxu0
    %v3937 = vpop.f32.mrb[0].mxu0
    %v3938 = vadd.f32 0.0, %v3937
    %v3939 = vpop.f32.mrb[0].mxu0
    %3940 = vmatprep.mubr.bf16.mxu0 0
    %3941 = vmatmul.mubr.bf16.gmra.mrb[0].mxu0 %v3850
    %v3942 = vpop.f32.mrb[0].mxu0
    %v3943 = vadd.f32 0.0, %v3942
    %v3944 = vpop.f32.mrb[0].mxu0
    %v3945 = vpop.f32.mrb[0].mxu0
    %v3946 = vadd.f32 0.0, %v3945
    %v3947 = vpop.f32.mrb[0].mxu0
    %3948 = vdwg.mxu0
    %v3949 = vadd.f32 %v3452, %v3887
    %v3950 = vadd.f32 %v3453, %v3890
    %v3951 = vadd.f32 %v3454, %v3895
    %v3952 = vadd.f32 %v3455, %v3898
    %v3953 = vadd.f32 %v3456, %v3903
    %v3954 = vadd.f32 %v3457, %v3906
    %v3955 = vadd.f32 %v3458, %v3911
    %v3956 = vadd.f32 %v3459, %v3914
    %v3957 = vadd.f32 %v3460, %v3919
    %v3958 = vadd.f32 %v3461, %v3922
    %v3959 = vadd.f32 %v3462, %v3927
    %v3960 = vadd.f32 %v3463, %v3930
    %v3961 = vadd.f32 %v3464, %v3935
    %v3962 = vadd.f32 %v3465, %v3938
    %v3963 = vadd.f32 %v3466, %v3943
    %v3964 = vadd.f32 %v3467, %v3946
    %v3965 = vsel %vm671, %v3949, 0.0
    %v3966 = vsel %vm671, %v3950, 0.0
    %v3967 = vadd.f32 %v3965, %v3966
    %v3968 = vsel %vm671, %v3951, 0.0
    %v3969 = vadd.f32 %v3967, %v3968
    %v3970 = vsel %vm671, %v3952, 0.0
    %v3971 = vadd.f32 %v3969, %v3970
    %v3972 = vsel %vm671, %v3953, 0.0
    %v3973 = vadd.f32 %v3971, %v3972
    %v3974 = vsel %vm671, %v3954, 0.0
    %v3975 = vadd.f32 %v3973, %v3974
    %v3976 = vsel %vm671, %v3955, 0.0
    %v3977 = vadd.f32 %v3975, %v3976
    %v3978 = vsel %vm671, %v3956, 0.0
    %v3979 = vadd.f32 %v3977, %v3978
    %v3980 = vsel %vm671, %v3957, 0.0
    %v3981 = vadd.f32 %v3979, %v3980
    %v3982 = vsel %vm671, %v3958, 0.0
    %v3983 = vadd.f32 %v3981, %v3982
    %v3984 = vsel %vm671, %v3959, 0.0
    %v3985 = vadd.f32 %v3983, %v3984
    %v3986 = vsel %vm671, %v3960, 0.0
    %v3987 = vadd.f32 %v3985, %v3986
    %v3988 = vsel %vm671, %v3961, 0.0
    %v3989 = vadd.f32 %v3987, %v3988
    %v3990 = vsel %vm671, %v3962, 0.0
    %v3991 = vadd.f32 %v3989, %v3990
    %v3992 = vsel %vm671, %v3963, 0.0
    %v3993 = vadd.f32 %v3991, %v3992
    %v3994 = vsel %vm671, %v3964, 0.0
    %v3995 = vadd.f32 %v3993, %v3994
    %v3996 = vrot.slane %v3995, 4
    %v3997 = vadd.f32 %v3995, %v3996
    %v3998 = vrot.slane %v3997, 2
    %v3999 = vadd.f32 %v3997, %v3998
    %v4000 = vrot.slane %v3999, 1
    %v4001 = vadd.f32 %v3999, %v4000
    %v4002 = vrcp.pop 128.0
    %v4003 = vmul.f32 %v4001, %v4002
    %v4004 = vsub.f32 %v3949, %v4003
    %v4005 = vsub.f32 %v3950, %v4003
    %v4006 = vsub.f32 %v3951, %v4003
    %v4007 = vsub.f32 %v3952, %v4003
    %v4008 = vsub.f32 %v3953, %v4003
    %v4009 = vsub.f32 %v3954, %v4003
    %v4010 = vsub.f32 %v3955, %v4003
    %v4011 = vsub.f32 %v3956, %v4003
    %v4012 = vsub.f32 %v3957, %v4003
    %v4013 = vsub.f32 %v3958, %v4003
    %v4014 = vsub.f32 %v3959, %v4003
    %v4015 = vsub.f32 %v3960, %v4003
    %v4016 = vsub.f32 %v3961, %v4003
    %v4017 = vsub.f32 %v3962, %v4003
    %v4018 = vsub.f32 %v3963, %v4003
    %v4019 = vsub.f32 %v3964, %v4003
    %v4020 = vmul.f32 %v4004, %v4004
    %v4021 = vmul.f32 %v4005, %v4005
    %v4022 = vmul.f32 %v4006, %v4006
    %v4023 = vmul.f32 %v4007, %v4007
    %v4024 = vmul.f32 %v4008, %v4008
    %v4025 = vmul.f32 %v4009, %v4009
    %v4026 = vmul.f32 %v4010, %v4010
    %v4027 = vmul.f32 %v4011, %v4011
    %v4028 = vmul.f32 %v4012, %v4012
    %v4029 = vmul.f32 %v4013, %v4013
    %v4030 = vmul.f32 %v4014, %v4014
    %v4031 = vmul.f32 %v4015, %v4015
    %v4032 = vmul.f32 %v4016, %v4016
    %v4033 = vmul.f32 %v4017, %v4017
    %v4034 = vmul.f32 %v4018, %v4018
    %v4035 = vmul.f32 %v4019, %v4019
    %v4036 = vsel %vm671, %v4020, 0.0
    %v4037 = vsel %vm671, %v4021, 0.0
    %v4038 = vadd.f32 %v4036, %v4037
    %v4039 = vsel %vm671, %v4022, 0.0
    %v4040 = vadd.f32 %v4038, %v4039
    %v4041 = vsel %vm671, %v4023, 0.0
    %v4042 = vadd.f32 %v4040, %v4041
    %v4043 = vsel %vm671, %v4024, 0.0
    %v4044 = vadd.f32 %v4042, %v4043
    %v4045 = vsel %vm671, %v4025, 0.0
    %v4046 = vadd.f32 %v4044, %v4045
    %v4047 = vsel %vm671, %v4026, 0.0
    %v4048 = vadd.f32 %v4046, %v4047
    %v4049 = vsel %vm671, %v4027, 0.0
    %v4050 = vadd.f32 %v4048, %v4049
    %v4051 = vsel %vm671, %v4028, 0.0
    %v4052 = vadd.f32 %v4050, %v4051
    %v4053 = vsel %vm671, %v4029, 0.0
    %v4054 = vadd.f32 %v4052, %v4053
    %v4055 = vsel %vm671, %v4030, 0.0
    %v4056 = vadd.f32 %v4054, %v4055
    %v4057 = vsel %vm671, %v4031, 0.0
    %v4058 = vadd.f32 %v4056, %v4057
    %v4059 = vsel %vm671, %v4032, 0.0
    %v4060 = vadd.f32 %v4058, %v4059
    %v4061 = vsel %vm671, %v4033, 0.0
    %v4062 = vadd.f32 %v4060, %v4061
    %v4063 = vsel %vm671, %v4034, 0.0
    %v4064 = vadd.f32 %v4062, %v4063
    %v4065 = vsel %vm671, %v4035, 0.0
    %v4066 = vadd.f32 %v4064, %v4065
    %v4067 = vrot.slane %v4066, 4
    %v4068 = vadd.f32 %v4066, %v4067
    %v4069 = vrot.slane %v4068, 2
    %v4070 = vadd.f32 %v4068, %v4069
    %v4071 = vrot.slane %v4070, 1
    %v4072 = vadd.f32 %v4070, %v4071
    %v4073 = vmul.f32 %v4072, %v4002
    %v4074 = vld [vmem:[%s3] sm:$0x1]
    %v4075 = vadd.f32 %v4073, 1e-05
    %v4076 = vrsqrt.pop %v4075
    %v4077 = vmul.f32 %v4074, %v4076
    %v4079 = vlaneseq
    %v4080 = vshrl.u32 %v4079, 7
    %v4081 = vsub.s32 0, %v4080
    %v4082 = vrot.slane %v4077, %v4081
    %v4084 = vmul.f32 %v4004, %v4082
    %v4085 = vmul.f32 %v4005, %v4082
    %v4086 = vmul.f32 %v4006, %v4082
    %v4087 = vmul.f32 %v4007, %v4082
    %v4088 = vmul.f32 %v4008, %v4082
    %v4089 = vmul.f32 %v4009, %v4082
    %v4090 = vmul.f32 %v4010, %v4082
    %v4091 = vmul.f32 %v4011, %v4082
    %v4092 = vmul.f32 %v4012, %v4082
    %v4093 = vmul.f32 %v4013, %v4082
    %v4094 = vmul.f32 %v4014, %v4082
    %v4095 = vmul.f32 %v4015, %v4082
    %v4096 = vmul.f32 %v4016, %v4082
    %v4097 = vmul.f32 %v4017, %v4082
    %v4098 = vmul.f32 %v4018, %v4082
    %v4099 = vmul.f32 %v4019, %v4082
    %v4100 = vld [vmem:[%s4] sm:$0x1]
    %v4102 = vlaneseq
    %v4103 = vshrl.u32 %v4102, 7
    %v4104 = vsub.s32 0, %v4103
    %v4105 = vrot.slane %v4100, %v4104
    %v4107 = vadd.f32 %v4084, %v4105
    %v4108 = vadd.f32 %v4085, %v4105
    %v4109 = vadd.f32 %v4086, %v4105
    %v4110 = vadd.f32 %v4087, %v4105
    %v4111 = vadd.f32 %v4088, %v4105
    %v4112 = vadd.f32 %v4089, %v4105
    %v4113 = vadd.f32 %v4090, %v4105
    %v4114 = vadd.f32 %v4091, %v4105
    %v4115 = vadd.f32 %v4092, %v4105
    %v4116 = vadd.f32 %v4093, %v4105
    %v4117 = vadd.f32 %v4094, %v4105
    %v4118 = vadd.f32 %v4095, %v4105
    %v4119 = vadd.f32 %v4096, %v4105
    %v4120 = vadd.f32 %v4097, %v4105
    %v4121 = vadd.f32 %v4098, %v4105
    %v4122 = vadd.f32 %v4099, %v4105
    %vm4123 = vcmp.ge.f32.partialorder %v4107, 0.0
    %vm4124 = vcmp.ge.f32.partialorder %v4108, 0.0
    %vm4125 = vcmp.ge.f32.partialorder %v4109, 0.0
    %vm4126 = vcmp.ge.f32.partialorder %v4110, 0.0
    %vm4127 = vcmp.ge.f32.partialorder %v4111, 0.0
    %vm4128 = vcmp.ge.f32.partialorder %v4112, 0.0
    %vm4129 = vcmp.ge.f32.partialorder %v4113, 0.0
    %vm4130 = vcmp.ge.f32.partialorder %v4114, 0.0
    %vm4131 = vcmp.ge.f32.partialorder %v4115, 0.0
    %vm4132 = vcmp.ge.f32.partialorder %v4116, 0.0
    %vm4133 = vcmp.ge.f32.partialorder %v4117, 0.0
    %vm4134 = vcmp.ge.f32.partialorder %v4118, 0.0
    %vm4135 = vcmp.ge.f32.partialorder %v4119, 0.0
    %vm4136 = vcmp.ge.f32.partialorder %v4120, 0.0
    %vm4137 = vcmp.ge.f32.partialorder %v4121, 0.0
    %vm4138 = vcmp.ge.f32.partialorder %v4122, 0.0
    %v4139 = vmul.f32 %v4107, 0.01
    %v4140 = vmul.f32 %v4108, 0.01
    %v4141 = vmul.f32 %v4109, 0.01
    %v4142 = vmul.f32 %v4110, 0.01
    %v4143 = vmul.f32 %v4111, 0.01
    %v4144 = vmul.f32 %v4112, 0.01
    %v4145 = vmul.f32 %v4113, 0.01
    %v4146 = vmul.f32 %v4114, 0.01
    %v4147 = vmul.f32 %v4115, 0.01
    %v4148 = vmul.f32 %v4116, 0.01
    %v4149 = vmul.f32 %v4117, 0.01
    %v4150 = vmul.f32 %v4118, 0.01
    %v4151 = vmul.f32 %v4119, 0.01
    %v4152 = vmul.f32 %v4120, 0.01
    %v4153 = vmul.f32 %v4121, 0.01
    %v4154 = vmul.f32 %v4122, 0.01
    %v4155 = vsel %vm4123, %v4107, %v4139
    %v4156 = vsel %vm4124, %v4108, %v4140
    %v4157 = vsel %vm4125, %v4109, %v4141
    %v4158 = vsel %vm4126, %v4110, %v4142
    %v4159 = vsel %vm4127, %v4111, %v4143
    %v4160 = vsel %vm4128, %v4112, %v4144
    %v4161 = vsel %vm4129, %v4113, %v4145
    %v4162 = vsel %vm4130, %v4114, %v4146
    %v4163 = vsel %vm4131, %v4115, %v4147
    %v4164 = vsel %vm4132, %v4116, %v4148
    %v4165 = vsel %vm4133, %v4117, %v4149
    %v4166 = vsel %vm4134, %v4118, %v4150
    %v4167 = vsel %vm4135, %v4119, %v4151
    %v4168 = vsel %vm4136, %v4120, %v4152
    %v4169 = vsel %vm4137, %v4121, %v4153
    %v4170 = vsel %vm4138, %v4122, %v4154
    %v4171 = vpack.c.bf16 %v4156, %v4155
    %v4172 = vpack.c.bf16 %v4158, %v4157
    %v4173 = vpack.c.bf16 %v4160, %v4159
    %v4174 = vpack.c.bf16 %v4162, %v4161
    %v4175 = vpack.c.bf16 %v4164, %v4163
    %v4176 = vpack.c.bf16 %v4166, %v4165
    %v4177 = vpack.c.bf16 %v4168, %v4167
    %v4178 = vpack.c.bf16 %v4170, %v4169
    %v4187 = vunpack.c.l.b16 %v4171
    %v4188 = vunpack.c.h.b16 %v4171
    %v4189 = vunpack.c.l.b16 %v4172
    %v4190 = vunpack.c.h.b16 %v4172
    %v4191 = vunpack.c.l.b16 %v4173
    %v4192 = vunpack.c.h.b16 %v4173
    %v4193 = vunpack.c.l.b16 %v4174
    %v4194 = vunpack.c.h.b16 %v4174
    %v4195 = vunpack.c.l.b16 %v4175
    %v4196 = vunpack.c.h.b16 %v4175
    %v4197 = vunpack.c.l.b16 %v4176
    %v4198 = vunpack.c.h.b16 %v4176
    %v4199 = vunpack.c.l.b16 %v4177
    %v4200 = vunpack.c.h.b16 %v4177
    %v4201 = vunpack.c.l.b16 %v4178
    %v4202 = vunpack.c.h.b16 %v4178
    %v4203 = vpack.c.b16 %v4187, %v4187
    %v4204 = vpack.c.b16 %v4188, %v4188
    %v4205 = vpack.c.b16 %v4189, %v4189
    %v4206 = vpack.c.b16 %v4190, %v4190
    %v4207 = vpack.c.b16 %v4191, %v4191
    %v4208 = vpack.c.b16 %v4192, %v4192
    %v4209 = vpack.c.b16 %v4193, %v4193
    %v4210 = vpack.c.b16 %v4194, %v4194
    %v4211 = vpack.c.b16 %v4195, %v4195
    %v4212 = vpack.c.b16 %v4196, %v4196
    %v4213 = vpack.c.b16 %v4197, %v4197
    %v4214 = vpack.c.b16 %v4198, %v4198
    %v4215 = vpack.c.b16 %v4199, %v4199
    %v4216 = vpack.c.b16 %v4200, %v4200
    %v4217 = vpack.c.b16 %v4201, %v4201
    %v4218 = vpack.c.b16 %v4202, %v4202
    %v4219 = vrot.slane %v4203, 7
    %v4220 = vrot.slane %v4219, 4
    %v4221 = vrot.slane %v4204, 7
    %v4222 = vrot.slane %v4221, 4
    %v4223 = vrot.slane %v4205, 7
    %v4224 = vrot.slane %v4223, 4
    %v4225 = vrot.slane %v4206, 7
    %v4226 = vrot.slane %v4225, 4
    %v4227 = vrot.slane %v4207, 7
    %v4228 = vrot.slane %v4227, 4
    %v4229 = vrot.slane %v4208, 7
    %v4230 = vrot.slane %v4229, 4
    %v4231 = vrot.slane %v4209, 7
    %v4232 = vrot.slane %v4231, 4
    %v4233 = vrot.slane %v4210, 7
    %v4234 = vrot.slane %v4233, 4
    %v4235 = vrot.slane %v4211, 7
    %v4236 = vrot.slane %v4235, 4
    %v4237 = vrot.slane %v4212, 7
    %v4238 = vrot.slane %v4237, 4
    %v4239 = vrot.slane %v4213, 7
    %v4240 = vrot.slane %v4239, 4
    %v4241 = vrot.slane %v4214, 7
    %v4242 = vrot.slane %v4241, 4
    %v4243 = vrot.slane %v4215, 7
    %v4244 = vrot.slane %v4243, 4
    %v4245 = vrot.slane %v4216, 7
    %v4246 = vrot.slane %v4245, 4
    %v4247 = vrot.slane %v4217, 7
    %v4248 = vrot.slane %v4247, 4
    %v4249 = vrot.slane %v4218, 7
    %v4250 = vrot.slane %v4249, 4
    %4283 = vst.msk [vmem:[%s198] sm:$0xe] %vm199, %v4219
    %4284 = vst.msk [vmem:[%s198 + $0x4] sm:$0x1] %vm201, %v4220
    %4285 = vst.msk [vmem:[%s198 + $0x8] sm:$0xe] %vm199, %v4221
    %4286 = vst.msk [vmem:[%s198 + $0xc] sm:$0x1] %vm201, %v4222
    %4287 = vst.msk [vmem:[%s198 + $0x10] sm:$0xe] %vm199, %v4223
    %4288 = vst.msk [vmem:[%s198 + $0x14] sm:$0x1] %vm201, %v4224
    %4289 = vst.msk [vmem:[%s198 + $0x18] sm:$0xe] %vm199, %v4225
    %4290 = vst.msk [vmem:[%s198 + $0x1c] sm:$0x1] %vm201, %v4226
    %4291 = vst.msk [vmem:[%s198 + $0x20] sm:$0xe] %vm199, %v4227
    %4292 = vst.msk [vmem:[%s198 + $0x24] sm:$0x1] %vm201, %v4228
    %4293 = vst.msk [vmem:[%s198 + $0x28] sm:$0xe] %vm199, %v4229
    %4294 = vst.msk [vmem:[%s198 + $0x2c] sm:$0x1] %vm201, %v4230
    %4295 = vst.msk [vmem:[%s198 + $0x30] sm:$0xe] %vm199, %v4231
    %4296 = vst.msk [vmem:[%s198 + $0x34] sm:$0x1] %vm201, %v4232
    %4297 = vst.msk [vmem:[%s198 + $0x38] sm:$0xe] %vm199, %v4233
    %4298 = vst.msk [vmem:[%s198 + $0x3c] sm:$0x1] %vm201, %v4234
    %4299 = vst.msk [vmem:[%s198 + $0x50] sm:$0xe] %vm199, %v4235
    %4300 = vst.msk [vmem:[%s198 + $0x54] sm:$0x1] %vm201, %v4236
    %4301 = vst.msk [vmem:[%s198 + $0x58] sm:$0xe] %vm199, %v4237
    %4302 = vst.msk [vmem:[%s198 + $0x5c] sm:$0x1] %vm201, %v4238
    %4303 = vst.msk [vmem:[%s198 + $0x60] sm:$0xe] %vm199, %v4239
    %4304 = vst.msk [vmem:[%s198 + $0x64] sm:$0x1] %vm201, %v4240
    %4305 = vst.msk [vmem:[%s198 + $0x68] sm:$0xe] %vm199, %v4241
    %4306 = vst.msk [vmem:[%s198 + $0x6c] sm:$0x1] %vm201, %v4242
    %4307 = vst.msk [vmem:[%s198 + $0x70] sm:$0xe] %vm199, %v4243
    %4308 = vst.msk [vmem:[%s198 + $0x74] sm:$0x1] %vm201, %v4244
    %4309 = vst.msk [vmem:[%s198 + $0x78] sm:$0xe] %vm199, %v4245
    %4310 = vst.msk [vmem:[%s198 + $0x7c] sm:$0x1] %vm201, %v4246
    %4311 = vst.msk [vmem:[%s198 + $0x80] sm:$0xe] %vm199, %v4247
    %4312 = vst.msk [vmem:[%s198 + $0x84] sm:$0x1] %vm201, %v4248
    %4313 = vst.msk [vmem:[%s198 + $0x88] sm:$0xe] %vm199, %v4249
    %4314 = vst.msk [vmem:[%s198 + $0x8c] sm:$0x1] %vm201, %v4250
    %v4315 = vld [vmem:[#allocation2] sm:$0xf]
    %v4316 = vld [vmem:[#allocation2 + $0x4] sm:$0x1]
    %v4317 = vld [vmem:[#allocation2 + $0x8] sm:$0xf]
    %v4318 = vld [vmem:[#allocation2 + $0xc] sm:$0x1]
    %v4319 = vld [vmem:[#allocation2 + $0x10] sm:$0xf]
    %v4320 = vld [vmem:[#allocation2 + $0x14] sm:$0x1]
    %v4321 = vld [vmem:[#allocation2 + $0x18] sm:$0xf]
    %v4322 = vld [vmem:[#allocation2 + $0x1c] sm:$0x1]
    %v4323 = vld [vmem:[#allocation2 + $0x20] sm:$0xf]
    %v4324 = vld [vmem:[#allocation2 + $0x24] sm:$0x1]
    %v4325 = vld [vmem:[#allocation2 + $0x28] sm:$0xf]
    %v4326 = vld [vmem:[#allocation2 + $0x2c] sm:$0x1]
    %v4327 = vld [vmem:[#allocation2 + $0x30] sm:$0xf]
    %v4328 = vld [vmem:[#allocation2 + $0x34] sm:$0x1]
    %v4329 = vld [vmem:[#allocation2 + $0x38] sm:$0xf]
    %v4330 = vld [vmem:[#allocation2 + $0x3c] sm:$0x1]
    %v4331 = vld [vmem:[#allocation2 + $0x50] sm:$0xf]
    %v4332 = vld [vmem:[#allocation2 + $0x54] sm:$0x1]
    %v4333 = vld [vmem:[#allocation2 + $0x58] sm:$0xf]
    %v4334 = vld [vmem:[#allocation2 + $0x5c] sm:$0x1]
    %v4335 = vld [vmem:[#allocation2 + $0x60] sm:$0xf]
    %v4336 = vld [vmem:[#allocation2 + $0x64] sm:$0x1]
    %v4337 = vld [vmem:[#allocation2 + $0x68] sm:$0xf]
    %v4338 = vld [vmem:[#allocation2 + $0x6c] sm:$0x1]
    %v4339 = vld [vmem:[#allocation2 + $0x70] sm:$0xf]
    %v4340 = vld [vmem:[#allocation2 + $0x74] sm:$0x1]
    %v4341 = vld [vmem:[#allocation2 + $0x78] sm:$0xf]
    %v4342 = vld [vmem:[#allocation2 + $0x7c] sm:$0x1]
    %v4343 = vld [vmem:[#allocation2 + $0x80] sm:$0xf]
    %v4344 = vld [vmem:[#allocation2 + $0x84] sm:$0x1]
    %v4345 = vld [vmem:[#allocation2 + $0x88] sm:$0xf]
    %v4346 = vld [vmem:[#allocation2 + $0x8c] sm:$0x1]
    %v4348 = vshrl.u32 %v4315, 16
    %v4350 = vrot.slane %v4348, 4
    %v4351 = vshll.u32 %v4315, 16
    %v4353 = vrot.slane %v4351, 5
    %v4354 = vor.u32 %v4350, %v4353
    %v4355 = vrot.slane %v4354, 4
    %v4357 = vshll.u32 %v4316, 16
    %v4359 = vrot.slane %v4357, 5
    %v4360 = vsel %vm267, %v4355, %v4359
    %v4362 = vshrl.u32 %v4317, 16
    %v4364 = vrot.slane %v4362, 4
    %v4365 = vshll.u32 %v4317, 16
    %v4367 = vrot.slane %v4365, 5
    %v4368 = vor.u32 %v4364, %v4367
    %v4369 = vrot.slane %v4368, 4
    %v4371 = vshll.u32 %v4318, 16
    %v4373 = vrot.slane %v4371, 5
    %v4374 = vsel %vm267, %v4369, %v4373
    %v4376 = vshrl.u32 %v4319, 16
    %v4378 = vrot.slane %v4376, 4
    %v4379 = vshll.u32 %v4319, 16
    %v4381 = vrot.slane %v4379, 5
    %v4382 = vor.u32 %v4378, %v4381
    %v4383 = vrot.slane %v4382, 4
    %v4385 = vshll.u32 %v4320, 16
    %v4387 = vrot.slane %v4385, 5
    %v4388 = vsel %vm267, %v4383, %v4387
    %v4390 = vshrl.u32 %v4321, 16
    %v4392 = vrot.slane %v4390, 4
    %v4393 = vshll.u32 %v4321, 16
    %v4395 = vrot.slane %v4393, 5
    %v4396 = vor.u32 %v4392, %v4395
    %v4397 = vrot.slane %v4396, 4
    %v4399 = vshll.u32 %v4322, 16
    %v4401 = vrot.slane %v4399, 5
    %v4402 = vsel %vm267, %v4397, %v4401
    %v4404 = vshrl.u32 %v4323, 16
    %v4406 = vrot.slane %v4404, 4
    %v4407 = vshll.u32 %v4323, 16
    %v4409 = vrot.slane %v4407, 5
    %v4410 = vor.u32 %v4406, %v4409
    %v4411 = vrot.slane %v4410, 4
    %v4413 = vshll.u32 %v4324, 16
    %v4415 = vrot.slane %v4413, 5
    %v4416 = vsel %vm267, %v4411, %v4415
    %v4418 = vshrl.u32 %v4325, 16
    %v4420 = vrot.slane %v4418, 4
    %v4421 = vshll.u32 %v4325, 16
    %v4423 = vrot.slane %v4421, 5
    %v4424 = vor.u32 %v4420, %v4423
    %v4425 = vrot.slane %v4424, 4
    %v4427 = vshll.u32 %v4326, 16
    %v4429 = vrot.slane %v4427, 5
    %v4430 = vsel %vm267, %v4425, %v4429
    %v4432 = vshrl.u32 %v4327, 16
    %v4434 = vrot.slane %v4432, 4
    %v4435 = vshll.u32 %v4327, 16
    %v4437 = vrot.slane %v4435, 5
    %v4438 = vor.u32 %v4434, %v4437
    %v4439 = vrot.slane %v4438, 4
    %v4441 = vshll.u32 %v4328, 16
    %v4443 = vrot.slane %v4441, 5
    %v4444 = vsel %vm267, %v4439, %v4443
    %v4446 = vshrl.u32 %v4329, 16
    %v4448 = vrot.slane %v4446, 4
    %v4449 = vshll.u32 %v4329, 16
    %v4451 = vrot.slane %v4449, 5
    %v4452 = vor.u32 %v4448, %v4451
    %v4453 = vrot.slane %v4452, 4
    %v4455 = vshll.u32 %v4330, 16
    %v4457 = vrot.slane %v4455, 5
    %v4458 = vsel %vm267, %v4453, %v4457
    %v4460 = vshrl.u32 %v4331, 16
    %v4462 = vrot.slane %v4460, 4
    %v4463 = vshll.u32 %v4331, 16
    %v4465 = vrot.slane %v4463, 5
    %v4466 = vor.u32 %v4462, %v4465
    %v4467 = vrot.slane %v4466, 4
    %v4469 = vshll.u32 %v4332, 16
    %v4471 = vrot.slane %v4469, 5
    %v4472 = vsel %vm267, %v4467, %v4471
    %v4474 = vshrl.u32 %v4333, 16
    %v4476 = vrot.slane %v4474, 4
    %v4477 = vshll.u32 %v4333, 16
    %v4479 = vrot.slane %v4477, 5
    %v4480 = vor.u32 %v4476, %v4479
    %v4481 = vrot.slane %v4480, 4
    %v4483 = vshll.u32 %v4334, 16
    %v4485 = vrot.slane %v4483, 5
    %v4486 = vsel %vm267, %v4481, %v4485
    %v4488 = vshrl.u32 %v4335, 16
    %v4490 = vrot.slane %v4488, 4
    %v4491 = vshll.u32 %v4335, 16
    %v4493 = vrot.slane %v4491, 5
    %v4494 = vor.u32 %v4490, %v4493
    %v4495 = vrot.slane %v4494, 4
    %v4497 = vshll.u32 %v4336, 16
    %v4499 = vrot.slane %v4497, 5
    %v4500 = vsel %vm267, %v4495, %v4499
    %v4502 = vshrl.u32 %v4337, 16
    %v4504 = vrot.slane %v4502, 4
    %v4505 = vshll.u32 %v4337, 16
    %v4507 = vrot.slane %v4505, 5
    %v4508 = vor.u32 %v4504, %v4507
    %v4509 = vrot.slane %v4508, 4
    %v4511 = vshll.u32 %v4338, 16
    %v4513 = vrot.slane %v4511, 5
    %v4514 = vsel %vm267, %v4509, %v4513
    %v4516 = vshrl.u32 %v4339, 16
    %v4518 = vrot.slane %v4516, 4
    %v4519 = vshll.u32 %v4339, 16
    %v4521 = vrot.slane %v4519, 5
    %v4522 = vor.u32 %v4518, %v4521
    %v4523 = vrot.slane %v4522, 4
    %v4525 = vshll.u32 %v4340, 16
    %v4527 = vrot.slane %v4525, 5
    %v4528 = vsel %vm267, %v4523, %v4527
    %v4530 = vshrl.u32 %v4341, 16
    %v4532 = vrot.slane %v4530, 4
    %v4533 = vshll.u32 %v4341, 16
    %v4535 = vrot.slane %v4533, 5
    %v4536 = vor.u32 %v4532, %v4535
    %v4537 = vrot.slane %v4536, 4
    %v4539 = vshll.u32 %v4342, 16
    %v4541 = vrot.slane %v4539, 5
    %v4542 = vsel %vm267, %v4537, %v4541
    %v4544 = vshrl.u32 %v4343, 16
    %v4546 = vrot.slane %v4544, 4
    %v4547 = vshll.u32 %v4343, 16
    %v4549 = vrot.slane %v4547, 5
    %v4550 = vor.u32 %v4546, %v4549
    %v4551 = vrot.slane %v4550, 4
    %v4553 = vshll.u32 %v4344, 16
    %v4555 = vrot.slane %v4553, 5
    %v4556 = vsel %vm267, %v4551, %v4555
    %v4558 = vshrl.u32 %v4345, 16
    %v4560 = vrot.slane %v4558, 4
    %v4561 = vshll.u32 %v4345, 16
    %v4563 = vrot.slane %v4561, 5
    %v4564 = vor.u32 %v4560, %v4563
    %v4565 = vrot.slane %v4564, 4
    %v4567 = vshll.u32 %v4346, 16
    %v4569 = vrot.slane %v4567, 5
    %v4570 = vsel %vm267, %v4565, %v4569
    %v4571 = vld [vmem:[%s2] sm:$0xf]
    %v4572 = vld [vmem:[%s2 + $0x4] sm:$0xf]
    %v4573 = vld [vmem:[%s2 + $0x8] sm:$0xf]
    %v4574 = vld [vmem:[%s2 + $0xc] sm:$0xf]
    %v4575 = vld [vmem:[%s2 + $0x10] sm:$0xf]
    %v4576 = vld [vmem:[%s2 + $0x14] sm:$0xf]
    %v4577 = vld [vmem:[%s2 + $0x18] sm:$0xf]
    %v4578 = vld [vmem:[%s2 + $0x1c] sm:$0xf]
    %v4579 = vld [vmem:[#allocation2] sm:$0xe]
    %v4580 = vld [vmem:[#allocation2 + $0x8] sm:$0xe]
    %v4581 = vld [vmem:[#allocation2 + $0x10] sm:$0xe]
    %v4582 = vld [vmem:[#allocation2 + $0x18] sm:$0xe]
    %v4583 = vld [vmem:[#allocation2 + $0x20] sm:$0xe]
    %v4584 = vld [vmem:[#allocation2 + $0x28] sm:$0xe]
    %v4585 = vld [vmem:[#allocation2 + $0x30] sm:$0xe]
    %v4586 = vld [vmem:[#allocation2 + $0x38] sm:$0xe]
    %v4587 = vld [vmem:[#allocation2 + $0x50] sm:$0xe]
    %v4588 = vld [vmem:[#allocation2 + $0x58] sm:$0xe]
    %v4589 = vld [vmem:[#allocation2 + $0x60] sm:$0xe]
    %v4590 = vld [vmem:[#allocation2 + $0x68] sm:$0xe]
    %v4591 = vld [vmem:[#allocation2 + $0x70] sm:$0xe]
    %v4592 = vld [vmem:[#allocation2 + $0x78] sm:$0xe]
    %v4593 = vld [vmem:[#allocation2 + $0x80] sm:$0xe]
    %v4594 = vld [vmem:[#allocation2 + $0x88] sm:$0xe]
    %v4627 = vrot.slane %v4579, 5
    %v4628 = vrot.slane %v4627, 4
    %v4629 = vrot.slane %v4316, 5
    %v4630 = vsel %vm550, %v4628, %v4629
    %v4631 = vrot.slane %v4580, 5
    %v4632 = vrot.slane %v4631, 4
    %v4633 = vrot.slane %v4318, 5
    %v4634 = vsel %vm550, %v4632, %v4633
    %v4635 = vrot.slane %v4581, 5
    %v4636 = vrot.slane %v4635, 4
    %v4637 = vrot.slane %v4320, 5
    %v4638 = vsel %vm550, %v4636, %v4637
    %v4639 = vrot.slane %v4582, 5
    %v4640 = vrot.slane %v4639, 4
    %v4641 = vrot.slane %v4322, 5
    %v4642 = vsel %vm550, %v4640, %v4641
    %v4643 = vrot.slane %v4583, 5
    %v4644 = vrot.slane %v4643, 4
    %v4645 = vrot.slane %v4324, 5
    %v4646 = vsel %vm550, %v4644, %v4645
    %v4647 = vrot.slane %v4584, 5
    %v4648 = vrot.slane %v4647, 4
    %v4649 = vrot.slane %v4326, 5
    %v4650 = vsel %vm550, %v4648, %v4649
    %v4651 = vrot.slane %v4585, 5
    %v4652 = vrot.slane %v4651, 4
    %v4653 = vrot.slane %v4328, 5
    %v4654 = vsel %vm550, %v4652, %v4653
    %v4655 = vrot.slane %v4586, 5
    %v4656 = vrot.slane %v4655, 4
    %v4657 = vrot.slane %v4330, 5
    %v4658 = vsel %vm550, %v4656, %v4657
    %v4659 = vrot.slane %v4587, 5
    %v4660 = vrot.slane %v4659, 4
    %v4661 = vrot.slane %v4332, 5
    %v4662 = vsel %vm550, %v4660, %v4661
    %v4663 = vrot.slane %v4588, 5
    %v4664 = vrot.slane %v4663, 4
    %v4665 = vrot.slane %v4334, 5
    %v4666 = vsel %vm550, %v4664, %v4665
    %v4667 = vrot.slane %v4589, 5
    %v4668 = vrot.slane %v4667, 4
    %v4669 = vrot.slane %v4336, 5
    %v4670 = vsel %vm550, %v4668, %v4669
    %v4671 = vrot.slane %v4590, 5
    %v4672 = vrot.slane %v4671, 4
    %v4673 = vrot.slane %v4338, 5
    %v4674 = vsel %vm550, %v4672, %v4673
    %v4675 = vrot.slane %v4591, 5
    %v4676 = vrot.slane %v4675, 4
    %v4677 = vrot.slane %v4340, 5
    %v4678 = vsel %vm550, %v4676, %v4677
    %v4679 = vrot.slane %v4592, 5
    %v4680 = vrot.slane %v4679, 4
    %v4681 = vrot.slane %v4342, 5
    %v4682 = vsel %vm550, %v4680, %v4681
    %v4683 = vrot.slane %v4593, 5
    %v4684 = vrot.slane %v4683, 4
    %v4685 = vrot.slane %v4344, 5
    %v4686 = vsel %vm550, %v4684, %v4685
    %v4687 = vrot.slane %v4594, 5
    %v4688 = vrot.slane %v4687, 4
    %v4689 = vrot.slane %v4346, 5
    %v4690 = vsel %vm550, %v4688, %v4689
    %v4691 = vld [vmem:[%s2 + $0x20] sm:$0xf]
    %v4692 = vld [vmem:[%s2 + $0x24] sm:$0xf]
    %v4693 = vld [vmem:[%s2 + $0x28] sm:$0xf]
    %v4694 = vld [vmem:[%s2 + $0x2c] sm:$0xf]
    %v4695 = vld [vmem:[%s2 + $0x30] sm:$0xf]
    %v4696 = vld [vmem:[%s2 + $0x34] sm:$0xf]
    %v4697 = vld [vmem:[%s2 + $0x38] sm:$0xf]
    %v4698 = vld [vmem:[%s2 + $0x3c] sm:$0xf]
    %v4699 = vunpack.c.l.b16 %v4630
    %v4700 = vunpack.c.l.b16 %v4634
    %v4701 = vunpack.c.l.b16 %v4638
    %v4702 = vunpack.c.l.b16 %v4642
    %v4703 = vunpack.c.l.b16 %v4646
    %v4704 = vunpack.c.l.b16 %v4650
    %v4705 = vunpack.c.l.b16 %v4654
    %v4706 = vunpack.c.l.b16 %v4658
    %v4707 = vunpack.c.l.b16 %v4662
    %v4708 = vunpack.c.l.b16 %v4666
    %v4709 = vunpack.c.l.b16 %v4670
    %v4710 = vunpack.c.l.b16 %v4674
    %v4711 = vunpack.c.l.b16 %v4678
    %v4712 = vunpack.c.l.b16 %v4682
    %v4713 = vunpack.c.l.b16 %v4686
    %v4714 = vunpack.c.l.b16 %v4690
    %v4715 = vpack.c.b16 %v4700, %v4699
    %v4716 = vpack.c.b16 %v4702, %v4701
    %v4717 = vpack.c.b16 %v4704, %v4703
    %v4718 = vpack.c.b16 %v4706, %v4705
    %v4719 = vpack.c.b16 %v4708, %v4707
    %v4720 = vpack.c.b16 %v4710, %v4709
    %v4721 = vpack.c.b16 %v4712, %v4711
    %v4722 = vpack.c.b16 %v4714, %v4713
    %v4731 = vunpack.c.l.b16 %v4691
    %v4732 = vunpack.c.l.b16 %v4692
    %v4733 = vunpack.c.l.b16 %v4693
    %v4734 = vunpack.c.l.b16 %v4694
    %v4735 = vunpack.c.l.b16 %v4695
    %v4736 = vunpack.c.l.b16 %v4696
    %v4737 = vunpack.c.l.b16 %v4697
    %v4738 = vunpack.c.l.b16 %v4698
    %v4739 = vpack.c.b16 %v4732, %v4731
    %v4740 = vpack.c.b16 %v4734, %v4733
    %v4741 = vpack.c.b16 %v4736, %v4735
    %v4742 = vpack.c.b16 %v4738, %v4737
    %v4748 = vsel %vm671, %v4715, 0
    %v4751 = vsel %vm671, %v4716, 0
    %v4754 = vsel %vm671, %v4717, 0
    %v4757 = vsel %vm671, %v4718, 0
    %v4760 = vsel %vm671, %v4719, 0
    %v4763 = vsel %vm671, %v4720, 0
    %v4766 = vsel %vm671, %v4721, 0
    %v4769 = vsel %vm671, %v4722, 0
    %4771 = vmatprep.subr.bf16.mxu0 0
    %4772 = vmatpush1.bf16.msra.mxu0 %v4739
    %4773 = vmatprep.subr.bf16.mxu0 0
    %4774 = vmatpush1.bf16.msra.mxu0 %v4740
    %4775 = vmatprep.subr.bf16.mxu0 0
    %4776 = vmatpush1.bf16.msra.mxu0 %v4741
    %4777 = vmatprep.subr.bf16.mxu0 0
    %4778 = vmatpush1.bf16.msra.mxu0 %v4742
    %4779 = vmatprep.subr.bf16.mxu0 0
    %4780 = vmatpush1.bf16.msra.mxu0 0
    %4781 = vmatprep.subr.bf16.mxu0 0
    %4782 = vmatpush1.bf16.msra.mxu0 0
    %4783 = vmatprep.subr.bf16.mxu0 0
    %4784 = vmatpush1.bf16.msra.mxu0 0
    %4785 = vmatprep.subr.bf16.mxu0 0
    %4786 = vmatpush1.bf16.msra.mxu0 0
    %4787 = vmatprep.subr.bf16.mxu0 0
    %4788 = vmatpush1.bf16.msra.mxu0 0
    %4789 = vmatprep.subr.bf16.mxu0 0
    %4790 = vmatpush1.bf16.msra.mxu0 0
    %4791 = vmatprep.subr.bf16.mxu0 0
    %4792 = vmatpush1.bf16.msra.mxu0 0
    %4793 = vmatprep.subr.bf16.mxu0 0
    %4794 = vmatpush1.bf16.msra.mxu0 0
    %4795 = vmatprep.subr.bf16.mxu0 0
    %4796 = vmatpush1.bf16.msra.mxu0 0
    %4797 = vmatprep.subr.bf16.mxu0 0
    %4798 = vmatpush1.bf16.msra.mxu0 0
    %4799 = vmatprep.subr.bf16.mxu0 0
    %4800 = vmatpush1.bf16.msra.mxu0 0
    %4801 = vmatprep.subr.bf16.mxu0 0
    %4802 = vmatpush1.bf16.msra.mxu0 0
    %4803 = vmatprep.mubr.bf16.mxu0 0
    %4804 = vmatmul.mubr.bf16.gmra.mrb[0].mxu0 %v4748
    %v4805 = vpop.f32.mrb[0].mxu0
    %v4806 = vadd.f32 0.0, %v4805
    %v4807 = vpop.f32.mrb[0].mxu0
    %v4808 = vpop.f32.mrb[0].mxu0
    %v4809 = vadd.f32 0.0, %v4808
    %v4810 = vpop.f32.mrb[0].mxu0
    %4811 = vmatprep.mubr.bf16.mxu0 0
    %4812 = vmatmul.mubr.bf16.gmra.mrb[0].mxu0 %v4751
    %v4813 = vpop.f32.mrb[0].mxu0
    %v4814 = vadd.f32 0.0, %v4813
    %v4815 = vpop.f32.mrb[0].mxu0
    %v4816 = vpop.f32.mrb[0].mxu0
    %v4817 = vadd.f32 0.0, %v4816
    %v4818 = vpop.f32.mrb[0].mxu0
    %4819 = vmatprep.mubr.bf16.mxu0 0
    %4820 = vmatmul.mubr.bf16.gmra.mrb[0].mxu0 %v4754
    %v4821 = vpop.f32.mrb[0].mxu0
    %v4822 = vadd.f32 0.0, %v4821
    %v4823 = vpop.f32.mrb[0].mxu0
    %v4824 = vpop.f32.mrb[0].mxu0
    %v4825 = vadd.f32 0.0, %v4824
    %v4826 = vpop.f32.mrb[0].mxu0
    %4827 = vmatprep.mubr.bf16.mxu0 0
    %4828 = vmatmul.mubr.bf16.gmra.mrb[0].mxu0 %v4757
    %v4829 = vpop.f32.mrb[0].mxu0
    %v4830 = vadd.f32 0.0, %v4829
    %v4831 = vpop.f32.mrb[0].mxu0
    %v4832 = vpop.f32.mrb[0].mxu0
    %v4833 = vadd.f32 0.0, %v4832
    %v4834 = vpop.f32.mrb[0].mxu0
    %4835 = vmatprep.mubr.bf16.mxu0 0
    %4836 = vmatmul.mubr.bf16.gmra.mrb[0].mxu0 %v4760
    %v4837 = vpop.f32.mrb[0].mxu0
    %v4838 = vadd.f32 0.0, %v4837
    %v4839 = vpop.f32.mrb[0].mxu0
    %v4840 = vpop.f32.mrb[0].mxu0
    %v4841 = vadd.f32 0.0, %v4840
    %v4842 = vpop.f32.mrb[0].mxu0
    %4843 = vmatprep.mubr.bf16.mxu0 0
    %4844 = vmatmul.mubr.bf16.gmra.mrb[0].mxu0 %v4763
    %v4845 = vpop.f32.mrb[0].mxu0
    %v4846 = vadd.f32 0.0, %v4845
    %v4847 = vpop.f32.mrb[0].mxu0
    %v4848 = vpop.f32.mrb[0].mxu0
    %v4849 = vadd.f32 0.0, %v4848
    %v4850 = vpop.f32.mrb[0].mxu0
    %4851 = vmatprep.mubr.bf16.mxu0 0
    %4852 = vmatmul.mubr.bf16.gmra.mrb[0].mxu0 %v4766
    %v4853 = vpop.f32.mrb[0].mxu0
    %v4854 = vadd.f32 0.0, %v4853
    %v4855 = vpop.f32.mrb[0].mxu0
    %v4856 = vpop.f32.mrb[0].mxu0
    %v4857 = vadd.f32 0.0, %v4856
    %v4858 = vpop.f32.mrb[0].mxu0
    %4859 = vmatprep.mubr.bf16.mxu0 0
    %4860 = vmatmul.mubr.bf16.gmra.mrb[0].mxu0 %v4769
    %v4861 = vpop.f32.mrb[0].mxu0
    %v4862 = vadd.f32 0.0, %v4861
    %v4863 = vpop.f32.mrb[0].mxu0
    %v4864 = vpop.f32.mrb[0].mxu0
    %v4865 = vadd.f32 0.0, %v4864
    %v4866 = vpop.f32.mrb[0].mxu0
    %4867 = vdwg.mxu0
    %v4868 = vunpack.c.l.b16 %v4360
    %v4869 = vunpack.c.l.b16 %v4374
    %v4870 = vunpack.c.l.b16 %v4388
    %v4871 = vunpack.c.l.b16 %v4402
    %v4872 = vunpack.c.l.b16 %v4416
    %v4873 = vunpack.c.l.b16 %v4430
    %v4874 = vunpack.c.l.b16 %v4444
    %v4875 = vunpack.c.l.b16 %v4458
    %v4876 = vunpack.c.l.b16 %v4472
    %v4877 = vunpack.c.l.b16 %v4486
    %v4878 = vunpack.c.l.b16 %v4500
    %v4879 = vunpack.c.l.b16 %v4514
    %v4880 = vunpack.c.l.b16 %v4528
    %v4881 = vunpack.c.l.b16 %v4542
    %v4882 = vunpack.c.l.b16 %v4556
    %v4883 = vunpack.c.l.b16 %v4570
    %v4884 = vpack.c.b16 %v4869, %v4868
    %v4885 = vpack.c.b16 %v4871, %v4870
    %v4886 = vpack.c.b16 %v4873, %v4872
    %v4887 = vpack.c.b16 %v4875, %v4874
    %v4888 = vpack.c.b16 %v4877, %v4876
    %v4889 = vpack.c.b16 %v4879, %v4878
    %v4890 = vpack.c.b16 %v4881, %v4880
    %v4891 = vpack.c.b16 %v4883, %v4882
    %v4900 = vunpack.c.l.b16 %v4571
    %v4901 = vunpack.c.l.b16 %v4572
    %v4902 = vunpack.c.l.b16 %v4573
    %v4903 = vunpack.c.l.b16 %v4574
    %v4904 = vunpack.c.l.b16 %v4575
    %v4905 = vunpack.c.l.b16 %v4576
    %v4906 = vunpack.c.l.b16 %v4577
    %v4907 = vunpack.c.l.b16 %v4578
    %v4908 = vpack.c.b16 %v4901, %v4900
    %v4909 = vpack.c.b16 %v4903, %v4902
    %v4910 = vpack.c.b16 %v4905, %v4904
    %v4911 = vpack.c.b16 %v4907, %v4906
    %v4917 = vsel %vm671, %v4884, 0
    %v4920 = vsel %vm671, %v4885, 0
    %v4923 = vsel %vm671, %v4886, 0
    %v4926 = vsel %vm671, %v4887, 0
    %v4929 = vsel %vm671, %v4888, 0
    %v4932 = vsel %vm671, %v4889, 0
    %v4935 = vsel %vm671, %v4890, 0
    %v4938 = vsel %vm671, %v4891, 0
    %4940 = vmatprep.subr.bf16.mxu0 0
    %4941 = vmatpush1.bf16.msra.mxu0 %v4908
    %4942 = vmatprep.subr.bf16.mxu0 0
    %4943 = vmatpush1.bf16.msra.mxu0 %v4909
    %4944 = vmatprep.subr.bf16.mxu0 0
    %4945 = vmatpush1.bf16.msra.mxu0 %v4910
    %4946 = vmatprep.subr.bf16.mxu0 0
    %4947 = vmatpush1.bf16.msra.mxu0 %v4911
    %4948 = vmatprep.subr.bf16.mxu0 0
    %4949 = vmatpush1.bf16.msra.mxu0 0
    %4950 = vmatprep.subr.bf16.mxu0 0
    %4951 = vmatpush1.bf16.msra.mxu0 0
    %4952 = vmatprep.subr.bf16.mxu0 0
    %4953 = vmatpush1.bf16.msra.mxu0 0
    %4954 = vmatprep.subr.bf16.mxu0 0
    %4955 = vmatpush1.bf16.msra.mxu0 0
    %4956 = vmatprep.subr.bf16.mxu0 0
    %4957 = vmatpush1.bf16.msra.mxu0 0
    %4958 = vmatprep.subr.bf16.mxu0 0
    %4959 = vmatpush1.bf16.msra.mxu0 0
    %4960 = vmatprep.subr.bf16.mxu0 0
    %4961 = vmatpush1.bf16.msra.mxu0 0
    %4962 = vmatprep.subr.bf16.mxu0 0
    %4963 = vmatpush1.bf16.msra.mxu0 0
    %4964 = vmatprep.subr.bf16.mxu0 0
    %4965 = vmatpush1.bf16.msra.mxu0 0
    %4966 = vmatprep.subr.bf16.mxu0 0
    %4967 = vmatpush1.bf16.msra.mxu0 0
    %4968 = vmatprep.subr.bf16.mxu0 0
    %4969 = vmatpush1.bf16.msra.mxu0 0
    %4970 = vmatprep.subr.bf16.mxu0 0
    %4971 = vmatpush1.bf16.msra.mxu0 0
    %4972 = vmatprep.mubr.bf16.mxu0 0
    %4973 = vmatmul.mubr.bf16.gmra.mrb[0].mxu0 %v4917
    %v4974 = vpop.f32.mrb[0].mxu0
    %v4975 = vadd.f32 %v4806, %v4974
    %v4976 = vpop.f32.mrb[0].mxu0
    %v4977 = vpop.f32.mrb[0].mxu0
    %v4978 = vadd.f32 %v4809, %v4977
    %v4979 = vpop.f32.mrb[0].mxu0
    %4980 = vmatprep.mubr.bf16.mxu0 0
    %4981 = vmatmul.mubr.bf16.gmra.mrb[0].mxu0 %v4920
    %v4982 = vpop.f32.mrb[0].mxu0
    %v4983 = vadd.f32 %v4814, %v4982
    %v4984 = vpop.f32.mrb[0].mxu0
    %v4985 = vpop.f32.mrb[0].mxu0
    %v4986 = vadd.f32 %v4817, %v4985
    %v4987 = vpop.f32.mrb[0].mxu0
    %4988 = vmatprep.mubr.bf16.mxu0 0
    %4989 = vmatmul.mubr.bf16.gmra.mrb[0].mxu0 %v4923
    %v4990 = vpop.f32.mrb[0].mxu0
    %v4991 = vadd.f32 %v4822, %v4990
    %v4992 = vpop.f32.mrb[0].mxu0
    %v4993 = vpop.f32.mrb[0].mxu0
    %v4994 = vadd.f32 %v4825, %v4993
    %v4995 = vpop.f32.mrb[0].mxu0
    %4996 = vmatprep.mubr.bf16.mxu0 0
    %4997 = vmatmul.mubr.bf16.gmra.mrb[0].mxu0 %v4926
    %v4998 = vpop.f32.mrb[0].mxu0
    %v4999 = vadd.f32 %v4830, %v4998
    %v5000 = vpop.f32.mrb[0].mxu0
    %v5001 = vpop.f32.mrb[0].mxu0
    %v5002 = vadd.f32 %v4833, %v5001
    %v5003 = vpop.f32.mrb[0].mxu0
    %5004 = vmatprep.mubr.bf16.mxu0 0
    %5005 = vmatmul.mubr.bf16.gmra.mrb[0].mxu0 %v4929
    %v5006 = vpop.f32.mrb[0].mxu0
    %v5007 = vadd.f32 %v4838, %v5006
    %v5008 = vpop.f32.mrb[0].mxu0
    %v5009 = vpop.f32.mrb[0].mxu0
    %v5010 = vadd.f32 %v4841, %v5009
    %v5011 = vpop.f32.mrb[0].mxu0
    %5012 = vmatprep.mubr.bf16.mxu0 0
    %5013 = vmatmul.mubr.bf16.gmra.mrb[0].mxu0 %v4932
    %v5014 = vpop.f32.mrb[0].mxu0
    %v5015 = vadd.f32 %v4846, %v5014
    %v5016 = vpop.f32.mrb[0].mxu0
    %v5017 = vpop.f32.mrb[0].mxu0
    %v5018 = vadd.f32 %v4849, %v5017
    %v5019 = vpop.f32.mrb[0].mxu0
    %5020 = vmatprep.mubr.bf16.mxu0 0
    %5021 = vmatmul.mubr.bf16.gmra.mrb[0].mxu0 %v4935
    %v5022 = vpop.f32.mrb[0].mxu0
    %v5023 = vadd.f32 %v4854, %v5022
    %v5024 = vpop.f32.mrb[0].mxu0
    %v5025 = vpop.f32.mrb[0].mxu0
    %v5026 = vadd.f32 %v4857, %v5025
    %v5027 = vpop.f32.mrb[0].mxu0
    %5028 = vmatprep.mubr.bf16.mxu0 0
    %5029 = vmatmul.mubr.bf16.gmra.mrb[0].mxu0 %v4938
    %v5030 = vpop.f32.mrb[0].mxu0
    %v5031 = vadd.f32 %v4862, %v5030
    %v5032 = vpop.f32.mrb[0].mxu0
    %v5033 = vpop.f32.mrb[0].mxu0
    %v5034 = vadd.f32 %v4865, %v5033
    %v5035 = vpop.f32.mrb[0].mxu0
    %5036 = vdwg.mxu0
    %v5037 = vld [vmem:[#allocation2 + $0x4] sm:$0x3]
    %v5038 = vld [vmem:[#allocation2 + $0xc] sm:$0x3]
    %v5039 = vld [vmem:[#allocation2 + $0x14] sm:$0x3]
    %v5040 = vld [vmem:[#allocation2 + $0x1c] sm:$0x3]
    %v5041 = vld [vmem:[#allocation2 + $0x24] sm:$0x3]
    %v5042 = vld [vmem:[#allocation2 + $0x2c] sm:$0x3]
    %v5043 = vld [vmem:[#allocation2 + $0x34] sm:$0x3]
    %v5044 = vld [vmem:[#allocation2 + $0x3c] sm:$0x3]
    %v5045 = vld [vmem:[#allocation2 + $0x54] sm:$0x3]
    %v5046 = vld [vmem:[#allocation2 + $0x5c] sm:$0x3]
    %v5047 = vld [vmem:[#allocation2 + $0x64] sm:$0x3]
    %v5048 = vld [vmem:[#allocation2 + $0x6c] sm:$0x3]
    %v5049 = vld [vmem:[#allocation2 + $0x74] sm:$0x3]
    %v5050 = vld [vmem:[#allocation2 + $0x7c] sm:$0x3]
    %v5051 = vld [vmem:[#allocation2 + $0x84] sm:$0x3]
    %v5052 = vld [vmem:[#allocation2 + $0x8c] sm:$0x3]
    %v5054 = vshrl.u32 %v4579, 16
    %v5056 = vrot.slane %v5054, 5
    %v5057 = vshll.u32 %v4579, 16
    %v5059 = vrot.slane %v5057, 6
    %v5060 = vor.u32 %v5056, %v5059
    %v5061 = vrot.slane %v5060, 4
    %v5063 = vshrl.u32 %v5037, 16
    %v5065 = vrot.slane %v5063, 5
    %v5066 = vshll.u32 %v5037, 16
    %v5068 = vrot.slane %v5066, 6
    %v5069 = vor.u32 %v5065, %v5068
    %v5070 = vsel %vm980, %v5061, %v5069
    %v5072 = vshrl.u32 %v4580, 16
    %v5074 = vrot.slane %v5072, 5
    %v5075 = vshll.u32 %v4580, 16
    %v5077 = vrot.slane %v5075, 6
    %v5078 = vor.u32 %v5074, %v5077
    %v5079 = vrot.slane %v5078, 4
    %v5081 = vshrl.u32 %v5038, 16
    %v5083 = vrot.slane %v5081, 5
    %v5084 = vshll.u32 %v5038, 16
    %v5086 = vrot.slane %v5084, 6
    %v5087 = vor.u32 %v5083, %v5086
    %v5088 = vsel %vm980, %v5079, %v5087
    %v5090 = vshrl.u32 %v4581, 16
    %v5092 = vrot.slane %v5090, 5
    %v5093 = vshll.u32 %v4581, 16
    %v5095 = vrot.slane %v5093, 6
    %v5096 = vor.u32 %v5092, %v5095
    %v5097 = vrot.slane %v5096, 4
    %v5099 = vshrl.u32 %v5039, 16
    %v5101 = vrot.slane %v5099, 5
    %v5102 = vshll.u32 %v5039, 16
    %v5104 = vrot.slane %v5102, 6
    %v5105 = vor.u32 %v5101, %v5104
    %v5106 = vsel %vm980, %v5097, %v5105
    %v5108 = vshrl.u32 %v4582, 16
    %v5110 = vrot.slane %v5108, 5
    %v5111 = vshll.u32 %v4582, 16
    %v5113 = vrot.slane %v5111, 6
    %v5114 = vor.u32 %v5110, %v5113
    %v5115 = vrot.slane %v5114, 4
    %v5117 = vshrl.u32 %v5040, 16
    %v5119 = vrot.slane %v5117, 5
    %v5120 = vshll.u32 %v5040, 16
    %v5122 = vrot.slane %v5120, 6
    %v5123 = vor.u32 %v5119, %v5122
    %v5124 = vsel %vm980, %v5115, %v5123
    %v5126 = vshrl.u32 %v4583, 16
    %v5128 = vrot.slane %v5126, 5
    %v5129 = vshll.u32 %v4583, 16
    %v5131 = vrot.slane %v5129, 6
    %v5132 = vor.u32 %v5128, %v5131
    %v5133 = vrot.slane %v5132, 4
    %v5135 = vshrl.u32 %v5041, 16
    %v5137 = vrot.slane %v5135, 5
    %v5138 = vshll.u32 %v5041, 16
    %v5140 = vrot.slane %v5138, 6
    %v5141 = vor.u32 %v5137, %v5140
    %v5142 = vsel %vm980, %v5133, %v5141
    %v5144 = vshrl.u32 %v4584, 16
    %v5146 = vrot.slane %v5144, 5
    %v5147 = vshll.u32 %v4584, 16
    %v5149 = vrot.slane %v5147, 6
    %v5150 = vor.u32 %v5146, %v5149
    %v5151 = vrot.slane %v5150, 4
    %v5153 = vshrl.u32 %v5042, 16
    %v5155 = vrot.slane %v5153, 5
    %v5156 = vshll.u32 %v5042, 16
    %v5158 = vrot.slane %v5156, 6
    %v5159 = vor.u32 %v5155, %v5158
    %v5160 = vsel %vm980, %v5151, %v5159
    %v5162 = vshrl.u32 %v4585, 16
    %v5164 = vrot.slane %v5162, 5
    %v5165 = vshll.u32 %v4585, 16
    %v5167 = vrot.slane %v5165, 6
    %v5168 = vor.u32 %v5164, %v5167
    %v5169 = vrot.slane %v5168, 4
    %v5171 = vshrl.u32 %v5043, 16
    %v5173 = vrot.slane %v5171, 5
    %v5174 = vshll.u32 %v5043, 16
    %v5176 = vrot.slane %v5174, 6
    %v5177 = vor.u32 %v5173, %v5176
    %v5178 = vsel %vm980, %v5169, %v5177
    %v5180 = vshrl.u32 %v4586, 16
    %v5182 = vrot.slane %v5180, 5
    %v5183 = vshll.u32 %v4586, 16
    %v5185 = vrot.slane %v5183, 6
    %v5186 = vor.u32 %v5182, %v5185
    %v5187 = vrot.slane %v5186, 4
    %v5189 = vshrl.u32 %v5044, 16
    %v5191 = vrot.slane %v5189, 5
    %v5192 = vshll.u32 %v5044, 16
    %v5194 = vrot.slane %v5192, 6
    %v5195 = vor.u32 %v5191, %v5194
    %v5196 = vsel %vm980, %v5187, %v5195
    %v5198 = vshrl.u32 %v4587, 16
    %v5200 = vrot.slane %v5198, 5
    %v5201 = vshll.u32 %v4587, 16
    %v5203 = vrot.slane %v5201, 6
    %v5204 = vor.u32 %v5200, %v5203
    %v5205 = vrot.slane %v5204, 4
    %v5207 = vshrl.u32 %v5045, 16
    %v5209 = vrot.slane %v5207, 5
    %v5210 = vshll.u32 %v5045, 16
    %v5212 = vrot.slane %v5210, 6
    %v5213 = vor.u32 %v5209, %v5212
    %v5214 = vsel %vm980, %v5205, %v5213
    %v5216 = vshrl.u32 %v4588, 16
    %v5218 = vrot.slane %v5216, 5
    %v5219 = vshll.u32 %v4588, 16
    %v5221 = vrot.slane %v5219, 6
    %v5222 = vor.u32 %v5218, %v5221
    %v5223 = vrot.slane %v5222, 4
    %v5225 = vshrl.u32 %v5046, 16
    %v5227 = vrot.slane %v5225, 5
    %v5228 = vshll.u32 %v5046, 16
    %v5230 = vrot.slane %v5228, 6
    %v5231 = vor.u32 %v5227, %v5230
    %v5232 = vsel %vm980, %v5223, %v5231
    %v5234 = vshrl.u32 %v4589, 16
    %v5236 = vrot.slane %v5234, 5
    %v5237 = vshll.u32 %v4589, 16
    %v5239 = vrot.slane %v5237, 6
    %v5240 = vor.u32 %v5236, %v5239
    %v5241 = vrot.slane %v5240, 4
    %v5243 = vshrl.u32 %v5047, 16
    %v5245 = vrot.slane %v5243, 5
    %v5246 = vshll.u32 %v5047, 16
    %v5248 = vrot.slane %v5246, 6
    %v5249 = vor.u32 %v5245, %v5248
    %v5250 = vsel %vm980, %v5241, %v5249
    %v5252 = vshrl.u32 %v4590, 16
    %v5254 = vrot.slane %v5252, 5
    %v5255 = vshll.u32 %v4590, 16
    %v5257 = vrot.slane %v5255, 6
    %v5258 = vor.u32 %v5254, %v5257
    %v5259 = vrot.slane %v5258, 4
    %v5261 = vshrl.u32 %v5048, 16
    %v5263 = vrot.slane %v5261, 5
    %v5264 = vshll.u32 %v5048, 16
    %v5266 = vrot.slane %v5264, 6
    %v5267 = vor.u32 %v5263, %v5266
    %v5268 = vsel %vm980, %v5259, %v5267
    %v5270 = vshrl.u32 %v4591, 16
    %v5272 = vrot.slane %v5270, 5
    %v5273 = vshll.u32 %v4591, 16
    %v5275 = vrot.slane %v5273, 6
    %v5276 = vor.u32 %v5272, %v5275
    %v5277 = vrot.slane %v5276, 4
    %v5279 = vshrl.u32 %v5049, 16
    %v5281 = vrot.slane %v5279, 5
    %v5282 = vshll.u32 %v5049, 16
    %v5284 = vrot.slane %v5282, 6
    %v5285 = vor.u32 %v5281, %v5284
    %v5286 = vsel %vm980, %v5277, %v5285
    %v5288 = vshrl.u32 %v4592, 16
    %v5290 = vrot.slane %v5288, 5
    %v5291 = vshll.u32 %v4592, 16
    %v5293 = vrot.slane %v5291, 6
    %v5294 = vor.u32 %v5290, %v5293
    %v5295 = vrot.slane %v5294, 4
    %v5297 = vshrl.u32 %v5050, 16
    %v5299 = vrot.slane %v5297, 5
    %v5300 = vshll.u32 %v5050, 16
    %v5302 = vrot.slane %v5300, 6
    %v5303 = vor.u32 %v5299, %v5302
    %v5304 = vsel %vm980, %v5295, %v5303
    %v5306 = vshrl.u32 %v4593, 16
    %v5308 = vrot.slane %v5306, 5
    %v5309 = vshll.u32 %v4593, 16
    %v5311 = vrot.slane %v5309, 6
    %v5312 = vor.u32 %v5308, %v5311
    %v5313 = vrot.slane %v5312, 4
    %v5315 = vshrl.u32 %v5051, 16
    %v5317 = vrot.slane %v5315, 5
    %v5318 = vshll.u32 %v5051, 16
    %v5320 = vrot.slane %v5318, 6
    %v5321 = vor.u32 %v5317, %v5320
    %v5322 = vsel %vm980, %v5313, %v5321
    %v5324 = vshrl.u32 %v4594, 16
    %v5326 = vrot.slane %v5324, 5
    %v5327 = vshll.u32 %v4594, 16
    %v5329 = vrot.slane %v5327, 6
    %v5330 = vor.u32 %v5326, %v5329
    %v5331 = vrot.slane %v5330, 4
    %v5333 = vshrl.u32 %v5052, 16
    %v5335 = vrot.slane %v5333, 5
    %v5336 = vshll.u32 %v5052, 16
    %v5338 = vrot.slane %v5336, 6
    %v5339 = vor.u32 %v5335, %v5338
    %v5340 = vsel %vm980, %v5331, %v5339
    %v5341 = vld [vmem:[%s2 + $0x40] sm:$0xf]
    %v5342 = vld [vmem:[%s2 + $0x44] sm:$0xf]
    %v5343 = vld [vmem:[%s2 + $0x48] sm:$0xf]
    %v5344 = vld [vmem:[%s2 + $0x4c] sm:$0xf]
    %v5345 = vld [vmem:[%s2 + $0x50] sm:$0xf]
    %v5346 = vld [vmem:[%s2 + $0x54] sm:$0xf]
    %v5347 = vld [vmem:[%s2 + $0x58] sm:$0xf]
    %v5348 = vld [vmem:[%s2 + $0x5c] sm:$0xf]
    %v5349 = vunpack.c.l.b16 %v5070
    %v5350 = vunpack.c.l.b16 %v5088
    %v5351 = vunpack.c.l.b16 %v5106
    %v5352 = vunpack.c.l.b16 %v5124
    %v5353 = vunpack.c.l.b16 %v5142
    %v5354 = vunpack.c.l.b16 %v5160
    %v5355 = vunpack.c.l.b16 %v5178
    %v5356 = vunpack.c.l.b16 %v5196
    %v5357 = vunpack.c.l.b16 %v5214
    %v5358 = vunpack.c.l.b16 %v5232
    %v5359 = vunpack.c.l.b16 %v5250
    %v5360 = vunpack.c.l.b16 %v5268
    %v5361 = vunpack.c.l.b16 %v5286
    %v5362 = vunpack.c.l.b16 %v5304
    %v5363 = vunpack.c.l.b16 %v5322
    %v5364 = vunpack.c.l.b16 %v5340
    %v5365 = vpack.c.b16 %v5350, %v5349
    %v5366 = vpack.c.b16 %v5352, %v5351
    %v5367 = vpack.c.b16 %v5354, %v5353
    %v5368 = vpack.c.b16 %v5356, %v5355
    %v5369 = vpack.c.b16 %v5358, %v5357
    %v5370 = vpack.c.b16 %v5360, %v5359
    %v5371 = vpack.c.b16 %v5362, %v5361
    %v5372 = vpack.c.b16 %v5364, %v5363
    %v5381 = vunpack.c.l.b16 %v5341
    %v5382 = vunpack.c.l.b16 %v5342
    %v5383 = vunpack.c.l.b16 %v5343
    %v5384 = vunpack.c.l.b16 %v5344
    %v5385 = vunpack.c.l.b16 %v5345
    %v5386 = vunpack.c.l.b16 %v5346
    %v5387 = vunpack.c.l.b16 %v5347
    %v5388 = vunpack.c.l.b16 %v5348
    %v5389 = vpack.c.b16 %v5382, %v5381
    %v5390 = vpack.c.b16 %v5384, %v5383
    %v5391 = vpack.c.b16 %v5386, %v5385
    %v5392 = vpack.c.b16 %v5388, %v5387
    %v5398 = vsel %vm671, %v5365, 0
    %v5401 = vsel %vm671, %v5366, 0
    %v5404 = vsel %vm671, %v5367, 0
    %v5407 = vsel %vm671, %v5368, 0
    %v5410 = vsel %vm671, %v5369, 0
    %v5413 = vsel %vm671, %v5370, 0
    %v5416 = vsel %vm671, %v5371, 0
    %v5419 = vsel %vm671, %v5372, 0
    %5421 = vmatprep.subr.bf16.mxu0 0
    %5422 = vmatpush1.bf16.msra.mxu0 %v5389
    %5423 = vmatprep.subr.bf16.mxu0 0
    %5424 = vmatpush1.bf16.msra.mxu0 %v5390
    %5425 = vmatprep.subr.bf16.mxu0 0
    %5426 = vmatpush1.bf16.msra.mxu0 %v5391
    %5427 = vmatprep.subr.bf16.mxu0 0
    %5428 = vmatpush1.bf16.msra.mxu0 %v5392
    %5429 = vmatprep.subr.bf16.mxu0 0
    %5430 = vmatpush1.bf16.msra.mxu0 0
    %5431 = vmatprep.subr.bf16.mxu0 0
    %5432 = vmatpush1.bf16.msra.mxu0 0
    %5433 = vmatprep.subr.bf16.mxu0 0
    %5434 = vmatpush1.bf16.msra.mxu0 0
    %5435 = vmatprep.subr.bf16.mxu0 0
    %5436 = vmatpush1.bf16.msra.mxu0 0
    %5437 = vmatprep.subr.bf16.mxu0 0
    %5438 = vmatpush1.bf16.msra.mxu0 0
    %5439 = vmatprep.subr.bf16.mxu0 0
    %5440 = vmatpush1.bf16.msra.mxu0 0
    %5441 = vmatprep.subr.bf16.mxu0 0
    %5442 = vmatpush1.bf16.msra.mxu0 0
    %5443 = vmatprep.subr.bf16.mxu0 0
    %5444 = vmatpush1.bf16.msra.mxu0 0
    %5445 = vmatprep.subr.bf16.mxu0 0
    %5446 = vmatpush1.bf16.msra.mxu0 0
    %5447 = vmatprep.subr.bf16.mxu0 0
    %5448 = vmatpush1.bf16.msra.mxu0 0
    %5449 = vmatprep.subr.bf16.mxu0 0
    %5450 = vmatpush1.bf16.msra.mxu0 0
    %5451 = vmatprep.subr.bf16.mxu0 0
    %5452 = vmatpush1.bf16.msra.mxu0 0
    %5453 = vmatprep.mubr.bf16.mxu0 0
    %5454 = vmatmul.mubr.bf16.gmra.mrb[0].mxu0 %v5398
    %v5455 = vpop.f32.mrb[0].mxu0
    %v5456 = vadd.f32 0.0, %v5455
    %v5457 = vpop.f32.mrb[0].mxu0
    %v5458 = vpop.f32.mrb[0].mxu0
    %v5459 = vadd.f32 0.0, %v5458
    %v5460 = vpop.f32.mrb[0].mxu0
    %5461 = vmatprep.mubr.bf16.mxu0 0
    %5462 = vmatmul.mubr.bf16.gmra.mrb[0].mxu0 %v5401
    %v5463 = vpop.f32.mrb[0].mxu0
    %v5464 = vadd.f32 0.0, %v5463
    %v5465 = vpop.f32.mrb[0].mxu0
    %v5466 = vpop.f32.mrb[0].mxu0
    %v5467 = vadd.f32 0.0, %v5466
    %v5468 = vpop.f32.mrb[0].mxu0
    %5469 = vmatprep.mubr.bf16.mxu0 0
    %5470 = vmatmul.mubr.bf16.gmra.mrb[0].mxu0 %v5404
    %v5471 = vpop.f32.mrb[0].mxu0
    %v5472 = vadd.f32 0.0, %v5471
    %v5473 = vpop.f32.mrb[0].mxu0
    %v5474 = vpop.f32.mrb[0].mxu0
    %v5475 = vadd.f32 0.0, %v5474
    %v5476 = vpop.f32.mrb[0].mxu0
    %5477 = vmatprep.mubr.bf16.mxu0 0
    %5478 = vmatmul.mubr.bf16.gmra.mrb[0].mxu0 %v5407
    %v5479 = vpop.f32.mrb[0].mxu0
    %v5480 = vadd.f32 0.0, %v5479
    %v5481 = vpop.f32.mrb[0].mxu0
    %v5482 = vpop.f32.mrb[0].mxu0
    %v5483 = vadd.f32 0.0, %v5482
    %v5484 = vpop.f32.mrb[0].mxu0
    %5485 = vmatprep.mubr.bf16.mxu0 0
    %5486 = vmatmul.mubr.bf16.gmra.mrb[0].mxu0 %v5410
    %v5487 = vpop.f32.mrb[0].mxu0
    %v5488 = vadd.f32 0.0, %v5487
    %v5489 = vpop.f32.mrb[0].mxu0
    %v5490 = vpop.f32.mrb[0].mxu0
    %v5491 = vadd.f32 0.0, %v5490
    %v5492 = vpop.f32.mrb[0].mxu0
    %5493 = vmatprep.mubr.bf16.mxu0 0
    %5494 = vmatmul.mubr.bf16.gmra.mrb[0].mxu0 %v5413
    %v5495 = vpop.f32.mrb[0].mxu0
    %v5496 = vadd.f32 0.0, %v5495
    %v5497 = vpop.f32.mrb[0].mxu0
    %v5498 = vpop.f32.mrb[0].mxu0
    %v5499 = vadd.f32 0.0, %v5498
    %v5500 = vpop.f32.mrb[0].mxu0
    %5501 = vmatprep.mubr.bf16.mxu0 0
    %5502 = vmatmul.mubr.bf16.gmra.mrb[0].mxu0 %v5416
    %v5503 = vpop.f32.mrb[0].mxu0
    %v5504 = vadd.f32 0.0, %v5503
    %v5505 = vpop.f32.mrb[0].mxu0
    %v5506 = vpop.f32.mrb[0].mxu0
    %v5507 = vadd.f32 0.0, %v5506
    %v5508 = vpop.f32.mrb[0].mxu0
    %5509 = vmatprep.mubr.bf16.mxu0 0
    %5510 = vmatmul.mubr.bf16.gmra.mrb[0].mxu0 %v5419
    %v5511 = vpop.f32.mrb[0].mxu0
    %v5512 = vadd.f32 0.0, %v5511
    %v5513 = vpop.f32.mrb[0].mxu0
    %v5514 = vpop.f32.mrb[0].mxu0
    %v5515 = vadd.f32 0.0, %v5514
    %v5516 = vpop.f32.mrb[0].mxu0
    %5517 = vdwg.mxu0
    %v5518 = vadd.f32 %v4975, %v5456
    %v5519 = vadd.f32 %v4978, %v5459
    %v5520 = vadd.f32 %v4983, %v5464
    %v5521 = vadd.f32 %v4986, %v5467
    %v5522 = vadd.f32 %v4991, %v5472
    %v5523 = vadd.f32 %v4994, %v5475
    %v5524 = vadd.f32 %v4999, %v5480
    %v5525 = vadd.f32 %v5002, %v5483
    %v5526 = vadd.f32 %v5007, %v5488
    %v5527 = vadd.f32 %v5010, %v5491
    %v5528 = vadd.f32 %v5015, %v5496
    %v5529 = vadd.f32 %v5018, %v5499
    %v5530 = vadd.f32 %v5023, %v5504
    %v5531 = vadd.f32 %v5026, %v5507
    %v5532 = vadd.f32 %v5031, %v5512
    %v5533 = vadd.f32 %v5034, %v5515
    %v5534 = vld [vmem:[%s198] sm:$0xf]
    %v5535 = vld [vmem:[%s198 + $0x4] sm:$0x1]
    %v5536 = vld [vmem:[%s198 + $0x8] sm:$0xf]
    %v5537 = vld [vmem:[%s198 + $0xc] sm:$0x1]
    %v5538 = vld [vmem:[%s198 + $0x10] sm:$0xf]
    %v5539 = vld [vmem:[%s198 + $0x14] sm:$0x1]
    %v5540 = vld [vmem:[%s198 + $0x18] sm:$0xf]
    %v5541 = vld [vmem:[%s198 + $0x1c] sm:$0x1]
    %v5542 = vld [vmem:[%s198 + $0x20] sm:$0xf]
    %v5543 = vld [vmem:[%s198 + $0x24] sm:$0x1]
    %v5544 = vld [vmem:[%s198 + $0x28] sm:$0xf]
    %v5545 = vld [vmem:[%s198 + $0x2c] sm:$0x1]
    %v5546 = vld [vmem:[%s198 + $0x30] sm:$0xf]
    %v5547 = vld [vmem:[%s198 + $0x34] sm:$0x1]
    %v5548 = vld [vmem:[%s198 + $0x38] sm:$0xf]
    %v5549 = vld [vmem:[%s198 + $0x3c] sm:$0x1]
    %v5550 = vld [vmem:[%s198 + $0x50] sm:$0xf]
    %v5551 = vld [vmem:[%s198 + $0x54] sm:$0x1]
    %v5552 = vld [vmem:[%s198 + $0x58] sm:$0xf]
    %v5553 = vld [vmem:[%s198 + $0x5c] sm:$0x1]
    %v5554 = vld [vmem:[%s198 + $0x60] sm:$0xf]
    %v5555 = vld [vmem:[%s198 + $0x64] sm:$0x1]
    %v5556 = vld [vmem:[%s198 + $0x68] sm:$0xf]
    %v5557 = vld [vmem:[%s198 + $0x6c] sm:$0x1]
    %v5558 = vld [vmem:[%s198 + $0x70] sm:$0xf]
    %v5559 = vld [vmem:[%s198 + $0x74] sm:$0x1]
    %v5560 = vld [vmem:[%s198 + $0x78] sm:$0xf]
    %v5561 = vld [vmem:[%s198 + $0x7c] sm:$0x1]
    %v5562 = vld [vmem:[%s198 + $0x80] sm:$0xf]
    %v5563 = vld [vmem:[%s198 + $0x84] sm:$0x1]
    %v5564 = vld [vmem:[%s198 + $0x88] sm:$0xf]
    %v5565 = vld [vmem:[%s198 + $0x8c] sm:$0x1]
    %v5567 = vshrl.u32 %v5534, 16
    %v5569 = vrot.slane %v5567, 4
    %v5570 = vshll.u32 %v5534, 16
    %v5572 = vrot.slane %v5570, 5
    %v5573 = vor.u32 %v5569, %v5572
    %v5574 = vrot.slane %v5573, 4
    %v5576 = vshll.u32 %v5535, 16
    %v5578 = vrot.slane %v5576, 5
    %v5579 = vsel %vm267, %v5574, %v5578
    %v5581 = vshrl.u32 %v5536, 16
    %v5583 = vrot.slane %v5581, 4
    %v5584 = vshll.u32 %v5536, 16
    %v5586 = vrot.slane %v5584, 5
    %v5587 = vor.u32 %v5583, %v5586
    %v5588 = vrot.slane %v5587, 4
    %v5590 = vshll.u32 %v5537, 16
    %v5592 = vrot.slane %v5590, 5
    %v5593 = vsel %vm267, %v5588, %v5592
    %v5595 = vshrl.u32 %v5538, 16
    %v5597 = vrot.slane %v5595, 4
    %v5598 = vshll.u32 %v5538, 16
    %v5600 = vrot.slane %v5598, 5
    %v5601 = vor.u32 %v5597, %v5600
    %v5602 = vrot.slane %v5601, 4
    %v5604 = vshll.u32 %v5539, 16
    %v5606 = vrot.slane %v5604, 5
    %v5607 = vsel %vm267, %v5602, %v5606
    %v5609 = vshrl.u32 %v5540, 16
    %v5611 = vrot.slane %v5609, 4
    %v5612 = vshll.u32 %v5540, 16
    %v5614 = vrot.slane %v5612, 5
    %v5615 = vor.u32 %v5611, %v5614
    %v5616 = vrot.slane %v5615, 4
    %v5618 = vshll.u32 %v5541, 16
    %v5620 = vrot.slane %v5618, 5
    %v5621 = vsel %vm267, %v5616, %v5620
    %v5623 = vshrl.u32 %v5542, 16
    %v5625 = vrot.slane %v5623, 4
    %v5626 = vshll.u32 %v5542, 16
    %v5628 = vrot.slane %v5626, 5
    %v5629 = vor.u32 %v5625, %v5628
    %v5630 = vrot.slane %v5629, 4
    %v5632 = vshll.u32 %v5543, 16
    %v5634 = vrot.slane %v5632, 5
    %v5635 = vsel %vm267, %v5630, %v5634
    %v5637 = vshrl.u32 %v5544, 16
    %v5639 = vrot.slane %v5637, 4
    %v5640 = vshll.u32 %v5544, 16
    %v5642 = vrot.slane %v5640, 5
    %v5643 = vor.u32 %v5639, %v5642
    %v5644 = vrot.slane %v5643, 4
    %v5646 = vshll.u32 %v5545, 16
    %v5648 = vrot.slane %v5646, 5
    %v5649 = vsel %vm267, %v5644, %v5648
    %v5651 = vshrl.u32 %v5546, 16
    %v5653 = vrot.slane %v5651, 4
    %v5654 = vshll.u32 %v5546, 16
    %v5656 = vrot.slane %v5654, 5
    %v5657 = vor.u32 %v5653, %v5656
    %v5658 = vrot.slane %v5657, 4
    %v5660 = vshll.u32 %v5547, 16
    %v5662 = vrot.slane %v5660, 5
    %v5663 = vsel %vm267, %v5658, %v5662
    %v5665 = vshrl.u32 %v5548, 16
    %v5667 = vrot.slane %v5665, 4
    %v5668 = vshll.u32 %v5548, 16
    %v5670 = vrot.slane %v5668, 5
    %v5671 = vor.u32 %v5667, %v5670
    %v5672 = vrot.slane %v5671, 4
    %v5674 = vshll.u32 %v5549, 16
    %v5676 = vrot.slane %v5674, 5
    %v5677 = vsel %vm267, %v5672, %v5676
    %v5679 = vshrl.u32 %v5550, 16
    %v5681 = vrot.slane %v5679, 4
    %v5682 = vshll.u32 %v5550, 16
    %v5684 = vrot.slane %v5682, 5
    %v5685 = vor.u32 %v5681, %v5684
    %v5686 = vrot.slane %v5685, 4
    %v5688 = vshll.u32 %v5551, 16
    %v5690 = vrot.slane %v5688, 5
    %v5691 = vsel %vm267, %v5686, %v5690
    %v5693 = vshrl.u32 %v5552, 16
    %v5695 = vrot.slane %v5693, 4
    %v5696 = vshll.u32 %v5552, 16
    %v5698 = vrot.slane %v5696, 5
    %v5699 = vor.u32 %v5695, %v5698
    %v5700 = vrot.slane %v5699, 4
    %v5702 = vshll.u32 %v5553, 16
    %v5704 = vrot.slane %v5702, 5
    %v5705 = vsel %vm267, %v5700, %v5704
    %v5707 = vshrl.u32 %v5554, 16
    %v5709 = vrot.slane %v5707, 4
    %v5710 = vshll.u32 %v5554, 16
    %v5712 = vrot.slane %v5710, 5
    %v5713 = vor.u32 %v5709, %v5712
    %v5714 = vrot.slane %v5713, 4
    %v5716 = vshll.u32 %v5555, 16
    %v5718 = vrot.slane %v5716, 5
    %v5719 = vsel %vm267, %v5714, %v5718
    %v5721 = vshrl.u32 %v5556, 16
    %v5723 = vrot.slane %v5721, 4
    %v5724 = vshll.u32 %v5556, 16
    %v5726 = vrot.slane %v5724, 5
    %v5727 = vor.u32 %v5723, %v5726
    %v5728 = vrot.slane %v5727, 4
    %v5730 = vshll.u32 %v5557, 16
    %v5732 = vrot.slane %v5730, 5
    %v5733 = vsel %vm267, %v5728, %v5732
    %v5735 = vshrl.u32 %v5558, 16
    %v5737 = vrot.slane %v5735, 4
    %v5738 = vshll.u32 %v5558, 16
    %v5740 = vrot.slane %v5738, 5
    %v5741 = vor.u32 %v5737, %v5740
    %v5742 = vrot.slane %v5741, 4
    %v5744 = vshll.u32 %v5559, 16
    %v5746 = vrot.slane %v5744, 5
    %v5747 = vsel %vm267, %v5742, %v5746
    %v5749 = vshrl.u32 %v5560, 16
    %v5751 = vrot.slane %v5749, 4
    %v5752 = vshll.u32 %v5560, 16
    %v5754 = vrot.slane %v5752, 5
    %v5755 = vor.u32 %v5751, %v5754
    %v5756 = vrot.slane %v5755, 4
    %v5758 = vshll.u32 %v5561, 16
    %v5760 = vrot.slane %v5758, 5
    %v5761 = vsel %vm267, %v5756, %v5760
    %v5763 = vshrl.u32 %v5562, 16
    %v5765 = vrot.slane %v5763, 4
    %v5766 = vshll.u32 %v5562, 16
    %v5768 = vrot.slane %v5766, 5
    %v5769 = vor.u32 %v5765, %v5768
    %v5770 = vrot.slane %v5769, 4
    %v5772 = vshll.u32 %v5563, 16
    %v5774 = vrot.slane %v5772, 5
    %v5775 = vsel %vm267, %v5770, %v5774
    %v5777 = vshrl.u32 %v5564, 16
    %v5779 = vrot.slane %v5777, 4
    %v5780 = vshll.u32 %v5564, 16
    %v5782 = vrot.slane %v5780, 5
    %v5783 = vor.u32 %v5779, %v5782
    %v5784 = vrot.slane %v5783, 4
    %v5786 = vshll.u32 %v5565, 16
    %v5788 = vrot.slane %v5786, 5
    %v5789 = vsel %vm267, %v5784, %v5788
    %v5790 = vld [vmem:[%s2 + $0x60] sm:$0xf]
    %v5791 = vld [vmem:[%s2 + $0x64] sm:$0xf]
    %v5792 = vld [vmem:[%s2 + $0x68] sm:$0xf]
    %v5793 = vld [vmem:[%s2 + $0x6c] sm:$0xf]
    %v5794 = vld [vmem:[%s2 + $0x70] sm:$0xf]
    %v5795 = vld [vmem:[%s2 + $0x74] sm:$0xf]
    %v5796 = vld [vmem:[%s2 + $0x78] sm:$0xf]
    %v5797 = vld [vmem:[%s2 + $0x7c] sm:$0xf]
    %v5798 = vunpack.c.l.b16 %v5579
    %v5799 = vunpack.c.l.b16 %v5593
    %v5800 = vunpack.c.l.b16 %v5607
    %v5801 = vunpack.c.l.b16 %v5621
    %v5802 = vunpack.c.l.b16 %v5635
    %v5803 = vunpack.c.l.b16 %v5649
    %v5804 = vunpack.c.l.b16 %v5663
    %v5805 = vunpack.c.l.b16 %v5677
    %v5806 = vunpack.c.l.b16 %v5691
    %v5807 = vunpack.c.l.b16 %v5705
    %v5808 = vunpack.c.l.b16 %v5719
    %v5809 = vunpack.c.l.b16 %v5733
    %v5810 = vunpack.c.l.b16 %v5747
    %v5811 = vunpack.c.l.b16 %v5761
    %v5812 = vunpack.c.l.b16 %v5775
    %v5813 = vunpack.c.l.b16 %v5789
    %v5814 = vpack.c.b16 %v5799, %v5798
    %v5815 = vpack.c.b16 %v5801, %v5800
    %v5816 = vpack.c.b16 %v5803, %v5802
    %v5817 = vpack.c.b16 %v5805, %v5804
    %v5818 = vpack.c.b16 %v5807, %v5806
    %v5819 = vpack.c.b16 %v5809, %v5808
    %v5820 = vpack.c.b16 %v5811, %v5810
    %v5821 = vpack.c.b16 %v5813, %v5812
    %v5830 = vunpack.c.l.b16 %v5790
    %v5831 = vunpack.c.l.b16 %v5791
    %v5832 = vunpack.c.l.b16 %v5792
    %v5833 = vunpack.c.l.b16 %v5793
    %v5834 = vunpack.c.l.b16 %v5794
    %v5835 = vunpack.c.l.b16 %v5795
    %v5836 = vunpack.c.l.b16 %v5796
    %v5837 = vunpack.c.l.b16 %v5797
    %v5838 = vpack.c.b16 %v5831, %v5830
    %v5839 = vpack.c.b16 %v5833, %v5832
    %v5840 = vpack.c.b16 %v5835, %v5834
    %v5841 = vpack.c.b16 %v5837, %v5836
    %v5847 = vsel %vm671, %v5814, 0
    %v5850 = vsel %vm671, %v5815, 0
    %v5853 = vsel %vm671, %v5816, 0
    %v5856 = vsel %vm671, %v5817, 0
    %v5859 = vsel %vm671, %v5818, 0
    %v5862 = vsel %vm671, %v5819, 0
    %v5865 = vsel %vm671, %v5820, 0
    %v5868 = vsel %vm671, %v5821, 0
    %5870 = vmatprep.subr.bf16.mxu0 0
    %5871 = vmatpush1.bf16.msra.mxu0 %v5838
    %5872 = vmatprep.subr.bf16.mxu0 0
    %5873 = vmatpush1.bf16.msra.mxu0 %v5839
    %5874 = vmatprep.subr.bf16.mxu0 0
    %5875 = vmatpush1.bf16.msra.mxu0 %v5840
    %5876 = vmatprep.subr.bf16.mxu0 0
    %5877 = vmatpush1.bf16.msra.mxu0 %v5841
    %5878 = vmatprep.subr.bf16.mxu0 0
    %5879 = vmatpush1.bf16.msra.mxu0 0
    %5880 = vmatprep.subr.bf16.mxu0 0
    %5881 = vmatpush1.bf16.msra.mxu0 0
    %5882 = vmatprep.subr.bf16.mxu0 0
    %5883 = vmatpush1.bf16.msra.mxu0 0
    %5884 = vmatprep.subr.bf16.mxu0 0
    %5885 = vmatpush1.bf16.msra.mxu0 0
    %5886 = vmatprep.subr.bf16.mxu0 0
    %5887 = vmatpush1.bf16.msra.mxu0 0
    %5888 = vmatprep.subr.bf16.mxu0 0
    %5889 = vmatpush1.bf16.msra.mxu0 0
    %5890 = vmatprep.subr.bf16.mxu0 0
    %5891 = vmatpush1.bf16.msra.mxu0 0
    %5892 = vmatprep.subr.bf16.mxu0 0
    %5893 = vmatpush1.bf16.msra.mxu0 0
    %5894 = vmatprep.subr.bf16.mxu0 0
    %5895 = vmatpush1.bf16.msra.mxu0 0
    %5896 = vmatprep.subr.bf16.mxu0 0
    %5897 = vmatpush1.bf16.msra.mxu0 0
    %5898 = vmatprep.subr.bf16.mxu0 0
    %5899 = vmatpush1.bf16.msra.mxu0 0
    %5900 = vmatprep.subr.bf16.mxu0 0
    %5901 = vmatpush1.bf16.msra.mxu0 0
    %5902 = vmatprep.mubr.bf16.mxu0 0
    %5903 = vmatmul.mubr.bf16.gmra.mrb[0].mxu0 %v5847
    %v5904 = vpop.f32.mrb[0].mxu0
    %v5905 = vadd.f32 0.0, %v5904
    %v5906 = vpop.f32.mrb[0].mxu0
    %v5907 = vpop.f32.mrb[0].mxu0
    %v5908 = vadd.f32 0.0, %v5907
    %v5909 = vpop.f32.mrb[0].mxu0
    %5910 = vmatprep.mubr.bf16.mxu0 0
    %5911 = vmatmul.mubr.bf16.gmra.mrb[0].mxu0 %v5850
    %v5912 = vpop.f32.mrb[0].mxu0
    %v5913 = vadd.f32 0.0, %v5912
    %v5914 = vpop.f32.mrb[0].mxu0
    %v5915 = vpop.f32.mrb[0].mxu0
    %v5916 = vadd.f32 0.0, %v5915
    %v5917 = vpop.f32.mrb[0].mxu0
    %5918 = vmatprep.mubr.bf16.mxu0 0
    %5919 = vmatmul.mubr.bf16.gmra.mrb[0].mxu0 %v5853
    %v5920 = vpop.f32.mrb[0].mxu0
    %v5921 = vadd.f32 0.0, %v5920
    %v5922 = vpop.f32.mrb[0].mxu0
    %v5923 = vpop.f32.mrb[0].mxu0
    %v5924 = vadd.f32 0.0, %v5923
    %v5925 = vpop.f32.mrb[0].mxu0
    %5926 = vmatprep.mubr.bf16.mxu0 0
    %5927 = vmatmul.mubr.bf16.gmra.mrb[0].mxu0 %v5856
    %v5928 = vpop.f32.mrb[0].mxu0
    %v5929 = vadd.f32 0.0, %v5928
    %v5930 = vpop.f32.mrb[0].mxu0
    %v5931 = vpop.f32.mrb[0].mxu0
    %v5932 = vadd.f32 0.0, %v5931
    %v5933 = vpop.f32.mrb[0].mxu0
    %5934 = vmatprep.mubr.bf16.mxu0 0
    %5935 = vmatmul.mubr.bf16.gmra.mrb[0].mxu0 %v5859
    %v5936 = vpop.f32.mrb[0].mxu0
    %v5937 = vadd.f32 0.0, %v5936
    %v5938 = vpop.f32.mrb[0].mxu0
    %v5939 = vpop.f32.mrb[0].mxu0
    %v5940 = vadd.f32 0.0, %v5939
    %v5941 = vpop.f32.mrb[0].mxu0
    %5942 = vmatprep.mubr.bf16.mxu0 0
    %5943 = vmatmul.mubr.bf16.gmra.mrb[0].mxu0 %v5862
    %v5944 = vpop.f32.mrb[0].mxu0
    %v5945 = vadd.f32 0.0, %v5944
    %v5946 = vpop.f32.mrb[0].mxu0
    %v5947 = vpop.f32.mrb[0].mxu0
    %v5948 = vadd.f32 0.0, %v5947
    %v5949 = vpop.f32.mrb[0].mxu0
    %5950 = vmatprep.mubr.bf16.mxu0 0
    %5951 = vmatmul.mubr.bf16.gmra.mrb[0].mxu0 %v5865
    %v5952 = vpop.f32.mrb[0].mxu0
    %v5953 = vadd.f32 0.0, %v5952
    %v5954 = vpop.f32.mrb[0].mxu0
    %v5955 = vpop.f32.mrb[0].mxu0
    %v5956 = vadd.f32 0.0, %v5955
    %v5957 = vpop.f32.mrb[0].mxu0
    %5958 = vmatprep.mubr.bf16.mxu0 0
    %5959 = vmatmul.mubr.bf16.gmra.mrb[0].mxu0 %v5868
    %v5960 = vpop.f32.mrb[0].mxu0
    %v5961 = vadd.f32 0.0, %v5960
    %v5962 = vpop.f32.mrb[0].mxu0
    %v5963 = vpop.f32.mrb[0].mxu0
    %v5964 = vadd.f32 0.0, %v5963
    %v5965 = vpop.f32.mrb[0].mxu0
    %5966 = vdwg.mxu0
    %v5967 = vadd.f32 %v5518, %v5905
    %v5968 = vadd.f32 %v5519, %v5908
    %v5969 = vadd.f32 %v5520, %v5913
    %v5970 = vadd.f32 %v5521, %v5916
    %v5971 = vadd.f32 %v5522, %v5921
    %v5972 = vadd.f32 %v5523, %v5924
    %v5973 = vadd.f32 %v5524, %v5929
    %v5974 = vadd.f32 %v5525, %v5932
    %v5975 = vadd.f32 %v5526, %v5937
    %v5976 = vadd.f32 %v5527, %v5940
    %v5977 = vadd.f32 %v5528, %v5945
    %v5978 = vadd.f32 %v5529, %v5948
    %v5979 = vadd.f32 %v5530, %v5953
    %v5980 = vadd.f32 %v5531, %v5956
    %v5981 = vadd.f32 %v5532, %v5961
    %v5982 = vadd.f32 %v5533, %v5964
    %v5983 = vld [vmem:[%s198] sm:$0xe]
    %v5984 = vld [vmem:[%s198 + $0x8] sm:$0xe]
    %v5985 = vld [vmem:[%s198 + $0x10] sm:$0xe]
    %v5986 = vld [vmem:[%s198 + $0x18] sm:$0xe]
    %v5987 = vld [vmem:[%s198 + $0x20] sm:$0xe]
    %v5988 = vld [vmem:[%s198 + $0x28] sm:$0xe]
    %v5989 = vld [vmem:[%s198 + $0x30] sm:$0xe]
    %v5990 = vld [vmem:[%s198 + $0x38] sm:$0xe]
    %v5991 = vld [vmem:[%s198 + $0x50] sm:$0xe]
    %v5992 = vld [vmem:[%s198 + $0x58] sm:$0xe]
    %v5993 = vld [vmem:[%s198 + $0x60] sm:$0xe]
    %v5994 = vld [vmem:[%s198 + $0x68] sm:$0xe]
    %v5995 = vld [vmem:[%s198 + $0x70] sm:$0xe]
    %v5996 = vld [vmem:[%s198 + $0x78] sm:$0xe]
    %v5997 = vld [vmem:[%s198 + $0x80] sm:$0xe]
    %v5998 = vld [vmem:[%s198 + $0x88] sm:$0xe]
    %v6031 = vrot.slane %v5983, 5
    %v6032 = vrot.slane %v6031, 4
    %v6033 = vrot.slane %v5535, 5
    %v6034 = vsel %vm550, %v6032, %v6033
    %v6035 = vrot.slane %v5984, 5
    %v6036 = vrot.slane %v6035, 4
    %v6037 = vrot.slane %v5537, 5
    %v6038 = vsel %vm550, %v6036, %v6037
    %v6039 = vrot.slane %v5985, 5
    %v6040 = vrot.slane %v6039, 4
    %v6041 = vrot.slane %v5539, 5
    %v6042 = vsel %vm550, %v6040, %v6041
    %v6043 = vrot.slane %v5986, 5
    %v6044 = vrot.slane %v6043, 4
    %v6045 = vrot.slane %v5541, 5
    %v6046 = vsel %vm550, %v6044, %v6045
    %v6047 = vrot.slane %v5987, 5
    %v6048 = vrot.slane %v6047, 4
    %v6049 = vrot.slane %v5543, 5
    %v6050 = vsel %vm550, %v6048, %v6049
    %v6051 = vrot.slane %v5988, 5
    %v6052 = vrot.slane %v6051, 4
    %v6053 = vrot.slane %v5545, 5
    %v6054 = vsel %vm550, %v6052, %v6053
    %v6055 = vrot.slane %v5989, 5
    %v6056 = vrot.slane %v6055, 4
    %v6057 = vrot.slane %v5547, 5
    %v6058 = vsel %vm550, %v6056, %v6057
    %v6059 = vrot.slane %v5990, 5
    %v6060 = vrot.slane %v6059, 4
    %v6061 = vrot.slane %v5549, 5
    %v6062 = vsel %vm550, %v6060, %v6061
    %v6063 = vrot.slane %v5991, 5
    %v6064 = vrot.slane %v6063, 4
    %v6065 = vrot.slane %v5551, 5
    %v6066 = vsel %vm550, %v6064, %v6065
    %v6067 = vrot.slane %v5992, 5
    %v6068 = vrot.slane %v6067, 4
    %v6069 = vrot.slane %v5553, 5
    %v6070 = vsel %vm550, %v6068, %v6069
    %v6071 = vrot.slane %v5993, 5
    %v6072 = vrot.slane %v6071, 4
    %v6073 = vrot.slane %v5555, 5
    %v6074 = vsel %vm550, %v6072, %v6073
    %v6075 = vrot.slane %v5994, 5
    %v6076 = vrot.slane %v6075, 4
    %v6077 = vrot.slane %v5557, 5
    %v6078 = vsel %vm550, %v6076, %v6077
    %v6079 = vrot.slane %v5995, 5
    %v6080 = vrot.slane %v6079, 4
    %v6081 = vrot.slane %v5559, 5
    %v6082 = vsel %vm550, %v6080, %v6081
    %v6083 = vrot.slane %v5996, 5
    %v6084 = vrot.slane %v6083, 4
    %v6085 = vrot.slane %v5561, 5
    %v6086 = vsel %vm550, %v6084, %v6085
    %v6087 = vrot.slane %v5997, 5
    %v6088 = vrot.slane %v6087, 4
    %v6089 = vrot.slane %v5563, 5
    %v6090 = vsel %vm550, %v6088, %v6089
    %v6091 = vrot.slane %v5998, 5
    %v6092 = vrot.slane %v6091, 4
    %v6093 = vrot.slane %v5565, 5
    %v6094 = vsel %vm550, %v6092, %v6093
    %v6095 = vld [vmem:[%s2 + $0x80] sm:$0xf]
    %v6096 = vld [vmem:[%s2 + $0x84] sm:$0xf]
    %v6097 = vld [vmem:[%s2 + $0x88] sm:$0xf]
    %v6098 = vld [vmem:[%s2 + $0x8c] sm:$0xf]
    %v6099 = vld [vmem:[%s2 + $0x90] sm:$0xf]
    %v6100 = vld [vmem:[%s2 + $0x94] sm:$0xf]
    %v6101 = vld [vmem:[%s2 + $0x98] sm:$0xf]
    %v6102 = vld [vmem:[%s2 + $0x9c] sm:$0xf]
    %v6103 = vunpack.c.l.b16 %v6034
    %v6104 = vunpack.c.l.b16 %v6038
    %v6105 = vunpack.c.l.b16 %v6042
    %v6106 = vunpack.c.l.b16 %v6046
    %v6107 = vunpack.c.l.b16 %v6050
    %v6108 = vunpack.c.l.b16 %v6054
    %v6109 = vunpack.c.l.b16 %v6058
    %v6110 = vunpack.c.l.b16 %v6062
    %v6111 = vunpack.c.l.b16 %v6066
    %v6112 = vunpack.c.l.b16 %v6070
    %v6113 = vunpack.c.l.b16 %v6074
    %v6114 = vunpack.c.l.b16 %v6078
    %v6115 = vunpack.c.l.b16 %v6082
    %v6116 = vunpack.c.l.b16 %v6086
    %v6117 = vunpack.c.l.b16 %v6090
    %v6118 = vunpack.c.l.b16 %v6094
    %v6119 = vpack.c.b16 %v6104, %v6103
    %v6120 = vpack.c.b16 %v6106, %v6105
    %v6121 = vpack.c.b16 %v6108, %v6107
    %v6122 = vpack.c.b16 %v6110, %v6109
    %v6123 = vpack.c.b16 %v6112, %v6111
    %v6124 = vpack.c.b16 %v6114, %v6113
    %v6125 = vpack.c.b16 %v6116, %v6115
    %v6126 = vpack.c.b16 %v6118, %v6117
    %v6135 = vunpack.c.l.b16 %v6095
    %v6136 = vunpack.c.l.b16 %v6096
    %v6137 = vunpack.c.l.b16 %v6097
    %v6138 = vunpack.c.l.b16 %v6098
    %v6139 = vunpack.c.l.b16 %v6099
    %v6140 = vunpack.c.l.b16 %v6100
    %v6141 = vunpack.c.l.b16 %v6101
    %v6142 = vunpack.c.l.b16 %v6102
    %v6143 = vpack.c.b16 %v6136, %v6135
    %v6144 = vpack.c.b16 %v6138, %v6137
    %v6145 = vpack.c.b16 %v6140, %v6139
    %v6146 = vpack.c.b16 %v6142, %v6141
    %v6152 = vsel %vm671, %v6119, 0
    %v6155 = vsel %vm671, %v6120, 0
    %v6158 = vsel %vm671, %v6121, 0
    %v6161 = vsel %vm671, %v6122, 0
    %v6164 = vsel %vm671, %v6123, 0
    %v6167 = vsel %vm671, %v6124, 0
    %v6170 = vsel %vm671, %v6125, 0
    %v6173 = vsel %vm671, %v6126, 0
    %6175 = vmatprep.subr.bf16.mxu0 0
    %6176 = vmatpush1.bf16.msra.mxu0 %v6143
    %6177 = vmatprep.subr.bf16.mxu0 0
    %6178 = vmatpush1.bf16.msra.mxu0 %v6144
    %6179 = vmatprep.subr.bf16.mxu0 0
    %6180 = vmatpush1.bf16.msra.mxu0 %v6145
    %6181 = vmatprep.subr.bf16.mxu0 0
    %6182 = vmatpush1.bf16.msra.mxu0 %v6146
    %6183 = vmatprep.subr.bf16.mxu0 0
    %6184 = vmatpush1.bf16.msra.mxu0 0
    %6185 = vmatprep.subr.bf16.mxu0 0
    %6186 = vmatpush1.bf16.msra.mxu0 0
    %6187 = vmatprep.subr.bf16.mxu0 0
    %6188 = vmatpush1.bf16.msra.mxu0 0
    %6189 = vmatprep.subr.bf16.mxu0 0
    %6190 = vmatpush1.bf16.msra.mxu0 0
    %6191 = vmatprep.subr.bf16.mxu0 0
    %6192 = vmatpush1.bf16.msra.mxu0 0
    %6193 = vmatprep.subr.bf16.mxu0 0
    %6194 = vmatpush1.bf16.msra.mxu0 0
    %6195 = vmatprep.subr.bf16.mxu0 0
    %6196 = vmatpush1.bf16.msra.mxu0 0
    %6197 = vmatprep.subr.bf16.mxu0 0
    %6198 = vmatpush1.bf16.msra.mxu0 0
    %6199 = vmatprep.subr.bf16.mxu0 0
    %6200 = vmatpush1.bf16.msra.mxu0 0
    %6201 = vmatprep.subr.bf16.mxu0 0
    %6202 = vmatpush1.bf16.msra.mxu0 0
    %6203 = vmatprep.subr.bf16.mxu0 0
    %6204 = vmatpush1.bf16.msra.mxu0 0
    %6205 = vmatprep.subr.bf16.mxu0 0
    %6206 = vmatpush1.bf16.msra.mxu0 0
    %6207 = vmatprep.mubr.bf16.mxu0 0
    %6208 = vmatmul.mubr.bf16.gmra.mrb[0].mxu0 %v6152
    %v6209 = vpop.f32.mrb[0].mxu0
    %v6210 = vadd.f32 0.0, %v6209
    %v6211 = vpop.f32.mrb[0].mxu0
    %v6212 = vpop.f32.mrb[0].mxu0
    %v6213 = vadd.f32 0.0, %v6212
    %v6214 = vpop.f32.mrb[0].mxu0
    %6215 = vmatprep.mubr.bf16.mxu0 0
    %6216 = vmatmul.mubr.bf16.gmra.mrb[0].mxu0 %v6155
    %v6217 = vpop.f32.mrb[0].mxu0
    %v6218 = vadd.f32 0.0, %v6217
    %v6219 = vpop.f32.mrb[0].mxu0
    %v6220 = vpop.f32.mrb[0].mxu0
    %v6221 = vadd.f32 0.0, %v6220
    %v6222 = vpop.f32.mrb[0].mxu0
    %6223 = vmatprep.mubr.bf16.mxu0 0
    %6224 = vmatmul.mubr.bf16.gmra.mrb[0].mxu0 %v6158
    %v6225 = vpop.f32.mrb[0].mxu0
    %v6226 = vadd.f32 0.0, %v6225
    %v6227 = vpop.f32.mrb[0].mxu0
    %v6228 = vpop.f32.mrb[0].mxu0
    %v6229 = vadd.f32 0.0, %v6228
    %v6230 = vpop.f32.mrb[0].mxu0
    %6231 = vmatprep.mubr.bf16.mxu0 0
    %6232 = vmatmul.mubr.bf16.gmra.mrb[0].mxu0 %v6161
    %v6233 = vpop.f32.mrb[0].mxu0
    %v6234 = vadd.f32 0.0, %v6233
    %v6235 = vpop.f32.mrb[0].mxu0
    %v6236 = vpop.f32.mrb[0].mxu0
    %v6237 = vadd.f32 0.0, %v6236
    %v6238 = vpop.f32.mrb[0].mxu0
    %6239 = vmatprep.mubr.bf16.mxu0 0
    %6240 = vmatmul.mubr.bf16.gmra.mrb[0].mxu0 %v6164
    %v6241 = vpop.f32.mrb[0].mxu0
    %v6242 = vadd.f32 0.0, %v6241
    %v6243 = vpop.f32.mrb[0].mxu0
    %v6244 = vpop.f32.mrb[0].mxu0
    %v6245 = vadd.f32 0.0, %v6244
    %v6246 = vpop.f32.mrb[0].mxu0
    %6247 = vmatprep.mubr.bf16.mxu0 0
    %6248 = vmatmul.mubr.bf16.gmra.mrb[0].mxu0 %v6167
    %v6249 = vpop.f32.mrb[0].mxu0
    %v6250 = vadd.f32 0.0, %v6249
    %v6251 = vpop.f32.mrb[0].mxu0
    %v6252 = vpop.f32.mrb[0].mxu0
    %v6253 = vadd.f32 0.0, %v6252
    %v6254 = vpop.f32.mrb[0].mxu0
    %6255 = vmatprep.mubr.bf16.mxu0 0
    %6256 = vmatmul.mubr.bf16.gmra.mrb[0].mxu0 %v6170
    %v6257 = vpop.f32.mrb[0].mxu0
    %v6258 = vadd.f32 0.0, %v6257
    %v6259 = vpop.f32.mrb[0].mxu0
    %v6260 = vpop.f32.mrb[0].mxu0
    %v6261 = vadd.f32 0.0, %v6260
    %v6262 = vpop.f32.mrb[0].mxu0
    %6263 = vmatprep.mubr.bf16.mxu0 0
    %6264 = vmatmul.mubr.bf16.gmra.mrb[0].mxu0 %v6173
    %v6265 = vpop.f32.mrb[0].mxu0
    %v6266 = vadd.f32 0.0, %v6265
    %v6267 = vpop.f32.mrb[0].mxu0
    %v6268 = vpop.f32.mrb[0].mxu0
    %v6269 = vadd.f32 0.0, %v6268
    %v6270 = vpop.f32.mrb[0].mxu0
    %6271 = vdwg.mxu0
    %v6272 = vadd.f32 %v5967, %v6210
    %v6273 = vadd.f32 %v5968, %v6213
    %v6274 = vadd.f32 %v5969, %v6218
    %v6275 = vadd.f32 %v5970, %v6221
    %v6276 = vadd.f32 %v5971, %v6226
    %v6277 = vadd.f32 %v5972, %v6229
    %v6278 = vadd.f32 %v5973, %v6234
    %v6279 = vadd.f32 %v5974, %v6237
    %v6280 = vadd.f32 %v5975, %v6242
    %v6281 = vadd.f32 %v5976, %v6245
    %v6282 = vadd.f32 %v5977, %v6250
    %v6283 = vadd.f32 %v5978, %v6253
    %v6284 = vadd.f32 %v5979, %v6258
    %v6285 = vadd.f32 %v5980, %v6261
    %v6286 = vadd.f32 %v5981, %v6266
    %v6287 = vadd.f32 %v5982, %v6269
    %v6288 = vld [vmem:[%s198 + $0x4] sm:$0x3]
    %v6289 = vld [vmem:[%s198 + $0xc] sm:$0x3]
    %v6290 = vld [vmem:[%s198 + $0x14] sm:$0x3]
    %v6291 = vld [vmem:[%s198 + $0x1c] sm:$0x3]
    %v6292 = vld [vmem:[%s198 + $0x24] sm:$0x3]
    %v6293 = vld [vmem:[%s198 + $0x2c] sm:$0x3]
    %v6294 = vld [vmem:[%s198 + $0x34] sm:$0x3]
    %v6295 = vld [vmem:[%s198 + $0x3c] sm:$0x3]
    %v6296 = vld [vmem:[%s198 + $0x54] sm:$0x3]
    %v6297 = vld [vmem:[%s198 + $0x5c] sm:$0x3]
    %v6298 = vld [vmem:[%s198 + $0x64] sm:$0x3]
    %v6299 = vld [vmem:[%s198 + $0x6c] sm:$0x3]
    %v6300 = vld [vmem:[%s198 + $0x74] sm:$0x3]
    %v6301 = vld [vmem:[%s198 + $0x7c] sm:$0x3]
    %v6302 = vld [vmem:[%s198 + $0x84] sm:$0x3]
    %v6303 = vld [vmem:[%s198 + $0x8c] sm:$0x3]
    %v6305 = vshrl.u32 %v5983, 16
    %v6307 = vrot.slane %v6305, 5
    %v6308 = vshll.u32 %v5983, 16
    %v6310 = vrot.slane %v6308, 6
    %v6311 = vor.u32 %v6307, %v6310
    %v6312 = vrot.slane %v6311, 4
    %v6314 = vshrl.u32 %v6288, 16
    %v6316 = vrot.slane %v6314, 5
    %v6317 = vshll.u32 %v6288, 16
    %v6319 = vrot.slane %v6317, 6
    %v6320 = vor.u32 %v6316, %v6319
    %v6321 = vsel %vm980, %v6312, %v6320
    %v6323 = vshrl.u32 %v5984, 16
    %v6325 = vrot.slane %v6323, 5
    %v6326 = vshll.u32 %v5984, 16
    %v6328 = vrot.slane %v6326, 6
    %v6329 = vor.u32 %v6325, %v6328
    %v6330 = vrot.slane %v6329, 4
    %v6332 = vshrl.u32 %v6289, 16
    %v6334 = vrot.slane %v6332, 5
    %v6335 = vshll.u32 %v6289, 16
    %v6337 = vrot.slane %v6335, 6
    %v6338 = vor.u32 %v6334, %v6337
    %v6339 = vsel %vm980, %v6330, %v6338
    %v6341 = vshrl.u32 %v5985, 16
    %v6343 = vrot.slane %v6341, 5
    %v6344 = vshll.u32 %v5985, 16
    %v6346 = vrot.slane %v6344, 6
    %v6347 = vor.u32 %v6343, %v6346
    %v6348 = vrot.slane %v6347, 4
    %v6350 = vshrl.u32 %v6290, 16
    %v6352 = vrot.slane %v6350, 5
    %v6353 = vshll.u32 %v6290, 16
    %v6355 = vrot.slane %v6353, 6
    %v6356 = vor.u32 %v6352, %v6355
    %v6357 = vsel %vm980, %v6348, %v6356
    %v6359 = vshrl.u32 %v5986, 16
    %v6361 = vrot.slane %v6359, 5
    %v6362 = vshll.u32 %v5986, 16
    %v6364 = vrot.slane %v6362, 6
    %v6365 = vor.u32 %v6361, %v6364
    %v6366 = vrot.slane %v6365, 4
    %v6368 = vshrl.u32 %v6291, 16
    %v6370 = vrot.slane %v6368, 5
    %v6371 = vshll.u32 %v6291, 16
    %v6373 = vrot.slane %v6371, 6
    %v6374 = vor.u32 %v6370, %v6373
    %v6375 = vsel %vm980, %v6366, %v6374
    %v6377 = vshrl.u32 %v5987, 16
    %v6379 = vrot.slane %v6377, 5
    %v6380 = vshll.u32 %v5987, 16
    %v6382 = vrot.slane %v6380, 6
    %v6383 = vor.u32 %v6379, %v6382
    %v6384 = vrot.slane %v6383, 4
    %v6386 = vshrl.u32 %v6292, 16
    %v6388 = vrot.slane %v6386, 5
    %v6389 = vshll.u32 %v6292, 16
    %v6391 = vrot.slane %v6389, 6
    %v6392 = vor.u32 %v6388, %v6391
    %v6393 = vsel %vm980, %v6384, %v6392
    %v6395 = vshrl.u32 %v5988, 16
    %v6397 = vrot.slane %v6395, 5
    %v6398 = vshll.u32 %v5988, 16
    %v6400 = vrot.slane %v6398, 6
    %v6401 = vor.u32 %v6397, %v6400
    %v6402 = vrot.slane %v6401, 4
    %v6404 = vshrl.u32 %v6293, 16
    %v6406 = vrot.slane %v6404, 5
    %v6407 = vshll.u32 %v6293, 16
    %v6409 = vrot.slane %v6407, 6
    %v6410 = vor.u32 %v6406, %v6409
    %v6411 = vsel %vm980, %v6402, %v6410
    %v6413 = vshrl.u32 %v5989, 16
    %v6415 = vrot.slane %v6413, 5
    %v6416 = vshll.u32 %v5989, 16
    %v6418 = vrot.slane %v6416, 6
    %v6419 = vor.u32 %v6415, %v6418
    %v6420 = vrot.slane %v6419, 4
    %v6422 = vshrl.u32 %v6294, 16
    %v6424 = vrot.slane %v6422, 5
    %v6425 = vshll.u32 %v6294, 16
    %v6427 = vrot.slane %v6425, 6
    %v6428 = vor.u32 %v6424, %v6427
    %v6429 = vsel %vm980, %v6420, %v6428
    %v6431 = vshrl.u32 %v5990, 16
    %v6433 = vrot.slane %v6431, 5
    %v6434 = vshll.u32 %v5990, 16
    %v6436 = vrot.slane %v6434, 6
    %v6437 = vor.u32 %v6433, %v6436
    %v6438 = vrot.slane %v6437, 4
    %v6440 = vshrl.u32 %v6295, 16
    %v6442 = vrot.slane %v6440, 5
    %v6443 = vshll.u32 %v6295, 16
    %v6445 = vrot.slane %v6443, 6
    %v6446 = vor.u32 %v6442, %v6445
    %v6447 = vsel %vm980, %v6438, %v6446
    %v6449 = vshrl.u32 %v5991, 16
    %v6451 = vrot.slane %v6449, 5
    %v6452 = vshll.u32 %v5991, 16
    %v6454 = vrot.slane %v6452, 6
    %v6455 = vor.u32 %v6451, %v6454
    %v6456 = vrot.slane %v6455, 4
    %v6458 = vshrl.u32 %v6296, 16
    %v6460 = vrot.slane %v6458, 5
    %v6461 = vshll.u32 %v6296, 16
    %v6463 = vrot.slane %v6461, 6
    %v6464 = vor.u32 %v6460, %v6463
    %v6465 = vsel %vm980, %v6456, %v6464
    %v6467 = vshrl.u32 %v5992, 16
    %v6469 = vrot.slane %v6467, 5
    %v6470 = vshll.u32 %v5992, 16
    %v6472 = vrot.slane %v6470, 6
    %v6473 = vor.u32 %v6469, %v6472
    %v6474 = vrot.slane %v6473, 4
    %v6476 = vshrl.u32 %v6297, 16
    %v6478 = vrot.slane %v6476, 5
    %v6479 = vshll.u32 %v6297, 16
    %v6481 = vrot.slane %v6479, 6
    %v6482 = vor.u32 %v6478, %v6481
    %v6483 = vsel %vm980, %v6474, %v6482
    %v6485 = vshrl.u32 %v5993, 16
    %v6487 = vrot.slane %v6485, 5
    %v6488 = vshll.u32 %v5993, 16
    %v6490 = vrot.slane %v6488, 6
    %v6491 = vor.u32 %v6487, %v6490
    %v6492 = vrot.slane %v6491, 4
    %v6494 = vshrl.u32 %v6298, 16
    %v6496 = vrot.slane %v6494, 5
    %v6497 = vshll.u32 %v6298, 16
    %v6499 = vrot.slane %v6497, 6
    %v6500 = vor.u32 %v6496, %v6499
    %v6501 = vsel %vm980, %v6492, %v6500
    %v6503 = vshrl.u32 %v5994, 16
    %v6505 = vrot.slane %v6503, 5
    %v6506 = vshll.u32 %v5994, 16
    %v6508 = vrot.slane %v6506, 6
    %v6509 = vor.u32 %v6505, %v6508
    %v6510 = vrot.slane %v6509, 4
    %v6512 = vshrl.u32 %v6299, 16
    %v6514 = vrot.slane %v6512, 5
    %v6515 = vshll.u32 %v6299, 16
    %v6517 = vrot.slane %v6515, 6
    %v6518 = vor.u32 %v6514, %v6517
    %v6519 = vsel %vm980, %v6510, %v6518
    %v6521 = vshrl.u32 %v5995, 16
    %v6523 = vrot.slane %v6521, 5
    %v6524 = vshll.u32 %v5995, 16
    %v6526 = vrot.slane %v6524, 6
    %v6527 = vor.u32 %v6523, %v6526
    %v6528 = vrot.slane %v6527, 4
    %v6530 = vshrl.u32 %v6300, 16
    %v6532 = vrot.slane %v6530, 5
    %v6533 = vshll.u32 %v6300, 16
    %v6535 = vrot.slane %v6533, 6
    %v6536 = vor.u32 %v6532, %v6535
    %v6537 = vsel %vm980, %v6528, %v6536
    %v6539 = vshrl.u32 %v5996, 16
    %v6541 = vrot.slane %v6539, 5
    %v6542 = vshll.u32 %v5996, 16
    %v6544 = vrot.slane %v6542, 6
    %v6545 = vor.u32 %v6541, %v6544
    %v6546 = vrot.slane %v6545, 4
    %v6548 = vshrl.u32 %v6301, 16
    %v6550 = vrot.slane %v6548, 5
    %v6551 = vshll.u32 %v6301, 16
    %v6553 = vrot.slane %v6551, 6
    %v6554 = vor.u32 %v6550, %v6553
    %v6555 = vsel %vm980, %v6546, %v6554
    %v6557 = vshrl.u32 %v5997, 16
    %v6559 = vrot.slane %v6557, 5
    %v6560 = vshll.u32 %v5997, 16
    %v6562 = vrot.slane %v6560, 6
    %v6563 = vor.u32 %v6559, %v6562
    %v6564 = vrot.slane %v6563, 4
    %v6566 = vshrl.u32 %v6302, 16
    %v6568 = vrot.slane %v6566, 5
    %v6569 = vshll.u32 %v6302, 16
    %v6571 = vrot.slane %v6569, 6
    %v6572 = vor.u32 %v6568, %v6571
    %v6573 = vsel %vm980, %v6564, %v6572
    %v6575 = vshrl.u32 %v5998, 16
    %v6577 = vrot.slane %v6575, 5
    %v6578 = vshll.u32 %v5998, 16
    %v6580 = vrot.slane %v6578, 6
    %v6581 = vor.u32 %v6577, %v6580
    %v6582 = vrot.slane %v6581, 4
    %v6584 = vshrl.u32 %v6303, 16
    %v6586 = vrot.slane %v6584, 5
    %v6587 = vshll.u32 %v6303, 16
    %v6589 = vrot.slane %v6587, 6
    %v6590 = vor.u32 %v6586, %v6589
    %v6591 = vsel %vm980, %v6582, %v6590
    %v6592 = vld [vmem:[%s2 + $0xa0] sm:$0xf]
    %v6593 = vld [vmem:[%s2 + $0xa4] sm:$0xf]
    %v6594 = vld [vmem:[%s2 + $0xa8] sm:$0xf]
    %v6595 = vld [vmem:[%s2 + $0xac] sm:$0xf]
    %v6596 = vld [vmem:[%s2 + $0xb0] sm:$0xf]
    %v6597 = vld [vmem:[%s2 + $0xb4] sm:$0xf]
    %v6598 = vld [vmem:[%s2 + $0xb8] sm:$0xf]
    %v6599 = vld [vmem:[%s2 + $0xbc] sm:$0xf]
    %v6600 = vunpack.c.l.b16 %v6321
    %v6601 = vunpack.c.l.b16 %v6339
    %v6602 = vunpack.c.l.b16 %v6357
    %v6603 = vunpack.c.l.b16 %v6375
    %v6604 = vunpack.c.l.b16 %v6393
    %v6605 = vunpack.c.l.b16 %v6411
    %v6606 = vunpack.c.l.b16 %v6429
    %v6607 = vunpack.c.l.b16 %v6447
    %v6608 = vunpack.c.l.b16 %v6465
    %v6609 = vunpack.c.l.b16 %v6483
    %v6610 = vunpack.c.l.b16 %v6501
    %v6611 = vunpack.c.l.b16 %v6519
    %v6612 = vunpack.c.l.b16 %v6537
    %v6613 = vunpack.c.l.b16 %v6555
    %v6614 = vunpack.c.l.b16 %v6573
    %v6615 = vunpack.c.l.b16 %v6591
    %v6616 = vpack.c.b16 %v6601, %v6600
    %v6617 = vpack.c.b16 %v6603, %v6602
    %v6618 = vpack.c.b16 %v6605, %v6604
    %v6619 = vpack.c.b16 %v6607, %v6606
    %v6620 = vpack.c.b16 %v6609, %v6608
    %v6621 = vpack.c.b16 %v6611, %v6610
    %v6622 = vpack.c.b16 %v6613, %v6612
    %v6623 = vpack.c.b16 %v6615, %v6614
    %v6632 = vunpack.c.l.b16 %v6592
    %v6633 = vunpack.c.l.b16 %v6593
    %v6634 = vunpack.c.l.b16 %v6594
    %v6635 = vunpack.c.l.b16 %v6595
    %v6636 = vunpack.c.l.b16 %v6596
    %v6637 = vunpack.c.l.b16 %v6597
    %v6638 = vunpack.c.l.b16 %v6598
    %v6639 = vunpack.c.l.b16 %v6599
    %v6640 = vpack.c.b16 %v6633, %v6632
    %v6641 = vpack.c.b16 %v6635, %v6634
    %v6642 = vpack.c.b16 %v6637, %v6636
    %v6643 = vpack.c.b16 %v6639, %v6638
    %v6649 = vsel %vm671, %v6616, 0
    %v6652 = vsel %vm671, %v6617, 0
    %v6655 = vsel %vm671, %v6618, 0
    %v6658 = vsel %vm671, %v6619, 0
    %v6661 = vsel %vm671, %v6620, 0
    %v6664 = vsel %vm671, %v6621, 0
    %v6667 = vsel %vm671, %v6622, 0
    %v6670 = vsel %vm671, %v6623, 0
    %6672 = vmatprep.subr.bf16.mxu0 0
    %6673 = vmatpush1.bf16.msra.mxu0 %v6640
    %6674 = vmatprep.subr.bf16.mxu0 0
    %6675 = vmatpush1.bf16.msra.mxu0 %v6641
    %6676 = vmatprep.subr.bf16.mxu0 0
    %6677 = vmatpush1.bf16.msra.mxu0 %v6642
    %6678 = vmatprep.subr.bf16.mxu0 0
    %6679 = vmatpush1.bf16.msra.mxu0 %v6643
    %6680 = vmatprep.subr.bf16.mxu0 0
    %6681 = vmatpush1.bf16.msra.mxu0 0
    %6682 = vmatprep.subr.bf16.mxu0 0
    %6683 = vmatpush1.bf16.msra.mxu0 0
    %6684 = vmatprep.subr.bf16.mxu0 0
    %6685 = vmatpush1.bf16.msra.mxu0 0
    %6686 = vmatprep.subr.bf16.mxu0 0
    %6687 = vmatpush1.bf16.msra.mxu0 0
    %6688 = vmatprep.subr.bf16.mxu0 0
    %6689 = vmatpush1.bf16.msra.mxu0 0
    %6690 = vmatprep.subr.bf16.mxu0 0
    %6691 = vmatpush1.bf16.msra.mxu0 0
    %6692 = vmatprep.subr.bf16.mxu0 0
    %6693 = vmatpush1.bf16.msra.mxu0 0
    %6694 = vmatprep.subr.bf16.mxu0 0
    %6695 = vmatpush1.bf16.msra.mxu0 0
    %6696 = vmatprep.subr.bf16.mxu0 0
    %6697 = vmatpush1.bf16.msra.mxu0 0
    %6698 = vmatprep.subr.bf16.mxu0 0
    %6699 = vmatpush1.bf16.msra.mxu0 0
    %6700 = vmatprep.subr.bf16.mxu0 0
    %6701 = vmatpush1.bf16.msra.mxu0 0
    %6702 = vmatprep.subr.bf16.mxu0 0
    %6703 = vmatpush1.bf16.msra.mxu0 0
    %6704 = vmatprep.mubr.bf16.mxu0 0
    %6705 = vmatmul.mubr.bf16.gmra.mrb[0].mxu0 %v6649
    %v6706 = vpop.f32.mrb[0].mxu0
    %v6707 = vadd.f32 0.0, %v6706
    %v6708 = vpop.f32.mrb[0].mxu0
    %v6709 = vpop.f32.mrb[0].mxu0
    %v6710 = vadd.f32 0.0, %v6709
    %v6711 = vpop.f32.mrb[0].mxu0
    %6712 = vmatprep.mubr.bf16.mxu0 0
    %6713 = vmatmul.mubr.bf16.gmra.mrb[0].mxu0 %v6652
    %v6714 = vpop.f32.mrb[0].mxu0
    %v6715 = vadd.f32 0.0, %v6714
    %v6716 = vpop.f32.mrb[0].mxu0
    %v6717 = vpop.f32.mrb[0].mxu0
    %v6718 = vadd.f32 0.0, %v6717
    %v6719 = vpop.f32.mrb[0].mxu0
    %6720 = vmatprep.mubr.bf16.mxu0 0
    %6721 = vmatmul.mubr.bf16.gmra.mrb[0].mxu0 %v6655
    %v6722 = vpop.f32.mrb[0].mxu0
    %v6723 = vadd.f32 0.0, %v6722
    %v6724 = vpop.f32.mrb[0].mxu0
    %v6725 = vpop.f32.mrb[0].mxu0
    %v6726 = vadd.f32 0.0, %v6725
    %v6727 = vpop.f32.mrb[0].mxu0
    %6728 = vmatprep.mubr.bf16.mxu0 0
    %6729 = vmatmul.mubr.bf16.gmra.mrb[0].mxu0 %v6658
    %v6730 = vpop.f32.mrb[0].mxu0
    %v6731 = vadd.f32 0.0, %v6730
    %v6732 = vpop.f32.mrb[0].mxu0
    %v6733 = vpop.f32.mrb[0].mxu0
    %v6734 = vadd.f32 0.0, %v6733
    %v6735 = vpop.f32.mrb[0].mxu0
    %6736 = vmatprep.mubr.bf16.mxu0 0
    %6737 = vmatmul.mubr.bf16.gmra.mrb[0].mxu0 %v6661
    %v6738 = vpop.f32.mrb[0].mxu0
    %v6739 = vadd.f32 0.0, %v6738
    %v6740 = vpop.f32.mrb[0].mxu0
    %v6741 = vpop.f32.mrb[0].mxu0
    %v6742 = vadd.f32 0.0, %v6741
    %v6743 = vpop.f32.mrb[0].mxu0
    %6744 = vmatprep.mubr.bf16.mxu0 0
    %6745 = vmatmul.mubr.bf16.gmra.mrb[0].mxu0 %v6664
    %v6746 = vpop.f32.mrb[0].mxu0
    %v6747 = vadd.f32 0.0, %v6746
    %v6748 = vpop.f32.mrb[0].mxu0
    %v6749 = vpop.f32.mrb[0].mxu0
    %v6750 = vadd.f32 0.0, %v6749
    %v6751 = vpop.f32.mrb[0].mxu0
    %6752 = vmatprep.mubr.bf16.mxu0 0
    %6753 = vmatmul.mubr.bf16.gmra.mrb[0].mxu0 %v6667
    %v6754 = vpop.f32.mrb[0].mxu0
    %v6755 = vadd.f32 0.0, %v6754
    %v6756 = vpop.f32.mrb[0].mxu0
    %v6757 = vpop.f32.mrb[0].mxu0
    %v6758 = vadd.f32 0.0, %v6757
    %v6759 = vpop.f32.mrb[0].mxu0
    %6760 = vmatprep.mubr.bf16.mxu0 0
    %6761 = vmatmul.mubr.bf16.gmra.mrb[0].mxu0 %v6670
    %v6762 = vpop.f32.mrb[0].mxu0
    %v6763 = vadd.f32 0.0, %v6762
    %v6764 = vpop.f32.mrb[0].mxu0
    %v6765 = vpop.f32.mrb[0].mxu0
    %v6766 = vadd.f32 0.0, %v6765
    %v6767 = vpop.f32.mrb[0].mxu0
    %6768 = vdwg.mxu0
    %v6769 = vadd.f32 %v6272, %v6707
    %v6770 = vadd.f32 %v6273, %v6710
    %v6771 = vadd.f32 %v6274, %v6715
    %v6772 = vadd.f32 %v6275, %v6718
    %v6773 = vadd.f32 %v6276, %v6723
    %v6774 = vadd.f32 %v6277, %v6726
    %v6775 = vadd.f32 %v6278, %v6731
    %v6776 = vadd.f32 %v6279, %v6734
    %v6777 = vadd.f32 %v6280, %v6739
    %v6778 = vadd.f32 %v6281, %v6742
    %v6779 = vadd.f32 %v6282, %v6747
    %v6780 = vadd.f32 %v6283, %v6750
    %v6781 = vadd.f32 %v6284, %v6755
    %v6782 = vadd.f32 %v6285, %v6758
    %v6783 = vadd.f32 %v6286, %v6763
    %v6784 = vadd.f32 %v6287, %v6766
    %v6785 = vld [vmem:[%s2713] sm:$0xf]
    %v6786 = vld [vmem:[%s2713 + $0x4] sm:$0x1]
    %v6787 = vld [vmem:[%s2713 + $0x8] sm:$0xf]
    %v6788 = vld [vmem:[%s2713 + $0xc] sm:$0x1]
    %v6789 = vld [vmem:[%s2713 + $0x10] sm:$0xf]
    %v6790 = vld [vmem:[%s2713 + $0x14] sm:$0x1]
    %v6791 = vld [vmem:[%s2713 + $0x18] sm:$0xf]
    %v6792 = vld [vmem:[%s2713 + $0x1c] sm:$0x1]
    %v6793 = vld [vmem:[%s2713 + $0x20] sm:$0xf]
    %v6794 = vld [vmem:[%s2713 + $0x24] sm:$0x1]
    %v6795 = vld [vmem:[%s2713 + $0x28] sm:$0xf]
    %v6796 = vld [vmem:[%s2713 + $0x2c] sm:$0x1]
    %v6797 = vld [vmem:[%s2713 + $0x30] sm:$0xf]
    %v6798 = vld [vmem:[%s2713 + $0x34] sm:$0x1]
    %v6799 = vld [vmem:[%s2713 + $0x38] sm:$0xf]
    %v6800 = vld [vmem:[%s2713 + $0x3c] sm:$0x1]
    %v6801 = vld [vmem:[%s2713 + $0x50] sm:$0xf]
    %v6802 = vld [vmem:[%s2713 + $0x54] sm:$0x1]
    %v6803 = vld [vmem:[%s2713 + $0x58] sm:$0xf]
    %v6804 = vld [vmem:[%s2713 + $0x5c] sm:$0x1]
    %v6805 = vld [vmem:[%s2713 + $0x60] sm:$0xf]
    %v6806 = vld [vmem:[%s2713 + $0x64] sm:$0x1]
    %v6807 = vld [vmem:[%s2713 + $0x68] sm:$0xf]
    %v6808 = vld [vmem:[%s2713 + $0x6c] sm:$0x1]
    %v6809 = vld [vmem:[%s2713 + $0x70] sm:$0xf]
    %v6810 = vld [vmem:[%s2713 + $0x74] sm:$0x1]
    %v6811 = vld [vmem:[%s2713 + $0x78] sm:$0xf]
    %v6812 = vld [vmem:[%s2713 + $0x7c] sm:$0x1]
    %v6813 = vld [vmem:[%s2713 + $0x80] sm:$0xf]
    %v6814 = vld [vmem:[%s2713 + $0x84] sm:$0x1]
    %v6815 = vld [vmem:[%s2713 + $0x88] sm:$0xf]
    %v6816 = vld [vmem:[%s2713 + $0x8c] sm:$0x1]
    %v6818 = vshrl.u32 %v6785, 16
    %v6820 = vrot.slane %v6818, 4
    %v6821 = vshll.u32 %v6785, 16
    %v6823 = vrot.slane %v6821, 5
    %v6824 = vor.u32 %v6820, %v6823
    %v6825 = vrot.slane %v6824, 4
    %v6827 = vshll.u32 %v6786, 16
    %v6829 = vrot.slane %v6827, 5
    %v6830 = vsel %vm267, %v6825, %v6829
    %v6832 = vshrl.u32 %v6787, 16
    %v6834 = vrot.slane %v6832, 4
    %v6835 = vshll.u32 %v6787, 16
    %v6837 = vrot.slane %v6835, 5
    %v6838 = vor.u32 %v6834, %v6837
    %v6839 = vrot.slane %v6838, 4
    %v6841 = vshll.u32 %v6788, 16
    %v6843 = vrot.slane %v6841, 5
    %v6844 = vsel %vm267, %v6839, %v6843
    %v6846 = vshrl.u32 %v6789, 16
    %v6848 = vrot.slane %v6846, 4
    %v6849 = vshll.u32 %v6789, 16
    %v6851 = vrot.slane %v6849, 5
    %v6852 = vor.u32 %v6848, %v6851
    %v6853 = vrot.slane %v6852, 4
    %v6855 = vshll.u32 %v6790, 16
    %v6857 = vrot.slane %v6855, 5
    %v6858 = vsel %vm267, %v6853, %v6857
    %v6860 = vshrl.u32 %v6791, 16
    %v6862 = vrot.slane %v6860, 4
    %v6863 = vshll.u32 %v6791, 16
    %v6865 = vrot.slane %v6863, 5
    %v6866 = vor.u32 %v6862, %v6865
    %v6867 = vrot.slane %v6866, 4
    %v6869 = vshll.u32 %v6792, 16
    %v6871 = vrot.slane %v6869, 5
    %v6872 = vsel %vm267, %v6867, %v6871
    %v6874 = vshrl.u32 %v6793, 16
    %v6876 = vrot.slane %v6874, 4
    %v6877 = vshll.u32 %v6793, 16
    %v6879 = vrot.slane %v6877, 5
    %v6880 = vor.u32 %v6876, %v6879
    %v6881 = vrot.slane %v6880, 4
    %v6883 = vshll.u32 %v6794, 16
    %v6885 = vrot.slane %v6883, 5
    %v6886 = vsel %vm267, %v6881, %v6885
    %v6888 = vshrl.u32 %v6795, 16
    %v6890 = vrot.slane %v6888, 4
    %v6891 = vshll.u32 %v6795, 16
    %v6893 = vrot.slane %v6891, 5
    %v6894 = vor.u32 %v6890, %v6893
    %v6895 = vrot.slane %v6894, 4
    %v6897 = vshll.u32 %v6796, 16
    %v6899 = vrot.slane %v6897, 5
    %v6900 = vsel %vm267, %v6895, %v6899
    %v6902 = vshrl.u32 %v6797, 16
    %v6904 = vrot.slane %v6902, 4
    %v6905 = vshll.u32 %v6797, 16
    %v6907 = vrot.slane %v6905, 5
    %v6908 = vor.u32 %v6904, %v6907
    %v6909 = vrot.slane %v6908, 4
    %v6911 = vshll.u32 %v6798, 16
    %v6913 = vrot.slane %v6911, 5
    %v6914 = vsel %vm267, %v6909, %v6913
    %v6916 = vshrl.u32 %v6799, 16
    %v6918 = vrot.slane %v6916, 4
    %v6919 = vshll.u32 %v6799, 16
    %v6921 = vrot.slane %v6919, 5
    %v6922 = vor.u32 %v6918, %v6921
    %v6923 = vrot.slane %v6922, 4
    %v6925 = vshll.u32 %v6800, 16
    %v6927 = vrot.slane %v6925, 5
    %v6928 = vsel %vm267, %v6923, %v6927
    %v6930 = vshrl.u32 %v6801, 16
    %v6932 = vrot.slane %v6930, 4
    %v6933 = vshll.u32 %v6801, 16
    %v6935 = vrot.slane %v6933, 5
    %v6936 = vor.u32 %v6932, %v6935
    %v6937 = vrot.slane %v6936, 4
    %v6939 = vshll.u32 %v6802, 16
    %v6941 = vrot.slane %v6939, 5
    %v6942 = vsel %vm267, %v6937, %v6941
    %v6944 = vshrl.u32 %v6803, 16
    %v6946 = vrot.slane %v6944, 4
    %v6947 = vshll.u32 %v6803, 16
    %v6949 = vrot.slane %v6947, 5
    %v6950 = vor.u32 %v6946, %v6949
    %v6951 = vrot.slane %v6950, 4
    %v6953 = vshll.u32 %v6804, 16
    %v6955 = vrot.slane %v6953, 5
    %v6956 = vsel %vm267, %v6951, %v6955
    %v6958 = vshrl.u32 %v6805, 16
    %v6960 = vrot.slane %v6958, 4
    %v6961 = vshll.u32 %v6805, 16
    %v6963 = vrot.slane %v6961, 5
    %v6964 = vor.u32 %v6960, %v6963
    %v6965 = vrot.slane %v6964, 4
    %v6967 = vshll.u32 %v6806, 16
    %v6969 = vrot.slane %v6967, 5
    %v6970 = vsel %vm267, %v6965, %v6969
    %v6972 = vshrl.u32 %v6807, 16
    %v6974 = vrot.slane %v6972, 4
    %v6975 = vshll.u32 %v6807, 16
    %v6977 = vrot.slane %v6975, 5
    %v6978 = vor.u32 %v6974, %v6977
    %v6979 = vrot.slane %v6978, 4
    %v6981 = vshll.u32 %v6808, 16
    %v6983 = vrot.slane %v6981, 5
    %v6984 = vsel %vm267, %v6979, %v6983
    %v6986 = vshrl.u32 %v6809, 16
    %v6988 = vrot.slane %v6986, 4
    %v6989 = vshll.u32 %v6809, 16
    %v6991 = vrot.slane %v6989, 5
    %v6992 = vor.u32 %v6988, %v6991
    %v6993 = vrot.slane %v6992, 4
    %v6995 = vshll.u32 %v6810, 16
    %v6997 = vrot.slane %v6995, 5
    %v6998 = vsel %vm267, %v6993, %v6997
    %v7000 = vshrl.u32 %v6811, 16
    %v7002 = vrot.slane %v7000, 4
    %v7003 = vshll.u32 %v6811, 16
    %v7005 = vrot.slane %v7003, 5
    %v7006 = vor.u32 %v7002, %v7005
    %v7007 = vrot.slane %v7006, 4
    %v7009 = vshll.u32 %v6812, 16
    %v7011 = vrot.slane %v7009, 5
    %v7012 = vsel %vm267, %v7007, %v7011
    %v7014 = vshrl.u32 %v6813, 16
    %v7016 = vrot.slane %v7014, 4
    %v7017 = vshll.u32 %v6813, 16
    %v7019 = vrot.slane %v7017, 5
    %v7020 = vor.u32 %v7016, %v7019
    %v7021 = vrot.slane %v7020, 4
    %v7023 = vshll.u32 %v6814, 16
    %v7025 = vrot.slane %v7023, 5
    %v7026 = vsel %vm267, %v7021, %v7025
    %v7028 = vshrl.u32 %v6815, 16
    %v7030 = vrot.slane %v7028, 4
    %v7031 = vshll.u32 %v6815, 16
    %v7033 = vrot.slane %v7031, 5
    %v7034 = vor.u32 %v7030, %v7033
    %v7035 = vrot.slane %v7034, 4
    %v7037 = vshll.u32 %v6816, 16
    %v7039 = vrot.slane %v7037, 5
    %v7040 = vsel %vm267, %v7035, %v7039
    %v7041 = vld [vmem:[%s2 + $0xc0] sm:$0xf]
    %v7042 = vld [vmem:[%s2 + $0xc4] sm:$0xf]
    %v7043 = vld [vmem:[%s2 + $0xc8] sm:$0xf]
    %v7044 = vld [vmem:[%s2 + $0xcc] sm:$0xf]
    %v7045 = vld [vmem:[%s2 + $0xd0] sm:$0xf]
    %v7046 = vld [vmem:[%s2 + $0xd4] sm:$0xf]
    %v7047 = vld [vmem:[%s2 + $0xd8] sm:$0xf]
    %v7048 = vld [vmem:[%s2 + $0xdc] sm:$0xf]
    %v7049 = vunpack.c.l.b16 %v6830
    %v7050 = vunpack.c.l.b16 %v6844
    %v7051 = vunpack.c.l.b16 %v6858
    %v7052 = vunpack.c.l.b16 %v6872
    %v7053 = vunpack.c.l.b16 %v6886
    %v7054 = vunpack.c.l.b16 %v6900
    %v7055 = vunpack.c.l.b16 %v6914
    %v7056 = vunpack.c.l.b16 %v6928
    %v7057 = vunpack.c.l.b16 %v6942
    %v7058 = vunpack.c.l.b16 %v6956
    %v7059 = vunpack.c.l.b16 %v6970
    %v7060 = vunpack.c.l.b16 %v6984
    %v7061 = vunpack.c.l.b16 %v6998
    %v7062 = vunpack.c.l.b16 %v7012
    %v7063 = vunpack.c.l.b16 %v7026
    %v7064 = vunpack.c.l.b16 %v7040
    %v7065 = vpack.c.b16 %v7050, %v7049
    %v7066 = vpack.c.b16 %v7052, %v7051
    %v7067 = vpack.c.b16 %v7054, %v7053
    %v7068 = vpack.c.b16 %v7056, %v7055
    %v7069 = vpack.c.b16 %v7058, %v7057
    %v7070 = vpack.c.b16 %v7060, %v7059
    %v7071 = vpack.c.b16 %v7062, %v7061
    %v7072 = vpack.c.b16 %v7064, %v7063
    %v7081 = vunpack.c.l.b16 %v7041
    %v7082 = vunpack.c.l.b16 %v7042
    %v7083 = vunpack.c.l.b16 %v7043
    %v7084 = vunpack.c.l.b16 %v7044
    %v7085 = vunpack.c.l.b16 %v7045
    %v7086 = vunpack.c.l.b16 %v7046
    %v7087 = vunpack.c.l.b16 %v7047
    %v7088 = vunpack.c.l.b16 %v7048
    %v7089 = vpack.c.b16 %v7082, %v7081
    %v7090 = vpack.c.b16 %v7084, %v7083
    %v7091 = vpack.c.b16 %v7086, %v7085
    %v7092 = vpack.c.b16 %v7088, %v7087
    %v7098 = vsel %vm671, %v7065, 0
    %v7101 = vsel %vm671, %v7066, 0
    %v7104 = vsel %vm671, %v7067, 0
    %v7107 = vsel %vm671, %v7068, 0
    %v7110 = vsel %vm671, %v7069, 0
    %v7113 = vsel %vm671, %v7070, 0
    %v7116 = vsel %vm671, %v7071, 0
    %v7119 = vsel %vm671, %v7072, 0
    %7121 = vmatprep.subr.bf16.mxu0 0
    %7122 = vmatpush1.bf16.msra.mxu0 %v7089
    %7123 = vmatprep.subr.bf16.mxu0 0
    %7124 = vmatpush1.bf16.msra.mxu0 %v7090
    %7125 = vmatprep.subr.bf16.mxu0 0
    %7126 = vmatpush1.bf16.msra.mxu0 %v7091
    %7127 = vmatprep.subr.bf16.mxu0 0
    %7128 = vmatpush1.bf16.msra.mxu0 %v7092
    %7129 = vmatprep.subr.bf16.mxu0 0
    %7130 = vmatpush1.bf16.msra.mxu0 0
    %7131 = vmatprep.subr.bf16.mxu0 0
    %7132 = vmatpush1.bf16.msra.mxu0 0
    %7133 = vmatprep.subr.bf16.mxu0 0
    %7134 = vmatpush1.bf16.msra.mxu0 0
    %7135 = vmatprep.subr.bf16.mxu0 0
    %7136 = vmatpush1.bf16.msra.mxu0 0
    %7137 = vmatprep.subr.bf16.mxu0 0
    %7138 = vmatpush1.bf16.msra.mxu0 0
    %7139 = vmatprep.subr.bf16.mxu0 0
    %7140 = vmatpush1.bf16.msra.mxu0 0
    %7141 = vmatprep.subr.bf16.mxu0 0
    %7142 = vmatpush1.bf16.msra.mxu0 0
    %7143 = vmatprep.subr.bf16.mxu0 0
    %7144 = vmatpush1.bf16.msra.mxu0 0
    %7145 = vmatprep.subr.bf16.mxu0 0
    %7146 = vmatpush1.bf16.msra.mxu0 0
    %7147 = vmatprep.subr.bf16.mxu0 0
    %7148 = vmatpush1.bf16.msra.mxu0 0
    %7149 = vmatprep.subr.bf16.mxu0 0
    %7150 = vmatpush1.bf16.msra.mxu0 0
    %7151 = vmatprep.subr.bf16.mxu0 0
    %7152 = vmatpush1.bf16.msra.mxu0 0
    %7153 = vmatprep.mubr.bf16.mxu0 0
    %7154 = vmatmul.mubr.bf16.gmra.mrb[0].mxu0 %v7098
    %v7155 = vpop.f32.mrb[0].mxu0
    %v7156 = vadd.f32 0.0, %v7155
    %v7157 = vpop.f32.mrb[0].mxu0
    %v7158 = vpop.f32.mrb[0].mxu0
    %v7159 = vadd.f32 0.0, %v7158
    %v7160 = vpop.f32.mrb[0].mxu0
    %7161 = vmatprep.mubr.bf16.mxu0 0
    %7162 = vmatmul.mubr.bf16.gmra.mrb[0].mxu0 %v7101
    %v7163 = vpop.f32.mrb[0].mxu0
    %v7164 = vadd.f32 0.0, %v7163
    %v7165 = vpop.f32.mrb[0].mxu0
    %v7166 = vpop.f32.mrb[0].mxu0
    %v7167 = vadd.f32 0.0, %v7166
    %v7168 = vpop.f32.mrb[0].mxu0
    %7169 = vmatprep.mubr.bf16.mxu0 0
    %7170 = vmatmul.mubr.bf16.gmra.mrb[0].mxu0 %v7104
    %v7171 = vpop.f32.mrb[0].mxu0
    %v7172 = vadd.f32 0.0, %v7171
    %v7173 = vpop.f32.mrb[0].mxu0
    %v7174 = vpop.f32.mrb[0].mxu0
    %v7175 = vadd.f32 0.0, %v7174
    %v7176 = vpop.f32.mrb[0].mxu0
    %7177 = vmatprep.mubr.bf16.mxu0 0
    %7178 = vmatmul.mubr.bf16.gmra.mrb[0].mxu0 %v7107
    %v7179 = vpop.f32.mrb[0].mxu0
    %v7180 = vadd.f32 0.0, %v7179
    %v7181 = vpop.f32.mrb[0].mxu0
    %v7182 = vpop.f32.mrb[0].mxu0
    %v7183 = vadd.f32 0.0, %v7182
    %v7184 = vpop.f32.mrb[0].mxu0
    %7185 = vmatprep.mubr.bf16.mxu0 0
    %7186 = vmatmul.mubr.bf16.gmra.mrb[0].mxu0 %v7110
    %v7187 = vpop.f32.mrb[0].mxu0
    %v7188 = vadd.f32 0.0, %v7187
    %v7189 = vpop.f32.mrb[0].mxu0
    %v7190 = vpop.f32.mrb[0].mxu0
    %v7191 = vadd.f32 0.0, %v7190
    %v7192 = vpop.f32.mrb[0].mxu0
    %7193 = vmatprep.mubr.bf16.mxu0 0
    %7194 = vmatmul.mubr.bf16.gmra.mrb[0].mxu0 %v7113
    %v7195 = vpop.f32.mrb[0].mxu0
    %v7196 = vadd.f32 0.0, %v7195
    %v7197 = vpop.f32.mrb[0].mxu0
    %v7198 = vpop.f32.mrb[0].mxu0
    %v7199 = vadd.f32 0.0, %v7198
    %v7200 = vpop.f32.mrb[0].mxu0
    %7201 = vmatprep.mubr.bf16.mxu0 0
    %7202 = vmatmul.mubr.bf16.gmra.mrb[0].mxu0 %v7116
    %v7203 = vpop.f32.mrb[0].mxu0
    %v7204 = vadd.f32 0.0, %v7203
    %v7205 = vpop.f32.mrb[0].mxu0
    %v7206 = vpop.f32.mrb[0].mxu0
    %v7207 = vadd.f32 0.0, %v7206
    %v7208 = vpop.f32.mrb[0].mxu0
    %7209 = vmatprep.mubr.bf16.mxu0 0
    %7210 = vmatmul.mubr.bf16.gmra.mrb[0].mxu0 %v7119
    %v7211 = vpop.f32.mrb[0].mxu0
    %v7212 = vadd.f32 0.0, %v7211
    %v7213 = vpop.f32.mrb[0].mxu0
    %v7214 = vpop.f32.mrb[0].mxu0
    %v7215 = vadd.f32 0.0, %v7214
    %v7216 = vpop.f32.mrb[0].mxu0
    %7217 = vdwg.mxu0
    %v7218 = vadd.f32 %v6769, %v7156
    %v7219 = vadd.f32 %v6770, %v7159
    %v7220 = vadd.f32 %v6771, %v7164
    %v7221 = vadd.f32 %v6772, %v7167
    %v7222 = vadd.f32 %v6773, %v7172
    %v7223 = vadd.f32 %v6774, %v7175
    %v7224 = vadd.f32 %v6775, %v7180
    %v7225 = vadd.f32 %v6776, %v7183
    %v7226 = vadd.f32 %v6777, %v7188
    %v7227 = vadd.f32 %v6778, %v7191
    %v7228 = vadd.f32 %v6779, %v7196
    %v7229 = vadd.f32 %v6780, %v7199
    %v7230 = vadd.f32 %v6781, %v7204
    %v7231 = vadd.f32 %v6782, %v7207
    %v7232 = vadd.f32 %v6783, %v7212
    %v7233 = vadd.f32 %v6784, %v7215
    %v7234 = vld [vmem:[%s2713] sm:$0xe]
    %v7235 = vld [vmem:[%s2713 + $0x8] sm:$0xe]
    %v7236 = vld [vmem:[%s2713 + $0x10] sm:$0xe]
    %v7237 = vld [vmem:[%s2713 + $0x18] sm:$0xe]
    %v7238 = vld [vmem:[%s2713 + $0x20] sm:$0xe]
    %v7239 = vld [vmem:[%s2713 + $0x28] sm:$0xe]
    %v7240 = vld [vmem:[%s2713 + $0x30] sm:$0xe]
    %v7241 = vld [vmem:[%s2713 + $0x38] sm:$0xe]
    %v7242 = vld [vmem:[%s2713 + $0x50] sm:$0xe]
    %v7243 = vld [vmem:[%s2713 + $0x58] sm:$0xe]
    %v7244 = vld [vmem:[%s2713 + $0x60] sm:$0xe]
    %v7245 = vld [vmem:[%s2713 + $0x68] sm:$0xe]
    %v7246 = vld [vmem:[%s2713 + $0x70] sm:$0xe]
    %v7247 = vld [vmem:[%s2713 + $0x78] sm:$0xe]
    %v7248 = vld [vmem:[%s2713 + $0x80] sm:$0xe]
    %v7249 = vld [vmem:[%s2713 + $0x88] sm:$0xe]
    %v7282 = vrot.slane %v7234, 5
    %v7283 = vrot.slane %v7282, 4
    %v7284 = vrot.slane %v6786, 5
    %v7285 = vsel %vm550, %v7283, %v7284
    %v7286 = vrot.slane %v7235, 5
    %v7287 = vrot.slane %v7286, 4
    %v7288 = vrot.slane %v6788, 5
    %v7289 = vsel %vm550, %v7287, %v7288
    %v7290 = vrot.slane %v7236, 5
    %v7291 = vrot.slane %v7290, 4
    %v7292 = vrot.slane %v6790, 5
    %v7293 = vsel %vm550, %v7291, %v7292
    %v7294 = vrot.slane %v7237, 5
    %v7295 = vrot.slane %v7294, 4
    %v7296 = vrot.slane %v6792, 5
    %v7297 = vsel %vm550, %v7295, %v7296
    %v7298 = vrot.slane %v7238, 5
    %v7299 = vrot.slane %v7298, 4
    %v7300 = vrot.slane %v6794, 5
    %v7301 = vsel %vm550, %v7299, %v7300
    %v7302 = vrot.slane %v7239, 5
    %v7303 = vrot.slane %v7302, 4
    %v7304 = vrot.slane %v6796, 5
    %v7305 = vsel %vm550, %v7303, %v7304
    %v7306 = vrot.slane %v7240, 5
    %v7307 = vrot.slane %v7306, 4
    %v7308 = vrot.slane %v6798, 5
    %v7309 = vsel %vm550, %v7307, %v7308
    %v7310 = vrot.slane %v7241, 5
    %v7311 = vrot.slane %v7310, 4
    %v7312 = vrot.slane %v6800, 5
    %v7313 = vsel %vm550, %v7311, %v7312
    %v7314 = vrot.slane %v7242, 5
    %v7315 = vrot.slane %v7314, 4
    %v7316 = vrot.slane %v6802, 5
    %v7317 = vsel %vm550, %v7315, %v7316
    %v7318 = vrot.slane %v7243, 5
    %v7319 = vrot.slane %v7318, 4
    %v7320 = vrot.slane %v6804, 5
    %v7321 = vsel %vm550, %v7319, %v7320
    %v7322 = vrot.slane %v7244, 5
    %v7323 = vrot.slane %v7322, 4
    %v7324 = vrot.slane %v6806, 5
    %v7325 = vsel %vm550, %v7323, %v7324
    %v7326 = vrot.slane %v7245, 5
    %v7327 = vrot.slane %v7326, 4
    %v7328 = vrot.slane %v6808, 5
    %v7329 = vsel %vm550, %v7327, %v7328
    %v7330 = vrot.slane %v7246, 5
    %v7331 = vrot.slane %v7330, 4
    %v7332 = vrot.slane %v6810, 5
    %v7333 = vsel %vm550, %v7331, %v7332
    %v7334 = vrot.slane %v7247, 5
    %v7335 = vrot.slane %v7334, 4
    %v7336 = vrot.slane %v6812, 5
    %v7337 = vsel %vm550, %v7335, %v7336
    %v7338 = vrot.slane %v7248, 5
    %v7339 = vrot.slane %v7338, 4
    %v7340 = vrot.slane %v6814, 5
    %v7341 = vsel %vm550, %v7339, %v7340
    %v7342 = vrot.slane %v7249, 5
    %v7343 = vrot.slane %v7342, 4
    %v7344 = vrot.slane %v6816, 5
    %v7345 = vsel %vm550, %v7343, %v7344
    %v7346 = vld [vmem:[%s2 + $0xe0] sm:$0xf]
    %v7347 = vld [vmem:[%s2 + $0xe4] sm:$0xf]
    %v7348 = vld [vmem:[%s2 + $0xe8] sm:$0xf]
    %v7349 = vld [vmem:[%s2 + $0xec] sm:$0xf]
    %v7350 = vld [vmem:[%s2 + $0xf0] sm:$0xf]
    %v7351 = vld [vmem:[%s2 + $0xf4] sm:$0xf]
    %v7352 = vld [vmem:[%s2 + $0xf8] sm:$0xf]
    %v7353 = vld [vmem:[%s2 + $0xfc] sm:$0xf]
    %v7354 = vunpack.c.l.b16 %v7285
    %v7355 = vunpack.c.l.b16 %v7289
    %v7356 = vunpack.c.l.b16 %v7293
    %v7357 = vunpack.c.l.b16 %v7297
    %v7358 = vunpack.c.l.b16 %v7301
    %v7359 = vunpack.c.l.b16 %v7305
    %v7360 = vunpack.c.l.b16 %v7309
    %v7361 = vunpack.c.l.b16 %v7313
    %v7362 = vunpack.c.l.b16 %v7317
    %v7363 = vunpack.c.l.b16 %v7321
    %v7364 = vunpack.c.l.b16 %v7325
    %v7365 = vunpack.c.l.b16 %v7329
    %v7366 = vunpack.c.l.b16 %v7333
    %v7367 = vunpack.c.l.b16 %v7337
    %v7368 = vunpack.c.l.b16 %v7341
    %v7369 = vunpack.c.l.b16 %v7345
    %v7370 = vpack.c.b16 %v7355, %v7354
    %v7371 = vpack.c.b16 %v7357, %v7356
    %v7372 = vpack.c.b16 %v7359, %v7358
    %v7373 = vpack.c.b16 %v7361, %v7360
    %v7374 = vpack.c.b16 %v7363, %v7362
    %v7375 = vpack.c.b16 %v7365, %v7364
    %v7376 = vpack.c.b16 %v7367, %v7366
    %v7377 = vpack.c.b16 %v7369, %v7368
    %v7386 = vunpack.c.l.b16 %v7346
    %v7387 = vunpack.c.l.b16 %v7347
    %v7388 = vunpack.c.l.b16 %v7348
    %v7389 = vunpack.c.l.b16 %v7349
    %v7390 = vunpack.c.l.b16 %v7350
    %v7391 = vunpack.c.l.b16 %v7351
    %v7392 = vunpack.c.l.b16 %v7352
    %v7393 = vunpack.c.l.b16 %v7353
    %v7394 = vpack.c.b16 %v7387, %v7386
    %v7395 = vpack.c.b16 %v7389, %v7388
    %v7396 = vpack.c.b16 %v7391, %v7390
    %v7397 = vpack.c.b16 %v7393, %v7392
    %v7403 = vsel %vm671, %v7370, 0
    %v7406 = vsel %vm671, %v7371, 0
    %v7409 = vsel %vm671, %v7372, 0
    %v7412 = vsel %vm671, %v7373, 0
    %v7415 = vsel %vm671, %v7374, 0
    %v7418 = vsel %vm671, %v7375, 0
    %v7421 = vsel %vm671, %v7376, 0
    %v7424 = vsel %vm671, %v7377, 0
    %7426 = vmatprep.subr.bf16.mxu0 0
    %7427 = vmatpush1.bf16.msra.mxu0 %v7394
    %7428 = vmatprep.subr.bf16.mxu0 0
    %7429 = vmatpush1.bf16.msra.mxu0 %v7395
    %7430 = vmatprep.subr.bf16.mxu0 0
    %7431 = vmatpush1.bf16.msra.mxu0 %v7396
    %7432 = vmatprep.subr.bf16.mxu0 0
    %7433 = vmatpush1.bf16.msra.mxu0 %v7397
    %7434 = vmatprep.subr.bf16.mxu0 0
    %7435 = vmatpush1.bf16.msra.mxu0 0
    %7436 = vmatprep.subr.bf16.mxu0 0
    %7437 = vmatpush1.bf16.msra.mxu0 0
    %7438 = vmatprep.subr.bf16.mxu0 0
    %7439 = vmatpush1.bf16.msra.mxu0 0
    %7440 = vmatprep.subr.bf16.mxu0 0
    %7441 = vmatpush1.bf16.msra.mxu0 0
    %7442 = vmatprep.subr.bf16.mxu0 0
    %7443 = vmatpush1.bf16.msra.mxu0 0
    %7444 = vmatprep.subr.bf16.mxu0 0
    %7445 = vmatpush1.bf16.msra.mxu0 0
    %7446 = vmatprep.subr.bf16.mxu0 0
    %7447 = vmatpush1.bf16.msra.mxu0 0
    %7448 = vmatprep.subr.bf16.mxu0 0
    %7449 = vmatpush1.bf16.msra.mxu0 0
    %7450 = vmatprep.subr.bf16.mxu0 0
    %7451 = vmatpush1.bf16.msra.mxu0 0
    %7452 = vmatprep.subr.bf16.mxu0 0
    %7453 = vmatpush1.bf16.msra.mxu0 0
    %7454 = vmatprep.subr.bf16.mxu0 0
    %7455 = vmatpush1.bf16.msra.mxu0 0
    %7456 = vmatprep.subr.bf16.mxu0 0
    %7457 = vmatpush1.bf16.msra.mxu0 0
    %7458 = vmatprep.mubr.bf16.mxu0 0
    %7459 = vmatmul.mubr.bf16.gmra.mrb[0].mxu0 %v7403
    %v7460 = vpop.f32.mrb[0].mxu0
    %v7461 = vadd.f32 0.0, %v7460
    %v7462 = vpop.f32.mrb[0].mxu0
    %v7463 = vpop.f32.mrb[0].mxu0
    %v7464 = vadd.f32 0.0, %v7463
    %v7465 = vpop.f32.mrb[0].mxu0
    %7466 = vmatprep.mubr.bf16.mxu0 0
    %7467 = vmatmul.mubr.bf16.gmra.mrb[0].mxu0 %v7406
    %v7468 = vpop.f32.mrb[0].mxu0
    %v7469 = vadd.f32 0.0, %v7468
    %v7470 = vpop.f32.mrb[0].mxu0
    %v7471 = vpop.f32.mrb[0].mxu0
    %v7472 = vadd.f32 0.0, %v7471
    %v7473 = vpop.f32.mrb[0].mxu0
    %7474 = vmatprep.mubr.bf16.mxu0 0
    %7475 = vmatmul.mubr.bf16.gmra.mrb[0].mxu0 %v7409
    %v7476 = vpop.f32.mrb[0].mxu0
    %v7477 = vadd.f32 0.0, %v7476
    %v7478 = vpop.f32.mrb[0].mxu0
    %v7479 = vpop.f32.mrb[0].mxu0
    %v7480 = vadd.f32 0.0, %v7479
    %v7481 = vpop.f32.mrb[0].mxu0
    %7482 = vmatprep.mubr.bf16.mxu0 0
    %7483 = vmatmul.mubr.bf16.gmra.mrb[0].mxu0 %v7412
    %v7484 = vpop.f32.mrb[0].mxu0
    %v7485 = vadd.f32 0.0, %v7484
    %v7486 = vpop.f32.mrb[0].mxu0
    %v7487 = vpop.f32.mrb[0].mxu0
    %v7488 = vadd.f32 0.0, %v7487
    %v7489 = vpop.f32.mrb[0].mxu0
    %7490 = vmatprep.mubr.bf16.mxu0 0
    %7491 = vmatmul.mubr.bf16.gmra.mrb[0].mxu0 %v7415
    %v7492 = vpop.f32.mrb[0].mxu0
    %v7493 = vadd.f32 0.0, %v7492
    %v7494 = vpop.f32.mrb[0].mxu0
    %v7495 = vpop.f32.mrb[0].mxu0
    %v7496 = vadd.f32 0.0, %v7495
    %v7497 = vpop.f32.mrb[0].mxu0
    %7498 = vmatprep.mubr.bf16.mxu0 0
    %7499 = vmatmul.mubr.bf16.gmra.mrb[0].mxu0 %v7418
    %v7500 = vpop.f32.mrb[0].mxu0
    %v7501 = vadd.f32 0.0, %v7500
    %v7502 = vpop.f32.mrb[0].mxu0
    %v7503 = vpop.f32.mrb[0].mxu0
    %v7504 = vadd.f32 0.0, %v7503
    %v7505 = vpop.f32.mrb[0].mxu0
    %7506 = vmatprep.mubr.bf16.mxu0 0
    %7507 = vmatmul.mubr.bf16.gmra.mrb[0].mxu0 %v7421
    %v7508 = vpop.f32.mrb[0].mxu0
    %v7509 = vadd.f32 0.0, %v7508
    %v7510 = vpop.f32.mrb[0].mxu0
    %v7511 = vpop.f32.mrb[0].mxu0
    %v7512 = vadd.f32 0.0, %v7511
    %v7513 = vpop.f32.mrb[0].mxu0
    %7514 = vmatprep.mubr.bf16.mxu0 0
    %7515 = vmatmul.mubr.bf16.gmra.mrb[0].mxu0 %v7424
    %v7516 = vpop.f32.mrb[0].mxu0
    %v7517 = vadd.f32 0.0, %v7516
    %v7518 = vpop.f32.mrb[0].mxu0
    %v7519 = vpop.f32.mrb[0].mxu0
    %v7520 = vadd.f32 0.0, %v7519
    %v7521 = vpop.f32.mrb[0].mxu0
    %7522 = vdwg.mxu0
    %v7523 = vadd.f32 %v7218, %v7461
    %v7524 = vadd.f32 %v7219, %v7464
    %v7525 = vadd.f32 %v7220, %v7469
    %v7526 = vadd.f32 %v7221, %v7472
    %v7527 = vadd.f32 %v7222, %v7477
    %v7528 = vadd.f32 %v7223, %v7480
    %v7529 = vadd.f32 %v7224, %v7485
    %v7530 = vadd.f32 %v7225, %v7488
    %v7531 = vadd.f32 %v7226, %v7493
    %v7532 = vadd.f32 %v7227, %v7496
    %v7533 = vadd.f32 %v7228, %v7501
    %v7534 = vadd.f32 %v7229, %v7504
    %v7535 = vadd.f32 %v7230, %v7509
    %v7536 = vadd.f32 %v7231, %v7512
    %v7537 = vadd.f32 %v7232, %v7517
    %v7538 = vadd.f32 %v7233, %v7520
    %v7539 = vld [vmem:[%s2713 + $0x4] sm:$0x3]
    %v7540 = vld [vmem:[%s2713 + $0xc] sm:$0x3]
    %v7541 = vld [vmem:[%s2713 + $0x14] sm:$0x3]
    %v7542 = vld [vmem:[%s2713 + $0x1c] sm:$0x3]
    %v7543 = vld [vmem:[%s2713 + $0x24] sm:$0x3]
    %v7544 = vld [vmem:[%s2713 + $0x2c] sm:$0x3]
    %v7545 = vld [vmem:[%s2713 + $0x34] sm:$0x3]
    %v7546 = vld [vmem:[%s2713 + $0x3c] sm:$0x3]
    %v7547 = vld [vmem:[%s2713 + $0x54] sm:$0x3]
    %v7548 = vld [vmem:[%s2713 + $0x5c] sm:$0x3]
    %v7549 = vld [vmem:[%s2713 + $0x64] sm:$0x3]
    %v7550 = vld [vmem:[%s2713 + $0x6c] sm:$0x3]
    %v7551 = vld [vmem:[%s2713 + $0x74] sm:$0x3]
    %v7552 = vld [vmem:[%s2713 + $0x7c] sm:$0x3]
    %v7553 = vld [vmem:[%s2713 + $0x84] sm:$0x3]
    %v7554 = vld [vmem:[%s2713 + $0x8c] sm:$0x3]
    %v7556 = vshrl.u32 %v7234, 16
    %v7558 = vrot.slane %v7556, 5
    %v7559 = vshll.u32 %v7234, 16
    %v7561 = vrot.slane %v7559, 6
    %v7562 = vor.u32 %v7558, %v7561
    %v7563 = vrot.slane %v7562, 4
    %v7565 = vshrl.u32 %v7539, 16
    %v7567 = vrot.slane %v7565, 5
    %v7568 = vshll.u32 %v7539, 16
    %v7570 = vrot.slane %v7568, 6
    %v7571 = vor.u32 %v7567, %v7570
    %v7572 = vsel %vm980, %v7563, %v7571
    %v7574 = vshrl.u32 %v7235, 16
    %v7576 = vrot.slane %v7574, 5
    %v7577 = vshll.u32 %v7235, 16
    %v7579 = vrot.slane %v7577, 6
    %v7580 = vor.u32 %v7576, %v7579
    %v7581 = vrot.slane %v7580, 4
    %v7583 = vshrl.u32 %v7540, 16
    %v7585 = vrot.slane %v7583, 5
    %v7586 = vshll.u32 %v7540, 16
    %v7588 = vrot.slane %v7586, 6
    %v7589 = vor.u32 %v7585, %v7588
    %v7590 = vsel %vm980, %v7581, %v7589
    %v7592 = vshrl.u32 %v7236, 16
    %v7594 = vrot.slane %v7592, 5
    %v7595 = vshll.u32 %v7236, 16
    %v7597 = vrot.slane %v7595, 6
    %v7598 = vor.u32 %v7594, %v7597
    %v7599 = vrot.slane %v7598, 4
    %v7601 = vshrl.u32 %v7541, 16
    %v7603 = vrot.slane %v7601, 5
    %v7604 = vshll.u32 %v7541, 16
    %v7606 = vrot.slane %v7604, 6
    %v7607 = vor.u32 %v7603, %v7606
    %v7608 = vsel %vm980, %v7599, %v7607
    %v7610 = vshrl.u32 %v7237, 16
    %v7612 = vrot.slane %v7610, 5
    %v7613 = vshll.u32 %v7237, 16
    %v7615 = vrot.slane %v7613, 6
    %v7616 = vor.u32 %v7612, %v7615
    %v7617 = vrot.slane %v7616, 4
    %v7619 = vshrl.u32 %v7542, 16
    %v7621 = vrot.slane %v7619, 5
    %v7622 = vshll.u32 %v7542, 16
    %v7624 = vrot.slane %v7622, 6
    %v7625 = vor.u32 %v7621, %v7624
    %v7626 = vsel %vm980, %v7617, %v7625
    %v7628 = vshrl.u32 %v7238, 16
    %v7630 = vrot.slane %v7628, 5
    %v7631 = vshll.u32 %v7238, 16
    %v7633 = vrot.slane %v7631, 6
    %v7634 = vor.u32 %v7630, %v7633
    %v7635 = vrot.slane %v7634, 4
    %v7637 = vshrl.u32 %v7543, 16
    %v7639 = vrot.slane %v7637, 5
    %v7640 = vshll.u32 %v7543, 16
    %v7642 = vrot.slane %v7640, 6
    %v7643 = vor.u32 %v7639, %v7642
    %v7644 = vsel %vm980, %v7635, %v7643
    %v7646 = vshrl.u32 %v7239, 16
    %v7648 = vrot.slane %v7646, 5
    %v7649 = vshll.u32 %v7239, 16
    %v7651 = vrot.slane %v7649, 6
    %v7652 = vor.u32 %v7648, %v7651
    %v7653 = vrot.slane %v7652, 4
    %v7655 = vshrl.u32 %v7544, 16
    %v7657 = vrot.slane %v7655, 5
    %v7658 = vshll.u32 %v7544, 16
    %v7660 = vrot.slane %v7658, 6
    %v7661 = vor.u32 %v7657, %v7660
    %v7662 = vsel %vm980, %v7653, %v7661
    %v7664 = vshrl.u32 %v7240, 16
    %v7666 = vrot.slane %v7664, 5
    %v7667 = vshll.u32 %v7240, 16
    %v7669 = vrot.slane %v7667, 6
    %v7670 = vor.u32 %v7666, %v7669
    %v7671 = vrot.slane %v7670, 4
    %v7673 = vshrl.u32 %v7545, 16
    %v7675 = vrot.slane %v7673, 5
    %v7676 = vshll.u32 %v7545, 16
    %v7678 = vrot.slane %v7676, 6
    %v7679 = vor.u32 %v7675, %v7678
    %v7680 = vsel %vm980, %v7671, %v7679
    %v7682 = vshrl.u32 %v7241, 16
    %v7684 = vrot.slane %v7682, 5
    %v7685 = vshll.u32 %v7241, 16
    %v7687 = vrot.slane %v7685, 6
    %v7688 = vor.u32 %v7684, %v7687
    %v7689 = vrot.slane %v7688, 4
    %v7691 = vshrl.u32 %v7546, 16
    %v7693 = vrot.slane %v7691, 5
    %v7694 = vshll.u32 %v7546, 16
    %v7696 = vrot.slane %v7694, 6
    %v7697 = vor.u32 %v7693, %v7696
    %v7698 = vsel %vm980, %v7689, %v7697
    %v7700 = vshrl.u32 %v7242, 16
    %v7702 = vrot.slane %v7700, 5
    %v7703 = vshll.u32 %v7242, 16
    %v7705 = vrot.slane %v7703, 6
    %v7706 = vor.u32 %v7702, %v7705
    %v7707 = vrot.slane %v7706, 4
    %v7709 = vshrl.u32 %v7547, 16
    %v7711 = vrot.slane %v7709, 5
    %v7712 = vshll.u32 %v7547, 16
    %v7714 = vrot.slane %v7712, 6
    %v7715 = vor.u32 %v7711, %v7714
    %v7716 = vsel %vm980, %v7707, %v7715
    %v7718 = vshrl.u32 %v7243, 16
    %v7720 = vrot.slane %v7718, 5
    %v7721 = vshll.u32 %v7243, 16
    %v7723 = vrot.slane %v7721, 6
    %v7724 = vor.u32 %v7720, %v7723
    %v7725 = vrot.slane %v7724, 4
    %v7727 = vshrl.u32 %v7548, 16
    %v7729 = vrot.slane %v7727, 5
    %v7730 = vshll.u32 %v7548, 16
    %v7732 = vrot.slane %v7730, 6
    %v7733 = vor.u32 %v7729, %v7732
    %v7734 = vsel %vm980, %v7725, %v7733
    %v7736 = vshrl.u32 %v7244, 16
    %v7738 = vrot.slane %v7736, 5
    %v7739 = vshll.u32 %v7244, 16
    %v7741 = vrot.slane %v7739, 6
    %v7742 = vor.u32 %v7738, %v7741
    %v7743 = vrot.slane %v7742, 4
    %v7745 = vshrl.u32 %v7549, 16
    %v7747 = vrot.slane %v7745, 5
    %v7748 = vshll.u32 %v7549, 16
    %v7750 = vrot.slane %v7748, 6
    %v7751 = vor.u32 %v7747, %v7750
    %v7752 = vsel %vm980, %v7743, %v7751
    %v7754 = vshrl.u32 %v7245, 16
    %v7756 = vrot.slane %v7754, 5
    %v7757 = vshll.u32 %v7245, 16
    %v7759 = vrot.slane %v7757, 6
    %v7760 = vor.u32 %v7756, %v7759
    %v7761 = vrot.slane %v7760, 4
    %v7763 = vshrl.u32 %v7550, 16
    %v7765 = vrot.slane %v7763, 5
    %v7766 = vshll.u32 %v7550, 16
    %v7768 = vrot.slane %v7766, 6
    %v7769 = vor.u32 %v7765, %v7768
    %v7770 = vsel %vm980, %v7761, %v7769
    %v7772 = vshrl.u32 %v7246, 16
    %v7774 = vrot.slane %v7772, 5
    %v7775 = vshll.u32 %v7246, 16
    %v7777 = vrot.slane %v7775, 6
    %v7778 = vor.u32 %v7774, %v7777
    %v7779 = vrot.slane %v7778, 4
    %v7781 = vshrl.u32 %v7551, 16
    %v7783 = vrot.slane %v7781, 5
    %v7784 = vshll.u32 %v7551, 16
    %v7786 = vrot.slane %v7784, 6
    %v7787 = vor.u32 %v7783, %v7786
    %v7788 = vsel %vm980, %v7779, %v7787
    %v7790 = vshrl.u32 %v7247, 16
    %v7792 = vrot.slane %v7790, 5
    %v7793 = vshll.u32 %v7247, 16
    %v7795 = vrot.slane %v7793, 6
    %v7796 = vor.u32 %v7792, %v7795
    %v7797 = vrot.slane %v7796, 4
    %v7799 = vshrl.u32 %v7552, 16
    %v7801 = vrot.slane %v7799, 5
    %v7802 = vshll.u32 %v7552, 16
    %v7804 = vrot.slane %v7802, 6
    %v7805 = vor.u32 %v7801, %v7804
    %v7806 = vsel %vm980, %v7797, %v7805
    %v7808 = vshrl.u32 %v7248, 16
    %v7810 = vrot.slane %v7808, 5
    %v7811 = vshll.u32 %v7248, 16
    %v7813 = vrot.slane %v7811, 6
    %v7814 = vor.u32 %v7810, %v7813
    %v7815 = vrot.slane %v7814, 4
    %v7817 = vshrl.u32 %v7553, 16
    %v7819 = vrot.slane %v7817, 5
    %v7820 = vshll.u32 %v7553, 16
    %v7822 = vrot.slane %v7820, 6
    %v7823 = vor.u32 %v7819, %v7822
    %v7824 = vsel %vm980, %v7815, %v7823
    %v7826 = vshrl.u32 %v7249, 16
    %v7828 = vrot.slane %v7826, 5
    %v7829 = vshll.u32 %v7249, 16
    %v7831 = vrot.slane %v7829, 6
    %v7832 = vor.u32 %v7828, %v7831
    %v7833 = vrot.slane %v7832, 4
    %v7835 = vshrl.u32 %v7554, 16
    %v7837 = vrot.slane %v7835, 5
    %v7838 = vshll.u32 %v7554, 16
    %v7840 = vrot.slane %v7838, 6
    %v7841 = vor.u32 %v7837, %v7840
    %v7842 = vsel %vm980, %v7833, %v7841
    %v7843 = vld [vmem:[%s2 + $0x100] sm:$0xf]
    %v7844 = vld [vmem:[%s2 + $0x104] sm:$0xf]
    %v7845 = vld [vmem:[%s2 + $0x108] sm:$0xf]
    %v7846 = vld [vmem:[%s2 + $0x10c] sm:$0xf]
    %v7847 = vld [vmem:[%s2 + $0x110] sm:$0xf]
    %v7848 = vld [vmem:[%s2 + $0x114] sm:$0xf]
    %v7849 = vld [vmem:[%s2 + $0x118] sm:$0xf]
    %v7850 = vld [vmem:[%s2 + $0x11c] sm:$0xf]
    %v7851 = vunpack.c.l.b16 %v7572
    %v7852 = vunpack.c.l.b16 %v7590
    %v7853 = vunpack.c.l.b16 %v7608
    %v7854 = vunpack.c.l.b16 %v7626
    %v7855 = vunpack.c.l.b16 %v7644
    %v7856 = vunpack.c.l.b16 %v7662
    %v7857 = vunpack.c.l.b16 %v7680
    %v7858 = vunpack.c.l.b16 %v7698
    %v7859 = vunpack.c.l.b16 %v7716
    %v7860 = vunpack.c.l.b16 %v7734
    %v7861 = vunpack.c.l.b16 %v7752
    %v7862 = vunpack.c.l.b16 %v7770
    %v7863 = vunpack.c.l.b16 %v7788
    %v7864 = vunpack.c.l.b16 %v7806
    %v7865 = vunpack.c.l.b16 %v7824
    %v7866 = vunpack.c.l.b16 %v7842
    %v7867 = vpack.c.b16 %v7852, %v7851
    %v7868 = vpack.c.b16 %v7854, %v7853
    %v7869 = vpack.c.b16 %v7856, %v7855
    %v7870 = vpack.c.b16 %v7858, %v7857
    %v7871 = vpack.c.b16 %v7860, %v7859
    %v7872 = vpack.c.b16 %v7862, %v7861
    %v7873 = vpack.c.b16 %v7864, %v7863
    %v7874 = vpack.c.b16 %v7866, %v7865
    %v7883 = vunpack.c.l.b16 %v7843
    %v7884 = vunpack.c.l.b16 %v7844
    %v7885 = vunpack.c.l.b16 %v7845
    %v7886 = vunpack.c.l.b16 %v7846
    %v7887 = vunpack.c.l.b16 %v7847
    %v7888 = vunpack.c.l.b16 %v7848
    %v7889 = vunpack.c.l.b16 %v7849
    %v7890 = vunpack.c.l.b16 %v7850
    %v7891 = vpack.c.b16 %v7884, %v7883
    %v7892 = vpack.c.b16 %v7886, %v7885
    %v7893 = vpack.c.b16 %v7888, %v7887
    %v7894 = vpack.c.b16 %v7890, %v7889
    %v7900 = vsel %vm671, %v7867, 0
    %v7903 = vsel %vm671, %v7868, 0
    %v7906 = vsel %vm671, %v7869, 0
    %v7909 = vsel %vm671, %v7870, 0
    %v7912 = vsel %vm671, %v7871, 0
    %v7915 = vsel %vm671, %v7872, 0
    %v7918 = vsel %vm671, %v7873, 0
    %v7921 = vsel %vm671, %v7874, 0
    %7923 = vmatprep.subr.bf16.mxu0 0
    %7924 = vmatpush1.bf16.msra.mxu0 %v7891
    %7925 = vmatprep.subr.bf16.mxu0 0
    %7926 = vmatpush1.bf16.msra.mxu0 %v7892
    %7927 = vmatprep.subr.bf16.mxu0 0
    %7928 = vmatpush1.bf16.msra.mxu0 %v7893
    %7929 = vmatprep.subr.bf16.mxu0 0
    %7930 = vmatpush1.bf16.msra.mxu0 %v7894
    %7931 = vmatprep.subr.bf16.mxu0 0
    %7932 = vmatpush1.bf16.msra.mxu0 0
    %7933 = vmatprep.subr.bf16.mxu0 0
    %7934 = vmatpush1.bf16.msra.mxu0 0
    %7935 = vmatprep.subr.bf16.mxu0 0
    %7936 = vmatpush1.bf16.msra.mxu0 0
    %7937 = vmatprep.subr.bf16.mxu0 0
    %7938 = vmatpush1.bf16.msra.mxu0 0
    %7939 = vmatprep.subr.bf16.mxu0 0
    %7940 = vmatpush1.bf16.msra.mxu0 0
    %7941 = vmatprep.subr.bf16.mxu0 0
    %7942 = vmatpush1.bf16.msra.mxu0 0
    %7943 = vmatprep.subr.bf16.mxu0 0
    %7944 = vmatpush1.bf16.msra.mxu0 0
    %7945 = vmatprep.subr.bf16.mxu0 0
    %7946 = vmatpush1.bf16.msra.mxu0 0
    %7947 = vmatprep.subr.bf16.mxu0 0
    %7948 = vmatpush1.bf16.msra.mxu0 0
    %7949 = vmatprep.subr.bf16.mxu0 0
    %7950 = vmatpush1.bf16.msra.mxu0 0
    %7951 = vmatprep.subr.bf16.mxu0 0
    %7952 = vmatpush1.bf16.msra.mxu0 0
    %7953 = vmatprep.subr.bf16.mxu0 0
    %7954 = vmatpush1.bf16.msra.mxu0 0
    %7955 = vmatprep.mubr.bf16.mxu0 0
    %7956 = vmatmul.mubr.bf16.gmra.mrb[0].mxu0 %v7900
    %v7957 = vpop.f32.mrb[0].mxu0
    %v7958 = vadd.f32 0.0, %v7957
    %v7959 = vpop.f32.mrb[0].mxu0
    %v7960 = vpop.f32.mrb[0].mxu0
    %v7961 = vadd.f32 0.0, %v7960
    %v7962 = vpop.f32.mrb[0].mxu0
    %7963 = vmatprep.mubr.bf16.mxu0 0
    %7964 = vmatmul.mubr.bf16.gmra.mrb[0].mxu0 %v7903
    %v7965 = vpop.f32.mrb[0].mxu0
    %v7966 = vadd.f32 0.0, %v7965
    %v7967 = vpop.f32.mrb[0].mxu0
    %v7968 = vpop.f32.mrb[0].mxu0
    %v7969 = vadd.f32 0.0, %v7968
    %v7970 = vpop.f32.mrb[0].mxu0
    %7971 = vmatprep.mubr.bf16.mxu0 0
    %7972 = vmatmul.mubr.bf16.gmra.mrb[0].mxu0 %v7906
    %v7973 = vpop.f32.mrb[0].mxu0
    %v7974 = vadd.f32 0.0, %v7973
    %v7975 = vpop.f32.mrb[0].mxu0
    %v7976 = vpop.f32.mrb[0].mxu0
    %v7977 = vadd.f32 0.0, %v7976
    %v7978 = vpop.f32.mrb[0].mxu0
    %7979 = vmatprep.mubr.bf16.mxu0 0
    %7980 = vmatmul.mubr.bf16.gmra.mrb[0].mxu0 %v7909
    %v7981 = vpop.f32.mrb[0].mxu0
    %v7982 = vadd.f32 0.0, %v7981
    %v7983 = vpop.f32.mrb[0].mxu0
    %v7984 = vpop.f32.mrb[0].mxu0
    %v7985 = vadd.f32 0.0, %v7984
    %v7986 = vpop.f32.mrb[0].mxu0
    %7987 = vmatprep.mubr.bf16.mxu0 0
    %7988 = vmatmul.mubr.bf16.gmra.mrb[0].mxu0 %v7912
    %v7989 = vpop.f32.mrb[0].mxu0
    %v7990 = vadd.f32 0.0, %v7989
    %v7991 = vpop.f32.mrb[0].mxu0
    %v7992 = vpop.f32.mrb[0].mxu0
    %v7993 = vadd.f32 0.0, %v7992
    %v7994 = vpop.f32.mrb[0].mxu0
    %7995 = vmatprep.mubr.bf16.mxu0 0
    %7996 = vmatmul.mubr.bf16.gmra.mrb[0].mxu0 %v7915
    %v7997 = vpop.f32.mrb[0].mxu0
    %v7998 = vadd.f32 0.0, %v7997
    %v7999 = vpop.f32.mrb[0].mxu0
    %v8000 = vpop.f32.mrb[0].mxu0
    %v8001 = vadd.f32 0.0, %v8000
    %v8002 = vpop.f32.mrb[0].mxu0
    %8003 = vmatprep.mubr.bf16.mxu0 0
    %8004 = vmatmul.mubr.bf16.gmra.mrb[0].mxu0 %v7918
    %v8005 = vpop.f32.mrb[0].mxu0
    %v8006 = vadd.f32 0.0, %v8005
    %v8007 = vpop.f32.mrb[0].mxu0
    %v8008 = vpop.f32.mrb[0].mxu0
    %v8009 = vadd.f32 0.0, %v8008
    %v8010 = vpop.f32.mrb[0].mxu0
    %8011 = vmatprep.mubr.bf16.mxu0 0
    %8012 = vmatmul.mubr.bf16.gmra.mrb[0].mxu0 %v7921
    %v8013 = vpop.f32.mrb[0].mxu0
    %v8014 = vadd.f32 0.0, %v8013
    %v8015 = vpop.f32.mrb[0].mxu0
    %v8016 = vpop.f32.mrb[0].mxu0
    %v8017 = vadd.f32 0.0, %v8016
    %v8018 = vpop.f32.mrb[0].mxu0
    %8019 = vdwg.mxu0
    %v8020 = vadd.f32 %v7523, %v7958
    %v8021 = vadd.f32 %v7524, %v7961
    %v8022 = vadd.f32 %v7525, %v7966
    %v8023 = vadd.f32 %v7526, %v7969
    %v8024 = vadd.f32 %v7527, %v7974
    %v8025 = vadd.f32 %v7528, %v7977
    %v8026 = vadd.f32 %v7529, %v7982
    %v8027 = vadd.f32 %v7530, %v7985
    %v8028 = vadd.f32 %v7531, %v7990
    %v8029 = vadd.f32 %v7532, %v7993
    %v8030 = vadd.f32 %v7533, %v7998
    %v8031 = vadd.f32 %v7534, %v8001
    %v8032 = vadd.f32 %v7535, %v8006
    %v8033 = vadd.f32 %v7536, %v8009
    %v8034 = vadd.f32 %v7537, %v8014
    %v8035 = vadd.f32 %v7538, %v8017
    %v8036 = vsel %vm671, %v8020, 0.0
    %v8037 = vsel %vm671, %v8021, 0.0
    %v8038 = vadd.f32 %v8036, %v8037
    %v8039 = vsel %vm671, %v8022, 0.0
    %v8040 = vadd.f32 %v8038, %v8039
    %v8041 = vsel %vm671, %v8023, 0.0
    %v8042 = vadd.f32 %v8040, %v8041
    %v8043 = vsel %vm671, %v8024, 0.0
    %v8044 = vadd.f32 %v8042, %v8043
    %v8045 = vsel %vm671, %v8025, 0.0
    %v8046 = vadd.f32 %v8044, %v8045
    %v8047 = vsel %vm671, %v8026, 0.0
    %v8048 = vadd.f32 %v8046, %v8047
    %v8049 = vsel %vm671, %v8027, 0.0
    %v8050 = vadd.f32 %v8048, %v8049
    %v8051 = vsel %vm671, %v8028, 0.0
    %v8052 = vadd.f32 %v8050, %v8051
    %v8053 = vsel %vm671, %v8029, 0.0
    %v8054 = vadd.f32 %v8052, %v8053
    %v8055 = vsel %vm671, %v8030, 0.0
    %v8056 = vadd.f32 %v8054, %v8055
    %v8057 = vsel %vm671, %v8031, 0.0
    %v8058 = vadd.f32 %v8056, %v8057
    %v8059 = vsel %vm671, %v8032, 0.0
    %v8060 = vadd.f32 %v8058, %v8059
    %v8061 = vsel %vm671, %v8033, 0.0
    %v8062 = vadd.f32 %v8060, %v8061
    %v8063 = vsel %vm671, %v8034, 0.0
    %v8064 = vadd.f32 %v8062, %v8063
    %v8065 = vsel %vm671, %v8035, 0.0
    %v8066 = vadd.f32 %v8064, %v8065
    %v8067 = vrot.slane %v8066, 4
    %v8068 = vadd.f32 %v8066, %v8067
    %v8069 = vrot.slane %v8068, 2
    %v8070 = vadd.f32 %v8068, %v8069
    %v8071 = vrot.slane %v8070, 1
    %v8072 = vadd.f32 %v8070, %v8071
    %v8073 = vmul.f32 %v8072, %v4002
    %v8074 = vsub.f32 %v8020, %v8073
    %v8075 = vsub.f32 %v8021, %v8073
    %v8076 = vsub.f32 %v8022, %v8073
    %v8077 = vsub.f32 %v8023, %v8073
    %v8078 = vsub.f32 %v8024, %v8073
    %v8079 = vsub.f32 %v8025, %v8073
    %v8080 = vsub.f32 %v8026, %v8073
    %v8081 = vsub.f32 %v8027, %v8073
    %v8082 = vsub.f32 %v8028, %v8073
    %v8083 = vsub.f32 %v8029, %v8073
    %v8084 = vsub.f32 %v8030, %v8073
    %v8085 = vsub.f32 %v8031, %v8073
    %v8086 = vsub.f32 %v8032, %v8073
    %v8087 = vsub.f32 %v8033, %v8073
    %v8088 = vsub.f32 %v8034, %v8073
    %v8089 = vsub.f32 %v8035, %v8073
    %v8090 = vmul.f32 %v8074, %v8074
    %v8091 = vmul.f32 %v8075, %v8075
    %v8092 = vmul.f32 %v8076, %v8076
    %v8093 = vmul.f32 %v8077, %v8077
    %v8094 = vmul.f32 %v8078, %v8078
    %v8095 = vmul.f32 %v8079, %v8079
    %v8096 = vmul.f32 %v8080, %v8080
    %v8097 = vmul.f32 %v8081, %v8081
    %v8098 = vmul.f32 %v8082, %v8082
    %v8099 = vmul.f32 %v8083, %v8083
    %v8100 = vmul.f32 %v8084, %v8084
    %v8101 = vmul.f32 %v8085, %v8085
    %v8102 = vmul.f32 %v8086, %v8086
    %v8103 = vmul.f32 %v8087, %v8087
    %v8104 = vmul.f32 %v8088, %v8088
    %v8105 = vmul.f32 %v8089, %v8089
    %v8106 = vsel %vm671, %v8090, 0.0
    %v8107 = vsel %vm671, %v8091, 0.0
    %v8108 = vadd.f32 %v8106, %v8107
    %v8109 = vsel %vm671, %v8092, 0.0
    %v8110 = vadd.f32 %v8108, %v8109
    %v8111 = vsel %vm671, %v8093, 0.0
    %v8112 = vadd.f32 %v8110, %v8111
    %v8113 = vsel %vm671, %v8094, 0.0
    %v8114 = vadd.f32 %v8112, %v8113
    %v8115 = vsel %vm671, %v8095, 0.0
    %v8116 = vadd.f32 %v8114, %v8115
    %v8117 = vsel %vm671, %v8096, 0.0
    %v8118 = vadd.f32 %v8116, %v8117
    %v8119 = vsel %vm671, %v8097, 0.0
    %v8120 = vadd.f32 %v8118, %v8119
    %v8121 = vsel %vm671, %v8098, 0.0
    %v8122 = vadd.f32 %v8120, %v8121
    %v8123 = vsel %vm671, %v8099, 0.0
    %v8124 = vadd.f32 %v8122, %v8123
    %v8125 = vsel %vm671, %v8100, 0.0
    %v8126 = vadd.f32 %v8124, %v8125
    %v8127 = vsel %vm671, %v8101, 0.0
    %v8128 = vadd.f32 %v8126, %v8127
    %v8129 = vsel %vm671, %v8102, 0.0
    %v8130 = vadd.f32 %v8128, %v8129
    %v8131 = vsel %vm671, %v8103, 0.0
    %v8132 = vadd.f32 %v8130, %v8131
    %v8133 = vsel %vm671, %v8104, 0.0
    %v8134 = vadd.f32 %v8132, %v8133
    %v8135 = vsel %vm671, %v8105, 0.0
    %v8136 = vadd.f32 %v8134, %v8135
    %v8137 = vrot.slane %v8136, 4
    %v8138 = vadd.f32 %v8136, %v8137
    %v8139 = vrot.slane %v8138, 2
    %v8140 = vadd.f32 %v8138, %v8139
    %v8141 = vrot.slane %v8140, 1
    %v8142 = vadd.f32 %v8140, %v8141
    %v8143 = vmul.f32 %v8142, %v4002
    %v8144 = vld [vmem:[%s5] sm:$0x1]
    %v8145 = vadd.f32 %v8143, 1e-05
    %v8146 = vrsqrt.pop %v8145
    %v8147 = vmul.f32 %v8144, %v8146
    %v8149 = vlaneseq
    %v8150 = vshrl.u32 %v8149, 7
    %v8151 = vsub.s32 0, %v8150
    %v8152 = vrot.slane %v8147, %v8151
    %v8154 = vmul.f32 %v8074, %v8152
    %v8155 = vmul.f32 %v8075, %v8152
    %v8156 = vmul.f32 %v8076, %v8152
    %v8157 = vmul.f32 %v8077, %v8152
    %v8158 = vmul.f32 %v8078, %v8152
    %v8159 = vmul.f32 %v8079, %v8152
    %v8160 = vmul.f32 %v8080, %v8152
    %v8161 = vmul.f32 %v8081, %v8152
    %v8162 = vmul.f32 %v8082, %v8152
    %v8163 = vmul.f32 %v8083, %v8152
    %v8164 = vmul.f32 %v8084, %v8152
    %v8165 = vmul.f32 %v8085, %v8152
    %v8166 = vmul.f32 %v8086, %v8152
    %v8167 = vmul.f32 %v8087, %v8152
    %v8168 = vmul.f32 %v8088, %v8152
    %v8169 = vmul.f32 %v8089, %v8152
    %v8170 = vld [vmem:[%s6] sm:$0x1]
    %v8172 = vlaneseq
    %v8173 = vshrl.u32 %v8172, 7
    %v8174 = vsub.s32 0, %v8173
    %v8175 = vrot.slane %v8170, %v8174
    %v8177 = vadd.f32 %v8154, %v8175
    %v8178 = vadd.f32 %v8155, %v8175
    %v8179 = vadd.f32 %v8156, %v8175
    %v8180 = vadd.f32 %v8157, %v8175
    %v8181 = vadd.f32 %v8158, %v8175
    %v8182 = vadd.f32 %v8159, %v8175
    %v8183 = vadd.f32 %v8160, %v8175
    %v8184 = vadd.f32 %v8161, %v8175
    %v8185 = vadd.f32 %v8162, %v8175
    %v8186 = vadd.f32 %v8163, %v8175
    %v8187 = vadd.f32 %v8164, %v8175
    %v8188 = vadd.f32 %v8165, %v8175
    %v8189 = vadd.f32 %v8166, %v8175
    %v8190 = vadd.f32 %v8167, %v8175
    %v8191 = vadd.f32 %v8168, %v8175
    %v8192 = vadd.f32 %v8169, %v8175
    %v8193 = vld [vmem:[%s0] sm:$0xff]
    %v8194 = vld [vmem:[%s0 + $0x8] sm:$0xff]
    %v8195 = vld [vmem:[%s0 + $0x10] sm:$0xff]
    %v8196 = vld [vmem:[%s0 + $0x18] sm:$0xff]
    %v8197 = vld [vmem:[%s0 + $0x20] sm:$0xff]
    %v8198 = vld [vmem:[%s0 + $0x28] sm:$0xff]
    %v8199 = vld [vmem:[%s0 + $0x30] sm:$0xff]
    %v8200 = vld [vmem:[%s0 + $0x38] sm:$0xff]
    %v8201 = vld [vmem:[%s0 + $0x40] sm:$0xff]
    %v8202 = vld [vmem:[%s0 + $0x48] sm:$0xff]
    %v8203 = vld [vmem:[%s0 + $0x50] sm:$0xff]
    %v8204 = vld [vmem:[%s0 + $0x58] sm:$0xff]
    %v8205 = vld [vmem:[%s0 + $0x60] sm:$0xff]
    %v8206 = vld [vmem:[%s0 + $0x68] sm:$0xff]
    %v8207 = vld [vmem:[%s0 + $0x70] sm:$0xff]
    %v8208 = vld [vmem:[%s0 + $0x78] sm:$0xff]
    %v8209 = vadd.f32 %v8177, %v8193
    %v8210 = vadd.f32 %v8178, %v8194
    %v8211 = vadd.f32 %v8179, %v8195
    %v8212 = vadd.f32 %v8180, %v8196
    %v8213 = vadd.f32 %v8181, %v8197
    %v8214 = vadd.f32 %v8182, %v8198
    %v8215 = vadd.f32 %v8183, %v8199
    %v8216 = vadd.f32 %v8184, %v8200
    %v8217 = vadd.f32 %v8185, %v8201
    %v8218 = vadd.f32 %v8186, %v8202
    %v8219 = vadd.f32 %v8187, %v8203
    %v8220 = vadd.f32 %v8188, %v8204
    %v8221 = vadd.f32 %v8189, %v8205
    %v8222 = vadd.f32 %v8190, %v8206
    %v8223 = vadd.f32 %v8191, %v8207
    %v8224 = vadd.f32 %v8192, %v8208
    %vm8225 = vcmp.ge.f32.partialorder %v8209, 0.0
    %vm8226 = vcmp.ge.f32.partialorder %v8210, 0.0
    %vm8227 = vcmp.ge.f32.partialorder %v8211, 0.0
    %vm8228 = vcmp.ge.f32.partialorder %v8212, 0.0
    %vm8229 = vcmp.ge.f32.partialorder %v8213, 0.0
    %vm8230 = vcmp.ge.f32.partialorder %v8214, 0.0
    %vm8231 = vcmp.ge.f32.partialorder %v8215, 0.0
    %vm8232 = vcmp.ge.f32.partialorder %v8216, 0.0
    %vm8233 = vcmp.ge.f32.partialorder %v8217, 0.0
    %vm8234 = vcmp.ge.f32.partialorder %v8218, 0.0
    %vm8235 = vcmp.ge.f32.partialorder %v8219, 0.0
    %vm8236 = vcmp.ge.f32.partialorder %v8220, 0.0
    %vm8237 = vcmp.ge.f32.partialorder %v8221, 0.0
    %vm8238 = vcmp.ge.f32.partialorder %v8222, 0.0
    %vm8239 = vcmp.ge.f32.partialorder %v8223, 0.0
    %vm8240 = vcmp.ge.f32.partialorder %v8224, 0.0
    %v8241 = vmul.f32 %v8209, 0.01
    %v8242 = vmul.f32 %v8210, 0.01
    %v8243 = vmul.f32 %v8211, 0.01
    %v8244 = vmul.f32 %v8212, 0.01
    %v8245 = vmul.f32 %v8213, 0.01
    %v8246 = vmul.f32 %v8214, 0.01
    %v8247 = vmul.f32 %v8215, 0.01
    %v8248 = vmul.f32 %v8216, 0.01
    %v8249 = vmul.f32 %v8217, 0.01
    %v8250 = vmul.f32 %v8218, 0.01
    %v8251 = vmul.f32 %v8219, 0.01
    %v8252 = vmul.f32 %v8220, 0.01
    %v8253 = vmul.f32 %v8221, 0.01
    %v8254 = vmul.f32 %v8222, 0.01
    %v8255 = vmul.f32 %v8223, 0.01
    %v8256 = vmul.f32 %v8224, 0.01
    %v8257 = vsel %vm8225, %v8209, %v8241
    %v8258 = vsel %vm8226, %v8210, %v8242
    %v8259 = vsel %vm8227, %v8211, %v8243
    %v8260 = vsel %vm8228, %v8212, %v8244
    %v8261 = vsel %vm8229, %v8213, %v8245
    %v8262 = vsel %vm8230, %v8214, %v8246
    %v8263 = vsel %vm8231, %v8215, %v8247
    %v8264 = vsel %vm8232, %v8216, %v8248
    %v8265 = vsel %vm8233, %v8217, %v8249
    %v8266 = vsel %vm8234, %v8218, %v8250
    %v8267 = vsel %vm8235, %v8219, %v8251
    %v8268 = vsel %vm8236, %v8220, %v8252
    %v8269 = vsel %vm8237, %v8221, %v8253
    %v8270 = vsel %vm8238, %v8222, %v8254
    %v8271 = vsel %vm8239, %v8223, %v8255
    %v8272 = vsel %vm8240, %v8224, %v8256
    %8273 = vst.msk [vmem:[#allocation3] sm:$0xff] %vm671, %v8257
    %8274 = vst.msk [vmem:[#allocation3 + $0x8] sm:$0xff] %vm671, %v8258
    %8275 = vst.msk [vmem:[#allocation3 + $0x10] sm:$0xff] %vm671, %v8259
    %8276 = vst.msk [vmem:[#allocation3 + $0x18] sm:$0xff] %vm671, %v8260
    %8277 = vst.msk [vmem:[#allocation3 + $0x20] sm:$0xff] %vm671, %v8261
    %8278 = vst.msk [vmem:[#allocation3 + $0x28] sm:$0xff] %vm671, %v8262
    %8279 = vst.msk [vmem:[#allocation3 + $0x30] sm:$0xff] %vm671, %v8263
    %8280 = vst.msk [vmem:[#allocation3 + $0x38] sm:$0xff] %vm671, %v8264
    %8281 = vst.msk [vmem:[#allocation3 + $0x40] sm:$0xff] %vm671, %v8265
    %8282 = vst.msk [vmem:[#allocation3 + $0x48] sm:$0xff] %vm671, %v8266
    %8283 = vst.msk [vmem:[#allocation3 + $0x50] sm:$0xff] %vm671, %v8267
    %8284 = vst.msk [vmem:[#allocation3 + $0x58] sm:$0xff] %vm671, %v8268
    %8285 = vst.msk [vmem:[#allocation3 + $0x60] sm:$0xff] %vm671, %v8269
    %8286 = vst.msk [vmem:[#allocation3 + $0x68] sm:$0xff] %vm671, %v8270
    %8287 = vst.msk [vmem:[#allocation3 + $0x70] sm:$0xff] %vm671, %v8271
    %8288 = vst.msk [vmem:[#allocation3 + $0x78] sm:$0xff] %vm671, %v8272
    // Predicated region
    $region30: #{resblock_forward.1} parent=1 // pred_check
      _
    $region31: #{resblock_forward.1} parent=1 // pred_check_branch
      %8290 = sbr.rel (0) target = $region33
    $region32: #{resblock_forward.1} parent=1 // pred_region
      %s8292 = ssub.s32 2048, 2048
      %8293 = vsyncadd [#allocation4], %s8292
      %s8294 = sshll.u32 [#allocation3], 4
      %s8295 = int_to_ptr.vmem [resolvable:$true] %s8294
      %8300 = dma.vmem_to_hbm [thread:$0]  %s8295, 2048, %s7, [#allocation4], 128, 128, 8
    $region33: #{resblock_forward.1} parent=1 // pred_fallthru
      _
    // Predicated region
    $region34: #{resblock_forward.1} parent=1 // pred_check
      _
    $region35: #{resblock_forward.1} parent=1 // pred_check_branch
      %8302 = sbr.rel (0) target = $region37
    $region36: #{resblock_forward.1} parent=1 // pred_region
      %8303 = dma.done [#allocation4], 2048
    $region37: #{resblock_forward.1} parent=1 // pred_fallthru
      _
    %8304 = vsyncpa [#allocation4], 1

</llo_original>
